<compile_context>
chip_gen: v7x
topology: tpu7x:2x2x1
jax: 0.10.0
libtpu: 0.0.40
codegen_flags: <defaults>
</compile_context>

<pallas_src>
import functools

import numpy as np
import jax
import jax.numpy as jnp
from jax import lax
from jax.experimental import pallas as pl
from jax.experimental.pallas import tpu as pltpu

C = 128          # residual trunk width
CIN = 17         # raw input channels
EPS = 1e-5


# ---------------------------------------------------------------------------
# Pallas kernel: whole network (5 residual blocks + policy/value heads)
# ---------------------------------------------------------------------------
def hpnet_kernel(x_ref, tapmask_ref, ws_ref, gamma_ref, beta_ref,
                 pcw_ref, pcb_ref, vcw_ref, vcb_ref,
                 pfcT_ref, pfcb_ref, vfcT_ref, vfcb_ref,
                 p_out_ref, v_out_ref, *, H, W):
    HW = H * W

    # Per-tap sublane shift amounts + boundary masks, built once and reused by
    # all 10 conv layers.  Tap t = ky*3+kx: output row i reads input row i+d
    # with d = (ky-1)*W + (kx-1); rows whose source falls off the board are
    # zeroed by the mask (which also covers the roll wrap-around).
    shifts, masks = [], []
    for ky in range(3):
        for kx in range(3):
            t = ky * 3 + kx
            d = (ky - 1) * W + (kx - 1)
            shifts.append(d)
            masks.append(jnp.broadcast_to(tapmask_ref[t], (HW, C)))

    def conv3x3(xf, layer):
        cols = []
        for d, m in zip(shifts, masks):
            if d == 0:
                cols.append(xf)                              # center tap
            else:
                s = pltpu.roll(xf, shift=(-d) % HW, axis=0)  # XLU sublane roll
                cols.append(s * m)
        x9 = jnp.concatenate(cols, axis=1).astype(jnp.bfloat16)   # [HW, 9*C]
        return jnp.dot(x9, ws_ref[layer],
                       preferred_element_type=jnp.float32)        # [HW, C]

    inv_hw = 1.0 / HW

    def bn_relu(y, idx):
        # training-mode BatchNorm2d, single-pass stats (biased variance, f32)
        s1 = jnp.sum(y, axis=0, keepdims=True)
        s2 = jnp.sum(y * y, axis=0, keepdims=True)
        mu = s1 * inv_hw
        var = s2 * inv_hw - mu * mu
        yn = (y - mu) * lax.rsqrt(var + EPS)
        return jnp.maximum(gamma_ref[idx] * yn + beta_ref[idx], 0.0)

    xf = x_ref[...]                                   # [HW, C] f32
    for i in range(5):
        temp = xf
        y = bn_relu(conv3x3(xf, 2 * i), 2 * i)
        y = bn_relu(conv3x3(y, 2 * i + 1), 2 * i + 1)
        xf = y if i == 0 else y + temp                # residual (skip block 0)

    # --- heads: 1x1 conv (single out channel) = VPU multiply + lane reduce ---
    p_feat = jnp.maximum(
        jnp.sum(xf * pcw_ref[...], axis=1, keepdims=True) + pcb_ref[...], 0.0)
    v_feat = jnp.maximum(
        jnp.sum(xf * vcw_ref[...], axis=1, keepdims=True) + vcb_ref[...], 0.0)

    p_logits = jnp.sum(p_feat * pfcT_ref[...], axis=0, keepdims=True) \
        + pfcb_ref[...]                               # [1, 3]
    p_shift = p_logits - jnp.max(p_logits, axis=1, keepdims=True)
    p_exp = jnp.exp(p_shift)
    p_out_ref[...] = p_exp / jnp.sum(p_exp, axis=1, keepdims=True)

    v_out_ref[...] = jnp.sum(v_feat * vfcT_ref[...], axis=0, keepdims=True) \
        + vfcb_ref[...]                               # [1, 1]


# ---------------------------------------------------------------------------
# Parameter init (deterministic, synthetic)
# ---------------------------------------------------------------------------
def init_params(key, l):
    HW = l * l
    keys = jax.random.split(key, 38)
    ki = iter(range(38))

    conv_ws = []
    for layer in range(10):
        cin = CIN if layer == 0 else C
        scale = (6.0 / (cin * 9 + C * 9)) ** 0.5          # xavier_uniform-ish
        w = jax.random.uniform(keys[next(ki)], (C, cin, 3, 3), jnp.float32,
                               -scale, scale)
        conv_ws.append(w)

    gammas = jnp.stack([1.0 + 0.1 * jax.random.normal(keys[next(ki)], (C,))
                        for _ in range(10)]).astype(jnp.float32)
    betas = jnp.stack([0.1 * jax.random.normal(keys[next(ki)], (C,))
                       for _ in range(10)]).astype(jnp.float32)

    pcw = 0.1 * jax.random.normal(keys[next(ki)], (C,), jnp.float32)
    pcb = 0.1 * jax.random.normal(keys[next(ki)], (), jnp.float32)
    vcw = 0.1 * jax.random.normal(keys[next(ki)], (C,), jnp.float32)
    vcb = 0.1 * jax.random.normal(keys[next(ki)], (), jnp.float32)

    pfc_w = 0.05 * jax.random.normal(keys[next(ki)], (3, HW), jnp.float32)
    pfc_b = 0.05 * jax.random.normal(keys[next(ki)], (3,), jnp.float32)
    vfc_w = 0.05 * jax.random.normal(keys[next(ki)], (1, HW), jnp.float32)
    vfc_b = 0.05 * jax.random.normal(keys[next(ki)], (1,), jnp.float32)

    return dict(conv_ws=conv_ws, gammas=gammas, betas=betas,
                pcw=pcw, pcb=pcb, vcw=vcw, vcb=vcb,
                pfc_w=pfc_w, pfc_b=pfc_b, vfc_w=vfc_w, vfc_b=vfc_b)


# ---------------------------------------------------------------------------
# One-time packing (hoisted out of the per-call path)
# ---------------------------------------------------------------------------
def make_tap_masks(H, W):
    """tapmask[t, i, 0] == 1 iff output row i has a valid source for tap t."""
    HW = H * W
    m = np.zeros((9, HW, 1), np.float32)
    for ky in range(3):
        for kx in range(3):
            t = ky * 3 + kx
            for h in range(H):
                for w in range(W):
                    hh, ww = h + ky - 1, w + kx - 1
                    if 0 <= hh < H and 0 <= ww < W:
                        m[t, h * W + w, 0] = 1.0
    return jnp.asarray(m)


def pack_params(params, l):
    ws9 = np.zeros((10, 9 * C, C), np.float32)          # im2col weight layout
    for layer in range(10):
        w = np.asarray(params['conv_ws'][layer])        # [Cout, Cin, 3, 3]
        cin = w.shape[1]
        wt = np.transpose(w, (2, 3, 1, 0))              # [3, 3, Cin, Cout]
        for ky in range(3):
            for kx in range(3):
                t = ky * 3 + kx
                ws9[layer, t * C:t * C + cin, :] = wt[ky, kx]

    gamma = np.asarray(params['gammas'], np.float32)[:, None, :]   # [10,1,C]
    beta = np.asarray(params['betas'], np.float32)[:, None, :]

    pcw = np.asarray(params['pcw'], np.float32).reshape(1, C)
    vcw = np.asarray(params['vcw'], np.float32).reshape(1, C)
    pcb = np.asarray(params['pcb'], np.float32).reshape(1, 1)
    vcb = np.asarray(params['vcb'], np.float32).reshape(1, 1)

    pfcT = np.asarray(params['pfc_w'], np.float32).T               # [HW, 3]
    pfcb = np.asarray(params['pfc_b'], np.float32).reshape(1, 3)
    vfcT = np.asarray(params['vfc_w'], np.float32).T               # [HW, 1]
    vfcb = np.asarray(params['vfc_b'], np.float32).reshape(1, 1)

    return (jnp.asarray(ws9).astype(jnp.bfloat16),       # MXU operands in bf16
            jnp.asarray(gamma), jnp.asarray(beta),
            jnp.asarray(pcw), jnp.asarray(pcb),
            jnp.asarray(vcw), jnp.asarray(vcb),
            jnp.asarray(pfcT), jnp.asarray(pfcb),
            jnp.asarray(vfcT), jnp.asarray(vfcb))


# ---------------------------------------------------------------------------
# Jittable wrapper: pack NCHW input on device, call pallas_call
# ---------------------------------------------------------------------------
@functools.partial(jax.jit, static_argnums=(3,))
def hpnet_pallas(x_nchw, tapmask, packed, l):
    H = W = l
    HW = H * W
    # NCHW -> [HW, 128] (17 real channels zero-padded to 128 lanes), on device.
    xf = jnp.transpose(x_nchw[0], (1, 2, 0)).reshape(HW, CIN).astype(jnp.float32)
    xf = jnp.pad(xf, ((0, 0), (0, C - CIN)))

    vmem = pl.BlockSpec(memory_space=pltpu.MemorySpace.VMEM)
    p_out, v_out = pl.pallas_call(
        functools.partial(hpnet_kernel, H=H, W=W),
        out_shape=(jax.ShapeDtypeStruct((1, 3), jnp.float32),
                   jax.ShapeDtypeStruct((1, 1), jnp.float32)),
        in_specs=[vmem] * 13,
        out_specs=(vmem, vmem),
        compiler_params=pltpu.CompilerParams(
            vmem_limit_bytes=32 * 1024 * 1024),
    )(xf, tapmask, *packed)
    return p_out[0], v_out[0]          # shapes (3,), (1,) — matches PyTorch


# ---------------------------------------------------------------------------
# Pure-JAX reference (independent formulation via lax.conv) for verification
# ---------------------------------------------------------------------------
def reference_forward(x, params):
    hp = lax.Precision.HIGHEST
    a = x                                                  # [1, 17, H, W]
    for i in range(5):
        temp = a
        for j in range(2):
            idx = 2 * i + j
            w = params['conv_ws'][idx]
            a = lax.conv_general_dilated(
                a, w, (1, 1), 'SAME',
                dimension_numbers=('NCHW', 'OIHW', 'NCHW'), precision=hp)
            mu = jnp.mean(a, axis=(0, 2, 3), keepdims=True)
            var = jnp.mean((a - mu) ** 2, axis=(0, 2, 3), keepdims=True)
            a = params['gammas'][idx][None, :, None, None] * (a - mu) \
                / jnp.sqrt(var + EPS) \
                + params['betas'][idx][None, :, None, None]
            a = jnp.maximum(a, 0.0)
        if i != 0:
            a = a + temp
    p_map = jnp.maximum(
        jnp.einsum('nchw,c->nhw', a, params['pcw'], precision=hp)
        + params['pcb'], 0.0)
    p_feat = p_map.reshape(-1)
    p_logits = jnp.dot(params['pfc_w'], p_feat, precision=hp) + params['pfc_b']
    p_out = jax.nn.softmax(p_logits)
    v_map = jnp.maximum(
        jnp.einsum('nchw,c->nhw', a, params['vcw'], precision=hp)
        + params['vcb'], 0.0)
    v_feat = v_map.reshape(-1)
    v_out = jnp.dot(params['vfc_w'], v_feat, precision=hp) + params['vfc_b']
    return p_out, v_out


if __name__ == "__main__":
    l = 8                                   # board size -> H = W = 8, HW = 64
    key = jax.random.PRNGKey(0)
    k_x, k_p = jax.random.split(key)
    params = init_params(k_p, l)
    x = jax.random.normal(k_x, (1, CIN, l, l), jnp.float32)   # NCHW, batch=1

    # one-time packing (outside the jitted per-call path)
    tapmask = make_tap_masks(l, l)
    packed = pack_params(params, l)

    p_out, v_out = hpnet_pallas(x, tapmask, packed, l)
    jax.block_until_ready((p_out, v_out))

    assert p_out.shape == (3,) and v_out.shape == (1,)
    assert abs(float(jnp.sum(p_out)) - 1.0) < 1e-4

    p_ref, v_ref = reference_forward(x, params)
    # Trunk matmuls feed the MXU bf16 operands (f32 accumulation), so compare
    # against the f32 reference with a slightly looser tolerance than pure f32.
    assert np.allclose(np.asarray(p_out), np.asarray(p_ref),
                       rtol=2e-2, atol=5e-3), (p_out, p_ref)
    assert np.allclose(np.asarray(v_out), np.asarray(v_ref),
                       rtol=2e-2, atol=5e-3), (v_out, v_ref)

    print("KERNEL_OK")
</pallas_src>

<mosaic_0001>
module attributes {stable_mosaic.version = 11 : i64} {
  func.func @hpnet_kernel(%arg0: memref<64x128xf32, #tpu.memory_space<vmem>>, %arg1: memref<9x64x1xf32, #tpu.memory_space<vmem>>, %arg2: memref<10x1152x128xbf16, #tpu.memory_space<vmem>>, %arg3: memref<10x1x128xf32, #tpu.memory_space<vmem>>, %arg4: memref<10x1x128xf32, #tpu.memory_space<vmem>>, %arg5: memref<1x128xf32, #tpu.memory_space<vmem>>, %arg6: memref<1x1xf32, #tpu.memory_space<vmem>>, %arg7: memref<1x128xf32, #tpu.memory_space<vmem>>, %arg8: memref<1x1xf32, #tpu.memory_space<vmem>>, %arg9: memref<64x3xf32, #tpu.memory_space<vmem>>, %arg10: memref<1x3xf32, #tpu.memory_space<vmem>>, %arg11: memref<64x1xf32, #tpu.memory_space<vmem>>, %arg12: memref<1x1xf32, #tpu.memory_space<vmem>>, %arg13: memref<1x3xf32, #tpu.memory_space<vmem>>, %arg14: memref<1x1xf32, #tpu.memory_space<vmem>>) attributes {dimension_semantics = [], scalar_prefetch = 0 : i64, scratch_operands = 0 : i64, tpu.core_type = #tpu.core_type<tc>} {
    %c0 = arith.constant 0 : index
    %c0_0 = arith.constant 0 : index
    %c0_1 = arith.constant 0 : index
    %0 = vector.load %arg1[%c0, %c0_0, %c0_1] : memref<9x64x1xf32, #tpu.memory_space<vmem>>, vector<1x64x1xf32>
    %1 = vector.shape_cast %0 : vector<1x64x1xf32> to vector<64x1xf32>
    %2 = vector.shape_cast %1 : vector<64x1xf32> to vector<64x1xf32>
    %3 = vector.broadcast %2 : vector<64x1xf32> to vector<64x128xf32>
    %c1 = arith.constant 1 : index
    %c0_2 = arith.constant 0 : index
    %c0_3 = arith.constant 0 : index
    %4 = vector.load %arg1[%c1, %c0_2, %c0_3] : memref<9x64x1xf32, #tpu.memory_space<vmem>>, vector<1x64x1xf32>
    %5 = vector.shape_cast %4 : vector<1x64x1xf32> to vector<64x1xf32>
    %6 = vector.shape_cast %5 : vector<64x1xf32> to vector<64x1xf32>
    %7 = vector.broadcast %6 : vector<64x1xf32> to vector<64x128xf32>
    %c2 = arith.constant 2 : index
    %c0_4 = arith.constant 0 : index
    %c0_5 = arith.constant 0 : index
    %8 = vector.load %arg1[%c2, %c0_4, %c0_5] : memref<9x64x1xf32, #tpu.memory_space<vmem>>, vector<1x64x1xf32>
    %9 = vector.shape_cast %8 : vector<1x64x1xf32> to vector<64x1xf32>
    %10 = vector.shape_cast %9 : vector<64x1xf32> to vector<64x1xf32>
    %11 = vector.broadcast %10 : vector<64x1xf32> to vector<64x128xf32>
    %c3 = arith.constant 3 : index
    %c0_6 = arith.constant 0 : index
    %c0_7 = arith.constant 0 : index
    %12 = vector.load %arg1[%c3, %c0_6, %c0_7] : memref<9x64x1xf32, #tpu.memory_space<vmem>>, vector<1x64x1xf32>
    %13 = vector.shape_cast %12 : vector<1x64x1xf32> to vector<64x1xf32>
    %14 = vector.shape_cast %13 : vector<64x1xf32> to vector<64x1xf32>
    %15 = vector.broadcast %14 : vector<64x1xf32> to vector<64x128xf32>
    %c5 = arith.constant 5 : index
    %c0_8 = arith.constant 0 : index
    %c0_9 = arith.constant 0 : index
    %16 = vector.load %arg1[%c5, %c0_8, %c0_9] : memref<9x64x1xf32, #tpu.memory_space<vmem>>, vector<1x64x1xf32>
    %17 = vector.shape_cast %16 : vector<1x64x1xf32> to vector<64x1xf32>
    %18 = vector.shape_cast %17 : vector<64x1xf32> to vector<64x1xf32>
    %19 = vector.broadcast %18 : vector<64x1xf32> to vector<64x128xf32>
    %c6 = arith.constant 6 : index
    %c0_10 = arith.constant 0 : index
    %c0_11 = arith.constant 0 : index
    %20 = vector.load %arg1[%c6, %c0_10, %c0_11] : memref<9x64x1xf32, #tpu.memory_space<vmem>>, vector<1x64x1xf32>
    %21 = vector.shape_cast %20 : vector<1x64x1xf32> to vector<64x1xf32>
    %22 = vector.shape_cast %21 : vector<64x1xf32> to vector<64x1xf32>
    %23 = vector.broadcast %22 : vector<64x1xf32> to vector<64x128xf32>
    %c7 = arith.constant 7 : index
    %c0_12 = arith.constant 0 : index
    %c0_13 = arith.constant 0 : index
    %24 = vector.load %arg1[%c7, %c0_12, %c0_13] : memref<9x64x1xf32, #tpu.memory_space<vmem>>, vector<1x64x1xf32>
    %25 = vector.shape_cast %24 : vector<1x64x1xf32> to vector<64x1xf32>
    %26 = vector.shape_cast %25 : vector<64x1xf32> to vector<64x1xf32>
    %27 = vector.broadcast %26 : vector<64x1xf32> to vector<64x128xf32>
    %c8 = arith.constant 8 : index
    %c0_14 = arith.constant 0 : index
    %c0_15 = arith.constant 0 : index
    %28 = vector.load %arg1[%c8, %c0_14, %c0_15] : memref<9x64x1xf32, #tpu.memory_space<vmem>>, vector<1x64x1xf32>
    %29 = vector.shape_cast %28 : vector<1x64x1xf32> to vector<64x1xf32>
    %30 = vector.shape_cast %29 : vector<64x1xf32> to vector<64x1xf32>
    %31 = vector.broadcast %30 : vector<64x1xf32> to vector<64x128xf32>
    %c0_16 = arith.constant 0 : index
    %c0_17 = arith.constant 0 : index
    %32 = vector.load %arg0[%c0_16, %c0_17] : memref<64x128xf32, #tpu.memory_space<vmem>>, vector<64x128xf32>
    %c9_i32 = arith.constant 9 : i32
    %33 = tpu.dynamic_rotate %32 by %c9_i32 dim 0 : vector<64x128xf32>, i32 -> vector<64x128xf32>
    %34 = arith.mulf %33, %3 : vector<64x128xf32>
    %c8_i32 = arith.constant 8 : i32
    %35 = tpu.dynamic_rotate %32 by %c8_i32 dim 0 : vector<64x128xf32>, i32 -> vector<64x128xf32>
    %36 = arith.mulf %35, %7 : vector<64x128xf32>
    %c7_i32 = arith.constant 7 : i32
    %37 = tpu.dynamic_rotate %32 by %c7_i32 dim 0 : vector<64x128xf32>, i32 -> vector<64x128xf32>
    %38 = arith.mulf %37, %11 : vector<64x128xf32>
    %c1_i32 = arith.constant 1 : i32
    %39 = tpu.dynamic_rotate %32 by %c1_i32 dim 0 : vector<64x128xf32>, i32 -> vector<64x128xf32>
    %40 = arith.mulf %39, %15 : vector<64x128xf32>
    %c63_i32 = arith.constant 63 : i32
    %41 = tpu.dynamic_rotate %32 by %c63_i32 dim 0 : vector<64x128xf32>, i32 -> vector<64x128xf32>
    %42 = arith.mulf %41, %19 : vector<64x128xf32>
    %c57_i32 = arith.constant 57 : i32
    %43 = tpu.dynamic_rotate %32 by %c57_i32 dim 0 : vector<64x128xf32>, i32 -> vector<64x128xf32>
    %44 = arith.mulf %43, %23 : vector<64x128xf32>
    %c56_i32 = arith.constant 56 : i32
    %45 = tpu.dynamic_rotate %32 by %c56_i32 dim 0 : vector<64x128xf32>, i32 -> vector<64x128xf32>
    %46 = arith.mulf %45, %27 : vector<64x128xf32>
    %c55_i32 = arith.constant 55 : i32
    %47 = tpu.dynamic_rotate %32 by %c55_i32 dim 0 : vector<64x128xf32>, i32 -> vector<64x128xf32>
    %48 = arith.mulf %47, %31 : vector<64x128xf32>
    %49 = tpu.concatenate %34, %36, %38, %40, %32, %42, %44, %46, %48 in 1 : vector<64x128xf32>, vector<64x128xf32>, vector<64x128xf32>, vector<64x128xf32>, vector<64x128xf32>, vector<64x128xf32>, vector<64x128xf32>, vector<64x128xf32>, vector<64x128xf32> -> vector<64x1152xf32>
    %50 = arith.truncf %49 : vector<64x1152xf32> to vector<64x1152xbf16>
    %c0_18 = arith.constant 0 : index
    %c0_19 = arith.constant 0 : index
    %c0_20 = arith.constant 0 : index
    %51 = vector.load %arg2[%c0_18, %c0_19, %c0_20] : memref<10x1152x128xbf16, #tpu.memory_space<vmem>>, vector<1x1152x128xbf16>
    %52 = vector.shape_cast %51 : vector<1x1152x128xbf16> to vector<1152x128xbf16>
    %cst = arith.constant dense<0.000000e+00> : vector<64x128xf32>
    %53 = tpu.matmul %50, %52, %cst {dimension_numbers = #tpu.dot_dimension_numbers<[1], [0], [0], [1], [0, 0, 1, 1], [], []>} : vector<64x1152xbf16>, vector<1152x128xbf16>, vector<64x128xf32> -> vector<64x128xf32>
    %cst_21 = arith.constant dense<0.000000e+00> : vector<128xf32>
    %54 = vector.multi_reduction <add>, %53, %cst_21 [0] : vector<64x128xf32> to vector<128xf32>
    %55 = vector.shape_cast %54 : vector<128xf32> to vector<1x128xf32>
    %56 = arith.mulf %53, %53 : vector<64x128xf32>
    %cst_22 = arith.constant dense<0.000000e+00> : vector<128xf32>
    %57 = vector.multi_reduction <add>, %56, %cst_22 [0] : vector<64x128xf32> to vector<128xf32>
    %58 = vector.shape_cast %57 : vector<128xf32> to vector<1x128xf32>
    %cst_23 = arith.constant 1.562500e-02 : f32
    %59 = vector.broadcast %cst_23 : f32 to vector<1x128xf32>
    %60 = arith.mulf %55, %59 : vector<1x128xf32>
    %cst_24 = arith.constant 1.562500e-02 : f32
    %61 = vector.broadcast %cst_24 : f32 to vector<1x128xf32>
    %62 = arith.mulf %58, %61 : vector<1x128xf32>
    %63 = arith.mulf %60, %60 : vector<1x128xf32>
    %64 = arith.subf %62, %63 : vector<1x128xf32>
    %65 = vector.broadcast %60 : vector<1x128xf32> to vector<64x128xf32>
    %66 = arith.subf %53, %65 : vector<64x128xf32>
    %cst_25 = arith.constant 9.99999974E-6 : f32
    %67 = vector.broadcast %cst_25 : f32 to vector<1x128xf32>
    %68 = arith.addf %64, %67 : vector<1x128xf32>
    %69 = math.rsqrt %68 : vector<1x128xf32>
    %70 = vector.broadcast %69 : vector<1x128xf32> to vector<64x128xf32>
    %71 = arith.mulf %66, %70 : vector<64x128xf32>
    %c0_26 = arith.constant 0 : index
    %c0_27 = arith.constant 0 : index
    %c0_28 = arith.constant 0 : index
    %72 = vector.load %arg3[%c0_26, %c0_27, %c0_28] : memref<10x1x128xf32, #tpu.memory_space<vmem>>, vector<1x1x128xf32>
    %73 = vector.shape_cast %72 : vector<1x1x128xf32> to vector<1x128xf32>
    %74 = vector.broadcast %73 : vector<1x128xf32> to vector<64x128xf32>
    %75 = arith.mulf %74, %71 : vector<64x128xf32>
    %c0_29 = arith.constant 0 : index
    %c0_30 = arith.constant 0 : index
    %c0_31 = arith.constant 0 : index
    %76 = vector.load %arg4[%c0_29, %c0_30, %c0_31] : memref<10x1x128xf32, #tpu.memory_space<vmem>>, vector<1x1x128xf32>
    %77 = vector.shape_cast %76 : vector<1x1x128xf32> to vector<1x128xf32>
    %78 = vector.broadcast %77 : vector<1x128xf32> to vector<64x128xf32>
    %79 = arith.addf %75, %78 : vector<64x128xf32>
    %cst_32 = arith.constant 0.000000e+00 : f32
    %80 = vector.broadcast %cst_32 : f32 to vector<64x128xf32>
    %81 = arith.maximumf %79, %80 : vector<64x128xf32>
    %c9_i32_33 = arith.constant 9 : i32
    %82 = tpu.dynamic_rotate %81 by %c9_i32_33 dim 0 : vector<64x128xf32>, i32 -> vector<64x128xf32>
    %83 = arith.mulf %82, %3 : vector<64x128xf32>
    %c8_i32_34 = arith.constant 8 : i32
    %84 = tpu.dynamic_rotate %81 by %c8_i32_34 dim 0 : vector<64x128xf32>, i32 -> vector<64x128xf32>
    %85 = arith.mulf %84, %7 : vector<64x128xf32>
    %c7_i32_35 = arith.constant 7 : i32
    %86 = tpu.dynamic_rotate %81 by %c7_i32_35 dim 0 : vector<64x128xf32>, i32 -> vector<64x128xf32>
    %87 = arith.mulf %86, %11 : vector<64x128xf32>
    %c1_i32_36 = arith.constant 1 : i32
    %88 = tpu.dynamic_rotate %81 by %c1_i32_36 dim 0 : vector<64x128xf32>, i32 -> vector<64x128xf32>
    %89 = arith.mulf %88, %15 : vector<64x128xf32>
    %c63_i32_37 = arith.constant 63 : i32
    %90 = tpu.dynamic_rotate %81 by %c63_i32_37 dim 0 : vector<64x128xf32>, i32 -> vector<64x128xf32>
    %91 = arith.mulf %90, %19 : vector<64x128xf32>
    %c57_i32_38 = arith.constant 57 : i32
    %92 = tpu.dynamic_rotate %81 by %c57_i32_38 dim 0 : vector<64x128xf32>, i32 -> vector<64x128xf32>
    %93 = arith.mulf %92, %23 : vector<64x128xf32>
    %c56_i32_39 = arith.constant 56 : i32
    %94 = tpu.dynamic_rotate %81 by %c56_i32_39 dim 0 : vector<64x128xf32>, i32 -> vector<64x128xf32>
    %95 = arith.mulf %94, %27 : vector<64x128xf32>
    %c55_i32_40 = arith.constant 55 : i32
    %96 = tpu.dynamic_rotate %81 by %c55_i32_40 dim 0 : vector<64x128xf32>, i32 -> vector<64x128xf32>
    %97 = arith.mulf %96, %31 : vector<64x128xf32>
    %98 = tpu.concatenate %83, %85, %87, %89, %81, %91, %93, %95, %97 in 1 : vector<64x128xf32>, vector<64x128xf32>, vector<64x128xf32>, vector<64x128xf32>, vector<64x128xf32>, vector<64x128xf32>, vector<64x128xf32>, vector<64x128xf32>, vector<64x128xf32> -> vector<64x1152xf32>
    %99 = arith.truncf %98 : vector<64x1152xf32> to vector<64x1152xbf16>
    %c1_41 = arith.constant 1 : index
    %c0_42 = arith.constant 0 : index
    %c0_43 = arith.constant 0 : index
    %100 = vector.load %arg2[%c1_41, %c0_42, %c0_43] : memref<10x1152x128xbf16, #tpu.memory_space<vmem>>, vector<1x1152x128xbf16>
    %101 = vector.shape_cast %100 : vector<1x1152x128xbf16> to vector<1152x128xbf16>
    %cst_44 = arith.constant dense<0.000000e+00> : vector<64x128xf32>
    %102 = tpu.matmul %99, %101, %cst_44 {dimension_numbers = #tpu.dot_dimension_numbers<[1], [0], [0], [1], [0, 0, 1, 1], [], []>} : vector<64x1152xbf16>, vector<1152x128xbf16>, vector<64x128xf32> -> vector<64x128xf32>
    %cst_45 = arith.constant dense<0.000000e+00> : vector<128xf32>
    %103 = vector.multi_reduction <add>, %102, %cst_45 [0] : vector<64x128xf32> to vector<128xf32>
    %104 = vector.shape_cast %103 : vector<128xf32> to vector<1x128xf32>
    %105 = arith.mulf %102, %102 : vector<64x128xf32>
    %cst_46 = arith.constant dense<0.000000e+00> : vector<128xf32>
    %106 = vector.multi_reduction <add>, %105, %cst_46 [0] : vector<64x128xf32> to vector<128xf32>
    %107 = vector.shape_cast %106 : vector<128xf32> to vector<1x128xf32>
    %cst_47 = arith.constant 1.562500e-02 : f32
    %108 = vector.broadcast %cst_47 : f32 to vector<1x128xf32>
    %109 = arith.mulf %104, %108 : vector<1x128xf32>
    %cst_48 = arith.constant 1.562500e-02 : f32
    %110 = vector.broadcast %cst_48 : f32 to vector<1x128xf32>
    %111 = arith.mulf %107, %110 : vector<1x128xf32>
    %112 = arith.mulf %109, %109 : vector<1x128xf32>
    %113 = arith.subf %111, %112 : vector<1x128xf32>
    %114 = vector.broadcast %109 : vector<1x128xf32> to vector<64x128xf32>
    %115 = arith.subf %102, %114 : vector<64x128xf32>
    %cst_49 = arith.constant 9.99999974E-6 : f32
    %116 = vector.broadcast %cst_49 : f32 to vector<1x128xf32>
    %117 = arith.addf %113, %116 : vector<1x128xf32>
    %118 = math.rsqrt %117 : vector<1x128xf32>
    %119 = vector.broadcast %118 : vector<1x128xf32> to vector<64x128xf32>
    %120 = arith.mulf %115, %119 : vector<64x128xf32>
    %c1_50 = arith.constant 1 : index
    %c0_51 = arith.constant 0 : index
    %c0_52 = arith.constant 0 : index
    %121 = vector.load %arg3[%c1_50, %c0_51, %c0_52] : memref<10x1x128xf32, #tpu.memory_space<vmem>>, vector<1x1x128xf32>
    %122 = vector.shape_cast %121 : vector<1x1x128xf32> to vector<1x128xf32>
    %123 = vector.broadcast %122 : vector<1x128xf32> to vector<64x128xf32>
    %124 = arith.mulf %123, %120 : vector<64x128xf32>
    %c1_53 = arith.constant 1 : index
    %c0_54 = arith.constant 0 : index
    %c0_55 = arith.constant 0 : index
    %125 = vector.load %arg4[%c1_53, %c0_54, %c0_55] : memref<10x1x128xf32, #tpu.memory_space<vmem>>, vector<1x1x128xf32>
    %126 = vector.shape_cast %125 : vector<1x1x128xf32> to vector<1x128xf32>
    %127 = vector.broadcast %126 : vector<1x128xf32> to vector<64x128xf32>
    %128 = arith.addf %124, %127 : vector<64x128xf32>
    %cst_56 = arith.constant 0.000000e+00 : f32
    %129 = vector.broadcast %cst_56 : f32 to vector<64x128xf32>
    %130 = arith.maximumf %128, %129 : vector<64x128xf32>
    %c9_i32_57 = arith.constant 9 : i32
    %131 = tpu.dynamic_rotate %130 by %c9_i32_57 dim 0 : vector<64x128xf32>, i32 -> vector<64x128xf32>
    %132 = arith.mulf %131, %3 : vector<64x128xf32>
    %c8_i32_58 = arith.constant 8 : i32
    %133 = tpu.dynamic_rotate %130 by %c8_i32_58 dim 0 : vector<64x128xf32>, i32 -> vector<64x128xf32>
    %134 = arith.mulf %133, %7 : vector<64x128xf32>
    %c7_i32_59 = arith.constant 7 : i32
    %135 = tpu.dynamic_rotate %130 by %c7_i32_59 dim 0 : vector<64x128xf32>, i32 -> vector<64x128xf32>
    %136 = arith.mulf %135, %11 : vector<64x128xf32>
    %c1_i32_60 = arith.constant 1 : i32
    %137 = tpu.dynamic_rotate %130 by %c1_i32_60 dim 0 : vector<64x128xf32>, i32 -> vector<64x128xf32>
    %138 = arith.mulf %137, %15 : vector<64x128xf32>
    %c63_i32_61 = arith.constant 63 : i32
    %139 = tpu.dynamic_rotate %130 by %c63_i32_61 dim 0 : vector<64x128xf32>, i32 -> vector<64x128xf32>
    %140 = arith.mulf %139, %19 : vector<64x128xf32>
    %c57_i32_62 = arith.constant 57 : i32
    %141 = tpu.dynamic_rotate %130 by %c57_i32_62 dim 0 : vector<64x128xf32>, i32 -> vector<64x128xf32>
    %142 = arith.mulf %141, %23 : vector<64x128xf32>
    %c56_i32_63 = arith.constant 56 : i32
    %143 = tpu.dynamic_rotate %130 by %c56_i32_63 dim 0 : vector<64x128xf32>, i32 -> vector<64x128xf32>
    %144 = arith.mulf %143, %27 : vector<64x128xf32>
    %c55_i32_64 = arith.constant 55 : i32
    %145 = tpu.dynamic_rotate %130 by %c55_i32_64 dim 0 : vector<64x128xf32>, i32 -> vector<64x128xf32>
    %146 = arith.mulf %145, %31 : vector<64x128xf32>
    %147 = tpu.concatenate %132, %134, %136, %138, %130, %140, %142, %144, %146 in 1 : vector<64x128xf32>, vector<64x128xf32>, vector<64x128xf32>, vector<64x128xf32>, vector<64x128xf32>, vector<64x128xf32>, vector<64x128xf32>, vector<64x128xf32>, vector<64x128xf32> -> vector<64x1152xf32>
    %148 = arith.truncf %147 : vector<64x1152xf32> to vector<64x1152xbf16>
    %c2_65 = arith.constant 2 : index
    %c0_66 = arith.constant 0 : index
    %c0_67 = arith.constant 0 : index
    %149 = vector.load %arg2[%c2_65, %c0_66, %c0_67] : memref<10x1152x128xbf16, #tpu.memory_space<vmem>>, vector<1x1152x128xbf16>
    %150 = vector.shape_cast %149 : vector<1x1152x128xbf16> to vector<1152x128xbf16>
    %cst_68 = arith.constant dense<0.000000e+00> : vector<64x128xf32>
    %151 = tpu.matmul %148, %150, %cst_68 {dimension_numbers = #tpu.dot_dimension_numbers<[1], [0], [0], [1], [0, 0, 1, 1], [], []>} : vector<64x1152xbf16>, vector<1152x128xbf16>, vector<64x128xf32> -> vector<64x128xf32>
    %cst_69 = arith.constant dense<0.000000e+00> : vector<128xf32>
    %152 = vector.multi_reduction <add>, %151, %cst_69 [0] : vector<64x128xf32> to vector<128xf32>
    %153 = vector.shape_cast %152 : vector<128xf32> to vector<1x128xf32>
    %154 = arith.mulf %151, %151 : vector<64x128xf32>
    %cst_70 = arith.constant dense<0.000000e+00> : vector<128xf32>
    %155 = vector.multi_reduction <add>, %154, %cst_70 [0] : vector<64x128xf32> to vector<128xf32>
    %156 = vector.shape_cast %155 : vector<128xf32> to vector<1x128xf32>
    %cst_71 = arith.constant 1.562500e-02 : f32
    %157 = vector.broadcast %cst_71 : f32 to vector<1x128xf32>
    %158 = arith.mulf %153, %157 : vector<1x128xf32>
    %cst_72 = arith.constant 1.562500e-02 : f32
    %159 = vector.broadcast %cst_72 : f32 to vector<1x128xf32>
    %160 = arith.mulf %156, %159 : vector<1x128xf32>
    %161 = arith.mulf %158, %158 : vector<1x128xf32>
    %162 = arith.subf %160, %161 : vector<1x128xf32>
    %163 = vector.broadcast %158 : vector<1x128xf32> to vector<64x128xf32>
    %164 = arith.subf %151, %163 : vector<64x128xf32>
    %cst_73 = arith.constant 9.99999974E-6 : f32
    %165 = vector.broadcast %cst_73 : f32 to vector<1x128xf32>
    %166 = arith.addf %162, %165 : vector<1x128xf32>
    %167 = math.rsqrt %166 : vector<1x128xf32>
    %168 = vector.broadcast %167 : vector<1x128xf32> to vector<64x128xf32>
    %169 = arith.mulf %164, %168 : vector<64x128xf32>
    %c2_74 = arith.constant 2 : index
    %c0_75 = arith.constant 0 : index
    %c0_76 = arith.constant 0 : index
    %170 = vector.load %arg3[%c2_74, %c0_75, %c0_76] : memref<10x1x128xf32, #tpu.memory_space<vmem>>, vector<1x1x128xf32>
    %171 = vector.shape_cast %170 : vector<1x1x128xf32> to vector<1x128xf32>
    %172 = vector.broadcast %171 : vector<1x128xf32> to vector<64x128xf32>
    %173 = arith.mulf %172, %169 : vector<64x128xf32>
    %c2_77 = arith.constant 2 : index
    %c0_78 = arith.constant 0 : index
    %c0_79 = arith.constant 0 : index
    %174 = vector.load %arg4[%c2_77, %c0_78, %c0_79] : memref<10x1x128xf32, #tpu.memory_space<vmem>>, vector<1x1x128xf32>
    %175 = vector.shape_cast %174 : vector<1x1x128xf32> to vector<1x128xf32>
    %176 = vector.broadcast %175 : vector<1x128xf32> to vector<64x128xf32>
    %177 = arith.addf %173, %176 : vector<64x128xf32>
    %cst_80 = arith.constant 0.000000e+00 : f32
    %178 = vector.broadcast %cst_80 : f32 to vector<64x128xf32>
    %179 = arith.maximumf %177, %178 : vector<64x128xf32>
    %c9_i32_81 = arith.constant 9 : i32
    %180 = tpu.dynamic_rotate %179 by %c9_i32_81 dim 0 : vector<64x128xf32>, i32 -> vector<64x128xf32>
    %181 = arith.mulf %180, %3 : vector<64x128xf32>
    %c8_i32_82 = arith.constant 8 : i32
    %182 = tpu.dynamic_rotate %179 by %c8_i32_82 dim 0 : vector<64x128xf32>, i32 -> vector<64x128xf32>
    %183 = arith.mulf %182, %7 : vector<64x128xf32>
    %c7_i32_83 = arith.constant 7 : i32
    %184 = tpu.dynamic_rotate %179 by %c7_i32_83 dim 0 : vector<64x128xf32>, i32 -> vector<64x128xf32>
    %185 = arith.mulf %184, %11 : vector<64x128xf32>
    %c1_i32_84 = arith.constant 1 : i32
    %186 = tpu.dynamic_rotate %179 by %c1_i32_84 dim 0 : vector<64x128xf32>, i32 -> vector<64x128xf32>
    %187 = arith.mulf %186, %15 : vector<64x128xf32>
    %c63_i32_85 = arith.constant 63 : i32
    %188 = tpu.dynamic_rotate %179 by %c63_i32_85 dim 0 : vector<64x128xf32>, i32 -> vector<64x128xf32>
    %189 = arith.mulf %188, %19 : vector<64x128xf32>
    %c57_i32_86 = arith.constant 57 : i32
    %190 = tpu.dynamic_rotate %179 by %c57_i32_86 dim 0 : vector<64x128xf32>, i32 -> vector<64x128xf32>
    %191 = arith.mulf %190, %23 : vector<64x128xf32>
    %c56_i32_87 = arith.constant 56 : i32
    %192 = tpu.dynamic_rotate %179 by %c56_i32_87 dim 0 : vector<64x128xf32>, i32 -> vector<64x128xf32>
    %193 = arith.mulf %192, %27 : vector<64x128xf32>
    %c55_i32_88 = arith.constant 55 : i32
    %194 = tpu.dynamic_rotate %179 by %c55_i32_88 dim 0 : vector<64x128xf32>, i32 -> vector<64x128xf32>
    %195 = arith.mulf %194, %31 : vector<64x128xf32>
    %196 = tpu.concatenate %181, %183, %185, %187, %179, %189, %191, %193, %195 in 1 : vector<64x128xf32>, vector<64x128xf32>, vector<64x128xf32>, vector<64x128xf32>, vector<64x128xf32>, vector<64x128xf32>, vector<64x128xf32>, vector<64x128xf32>, vector<64x128xf32> -> vector<64x1152xf32>
    %197 = arith.truncf %196 : vector<64x1152xf32> to vector<64x1152xbf16>
    %c3_89 = arith.constant 3 : index
    %c0_90 = arith.constant 0 : index
    %c0_91 = arith.constant 0 : index
    %198 = vector.load %arg2[%c3_89, %c0_90, %c0_91] : memref<10x1152x128xbf16, #tpu.memory_space<vmem>>, vector<1x1152x128xbf16>
    %199 = vector.shape_cast %198 : vector<1x1152x128xbf16> to vector<1152x128xbf16>
    %cst_92 = arith.constant dense<0.000000e+00> : vector<64x128xf32>
    %200 = tpu.matmul %197, %199, %cst_92 {dimension_numbers = #tpu.dot_dimension_numbers<[1], [0], [0], [1], [0, 0, 1, 1], [], []>} : vector<64x1152xbf16>, vector<1152x128xbf16>, vector<64x128xf32> -> vector<64x128xf32>
    %cst_93 = arith.constant dense<0.000000e+00> : vector<128xf32>
    %201 = vector.multi_reduction <add>, %200, %cst_93 [0] : vector<64x128xf32> to vector<128xf32>
    %202 = vector.shape_cast %201 : vector<128xf32> to vector<1x128xf32>
    %203 = arith.mulf %200, %200 : vector<64x128xf32>
    %cst_94 = arith.constant dense<0.000000e+00> : vector<128xf32>
    %204 = vector.multi_reduction <add>, %203, %cst_94 [0] : vector<64x128xf32> to vector<128xf32>
    %205 = vector.shape_cast %204 : vector<128xf32> to vector<1x128xf32>
    %cst_95 = arith.constant 1.562500e-02 : f32
    %206 = vector.broadcast %cst_95 : f32 to vector<1x128xf32>
    %207 = arith.mulf %202, %206 : vector<1x128xf32>
    %cst_96 = arith.constant 1.562500e-02 : f32
    %208 = vector.broadcast %cst_96 : f32 to vector<1x128xf32>
    %209 = arith.mulf %205, %208 : vector<1x128xf32>
    %210 = arith.mulf %207, %207 : vector<1x128xf32>
    %211 = arith.subf %209, %210 : vector<1x128xf32>
    %212 = vector.broadcast %207 : vector<1x128xf32> to vector<64x128xf32>
    %213 = arith.subf %200, %212 : vector<64x128xf32>
    %cst_97 = arith.constant 9.99999974E-6 : f32
    %214 = vector.broadcast %cst_97 : f32 to vector<1x128xf32>
    %215 = arith.addf %211, %214 : vector<1x128xf32>
    %216 = math.rsqrt %215 : vector<1x128xf32>
    %217 = vector.broadcast %216 : vector<1x128xf32> to vector<64x128xf32>
    %218 = arith.mulf %213, %217 : vector<64x128xf32>
    %c3_98 = arith.constant 3 : index
    %c0_99 = arith.constant 0 : index
    %c0_100 = arith.constant 0 : index
    %219 = vector.load %arg3[%c3_98, %c0_99, %c0_100] : memref<10x1x128xf32, #tpu.memory_space<vmem>>, vector<1x1x128xf32>
    %220 = vector.shape_cast %219 : vector<1x1x128xf32> to vector<1x128xf32>
    %221 = vector.broadcast %220 : vector<1x128xf32> to vector<64x128xf32>
    %222 = arith.mulf %221, %218 : vector<64x128xf32>
    %c3_101 = arith.constant 3 : index
    %c0_102 = arith.constant 0 : index
    %c0_103 = arith.constant 0 : index
    %223 = vector.load %arg4[%c3_101, %c0_102, %c0_103] : memref<10x1x128xf32, #tpu.memory_space<vmem>>, vector<1x1x128xf32>
    %224 = vector.shape_cast %223 : vector<1x1x128xf32> to vector<1x128xf32>
    %225 = vector.broadcast %224 : vector<1x128xf32> to vector<64x128xf32>
    %226 = arith.addf %222, %225 : vector<64x128xf32>
    %cst_104 = arith.constant 0.000000e+00 : f32
    %227 = vector.broadcast %cst_104 : f32 to vector<64x128xf32>
    %228 = arith.maximumf %226, %227 : vector<64x128xf32>
    %229 = arith.addf %228, %130 : vector<64x128xf32>
    %c9_i32_105 = arith.constant 9 : i32
    %230 = tpu.dynamic_rotate %229 by %c9_i32_105 dim 0 : vector<64x128xf32>, i32 -> vector<64x128xf32>
    %231 = arith.mulf %230, %3 : vector<64x128xf32>
    %c8_i32_106 = arith.constant 8 : i32
    %232 = tpu.dynamic_rotate %229 by %c8_i32_106 dim 0 : vector<64x128xf32>, i32 -> vector<64x128xf32>
    %233 = arith.mulf %232, %7 : vector<64x128xf32>
    %c7_i32_107 = arith.constant 7 : i32
    %234 = tpu.dynamic_rotate %229 by %c7_i32_107 dim 0 : vector<64x128xf32>, i32 -> vector<64x128xf32>
    %235 = arith.mulf %234, %11 : vector<64x128xf32>
    %c1_i32_108 = arith.constant 1 : i32
    %236 = tpu.dynamic_rotate %229 by %c1_i32_108 dim 0 : vector<64x128xf32>, i32 -> vector<64x128xf32>
    %237 = arith.mulf %236, %15 : vector<64x128xf32>
    %c63_i32_109 = arith.constant 63 : i32
    %238 = tpu.dynamic_rotate %229 by %c63_i32_109 dim 0 : vector<64x128xf32>, i32 -> vector<64x128xf32>
    %239 = arith.mulf %238, %19 : vector<64x128xf32>
    %c57_i32_110 = arith.constant 57 : i32
    %240 = tpu.dynamic_rotate %229 by %c57_i32_110 dim 0 : vector<64x128xf32>, i32 -> vector<64x128xf32>
    %241 = arith.mulf %240, %23 : vector<64x128xf32>
    %c56_i32_111 = arith.constant 56 : i32
    %242 = tpu.dynamic_rotate %229 by %c56_i32_111 dim 0 : vector<64x128xf32>, i32 -> vector<64x128xf32>
    %243 = arith.mulf %242, %27 : vector<64x128xf32>
    %c55_i32_112 = arith.constant 55 : i32
    %244 = tpu.dynamic_rotate %229 by %c55_i32_112 dim 0 : vector<64x128xf32>, i32 -> vector<64x128xf32>
    %245 = arith.mulf %244, %31 : vector<64x128xf32>
    %246 = tpu.concatenate %231, %233, %235, %237, %229, %239, %241, %243, %245 in 1 : vector<64x128xf32>, vector<64x128xf32>, vector<64x128xf32>, vector<64x128xf32>, vector<64x128xf32>, vector<64x128xf32>, vector<64x128xf32>, vector<64x128xf32>, vector<64x128xf32> -> vector<64x1152xf32>
    %247 = arith.truncf %246 : vector<64x1152xf32> to vector<64x1152xbf16>
    %c4 = arith.constant 4 : index
    %c0_113 = arith.constant 0 : index
    %c0_114 = arith.constant 0 : index
    %248 = vector.load %arg2[%c4, %c0_113, %c0_114] : memref<10x1152x128xbf16, #tpu.memory_space<vmem>>, vector<1x1152x128xbf16>
    %249 = vector.shape_cast %248 : vector<1x1152x128xbf16> to vector<1152x128xbf16>
    %cst_115 = arith.constant dense<0.000000e+00> : vector<64x128xf32>
    %250 = tpu.matmul %247, %249, %cst_115 {dimension_numbers = #tpu.dot_dimension_numbers<[1], [0], [0], [1], [0, 0, 1, 1], [], []>} : vector<64x1152xbf16>, vector<1152x128xbf16>, vector<64x128xf32> -> vector<64x128xf32>
    %cst_116 = arith.constant dense<0.000000e+00> : vector<128xf32>
    %251 = vector.multi_reduction <add>, %250, %cst_116 [0] : vector<64x128xf32> to vector<128xf32>
    %252 = vector.shape_cast %251 : vector<128xf32> to vector<1x128xf32>
    %253 = arith.mulf %250, %250 : vector<64x128xf32>
    %cst_117 = arith.constant dense<0.000000e+00> : vector<128xf32>
    %254 = vector.multi_reduction <add>, %253, %cst_117 [0] : vector<64x128xf32> to vector<128xf32>
    %255 = vector.shape_cast %254 : vector<128xf32> to vector<1x128xf32>
    %cst_118 = arith.constant 1.562500e-02 : f32
    %256 = vector.broadcast %cst_118 : f32 to vector<1x128xf32>
    %257 = arith.mulf %252, %256 : vector<1x128xf32>
    %cst_119 = arith.constant 1.562500e-02 : f32
    %258 = vector.broadcast %cst_119 : f32 to vector<1x128xf32>
    %259 = arith.mulf %255, %258 : vector<1x128xf32>
    %260 = arith.mulf %257, %257 : vector<1x128xf32>
    %261 = arith.subf %259, %260 : vector<1x128xf32>
    %262 = vector.broadcast %257 : vector<1x128xf32> to vector<64x128xf32>
    %263 = arith.subf %250, %262 : vector<64x128xf32>
    %cst_120 = arith.constant 9.99999974E-6 : f32
    %264 = vector.broadcast %cst_120 : f32 to vector<1x128xf32>
    %265 = arith.addf %261, %264 : vector<1x128xf32>
    %266 = math.rsqrt %265 : vector<1x128xf32>
    %267 = vector.broadcast %266 : vector<1x128xf32> to vector<64x128xf32>
    %268 = arith.mulf %263, %267 : vector<64x128xf32>
    %c4_121 = arith.constant 4 : index
    %c0_122 = arith.constant 0 : index
    %c0_123 = arith.constant 0 : index
    %269 = vector.load %arg3[%c4_121, %c0_122, %c0_123] : memref<10x1x128xf32, #tpu.memory_space<vmem>>, vector<1x1x128xf32>
    %270 = vector.shape_cast %269 : vector<1x1x128xf32> to vector<1x128xf32>
    %271 = vector.broadcast %270 : vector<1x128xf32> to vector<64x128xf32>
    %272 = arith.mulf %271, %268 : vector<64x128xf32>
    %c4_124 = arith.constant 4 : index
    %c0_125 = arith.constant 0 : index
    %c0_126 = arith.constant 0 : index
    %273 = vector.load %arg4[%c4_124, %c0_125, %c0_126] : memref<10x1x128xf32, #tpu.memory_space<vmem>>, vector<1x1x128xf32>
    %274 = vector.shape_cast %273 : vector<1x1x128xf32> to vector<1x128xf32>
    %275 = vector.broadcast %274 : vector<1x128xf32> to vector<64x128xf32>
    %276 = arith.addf %272, %275 : vector<64x128xf32>
    %cst_127 = arith.constant 0.000000e+00 : f32
    %277 = vector.broadcast %cst_127 : f32 to vector<64x128xf32>
    %278 = arith.maximumf %276, %277 : vector<64x128xf32>
    %c9_i32_128 = arith.constant 9 : i32
    %279 = tpu.dynamic_rotate %278 by %c9_i32_128 dim 0 : vector<64x128xf32>, i32 -> vector<64x128xf32>
    %280 = arith.mulf %279, %3 : vector<64x128xf32>
    %c8_i32_129 = arith.constant 8 : i32
    %281 = tpu.dynamic_rotate %278 by %c8_i32_129 dim 0 : vector<64x128xf32>, i32 -> vector<64x128xf32>
    %282 = arith.mulf %281, %7 : vector<64x128xf32>
    %c7_i32_130 = arith.constant 7 : i32
    %283 = tpu.dynamic_rotate %278 by %c7_i32_130 dim 0 : vector<64x128xf32>, i32 -> vector<64x128xf32>
    %284 = arith.mulf %283, %11 : vector<64x128xf32>
    %c1_i32_131 = arith.constant 1 : i32
    %285 = tpu.dynamic_rotate %278 by %c1_i32_131 dim 0 : vector<64x128xf32>, i32 -> vector<64x128xf32>
    %286 = arith.mulf %285, %15 : vector<64x128xf32>
    %c63_i32_132 = arith.constant 63 : i32
    %287 = tpu.dynamic_rotate %278 by %c63_i32_132 dim 0 : vector<64x128xf32>, i32 -> vector<64x128xf32>
    %288 = arith.mulf %287, %19 : vector<64x128xf32>
    %c57_i32_133 = arith.constant 57 : i32
    %289 = tpu.dynamic_rotate %278 by %c57_i32_133 dim 0 : vector<64x128xf32>, i32 -> vector<64x128xf32>
    %290 = arith.mulf %289, %23 : vector<64x128xf32>
    %c56_i32_134 = arith.constant 56 : i32
    %291 = tpu.dynamic_rotate %278 by %c56_i32_134 dim 0 : vector<64x128xf32>, i32 -> vector<64x128xf32>
    %292 = arith.mulf %291, %27 : vector<64x128xf32>
    %c55_i32_135 = arith.constant 55 : i32
    %293 = tpu.dynamic_rotate %278 by %c55_i32_135 dim 0 : vector<64x128xf32>, i32 -> vector<64x128xf32>
    %294 = arith.mulf %293, %31 : vector<64x128xf32>
    %295 = tpu.concatenate %280, %282, %284, %286, %278, %288, %290, %292, %294 in 1 : vector<64x128xf32>, vector<64x128xf32>, vector<64x128xf32>, vector<64x128xf32>, vector<64x128xf32>, vector<64x128xf32>, vector<64x128xf32>, vector<64x128xf32>, vector<64x128xf32> -> vector<64x1152xf32>
    %296 = arith.truncf %295 : vector<64x1152xf32> to vector<64x1152xbf16>
    %c5_136 = arith.constant 5 : index
    %c0_137 = arith.constant 0 : index
    %c0_138 = arith.constant 0 : index
    %297 = vector.load %arg2[%c5_136, %c0_137, %c0_138] : memref<10x1152x128xbf16, #tpu.memory_space<vmem>>, vector<1x1152x128xbf16>
    %298 = vector.shape_cast %297 : vector<1x1152x128xbf16> to vector<1152x128xbf16>
    %cst_139 = arith.constant dense<0.000000e+00> : vector<64x128xf32>
    %299 = tpu.matmul %296, %298, %cst_139 {dimension_numbers = #tpu.dot_dimension_numbers<[1], [0], [0], [1], [0, 0, 1, 1], [], []>} : vector<64x1152xbf16>, vector<1152x128xbf16>, vector<64x128xf32> -> vector<64x128xf32>
    %cst_140 = arith.constant dense<0.000000e+00> : vector<128xf32>
    %300 = vector.multi_reduction <add>, %299, %cst_140 [0] : vector<64x128xf32> to vector<128xf32>
    %301 = vector.shape_cast %300 : vector<128xf32> to vector<1x128xf32>
    %302 = arith.mulf %299, %299 : vector<64x128xf32>
    %cst_141 = arith.constant dense<0.000000e+00> : vector<128xf32>
    %303 = vector.multi_reduction <add>, %302, %cst_141 [0] : vector<64x128xf32> to vector<128xf32>
    %304 = vector.shape_cast %303 : vector<128xf32> to vector<1x128xf32>
    %cst_142 = arith.constant 1.562500e-02 : f32
    %305 = vector.broadcast %cst_142 : f32 to vector<1x128xf32>
    %306 = arith.mulf %301, %305 : vector<1x128xf32>
    %cst_143 = arith.constant 1.562500e-02 : f32
    %307 = vector.broadcast %cst_143 : f32 to vector<1x128xf32>
    %308 = arith.mulf %304, %307 : vector<1x128xf32>
    %309 = arith.mulf %306, %306 : vector<1x128xf32>
    %310 = arith.subf %308, %309 : vector<1x128xf32>
    %311 = vector.broadcast %306 : vector<1x128xf32> to vector<64x128xf32>
    %312 = arith.subf %299, %311 : vector<64x128xf32>
    %cst_144 = arith.constant 9.99999974E-6 : f32
    %313 = vector.broadcast %cst_144 : f32 to vector<1x128xf32>
    %314 = arith.addf %310, %313 : vector<1x128xf32>
    %315 = math.rsqrt %314 : vector<1x128xf32>
    %316 = vector.broadcast %315 : vector<1x128xf32> to vector<64x128xf32>
    %317 = arith.mulf %312, %316 : vector<64x128xf32>
    %c5_145 = arith.constant 5 : index
    %c0_146 = arith.constant 0 : index
    %c0_147 = arith.constant 0 : index
    %318 = vector.load %arg3[%c5_145, %c0_146, %c0_147] : memref<10x1x128xf32, #tpu.memory_space<vmem>>, vector<1x1x128xf32>
    %319 = vector.shape_cast %318 : vector<1x1x128xf32> to vector<1x128xf32>
    %320 = vector.broadcast %319 : vector<1x128xf32> to vector<64x128xf32>
    %321 = arith.mulf %320, %317 : vector<64x128xf32>
    %c5_148 = arith.constant 5 : index
    %c0_149 = arith.constant 0 : index
    %c0_150 = arith.constant 0 : index
    %322 = vector.load %arg4[%c5_148, %c0_149, %c0_150] : memref<10x1x128xf32, #tpu.memory_space<vmem>>, vector<1x1x128xf32>
    %323 = vector.shape_cast %322 : vector<1x1x128xf32> to vector<1x128xf32>
    %324 = vector.broadcast %323 : vector<1x128xf32> to vector<64x128xf32>
    %325 = arith.addf %321, %324 : vector<64x128xf32>
    %cst_151 = arith.constant 0.000000e+00 : f32
    %326 = vector.broadcast %cst_151 : f32 to vector<64x128xf32>
    %327 = arith.maximumf %325, %326 : vector<64x128xf32>
    %328 = arith.addf %327, %229 : vector<64x128xf32>
    %c9_i32_152 = arith.constant 9 : i32
    %329 = tpu.dynamic_rotate %328 by %c9_i32_152 dim 0 : vector<64x128xf32>, i32 -> vector<64x128xf32>
    %330 = arith.mulf %329, %3 : vector<64x128xf32>
    %c8_i32_153 = arith.constant 8 : i32
    %331 = tpu.dynamic_rotate %328 by %c8_i32_153 dim 0 : vector<64x128xf32>, i32 -> vector<64x128xf32>
    %332 = arith.mulf %331, %7 : vector<64x128xf32>
    %c7_i32_154 = arith.constant 7 : i32
    %333 = tpu.dynamic_rotate %328 by %c7_i32_154 dim 0 : vector<64x128xf32>, i32 -> vector<64x128xf32>
    %334 = arith.mulf %333, %11 : vector<64x128xf32>
    %c1_i32_155 = arith.constant 1 : i32
    %335 = tpu.dynamic_rotate %328 by %c1_i32_155 dim 0 : vector<64x128xf32>, i32 -> vector<64x128xf32>
    %336 = arith.mulf %335, %15 : vector<64x128xf32>
    %c63_i32_156 = arith.constant 63 : i32
    %337 = tpu.dynamic_rotate %328 by %c63_i32_156 dim 0 : vector<64x128xf32>, i32 -> vector<64x128xf32>
    %338 = arith.mulf %337, %19 : vector<64x128xf32>
    %c57_i32_157 = arith.constant 57 : i32
    %339 = tpu.dynamic_rotate %328 by %c57_i32_157 dim 0 : vector<64x128xf32>, i32 -> vector<64x128xf32>
    %340 = arith.mulf %339, %23 : vector<64x128xf32>
    %c56_i32_158 = arith.constant 56 : i32
    %341 = tpu.dynamic_rotate %328 by %c56_i32_158 dim 0 : vector<64x128xf32>, i32 -> vector<64x128xf32>
    %342 = arith.mulf %341, %27 : vector<64x128xf32>
    %c55_i32_159 = arith.constant 55 : i32
    %343 = tpu.dynamic_rotate %328 by %c55_i32_159 dim 0 : vector<64x128xf32>, i32 -> vector<64x128xf32>
    %344 = arith.mulf %343, %31 : vector<64x128xf32>
    %345 = tpu.concatenate %330, %332, %334, %336, %328, %338, %340, %342, %344 in 1 : vector<64x128xf32>, vector<64x128xf32>, vector<64x128xf32>, vector<64x128xf32>, vector<64x128xf32>, vector<64x128xf32>, vector<64x128xf32>, vector<64x128xf32>, vector<64x128xf32> -> vector<64x1152xf32>
    %346 = arith.truncf %345 : vector<64x1152xf32> to vector<64x1152xbf16>
    %c6_160 = arith.constant 6 : index
    %c0_161 = arith.constant 0 : index
    %c0_162 = arith.constant 0 : index
    %347 = vector.load %arg2[%c6_160, %c0_161, %c0_162] : memref<10x1152x128xbf16, #tpu.memory_space<vmem>>, vector<1x1152x128xbf16>
    %348 = vector.shape_cast %347 : vector<1x1152x128xbf16> to vector<1152x128xbf16>
    %cst_163 = arith.constant dense<0.000000e+00> : vector<64x128xf32>
    %349 = tpu.matmul %346, %348, %cst_163 {dimension_numbers = #tpu.dot_dimension_numbers<[1], [0], [0], [1], [0, 0, 1, 1], [], []>} : vector<64x1152xbf16>, vector<1152x128xbf16>, vector<64x128xf32> -> vector<64x128xf32>
    %cst_164 = arith.constant dense<0.000000e+00> : vector<128xf32>
    %350 = vector.multi_reduction <add>, %349, %cst_164 [0] : vector<64x128xf32> to vector<128xf32>
    %351 = vector.shape_cast %350 : vector<128xf32> to vector<1x128xf32>
    %352 = arith.mulf %349, %349 : vector<64x128xf32>
    %cst_165 = arith.constant dense<0.000000e+00> : vector<128xf32>
    %353 = vector.multi_reduction <add>, %352, %cst_165 [0] : vector<64x128xf32> to vector<128xf32>
    %354 = vector.shape_cast %353 : vector<128xf32> to vector<1x128xf32>
    %cst_166 = arith.constant 1.562500e-02 : f32
    %355 = vector.broadcast %cst_166 : f32 to vector<1x128xf32>
    %356 = arith.mulf %351, %355 : vector<1x128xf32>
    %cst_167 = arith.constant 1.562500e-02 : f32
    %357 = vector.broadcast %cst_167 : f32 to vector<1x128xf32>
    %358 = arith.mulf %354, %357 : vector<1x128xf32>
    %359 = arith.mulf %356, %356 : vector<1x128xf32>
    %360 = arith.subf %358, %359 : vector<1x128xf32>
    %361 = vector.broadcast %356 : vector<1x128xf32> to vector<64x128xf32>
    %362 = arith.subf %349, %361 : vector<64x128xf32>
    %cst_168 = arith.constant 9.99999974E-6 : f32
    %363 = vector.broadcast %cst_168 : f32 to vector<1x128xf32>
    %364 = arith.addf %360, %363 : vector<1x128xf32>
    %365 = math.rsqrt %364 : vector<1x128xf32>
    %366 = vector.broadcast %365 : vector<1x128xf32> to vector<64x128xf32>
    %367 = arith.mulf %362, %366 : vector<64x128xf32>
    %c6_169 = arith.constant 6 : index
    %c0_170 = arith.constant 0 : index
    %c0_171 = arith.constant 0 : index
    %368 = vector.load %arg3[%c6_169, %c0_170, %c0_171] : memref<10x1x128xf32, #tpu.memory_space<vmem>>, vector<1x1x128xf32>
    %369 = vector.shape_cast %368 : vector<1x1x128xf32> to vector<1x128xf32>
    %370 = vector.broadcast %369 : vector<1x128xf32> to vector<64x128xf32>
    %371 = arith.mulf %370, %367 : vector<64x128xf32>
    %c6_172 = arith.constant 6 : index
    %c0_173 = arith.constant 0 : index
    %c0_174 = arith.constant 0 : index
    %372 = vector.load %arg4[%c6_172, %c0_173, %c0_174] : memref<10x1x128xf32, #tpu.memory_space<vmem>>, vector<1x1x128xf32>
    %373 = vector.shape_cast %372 : vector<1x1x128xf32> to vector<1x128xf32>
    %374 = vector.broadcast %373 : vector<1x128xf32> to vector<64x128xf32>
    %375 = arith.addf %371, %374 : vector<64x128xf32>
    %cst_175 = arith.constant 0.000000e+00 : f32
    %376 = vector.broadcast %cst_175 : f32 to vector<64x128xf32>
    %377 = arith.maximumf %375, %376 : vector<64x128xf32>
    %c9_i32_176 = arith.constant 9 : i32
    %378 = tpu.dynamic_rotate %377 by %c9_i32_176 dim 0 : vector<64x128xf32>, i32 -> vector<64x128xf32>
    %379 = arith.mulf %378, %3 : vector<64x128xf32>
    %c8_i32_177 = arith.constant 8 : i32
    %380 = tpu.dynamic_rotate %377 by %c8_i32_177 dim 0 : vector<64x128xf32>, i32 -> vector<64x128xf32>
    %381 = arith.mulf %380, %7 : vector<64x128xf32>
    %c7_i32_178 = arith.constant 7 : i32
    %382 = tpu.dynamic_rotate %377 by %c7_i32_178 dim 0 : vector<64x128xf32>, i32 -> vector<64x128xf32>
    %383 = arith.mulf %382, %11 : vector<64x128xf32>
    %c1_i32_179 = arith.constant 1 : i32
    %384 = tpu.dynamic_rotate %377 by %c1_i32_179 dim 0 : vector<64x128xf32>, i32 -> vector<64x128xf32>
    %385 = arith.mulf %384, %15 : vector<64x128xf32>
    %c63_i32_180 = arith.constant 63 : i32
    %386 = tpu.dynamic_rotate %377 by %c63_i32_180 dim 0 : vector<64x128xf32>, i32 -> vector<64x128xf32>
    %387 = arith.mulf %386, %19 : vector<64x128xf32>
    %c57_i32_181 = arith.constant 57 : i32
    %388 = tpu.dynamic_rotate %377 by %c57_i32_181 dim 0 : vector<64x128xf32>, i32 -> vector<64x128xf32>
    %389 = arith.mulf %388, %23 : vector<64x128xf32>
    %c56_i32_182 = arith.constant 56 : i32
    %390 = tpu.dynamic_rotate %377 by %c56_i32_182 dim 0 : vector<64x128xf32>, i32 -> vector<64x128xf32>
    %391 = arith.mulf %390, %27 : vector<64x128xf32>
    %c55_i32_183 = arith.constant 55 : i32
    %392 = tpu.dynamic_rotate %377 by %c55_i32_183 dim 0 : vector<64x128xf32>, i32 -> vector<64x128xf32>
    %393 = arith.mulf %392, %31 : vector<64x128xf32>
    %394 = tpu.concatenate %379, %381, %383, %385, %377, %387, %389, %391, %393 in 1 : vector<64x128xf32>, vector<64x128xf32>, vector<64x128xf32>, vector<64x128xf32>, vector<64x128xf32>, vector<64x128xf32>, vector<64x128xf32>, vector<64x128xf32>, vector<64x128xf32> -> vector<64x1152xf32>
    %395 = arith.truncf %394 : vector<64x1152xf32> to vector<64x1152xbf16>
    %c7_184 = arith.constant 7 : index
    %c0_185 = arith.constant 0 : index
    %c0_186 = arith.constant 0 : index
    %396 = vector.load %arg2[%c7_184, %c0_185, %c0_186] : memref<10x1152x128xbf16, #tpu.memory_space<vmem>>, vector<1x1152x128xbf16>
    %397 = vector.shape_cast %396 : vector<1x1152x128xbf16> to vector<1152x128xbf16>
    %cst_187 = arith.constant dense<0.000000e+00> : vector<64x128xf32>
    %398 = tpu.matmul %395, %397, %cst_187 {dimension_numbers = #tpu.dot_dimension_numbers<[1], [0], [0], [1], [0, 0, 1, 1], [], []>} : vector<64x1152xbf16>, vector<1152x128xbf16>, vector<64x128xf32> -> vector<64x128xf32>
    %cst_188 = arith.constant dense<0.000000e+00> : vector<128xf32>
    %399 = vector.multi_reduction <add>, %398, %cst_188 [0] : vector<64x128xf32> to vector<128xf32>
    %400 = vector.shape_cast %399 : vector<128xf32> to vector<1x128xf32>
    %401 = arith.mulf %398, %398 : vector<64x128xf32>
    %cst_189 = arith.constant dense<0.000000e+00> : vector<128xf32>
    %402 = vector.multi_reduction <add>, %401, %cst_189 [0] : vector<64x128xf32> to vector<128xf32>
    %403 = vector.shape_cast %402 : vector<128xf32> to vector<1x128xf32>
    %cst_190 = arith.constant 1.562500e-02 : f32
    %404 = vector.broadcast %cst_190 : f32 to vector<1x128xf32>
    %405 = arith.mulf %400, %404 : vector<1x128xf32>
    %cst_191 = arith.constant 1.562500e-02 : f32
    %406 = vector.broadcast %cst_191 : f32 to vector<1x128xf32>
    %407 = arith.mulf %403, %406 : vector<1x128xf32>
    %408 = arith.mulf %405, %405 : vector<1x128xf32>
    %409 = arith.subf %407, %408 : vector<1x128xf32>
    %410 = vector.broadcast %405 : vector<1x128xf32> to vector<64x128xf32>
    %411 = arith.subf %398, %410 : vector<64x128xf32>
    %cst_192 = arith.constant 9.99999974E-6 : f32
    %412 = vector.broadcast %cst_192 : f32 to vector<1x128xf32>
    %413 = arith.addf %409, %412 : vector<1x128xf32>
    %414 = math.rsqrt %413 : vector<1x128xf32>
    %415 = vector.broadcast %414 : vector<1x128xf32> to vector<64x128xf32>
    %416 = arith.mulf %411, %415 : vector<64x128xf32>
    %c7_193 = arith.constant 7 : index
    %c0_194 = arith.constant 0 : index
    %c0_195 = arith.constant 0 : index
    %417 = vector.load %arg3[%c7_193, %c0_194, %c0_195] : memref<10x1x128xf32, #tpu.memory_space<vmem>>, vector<1x1x128xf32>
    %418 = vector.shape_cast %417 : vector<1x1x128xf32> to vector<1x128xf32>
    %419 = vector.broadcast %418 : vector<1x128xf32> to vector<64x128xf32>
    %420 = arith.mulf %419, %416 : vector<64x128xf32>
    %c7_196 = arith.constant 7 : index
    %c0_197 = arith.constant 0 : index
    %c0_198 = arith.constant 0 : index
    %421 = vector.load %arg4[%c7_196, %c0_197, %c0_198] : memref<10x1x128xf32, #tpu.memory_space<vmem>>, vector<1x1x128xf32>
    %422 = vector.shape_cast %421 : vector<1x1x128xf32> to vector<1x128xf32>
    %423 = vector.broadcast %422 : vector<1x128xf32> to vector<64x128xf32>
    %424 = arith.addf %420, %423 : vector<64x128xf32>
    %cst_199 = arith.constant 0.000000e+00 : f32
    %425 = vector.broadcast %cst_199 : f32 to vector<64x128xf32>
    %426 = arith.maximumf %424, %425 : vector<64x128xf32>
    %427 = arith.addf %426, %328 : vector<64x128xf32>
    %c9_i32_200 = arith.constant 9 : i32
    %428 = tpu.dynamic_rotate %427 by %c9_i32_200 dim 0 : vector<64x128xf32>, i32 -> vector<64x128xf32>
    %429 = arith.mulf %428, %3 : vector<64x128xf32>
    %c8_i32_201 = arith.constant 8 : i32
    %430 = tpu.dynamic_rotate %427 by %c8_i32_201 dim 0 : vector<64x128xf32>, i32 -> vector<64x128xf32>
    %431 = arith.mulf %430, %7 : vector<64x128xf32>
    %c7_i32_202 = arith.constant 7 : i32
    %432 = tpu.dynamic_rotate %427 by %c7_i32_202 dim 0 : vector<64x128xf32>, i32 -> vector<64x128xf32>
    %433 = arith.mulf %432, %11 : vector<64x128xf32>
    %c1_i32_203 = arith.constant 1 : i32
    %434 = tpu.dynamic_rotate %427 by %c1_i32_203 dim 0 : vector<64x128xf32>, i32 -> vector<64x128xf32>
    %435 = arith.mulf %434, %15 : vector<64x128xf32>
    %c63_i32_204 = arith.constant 63 : i32
    %436 = tpu.dynamic_rotate %427 by %c63_i32_204 dim 0 : vector<64x128xf32>, i32 -> vector<64x128xf32>
    %437 = arith.mulf %436, %19 : vector<64x128xf32>
    %c57_i32_205 = arith.constant 57 : i32
    %438 = tpu.dynamic_rotate %427 by %c57_i32_205 dim 0 : vector<64x128xf32>, i32 -> vector<64x128xf32>
    %439 = arith.mulf %438, %23 : vector<64x128xf32>
    %c56_i32_206 = arith.constant 56 : i32
    %440 = tpu.dynamic_rotate %427 by %c56_i32_206 dim 0 : vector<64x128xf32>, i32 -> vector<64x128xf32>
    %441 = arith.mulf %440, %27 : vector<64x128xf32>
    %c55_i32_207 = arith.constant 55 : i32
    %442 = tpu.dynamic_rotate %427 by %c55_i32_207 dim 0 : vector<64x128xf32>, i32 -> vector<64x128xf32>
    %443 = arith.mulf %442, %31 : vector<64x128xf32>
    %444 = tpu.concatenate %429, %431, %433, %435, %427, %437, %439, %441, %443 in 1 : vector<64x128xf32>, vector<64x128xf32>, vector<64x128xf32>, vector<64x128xf32>, vector<64x128xf32>, vector<64x128xf32>, vector<64x128xf32>, vector<64x128xf32>, vector<64x128xf32> -> vector<64x1152xf32>
    %445 = arith.truncf %444 : vector<64x1152xf32> to vector<64x1152xbf16>
    %c8_208 = arith.constant 8 : index
    %c0_209 = arith.constant 0 : index
    %c0_210 = arith.constant 0 : index
    %446 = vector.load %arg2[%c8_208, %c0_209, %c0_210] : memref<10x1152x128xbf16, #tpu.memory_space<vmem>>, vector<1x1152x128xbf16>
    %447 = vector.shape_cast %446 : vector<1x1152x128xbf16> to vector<1152x128xbf16>
    %cst_211 = arith.constant dense<0.000000e+00> : vector<64x128xf32>
    %448 = tpu.matmul %445, %447, %cst_211 {dimension_numbers = #tpu.dot_dimension_numbers<[1], [0], [0], [1], [0, 0, 1, 1], [], []>} : vector<64x1152xbf16>, vector<1152x128xbf16>, vector<64x128xf32> -> vector<64x128xf32>
    %cst_212 = arith.constant dense<0.000000e+00> : vector<128xf32>
    %449 = vector.multi_reduction <add>, %448, %cst_212 [0] : vector<64x128xf32> to vector<128xf32>
    %450 = vector.shape_cast %449 : vector<128xf32> to vector<1x128xf32>
    %451 = arith.mulf %448, %448 : vector<64x128xf32>
    %cst_213 = arith.constant dense<0.000000e+00> : vector<128xf32>
    %452 = vector.multi_reduction <add>, %451, %cst_213 [0] : vector<64x128xf32> to vector<128xf32>
    %453 = vector.shape_cast %452 : vector<128xf32> to vector<1x128xf32>
    %cst_214 = arith.constant 1.562500e-02 : f32
    %454 = vector.broadcast %cst_214 : f32 to vector<1x128xf32>
    %455 = arith.mulf %450, %454 : vector<1x128xf32>
    %cst_215 = arith.constant 1.562500e-02 : f32
    %456 = vector.broadcast %cst_215 : f32 to vector<1x128xf32>
    %457 = arith.mulf %453, %456 : vector<1x128xf32>
    %458 = arith.mulf %455, %455 : vector<1x128xf32>
    %459 = arith.subf %457, %458 : vector<1x128xf32>
    %460 = vector.broadcast %455 : vector<1x128xf32> to vector<64x128xf32>
    %461 = arith.subf %448, %460 : vector<64x128xf32>
    %cst_216 = arith.constant 9.99999974E-6 : f32
    %462 = vector.broadcast %cst_216 : f32 to vector<1x128xf32>
    %463 = arith.addf %459, %462 : vector<1x128xf32>
    %464 = math.rsqrt %463 : vector<1x128xf32>
    %465 = vector.broadcast %464 : vector<1x128xf32> to vector<64x128xf32>
    %466 = arith.mulf %461, %465 : vector<64x128xf32>
    %c8_217 = arith.constant 8 : index
    %c0_218 = arith.constant 0 : index
    %c0_219 = arith.constant 0 : index
    %467 = vector.load %arg3[%c8_217, %c0_218, %c0_219] : memref<10x1x128xf32, #tpu.memory_space<vmem>>, vector<1x1x128xf32>
    %468 = vector.shape_cast %467 : vector<1x1x128xf32> to vector<1x128xf32>
    %469 = vector.broadcast %468 : vector<1x128xf32> to vector<64x128xf32>
    %470 = arith.mulf %469, %466 : vector<64x128xf32>
    %c8_220 = arith.constant 8 : index
    %c0_221 = arith.constant 0 : index
    %c0_222 = arith.constant 0 : index
    %471 = vector.load %arg4[%c8_220, %c0_221, %c0_222] : memref<10x1x128xf32, #tpu.memory_space<vmem>>, vector<1x1x128xf32>
    %472 = vector.shape_cast %471 : vector<1x1x128xf32> to vector<1x128xf32>
    %473 = vector.broadcast %472 : vector<1x128xf32> to vector<64x128xf32>
    %474 = arith.addf %470, %473 : vector<64x128xf32>
    %cst_223 = arith.constant 0.000000e+00 : f32
    %475 = vector.broadcast %cst_223 : f32 to vector<64x128xf32>
    %476 = arith.maximumf %474, %475 : vector<64x128xf32>
    %c9_i32_224 = arith.constant 9 : i32
    %477 = tpu.dynamic_rotate %476 by %c9_i32_224 dim 0 : vector<64x128xf32>, i32 -> vector<64x128xf32>
    %478 = arith.mulf %477, %3 : vector<64x128xf32>
    %c8_i32_225 = arith.constant 8 : i32
    %479 = tpu.dynamic_rotate %476 by %c8_i32_225 dim 0 : vector<64x128xf32>, i32 -> vector<64x128xf32>
    %480 = arith.mulf %479, %7 : vector<64x128xf32>
    %c7_i32_226 = arith.constant 7 : i32
    %481 = tpu.dynamic_rotate %476 by %c7_i32_226 dim 0 : vector<64x128xf32>, i32 -> vector<64x128xf32>
    %482 = arith.mulf %481, %11 : vector<64x128xf32>
    %c1_i32_227 = arith.constant 1 : i32
    %483 = tpu.dynamic_rotate %476 by %c1_i32_227 dim 0 : vector<64x128xf32>, i32 -> vector<64x128xf32>
    %484 = arith.mulf %483, %15 : vector<64x128xf32>
    %c63_i32_228 = arith.constant 63 : i32
    %485 = tpu.dynamic_rotate %476 by %c63_i32_228 dim 0 : vector<64x128xf32>, i32 -> vector<64x128xf32>
    %486 = arith.mulf %485, %19 : vector<64x128xf32>
    %c57_i32_229 = arith.constant 57 : i32
    %487 = tpu.dynamic_rotate %476 by %c57_i32_229 dim 0 : vector<64x128xf32>, i32 -> vector<64x128xf32>
    %488 = arith.mulf %487, %23 : vector<64x128xf32>
    %c56_i32_230 = arith.constant 56 : i32
    %489 = tpu.dynamic_rotate %476 by %c56_i32_230 dim 0 : vector<64x128xf32>, i32 -> vector<64x128xf32>
    %490 = arith.mulf %489, %27 : vector<64x128xf32>
    %c55_i32_231 = arith.constant 55 : i32
    %491 = tpu.dynamic_rotate %476 by %c55_i32_231 dim 0 : vector<64x128xf32>, i32 -> vector<64x128xf32>
    %492 = arith.mulf %491, %31 : vector<64x128xf32>
    %493 = tpu.concatenate %478, %480, %482, %484, %476, %486, %488, %490, %492 in 1 : vector<64x128xf32>, vector<64x128xf32>, vector<64x128xf32>, vector<64x128xf32>, vector<64x128xf32>, vector<64x128xf32>, vector<64x128xf32>, vector<64x128xf32>, vector<64x128xf32> -> vector<64x1152xf32>
    %494 = arith.truncf %493 : vector<64x1152xf32> to vector<64x1152xbf16>
    %c9 = arith.constant 9 : index
    %c0_232 = arith.constant 0 : index
    %c0_233 = arith.constant 0 : index
    %495 = vector.load %arg2[%c9, %c0_232, %c0_233] : memref<10x1152x128xbf16, #tpu.memory_space<vmem>>, vector<1x1152x128xbf16>
    %496 = vector.shape_cast %495 : vector<1x1152x128xbf16> to vector<1152x128xbf16>
    %cst_234 = arith.constant dense<0.000000e+00> : vector<64x128xf32>
    %497 = tpu.matmul %494, %496, %cst_234 {dimension_numbers = #tpu.dot_dimension_numbers<[1], [0], [0], [1], [0, 0, 1, 1], [], []>} : vector<64x1152xbf16>, vector<1152x128xbf16>, vector<64x128xf32> -> vector<64x128xf32>
    %cst_235 = arith.constant dense<0.000000e+00> : vector<128xf32>
    %498 = vector.multi_reduction <add>, %497, %cst_235 [0] : vector<64x128xf32> to vector<128xf32>
    %499 = vector.shape_cast %498 : vector<128xf32> to vector<1x128xf32>
    %500 = arith.mulf %497, %497 : vector<64x128xf32>
    %cst_236 = arith.constant dense<0.000000e+00> : vector<128xf32>
    %501 = vector.multi_reduction <add>, %500, %cst_236 [0] : vector<64x128xf32> to vector<128xf32>
    %502 = vector.shape_cast %501 : vector<128xf32> to vector<1x128xf32>
    %cst_237 = arith.constant 1.562500e-02 : f32
    %503 = vector.broadcast %cst_237 : f32 to vector<1x128xf32>
    %504 = arith.mulf %499, %503 : vector<1x128xf32>
    %cst_238 = arith.constant 1.562500e-02 : f32
    %505 = vector.broadcast %cst_238 : f32 to vector<1x128xf32>
    %506 = arith.mulf %502, %505 : vector<1x128xf32>
    %507 = arith.mulf %504, %504 : vector<1x128xf32>
    %508 = arith.subf %506, %507 : vector<1x128xf32>
    %509 = vector.broadcast %504 : vector<1x128xf32> to vector<64x128xf32>
    %510 = arith.subf %497, %509 : vector<64x128xf32>
    %cst_239 = arith.constant 9.99999974E-6 : f32
    %511 = vector.broadcast %cst_239 : f32 to vector<1x128xf32>
    %512 = arith.addf %508, %511 : vector<1x128xf32>
    %513 = math.rsqrt %512 : vector<1x128xf32>
    %514 = vector.broadcast %513 : vector<1x128xf32> to vector<64x128xf32>
    %515 = arith.mulf %510, %514 : vector<64x128xf32>
    %c9_240 = arith.constant 9 : index
    %c0_241 = arith.constant 0 : index
    %c0_242 = arith.constant 0 : index
    %516 = vector.load %arg3[%c9_240, %c0_241, %c0_242] : memref<10x1x128xf32, #tpu.memory_space<vmem>>, vector<1x1x128xf32>
    %517 = vector.shape_cast %516 : vector<1x1x128xf32> to vector<1x128xf32>
    %518 = vector.broadcast %517 : vector<1x128xf32> to vector<64x128xf32>
    %519 = arith.mulf %518, %515 : vector<64x128xf32>
    %c9_243 = arith.constant 9 : index
    %c0_244 = arith.constant 0 : index
    %c0_245 = arith.constant 0 : index
    %520 = vector.load %arg4[%c9_243, %c0_244, %c0_245] : memref<10x1x128xf32, #tpu.memory_space<vmem>>, vector<1x1x128xf32>
    %521 = vector.shape_cast %520 : vector<1x1x128xf32> to vector<1x128xf32>
    %522 = vector.broadcast %521 : vector<1x128xf32> to vector<64x128xf32>
    %523 = arith.addf %519, %522 : vector<64x128xf32>
    %cst_246 = arith.constant 0.000000e+00 : f32
    %524 = vector.broadcast %cst_246 : f32 to vector<64x128xf32>
    %525 = arith.maximumf %523, %524 : vector<64x128xf32>
    %526 = arith.addf %525, %427 : vector<64x128xf32>
    %c0_247 = arith.constant 0 : index
    %c0_248 = arith.constant 0 : index
    %527 = vector.load %arg5[%c0_247, %c0_248] : memref<1x128xf32, #tpu.memory_space<vmem>>, vector<1x128xf32>
    %528 = vector.broadcast %527 : vector<1x128xf32> to vector<64x128xf32>
    %529 = arith.mulf %526, %528 : vector<64x128xf32>
    %cst_249 = arith.constant dense<0.000000e+00> : vector<64xf32>
    %530 = vector.multi_reduction <add>, %529, %cst_249 [1] : vector<64x128xf32> to vector<64xf32>
    %531 = vector.shape_cast %530 : vector<64xf32> to vector<64x1xf32>
    %c0_250 = arith.constant 0 : index
    %c0_251 = arith.constant 0 : index
    %532 = vector.load %arg6[%c0_250, %c0_251] : memref<1x1xf32, #tpu.memory_space<vmem>>, vector<1x1xf32>
    %533 = vector.broadcast %532 : vector<1x1xf32> to vector<64x1xf32>
    %534 = arith.addf %531, %533 : vector<64x1xf32>
    %cst_252 = arith.constant 0.000000e+00 : f32
    %535 = vector.broadcast %cst_252 : f32 to vector<64x1xf32>
    %536 = arith.maximumf %534, %535 : vector<64x1xf32>
    %c0_253 = arith.constant 0 : index
    %c0_254 = arith.constant 0 : index
    %537 = vector.load %arg7[%c0_253, %c0_254] : memref<1x128xf32, #tpu.memory_space<vmem>>, vector<1x128xf32>
    %538 = vector.broadcast %537 : vector<1x128xf32> to vector<64x128xf32>
    %539 = arith.mulf %526, %538 : vector<64x128xf32>
    %cst_255 = arith.constant dense<0.000000e+00> : vector<64xf32>
    %540 = vector.multi_reduction <add>, %539, %cst_255 [1] : vector<64x128xf32> to vector<64xf32>
    %541 = vector.shape_cast %540 : vector<64xf32> to vector<64x1xf32>
    %c0_256 = arith.constant 0 : index
    %c0_257 = arith.constant 0 : index
    %542 = vector.load %arg8[%c0_256, %c0_257] : memref<1x1xf32, #tpu.memory_space<vmem>>, vector<1x1xf32>
    %543 = vector.broadcast %542 : vector<1x1xf32> to vector<64x1xf32>
    %544 = arith.addf %541, %543 : vector<64x1xf32>
    %cst_258 = arith.constant 0.000000e+00 : f32
    %545 = vector.broadcast %cst_258 : f32 to vector<64x1xf32>
    %546 = arith.maximumf %544, %545 : vector<64x1xf32>
    %c0_259 = arith.constant 0 : index
    %c0_260 = arith.constant 0 : index
    %547 = vector.load %arg9[%c0_259, %c0_260] : memref<64x3xf32, #tpu.memory_space<vmem>>, vector<64x3xf32>
    %548 = vector.broadcast %536 : vector<64x1xf32> to vector<64x3xf32>
    %549 = arith.mulf %548, %547 : vector<64x3xf32>
    %cst_261 = arith.constant dense<0.000000e+00> : vector<3xf32>
    %550 = vector.multi_reduction <add>, %549, %cst_261 [0] : vector<64x3xf32> to vector<3xf32>
    %551 = vector.shape_cast %550 : vector<3xf32> to vector<1x3xf32>
    %c0_262 = arith.constant 0 : index
    %c0_263 = arith.constant 0 : index
    %552 = vector.load %arg10[%c0_262, %c0_263] : memref<1x3xf32, #tpu.memory_space<vmem>>, vector<1x3xf32>
    %553 = arith.addf %551, %552 : vector<1x3xf32>
    %cst_264 = arith.constant dense<0xFF800000> : vector<1xf32>
    %554 = vector.multi_reduction <maximumf>, %553, %cst_264 [1] : vector<1x3xf32> to vector<1xf32>
    %555 = vector.shape_cast %554 : vector<1xf32> to vector<1x1xf32>
    %556 = vector.broadcast %555 : vector<1x1xf32> to vector<1x3xf32>
    %557 = arith.subf %553, %556 : vector<1x3xf32>
    %558 = math.exp %557 : vector<1x3xf32>
    %cst_265 = arith.constant dense<0.000000e+00> : vector<1xf32>
    %559 = vector.multi_reduction <add>, %558, %cst_265 [1] : vector<1x3xf32> to vector<1xf32>
    %560 = vector.shape_cast %559 : vector<1xf32> to vector<1x1xf32>
    %561 = vector.broadcast %560 : vector<1x1xf32> to vector<1x3xf32>
    %562 = arith.divf %558, %561 : vector<1x3xf32>
    %c0_266 = arith.constant 0 : index
    %c0_267 = arith.constant 0 : index
    %563 = vector.load %arg13[%c0_266, %c0_267] : memref<1x3xf32, #tpu.memory_space<vmem>>, vector<1x3xf32>
    tpu.vector_store %arg13[%c0_266, %c0_267], %562 {strides = array<i32>} : memref<1x3xf32, #tpu.memory_space<vmem>>, vector<1x3xf32>,
    %c0_268 = arith.constant 0 : index
    %c0_269 = arith.constant 0 : index
    %564 = vector.load %arg11[%c0_268, %c0_269] : memref<64x1xf32, #tpu.memory_space<vmem>>, vector<64x1xf32>
    %565 = arith.mulf %546, %564 : vector<64x1xf32>
    %cst_270 = arith.constant dense<0.000000e+00> : vector<1xf32>
    %566 = vector.multi_reduction <add>, %565, %cst_270 [0] : vector<64x1xf32> to vector<1xf32>
    %567 = vector.shape_cast %566 : vector<1xf32> to vector<1x1xf32>
    %c0_271 = arith.constant 0 : index
    %c0_272 = arith.constant 0 : index
    %568 = vector.load %arg12[%c0_271, %c0_272] : memref<1x1xf32, #tpu.memory_space<vmem>>, vector<1x1xf32>
    %569 = arith.addf %567, %568 : vector<1x1xf32>
    %c0_273 = arith.constant 0 : index
    %c0_274 = arith.constant 0 : index
    %570 = vector.load %arg14[%c0_273, %c0_274] : memref<1x1xf32, #tpu.memory_space<vmem>>, vector<1x1xf32>
    tpu.vector_store %arg14[%c0_273, %c0_274], %569 {strides = array<i32>} : memref<1x1xf32, #tpu.memory_space<vmem>>, vector<1x1xf32>,
    return
  }
}

</mosaic_0001>

<llo_original>
// kernel: hpnet_pallas.1
$region0: #{hpnet_pallas.1}
  #allocation0 [shape = 'u32[]', space=smem, size = 0x4, offset = 0x4, fixed_abs, tag = 'smem constant byte address 0x4 - core index']
  #allocation1 [shape = 'u32[144,128]{1,0:T(1,128)}', space=vmem, size = 0x12000, scoped, tag = 'internal scratch']
  #allocation2 [shape = 'f32[1,1]{1,0:T(1,128)S(1)}', space=vmem, size = 0x200, scoped, tag = 'scoped memory for hpnet_pallas.1']
  #allocation3 [shape = 'f32[1,1]{1,0:T(1,128)S(1)}', space=vmem, size = 0x200, scoped, tag = 'scoped memory for hpnet_pallas.1']
  #allocation4 [shape = 'f32[1,1]{1,0:T(1,128)S(1)}', space=vmem, size = 0x200, scoped, tag = 'scoped memory for hpnet_pallas.1']
  %s0 = inlined_call_operand.vmem [shape: f32[64,128], index: 0, kind: input, shape index: {}]
  %s1 = inlined_call_operand.vmem [shape: f32[9,64,1], index: 1, kind: input, shape index: {}]
  %s2 = inlined_call_operand.hbm [shape: bf16[10,1152,128], index: 2, kind: input, shape index: {}]
  %s3 = inlined_call_operand.hbm [shape: f32[10,1,128], index: 3, kind: input, shape index: {}]
  %s4 = inlined_call_operand.hbm [shape: f32[10,1,128], index: 4, kind: input, shape index: {}]
  %s5 = inlined_call_operand.hbm [shape: f32[1,128], index: 5, kind: input, shape index: {}]
  %s6 = inlined_call_operand.<no memory space> [shape: f32[1,1], index: 6, kind: input, shape index: {}]
  %s7 = inlined_call_operand.hbm [shape: f32[1,128], index: 7, kind: input, shape index: {}]
  %s8 = inlined_call_operand.<no memory space> [shape: f32[1,1], index: 8, kind: input, shape index: {}]
  %s9 = inlined_call_operand.vmem [shape: f32[64,3], index: 9, kind: input, shape index: {}]
  %s10 = inlined_call_operand.hbm [shape: f32[1,3], index: 10, kind: input, shape index: {}]
  %s11 = inlined_call_operand.vmem [shape: f32[64,1], index: 11, kind: input, shape index: {}]
  %s12 = inlined_call_operand.<no memory space> [shape: f32[1,1], index: 12, kind: input, shape index: {}]
  %s13 = inlined_call_operand.hbm [shape: f32[1,3], index: 13, kind: output, shape index: {0}]
  %s14 = inlined_call_operand.hbm [shape: f32[1,1], index: 14, kind: output, shape index: {1}]
  %15 = xla_tuple %s13, %s14
  %s16 = sld [smem:[#allocation0]]
  $region94: #{hpnet_pallas.1} parent=0
    _
  %s18 = ssub.s32 1, %s16
  %s19 = scalar_select 0, %s18, %s16
  %v20 = vstv %s6
  %21 = vst [vmem:[#allocation2] sm:$0x1] %v20
  %v22 = vstv %s8
  %23 = vst [vmem:[#allocation3] sm:$0x1] %v22
  %v24 = vstv %s12
  %25 = vst [vmem:[#allocation4] sm:$0x1] %v24
  $region1: #{hpnet_pallas.1} parent=0
    #allocation5 [shape = 'u8[2949120]{0}', space=vmem, size = 0x2d0000, scoped, tag = 'input window, operand 2, single buffered']
    #allocation6 [shape = 's32[1]{0}', space=sflag, size = 0x4, scoped, tag = 'scoped memory for hpnet_pallas.1']
    #allocation7 [shape = 's32[1]{0}', space=sflag, size = 0x4, scoped, tag = 'scoped memory for hpnet_pallas.1']
    #allocation8 [shape = 'u8[5120]{0}', space=vmem, size = 0x1400, scoped, tag = 'input window, operand 3, single buffered']
    #allocation9 [shape = 's32[1]{0}', space=sflag, size = 0x4, scoped, tag = 'scoped memory for hpnet_pallas.1']
    #allocation10 [shape = 'u8[5120]{0}', space=vmem, size = 0x1400, scoped, tag = 'input window, operand 4, single buffered']
    #allocation11 [shape = 'u8[512]{0}', space=vmem, size = 0x400, scoped, tag = 'input window, operand 5, single buffered']
    #allocation12 [shape = 's32[1]{0}', space=sflag, size = 0x4, scoped, tag = 'scoped memory for hpnet_pallas.1']
    #allocation13 [shape = 'u8[512]{0}', space=vmem, size = 0x400, scoped, tag = 'input window, operand 7, single buffered']
    #allocation14 [shape = 'u8[512]{0}', space=vmem, size = 0x400, scoped, tag = 'input window, operand 10, single buffered']
    #allocation15 [shape = 's32[1]{0}', space=sflag, size = 0x4, scoped, tag = 'scoped memory for hpnet_pallas.1']
    #allocation16 [shape = 'u8[512]{0}', space=vmem, size = 0x400, scoped, tag = 'output window, operand 0, single buffered']
    #allocation17 [shape = 'u8[512]{0}', space=vmem, size = 0x400, scoped, tag = 'output window, operand 1, single buffered']
    #allocation18 [shape = 's32[1]{0}', space=sflag, size = 0x4, scoped, tag = 'scoped memory for hpnet_pallas.1']
    %26 = vsyncpa [#allocation6], 0
    %27 = vsyncpa [#allocation9], 0
    %28 = vsyncpa [#allocation12], 0
    %29 = vsyncpa [#allocation15], 0
    %30 = vsyncpa [#allocation7], 0
    %31 = vsyncpa [#allocation18], 0
    // Predicated region
    $region2: #{hpnet_pallas.1} parent=1 // pred_check
      _
    $region3: #{hpnet_pallas.1} parent=1 // pred_check_branch
      %33 = sbr.rel (0) target = $region5
    $region4: #{hpnet_pallas.1} parent=1 // pred_region
      _
    $region5: #{hpnet_pallas.1} parent=1 // pred_fallthru
      _
    // Predicated region
    $region6: #{hpnet_pallas.1} parent=1 // pred_check
      _
    $region7: #{hpnet_pallas.1} parent=1 // pred_check_branch
      %35 = sbr.rel (0) target = $region9
    $region8: #{hpnet_pallas.1} parent=1 // pred_region
      _
    $region9: #{hpnet_pallas.1} parent=1 // pred_fallthru
      _
    // Predicated region
    $region10: #{hpnet_pallas.1} parent=1 // pred_check
      _
    $region11: #{hpnet_pallas.1} parent=1 // pred_check_branch
      %37 = sbr.rel (0) target = $region13
    $region12: #{hpnet_pallas.1} parent=1 // pred_region
      %s39 = ssub.s32 92160, 92160
      %40 = vsyncadd [#allocation6], %s39
      %s41 = sshll.u32 [#allocation5], 4
      %s42 = int_to_ptr.vmem [resolvable:$true] %s41
      %47 = dma.hbm_to_vmem [thread:$0]  %s2, 92160, %s42, [#allocation6], 64, 64, 4
    $region13: #{hpnet_pallas.1} parent=1 // pred_fallthru
      _
    // Predicated region
    $region14: #{hpnet_pallas.1} parent=1 // pred_check
      _
    $region15: #{hpnet_pallas.1} parent=1 // pred_check_branch
      %49 = sbr.rel (0) target = $region17
    $region16: #{hpnet_pallas.1} parent=1 // pred_region
      %s51 = ssub.s32 160, 160
      %52 = vsyncadd [#allocation9], %s51
      %s53 = sshll.u32 [#allocation8], 4
      %s54 = int_to_ptr.vmem [resolvable:$true] %s53
      %59 = dma.hbm_to_vmem [thread:$0]  %s3, 160, %s54, [#allocation9], 16, 16, 1
    $region17: #{hpnet_pallas.1} parent=1 // pred_fallthru
      _
    // Predicated region
    $region18: #{hpnet_pallas.1} parent=1 // pred_check
      _
    $region19: #{hpnet_pallas.1} parent=1 // pred_check_branch
      %61 = sbr.rel (0) target = $region21
    $region20: #{hpnet_pallas.1} parent=1 // pred_region
      %s63 = ssub.s32 160, 160
      %64 = vsyncadd [#allocation9], %s63
      %s65 = sshll.u32 [#allocation10], 4
      %s66 = int_to_ptr.vmem [resolvable:$true] %s65
      %71 = dma.hbm_to_vmem [thread:$0]  %s4, 160, %s66, [#allocation9], 16, 16, 1
    $region21: #{hpnet_pallas.1} parent=1 // pred_fallthru
      _
    // Predicated region
    $region22: #{hpnet_pallas.1} parent=1 // pred_check
      _
    $region23: #{hpnet_pallas.1} parent=1 // pred_check_branch
      %73 = sbr.rel (0) target = $region25
    $region24: #{hpnet_pallas.1} parent=1 // pred_region
      %s75 = ssub.s32 16, 16
      %76 = vsyncadd [#allocation12], %s75
      %s78 = sshll.u32 [#allocation11], 4
      %s79 = int_to_ptr.vmem [resolvable:$true] %s78
      %81 = dma.hbm_to_vmem [thread:$0]  %s5, 16, %s79, [#allocation12]
    $region25: #{hpnet_pallas.1} parent=1 // pred_fallthru
      _
    // Predicated region
    $region26: #{hpnet_pallas.1} parent=1 // pred_check
      _
    $region27: #{hpnet_pallas.1} parent=1 // pred_check_branch
      %83 = sbr.rel (0) target = $region29
    $region28: #{hpnet_pallas.1} parent=1 // pred_region
      _
    $region29: #{hpnet_pallas.1} parent=1 // pred_fallthru
      _
    // Predicated region
    $region30: #{hpnet_pallas.1} parent=1 // pred_check
      _
    $region31: #{hpnet_pallas.1} parent=1 // pred_check_branch
      %85 = sbr.rel (0) target = $region33
    $region32: #{hpnet_pallas.1} parent=1 // pred_region
      %s87 = ssub.s32 16, 16
      %88 = vsyncadd [#allocation12], %s87
      %s90 = sshll.u32 [#allocation13], 4
      %s91 = int_to_ptr.vmem [resolvable:$true] %s90
      %93 = dma.hbm_to_vmem [thread:$0]  %s7, 16, %s91, [#allocation12]
    $region33: #{hpnet_pallas.1} parent=1 // pred_fallthru
      _
    // Predicated region
    $region34: #{hpnet_pallas.1} parent=1 // pred_check
      _
    $region35: #{hpnet_pallas.1} parent=1 // pred_check_branch
      %95 = sbr.rel (0) target = $region37
    $region36: #{hpnet_pallas.1} parent=1 // pred_region
      _
    $region37: #{hpnet_pallas.1} parent=1 // pred_fallthru
      _
    // Predicated region
    $region38: #{hpnet_pallas.1} parent=1 // pred_check
      _
    $region39: #{hpnet_pallas.1} parent=1 // pred_check_branch
      %97 = sbr.rel (0) target = $region41
    $region40: #{hpnet_pallas.1} parent=1 // pred_region
      _
    $region41: #{hpnet_pallas.1} parent=1 // pred_fallthru
      _
    // Predicated region
    $region42: #{hpnet_pallas.1} parent=1 // pred_check
      _
    $region43: #{hpnet_pallas.1} parent=1 // pred_check_branch
      %99 = sbr.rel (0) target = $region45
    $region44: #{hpnet_pallas.1} parent=1 // pred_region
      %s101 = ssub.s32 16, 16
      %102 = vsyncadd [#allocation15], %s101
      %s104 = sshll.u32 [#allocation14], 4
      %s105 = int_to_ptr.vmem [resolvable:$true] %s104
      %107 = dma.hbm_to_vmem [thread:$0]  %s10, 16, %s105, [#allocation15]
    $region45: #{hpnet_pallas.1} parent=1 // pred_fallthru
      _
    // Predicated region
    $region46: #{hpnet_pallas.1} parent=1 // pred_check
      _
    $region47: #{hpnet_pallas.1} parent=1 // pred_check_branch
      %109 = sbr.rel (0) target = $region49
    $region48: #{hpnet_pallas.1} parent=1 // pred_region
      _
    $region49: #{hpnet_pallas.1} parent=1 // pred_fallthru
      _
    // Predicated region
    $region50: #{hpnet_pallas.1} parent=1 // pred_check
      _
    $region51: #{hpnet_pallas.1} parent=1 // pred_check_branch
      %111 = sbr.rel (0) target = $region53
    $region52: #{hpnet_pallas.1} parent=1 // pred_region
      _
    $region53: #{hpnet_pallas.1} parent=1 // pred_fallthru
      _
    // Predicated region
    $region54: #{hpnet_pallas.1} parent=1 // pred_check
      _
    $region55: #{hpnet_pallas.1} parent=1 // pred_check_branch
      %113 = sbr.rel (0) target = $region57
    $region56: #{hpnet_pallas.1} parent=1 // pred_region
      %114 = dma.done [#allocation6], 92160
    $region57: #{hpnet_pallas.1} parent=1 // pred_fallthru
      _
    // Predicated region
    $region58: #{hpnet_pallas.1} parent=1 // pred_check
      _
    $region59: #{hpnet_pallas.1} parent=1 // pred_check_branch
      %116 = sbr.rel (0) target = $region61
    $region60: #{hpnet_pallas.1} parent=1 // pred_region
      %117 = dma.done [#allocation9], 160
    $region61: #{hpnet_pallas.1} parent=1 // pred_fallthru
      _
    // Predicated region
    $region62: #{hpnet_pallas.1} parent=1 // pred_check
      _
    $region63: #{hpnet_pallas.1} parent=1 // pred_check_branch
      %119 = sbr.rel (0) target = $region65
    $region64: #{hpnet_pallas.1} parent=1 // pred_region
      %120 = dma.done [#allocation9], 160
    $region65: #{hpnet_pallas.1} parent=1 // pred_fallthru
      _
    // Predicated region
    $region66: #{hpnet_pallas.1} parent=1 // pred_check
      _
    $region67: #{hpnet_pallas.1} parent=1 // pred_check_branch
      %122 = sbr.rel (0) target = $region69
    $region68: #{hpnet_pallas.1} parent=1 // pred_region
      %123 = dma.done [#allocation12], 16
    $region69: #{hpnet_pallas.1} parent=1 // pred_fallthru
      _
    // Predicated region
    $region70: #{hpnet_pallas.1} parent=1 // pred_check
      _
    $region71: #{hpnet_pallas.1} parent=1 // pred_check_branch
      %125 = sbr.rel (0) target = $region73
    $region72: #{hpnet_pallas.1} parent=1 // pred_region
      %126 = dma.done [#allocation12], 16
    $region73: #{hpnet_pallas.1} parent=1 // pred_fallthru
      _
    // Predicated region
    $region74: #{hpnet_pallas.1} parent=1 // pred_check
      _
    $region75: #{hpnet_pallas.1} parent=1 // pred_check_branch
      %128 = sbr.rel (0) target = $region77
    $region76: #{hpnet_pallas.1} parent=1 // pred_region
      %129 = dma.done [#allocation15], 16
    $region77: #{hpnet_pallas.1} parent=1 // pred_fallthru
      _
    %v131 = vld [vmem:[%s1] sm:$0xff]
    %v132 = vld [vmem:[%s1 + $0x8] sm:$0xff]
    %v133 = vld [vmem:[%s1 + $0x10] sm:$0xff]
    %v134 = vld [vmem:[%s1 + $0x18] sm:$0xff]
    %v135 = vld [vmem:[%s1 + $0x20] sm:$0xff]
    %v136 = vld [vmem:[%s1 + $0x28] sm:$0xff]
    %v137 = vld [vmem:[%s1 + $0x30] sm:$0xff]
    %v138 = vld [vmem:[%s1 + $0x38] sm:$0xff]
    %140 = vset.pattern.permute.xlu0 0
    %141 = vperm.xlu0 %140, %v131
    %v142 = vpop.permute.xlu0 %141
    %145 = vset.pattern.permute.xlu0 0
    %146 = vperm.xlu0 %145, %v132
    %v147 = vpop.permute.xlu0 %146
    %150 = vset.pattern.permute.xlu0 0
    %151 = vperm.xlu0 %150, %v133
    %v152 = vpop.permute.xlu0 %151
    %155 = vset.pattern.permute.xlu0 0
    %156 = vperm.xlu0 %155, %v134
    %v157 = vpop.permute.xlu0 %156
    %160 = vset.pattern.permute.xlu0 0
    %161 = vperm.xlu0 %160, %v135
    %v162 = vpop.permute.xlu0 %161
    %165 = vset.pattern.permute.xlu0 0
    %166 = vperm.xlu0 %165, %v136
    %v167 = vpop.permute.xlu0 %166
    %170 = vset.pattern.permute.xlu0 0
    %171 = vperm.xlu0 %170, %v137
    %v172 = vpop.permute.xlu0 %171
    %175 = vset.pattern.permute.xlu0 0
    %176 = vperm.xlu0 %175, %v138
    %v177 = vpop.permute.xlu0 %176
    %s179 = scalar_lea.vmem %s1, 64
    %v180 = vld [vmem:[%s179] sm:$0xff]
    %v181 = vld [vmem:[%s179 + $0x8] sm:$0xff]
    %v182 = vld [vmem:[%s179 + $0x10] sm:$0xff]
    %v183 = vld [vmem:[%s179 + $0x18] sm:$0xff]
    %v184 = vld [vmem:[%s179 + $0x20] sm:$0xff]
    %v185 = vld [vmem:[%s179 + $0x28] sm:$0xff]
    %v186 = vld [vmem:[%s179 + $0x30] sm:$0xff]
    %v187 = vld [vmem:[%s179 + $0x38] sm:$0xff]
    %189 = vset.pattern.permute.xlu0 0
    %190 = vperm.xlu0 %189, %v180
    %v191 = vpop.permute.xlu0 %190
    %194 = vset.pattern.permute.xlu0 0
    %195 = vperm.xlu0 %194, %v181
    %v196 = vpop.permute.xlu0 %195
    %199 = vset.pattern.permute.xlu0 0
    %200 = vperm.xlu0 %199, %v182
    %v201 = vpop.permute.xlu0 %200
    %204 = vset.pattern.permute.xlu0 0
    %205 = vperm.xlu0 %204, %v183
    %v206 = vpop.permute.xlu0 %205
    %209 = vset.pattern.permute.xlu0 0
    %210 = vperm.xlu0 %209, %v184
    %v211 = vpop.permute.xlu0 %210
    %214 = vset.pattern.permute.xlu0 0
    %215 = vperm.xlu0 %214, %v185
    %v216 = vpop.permute.xlu0 %215
    %219 = vset.pattern.permute.xlu0 0
    %220 = vperm.xlu0 %219, %v186
    %v221 = vpop.permute.xlu0 %220
    %224 = vset.pattern.permute.xlu0 0
    %225 = vperm.xlu0 %224, %v187
    %v226 = vpop.permute.xlu0 %225
    %s228 = scalar_lea.vmem %s1, 128
    %v229 = vld [vmem:[%s228] sm:$0xff]
    %v230 = vld [vmem:[%s228 + $0x8] sm:$0xff]
    %v231 = vld [vmem:[%s228 + $0x10] sm:$0xff]
    %v232 = vld [vmem:[%s228 + $0x18] sm:$0xff]
    %v233 = vld [vmem:[%s228 + $0x20] sm:$0xff]
    %v234 = vld [vmem:[%s228 + $0x28] sm:$0xff]
    %v235 = vld [vmem:[%s228 + $0x30] sm:$0xff]
    %v236 = vld [vmem:[%s228 + $0x38] sm:$0xff]
    %238 = vset.pattern.permute.xlu0 0
    %239 = vperm.xlu0 %238, %v229
    %v240 = vpop.permute.xlu0 %239
    %243 = vset.pattern.permute.xlu0 0
    %244 = vperm.xlu0 %243, %v230
    %v245 = vpop.permute.xlu0 %244
    %248 = vset.pattern.permute.xlu0 0
    %249 = vperm.xlu0 %248, %v231
    %v250 = vpop.permute.xlu0 %249
    %253 = vset.pattern.permute.xlu0 0
    %254 = vperm.xlu0 %253, %v232
    %v255 = vpop.permute.xlu0 %254
    %258 = vset.pattern.permute.xlu0 0
    %259 = vperm.xlu0 %258, %v233
    %v260 = vpop.permute.xlu0 %259
    %263 = vset.pattern.permute.xlu0 0
    %264 = vperm.xlu0 %263, %v234
    %v265 = vpop.permute.xlu0 %264
    %268 = vset.pattern.permute.xlu0 0
    %269 = vperm.xlu0 %268, %v235
    %v270 = vpop.permute.xlu0 %269
    %273 = vset.pattern.permute.xlu0 0
    %274 = vperm.xlu0 %273, %v236
    %v275 = vpop.permute.xlu0 %274
    %s277 = scalar_lea.vmem %s1, 192
    %v278 = vld [vmem:[%s277] sm:$0xff]
    %v279 = vld [vmem:[%s277 + $0x8] sm:$0xff]
    %v280 = vld [vmem:[%s277 + $0x10] sm:$0xff]
    %v281 = vld [vmem:[%s277 + $0x18] sm:$0xff]
    %v282 = vld [vmem:[%s277 + $0x20] sm:$0xff]
    %v283 = vld [vmem:[%s277 + $0x28] sm:$0xff]
    %v284 = vld [vmem:[%s277 + $0x30] sm:$0xff]
    %v285 = vld [vmem:[%s277 + $0x38] sm:$0xff]
    %287 = vset.pattern.permute.xlu0 0
    %288 = vperm.xlu0 %287, %v278
    %v289 = vpop.permute.xlu0 %288
    %292 = vset.pattern.permute.xlu0 0
    %293 = vperm.xlu0 %292, %v279
    %v294 = vpop.permute.xlu0 %293
    %297 = vset.pattern.permute.xlu0 0
    %298 = vperm.xlu0 %297, %v280
    %v299 = vpop.permute.xlu0 %298
    %302 = vset.pattern.permute.xlu0 0
    %303 = vperm.xlu0 %302, %v281
    %v304 = vpop.permute.xlu0 %303
    %307 = vset.pattern.permute.xlu0 0
    %308 = vperm.xlu0 %307, %v282
    %v309 = vpop.permute.xlu0 %308
    %312 = vset.pattern.permute.xlu0 0
    %313 = vperm.xlu0 %312, %v283
    %v314 = vpop.permute.xlu0 %313
    %317 = vset.pattern.permute.xlu0 0
    %318 = vperm.xlu0 %317, %v284
    %v319 = vpop.permute.xlu0 %318
    %322 = vset.pattern.permute.xlu0 0
    %323 = vperm.xlu0 %322, %v285
    %v324 = vpop.permute.xlu0 %323
    %s326 = scalar_lea.vmem %s1, 320
    %v327 = vld [vmem:[%s326] sm:$0xff]
    %v328 = vld [vmem:[%s326 + $0x8] sm:$0xff]
    %v329 = vld [vmem:[%s326 + $0x10] sm:$0xff]
    %v330 = vld [vmem:[%s326 + $0x18] sm:$0xff]
    %v331 = vld [vmem:[%s326 + $0x20] sm:$0xff]
    %v332 = vld [vmem:[%s326 + $0x28] sm:$0xff]
    %v333 = vld [vmem:[%s326 + $0x30] sm:$0xff]
    %v334 = vld [vmem:[%s326 + $0x38] sm:$0xff]
    %336 = vset.pattern.permute.xlu0 0
    %337 = vperm.xlu0 %336, %v327
    %v338 = vpop.permute.xlu0 %337
    %341 = vset.pattern.permute.xlu0 0
    %342 = vperm.xlu0 %341, %v328
    %v343 = vpop.permute.xlu0 %342
    %346 = vset.pattern.permute.xlu0 0
    %347 = vperm.xlu0 %346, %v329
    %v348 = vpop.permute.xlu0 %347
    %351 = vset.pattern.permute.xlu0 0
    %352 = vperm.xlu0 %351, %v330
    %v353 = vpop.permute.xlu0 %352
    %356 = vset.pattern.permute.xlu0 0
    %357 = vperm.xlu0 %356, %v331
    %v358 = vpop.permute.xlu0 %357
    %361 = vset.pattern.permute.xlu0 0
    %362 = vperm.xlu0 %361, %v332
    %v363 = vpop.permute.xlu0 %362
    %366 = vset.pattern.permute.xlu0 0
    %367 = vperm.xlu0 %366, %v333
    %v368 = vpop.permute.xlu0 %367
    %371 = vset.pattern.permute.xlu0 0
    %372 = vperm.xlu0 %371, %v334
    %v373 = vpop.permute.xlu0 %372
    %s375 = scalar_lea.vmem %s1, 384
    %v376 = vld [vmem:[%s375] sm:$0xff]
    %v377 = vld [vmem:[%s375 + $0x8] sm:$0xff]
    %v378 = vld [vmem:[%s375 + $0x10] sm:$0xff]
    %v379 = vld [vmem:[%s375 + $0x18] sm:$0xff]
    %v380 = vld [vmem:[%s375 + $0x20] sm:$0xff]
    %v381 = vld [vmem:[%s375 + $0x28] sm:$0xff]
    %v382 = vld [vmem:[%s375 + $0x30] sm:$0xff]
    %v383 = vld [vmem:[%s375 + $0x38] sm:$0xff]
    %385 = vset.pattern.permute.xlu0 0
    %386 = vperm.xlu0 %385, %v376
    %v387 = vpop.permute.xlu0 %386
    %390 = vset.pattern.permute.xlu0 0
    %391 = vperm.xlu0 %390, %v377
    %v392 = vpop.permute.xlu0 %391
    %395 = vset.pattern.permute.xlu0 0
    %396 = vperm.xlu0 %395, %v378
    %v397 = vpop.permute.xlu0 %396
    %400 = vset.pattern.permute.xlu0 0
    %401 = vperm.xlu0 %400, %v379
    %v402 = vpop.permute.xlu0 %401
    %405 = vset.pattern.permute.xlu0 0
    %406 = vperm.xlu0 %405, %v380
    %v407 = vpop.permute.xlu0 %406
    %410 = vset.pattern.permute.xlu0 0
    %411 = vperm.xlu0 %410, %v381
    %v412 = vpop.permute.xlu0 %411
    %415 = vset.pattern.permute.xlu0 0
    %416 = vperm.xlu0 %415, %v382
    %v417 = vpop.permute.xlu0 %416
    %420 = vset.pattern.permute.xlu0 0
    %421 = vperm.xlu0 %420, %v383
    %v422 = vpop.permute.xlu0 %421
    %s424 = scalar_lea.vmem %s1, 448
    %v425 = vld [vmem:[%s424] sm:$0xff]
    %v426 = vld [vmem:[%s424 + $0x8] sm:$0xff]
    %v427 = vld [vmem:[%s424 + $0x10] sm:$0xff]
    %v428 = vld [vmem:[%s424 + $0x18] sm:$0xff]
    %v429 = vld [vmem:[%s424 + $0x20] sm:$0xff]
    %v430 = vld [vmem:[%s424 + $0x28] sm:$0xff]
    %v431 = vld [vmem:[%s424 + $0x30] sm:$0xff]
    %v432 = vld [vmem:[%s424 + $0x38] sm:$0xff]
    %434 = vset.pattern.permute.xlu0 0
    %435 = vperm.xlu0 %434, %v425
    %v436 = vpop.permute.xlu0 %435
    %439 = vset.pattern.permute.xlu0 0
    %440 = vperm.xlu0 %439, %v426
    %v441 = vpop.permute.xlu0 %440
    %444 = vset.pattern.permute.xlu0 0
    %445 = vperm.xlu0 %444, %v427
    %v446 = vpop.permute.xlu0 %445
    %449 = vset.pattern.permute.xlu0 0
    %450 = vperm.xlu0 %449, %v428
    %v451 = vpop.permute.xlu0 %450
    %454 = vset.pattern.permute.xlu0 0
    %455 = vperm.xlu0 %454, %v429
    %v456 = vpop.permute.xlu0 %455
    %459 = vset.pattern.permute.xlu0 0
    %460 = vperm.xlu0 %459, %v430
    %v461 = vpop.permute.xlu0 %460
    %464 = vset.pattern.permute.xlu0 0
    %465 = vperm.xlu0 %464, %v431
    %v466 = vpop.permute.xlu0 %465
    %469 = vset.pattern.permute.xlu0 0
    %470 = vperm.xlu0 %469, %v432
    %v471 = vpop.permute.xlu0 %470
    %s473 = scalar_lea.vmem %s1, 512
    %v474 = vld [vmem:[%s473] sm:$0xff]
    %v475 = vld [vmem:[%s473 + $0x8] sm:$0xff]
    %v476 = vld [vmem:[%s473 + $0x10] sm:$0xff]
    %v477 = vld [vmem:[%s473 + $0x18] sm:$0xff]
    %v478 = vld [vmem:[%s473 + $0x20] sm:$0xff]
    %v479 = vld [vmem:[%s473 + $0x28] sm:$0xff]
    %v480 = vld [vmem:[%s473 + $0x30] sm:$0xff]
    %v481 = vld [vmem:[%s473 + $0x38] sm:$0xff]
    %483 = vset.pattern.permute.xlu0 0
    %484 = vperm.xlu0 %483, %v474
    %v485 = vpop.permute.xlu0 %484
    %488 = vset.pattern.permute.xlu0 0
    %489 = vperm.xlu0 %488, %v475
    %v490 = vpop.permute.xlu0 %489
    %493 = vset.pattern.permute.xlu0 0
    %494 = vperm.xlu0 %493, %v476
    %v495 = vpop.permute.xlu0 %494
    %498 = vset.pattern.permute.xlu0 0
    %499 = vperm.xlu0 %498, %v477
    %v500 = vpop.permute.xlu0 %499
    %503 = vset.pattern.permute.xlu0 0
    %504 = vperm.xlu0 %503, %v478
    %v505 = vpop.permute.xlu0 %504
    %508 = vset.pattern.permute.xlu0 0
    %509 = vperm.xlu0 %508, %v479
    %v510 = vpop.permute.xlu0 %509
    %513 = vset.pattern.permute.xlu0 0
    %514 = vperm.xlu0 %513, %v480
    %v515 = vpop.permute.xlu0 %514
    %518 = vset.pattern.permute.xlu0 0
    %519 = vperm.xlu0 %518, %v481
    %v520 = vpop.permute.xlu0 %519
    %v522 = vld [vmem:[%s0] sm:$0xff]
    %v523 = vld [vmem:[%s0 + $0x8] sm:$0xff]
    %v524 = vld [vmem:[%s0 + $0x10] sm:$0xff]
    %v525 = vld [vmem:[%s0 + $0x18] sm:$0xff]
    %v526 = vld [vmem:[%s0 + $0x20] sm:$0xff]
    %v527 = vld [vmem:[%s0 + $0x28] sm:$0xff]
    %v528 = vld [vmem:[%s0 + $0x30] sm:$0xff]
    %v529 = vld [vmem:[%s0 + $0x38] sm:$0xff]
    %v530 = vrot.slane %v522, 7
    %v531 = vrot.slane %v523, 7
    %v532 = vrot.slane %v524, 7
    %v533 = vrot.slane %v525, 7
    %v534 = vrot.slane %v526, 7
    %v535 = vrot.slane %v527, 7
    %v536 = vrot.slane %v528, 7
    %v537 = vrot.slane %v529, 7
    %v538 = vlaneseq
    %v539 = vshrl.u32 %v538, 7
    %vm540 = vcmp.lt.s32.totalorder %v539, 1
    %v541 = vsel %vm540, %v536, %v537
    %v542 = vsel %vm540, %v535, %v536
    %v543 = vsel %vm540, %v534, %v535
    %v544 = vsel %vm540, %v533, %v534
    %v545 = vsel %vm540, %v532, %v533
    %v546 = vsel %vm540, %v531, %v532
    %v547 = vsel %vm540, %v530, %v531
    %v548 = vsel %vm540, %v537, %v530
    %v549 = vmul.f32 %v541, %v142
    %v550 = vmul.f32 %v548, %v147
    %v551 = vmul.f32 %v547, %v152
    %v552 = vmul.f32 %v546, %v157
    %v553 = vmul.f32 %v545, %v162
    %v554 = vmul.f32 %v544, %v167
    %v555 = vmul.f32 %v543, %v172
    %v556 = vmul.f32 %v542, %v177
    %v557 = vmul.f32 %v529, %v191
    %v558 = vmul.f32 %v522, %v196
    %v559 = vmul.f32 %v523, %v201
    %v560 = vmul.f32 %v524, %v206
    %v561 = vmul.f32 %v525, %v211
    %v562 = vmul.f32 %v526, %v216
    %v563 = vmul.f32 %v527, %v221
    %v564 = vmul.f32 %v528, %v226
    %v565 = vrot.slane %v522, 1
    %v566 = vrot.slane %v523, 1
    %v567 = vrot.slane %v524, 1
    %v568 = vrot.slane %v525, 1
    %v569 = vrot.slane %v526, 1
    %v570 = vrot.slane %v527, 1
    %v571 = vrot.slane %v528, 1
    %v572 = vrot.slane %v529, 1
    %vm573 = vcmp.lt.s32.totalorder %v539, 7
    %v574 = vsel %vm573, %v571, %v572
    %v575 = vsel %vm573, %v570, %v571
    %v576 = vsel %vm573, %v569, %v570
    %v577 = vsel %vm573, %v568, %v569
    %v578 = vsel %vm573, %v567, %v568
    %v579 = vsel %vm573, %v566, %v567
    %v580 = vsel %vm573, %v565, %v566
    %v581 = vsel %vm573, %v572, %v565
    %v582 = vmul.f32 %v581, %v240
    %v583 = vmul.f32 %v580, %v245
    %v584 = vmul.f32 %v579, %v250
    %v585 = vmul.f32 %v578, %v255
    %v586 = vmul.f32 %v577, %v260
    %v587 = vmul.f32 %v576, %v265
    %v588 = vmul.f32 %v575, %v270
    %v589 = vmul.f32 %v574, %v275
    %v590 = vmul.f32 %v548, %v289
    %v591 = vmul.f32 %v547, %v294
    %v592 = vmul.f32 %v546, %v299
    %v593 = vmul.f32 %v545, %v304
    %v594 = vmul.f32 %v544, %v309
    %v595 = vmul.f32 %v543, %v314
    %v596 = vmul.f32 %v542, %v319
    %v597 = vmul.f32 %v541, %v324
    %v598 = vmul.f32 %v580, %v338
    %v599 = vmul.f32 %v579, %v343
    %v600 = vmul.f32 %v578, %v348
    %v601 = vmul.f32 %v577, %v353
    %v602 = vmul.f32 %v576, %v358
    %v603 = vmul.f32 %v575, %v363
    %v604 = vmul.f32 %v574, %v368
    %v605 = vmul.f32 %v581, %v373
    %v606 = vmul.f32 %v547, %v387
    %v607 = vmul.f32 %v546, %v392
    %v608 = vmul.f32 %v545, %v397
    %v609 = vmul.f32 %v544, %v402
    %v610 = vmul.f32 %v543, %v407
    %v611 = vmul.f32 %v542, %v412
    %v612 = vmul.f32 %v541, %v417
    %v613 = vmul.f32 %v548, %v422
    %v614 = vmul.f32 %v523, %v436
    %v615 = vmul.f32 %v524, %v441
    %v616 = vmul.f32 %v525, %v446
    %v617 = vmul.f32 %v526, %v451
    %v618 = vmul.f32 %v527, %v456
    %v619 = vmul.f32 %v528, %v461
    %v620 = vmul.f32 %v529, %v466
    %v621 = vmul.f32 %v522, %v471
    %v622 = vmul.f32 %v579, %v485
    %v623 = vmul.f32 %v578, %v490
    %v624 = vmul.f32 %v577, %v495
    %v625 = vmul.f32 %v576, %v500
    %v626 = vmul.f32 %v575, %v505
    %v627 = vmul.f32 %v574, %v510
    %v628 = vmul.f32 %v581, %v515
    %v629 = vmul.f32 %v580, %v520
    %v630 = vpack.c.bf16 %v550, %v549
    %v631 = vpack.c.bf16 %v558, %v557
    %v632 = vpack.c.bf16 %v583, %v582
    %v633 = vpack.c.bf16 %v591, %v590
    %v634 = vpack.c.bf16 %v523, %v522
    %v635 = vpack.c.bf16 %v599, %v598
    %v636 = vpack.c.bf16 %v607, %v606
    %v637 = vpack.c.bf16 %v615, %v614
    %v638 = vpack.c.bf16 %v623, %v622
    %v639 = vpack.c.bf16 %v552, %v551
    %v640 = vpack.c.bf16 %v560, %v559
    %v641 = vpack.c.bf16 %v585, %v584
    %v642 = vpack.c.bf16 %v593, %v592
    %v643 = vpack.c.bf16 %v525, %v524
    %v644 = vpack.c.bf16 %v601, %v600
    %v645 = vpack.c.bf16 %v609, %v608
    %v646 = vpack.c.bf16 %v617, %v616
    %v647 = vpack.c.bf16 %v625, %v624
    %v648 = vpack.c.bf16 %v554, %v553
    %v649 = vpack.c.bf16 %v562, %v561
    %v650 = vpack.c.bf16 %v587, %v586
    %v651 = vpack.c.bf16 %v595, %v594
    %v652 = vpack.c.bf16 %v527, %v526
    %v653 = vpack.c.bf16 %v603, %v602
    %v654 = vpack.c.bf16 %v611, %v610
    %v655 = vpack.c.bf16 %v619, %v618
    %v656 = vpack.c.bf16 %v627, %v626
    %v657 = vpack.c.bf16 %v556, %v555
    %v658 = vpack.c.bf16 %v564, %v563
    %v659 = vpack.c.bf16 %v589, %v588
    %v660 = vpack.c.bf16 %v597, %v596
    %v661 = vpack.c.bf16 %v529, %v528
    %v662 = vpack.c.bf16 %v605, %v604
    %v663 = vpack.c.bf16 %v613, %v612
    %v664 = vpack.c.bf16 %v621, %v620
    %v665 = vpack.c.bf16 %v629, %v628
    %v666 = vld [vmem:[#allocation5] sm:$0xf]
    %v667 = vld [vmem:[#allocation5 + $0x4] sm:$0xf]
    %v668 = vld [vmem:[#allocation5 + $0x8] sm:$0xf]
    %v669 = vld [vmem:[#allocation5 + $0xc] sm:$0xf]
    %v670 = vld [vmem:[#allocation5 + $0x10] sm:$0xf]
    %v671 = vld [vmem:[#allocation5 + $0x14] sm:$0xf]
    %v672 = vld [vmem:[#allocation5 + $0x18] sm:$0xf]
    %v673 = vld [vmem:[#allocation5 + $0x1c] sm:$0xf]
    %v674 = vld [vmem:[#allocation5 + $0x20] sm:$0xf]
    %v675 = vld [vmem:[#allocation5 + $0x24] sm:$0xf]
    %v676 = vld [vmem:[#allocation5 + $0x28] sm:$0xf]
    %v677 = vld [vmem:[#allocation5 + $0x2c] sm:$0xf]
    %v678 = vld [vmem:[#allocation5 + $0x30] sm:$0xf]
    %v679 = vld [vmem:[#allocation5 + $0x34] sm:$0xf]
    %v680 = vld [vmem:[#allocation5 + $0x38] sm:$0xf]
    %v681 = vld [vmem:[#allocation5 + $0x3c] sm:$0xf]
    %v682 = vld [vmem:[#allocation5 + $0x40] sm:$0xf]
    %v683 = vld [vmem:[#allocation5 + $0x44] sm:$0xf]
    %v684 = vld [vmem:[#allocation5 + $0x48] sm:$0xf]
    %v685 = vld [vmem:[#allocation5 + $0x4c] sm:$0xf]
    %v686 = vld [vmem:[#allocation5 + $0x50] sm:$0xf]
    %v687 = vld [vmem:[#allocation5 + $0x54] sm:$0xf]
    %v688 = vld [vmem:[#allocation5 + $0x58] sm:$0xf]
    %v689 = vld [vmem:[#allocation5 + $0x5c] sm:$0xf]
    %v690 = vld [vmem:[#allocation5 + $0x60] sm:$0xf]
    %v691 = vld [vmem:[#allocation5 + $0x64] sm:$0xf]
    %v692 = vld [vmem:[#allocation5 + $0x68] sm:$0xf]
    %v693 = vld [vmem:[#allocation5 + $0x6c] sm:$0xf]
    %v694 = vld [vmem:[#allocation5 + $0x70] sm:$0xf]
    %v695 = vld [vmem:[#allocation5 + $0x74] sm:$0xf]
    %v696 = vld [vmem:[#allocation5 + $0x78] sm:$0xf]
    %v697 = vld [vmem:[#allocation5 + $0x7c] sm:$0xf]
    %v698 = vld [vmem:[#allocation5 + $0x80] sm:$0xf]
    %v699 = vld [vmem:[#allocation5 + $0x84] sm:$0xf]
    %v700 = vld [vmem:[#allocation5 + $0x88] sm:$0xf]
    %v701 = vld [vmem:[#allocation5 + $0x8c] sm:$0xf]
    %v702 = vld [vmem:[#allocation5 + $0x90] sm:$0xf]
    %v703 = vld [vmem:[#allocation5 + $0x94] sm:$0xf]
    %v704 = vld [vmem:[#allocation5 + $0x98] sm:$0xf]
    %v705 = vld [vmem:[#allocation5 + $0x9c] sm:$0xf]
    %v706 = vld [vmem:[#allocation5 + $0xa0] sm:$0xf]
    %v707 = vld [vmem:[#allocation5 + $0xa4] sm:$0xf]
    %v708 = vld [vmem:[#allocation5 + $0xa8] sm:$0xf]
    %v709 = vld [vmem:[#allocation5 + $0xac] sm:$0xf]
    %v710 = vld [vmem:[#allocation5 + $0xb0] sm:$0xf]
    %v711 = vld [vmem:[#allocation5 + $0xb4] sm:$0xf]
    %v712 = vld [vmem:[#allocation5 + $0xb8] sm:$0xf]
    %v713 = vld [vmem:[#allocation5 + $0xbc] sm:$0xf]
    %v714 = vld [vmem:[#allocation5 + $0xc0] sm:$0xf]
    %v715 = vld [vmem:[#allocation5 + $0xc4] sm:$0xf]
    %v716 = vld [vmem:[#allocation5 + $0xc8] sm:$0xf]
    %v717 = vld [vmem:[#allocation5 + $0xcc] sm:$0xf]
    %v718 = vld [vmem:[#allocation5 + $0xd0] sm:$0xf]
    %v719 = vld [vmem:[#allocation5 + $0xd4] sm:$0xf]
    %v720 = vld [vmem:[#allocation5 + $0xd8] sm:$0xf]
    %v721 = vld [vmem:[#allocation5 + $0xdc] sm:$0xf]
    %v722 = vld [vmem:[#allocation5 + $0xe0] sm:$0xf]
    %v723 = vld [vmem:[#allocation5 + $0xe4] sm:$0xf]
    %v724 = vld [vmem:[#allocation5 + $0xe8] sm:$0xf]
    %v725 = vld [vmem:[#allocation5 + $0xec] sm:$0xf]
    %v726 = vld [vmem:[#allocation5 + $0xf0] sm:$0xf]
    %v727 = vld [vmem:[#allocation5 + $0xf4] sm:$0xf]
    %v728 = vld [vmem:[#allocation5 + $0xf8] sm:$0xf]
    %v729 = vld [vmem:[#allocation5 + $0xfc] sm:$0xf]
    %v730 = vld [vmem:[#allocation5 + $0x100] sm:$0xf]
    %v731 = vld [vmem:[#allocation5 + $0x104] sm:$0xf]
    %v732 = vld [vmem:[#allocation5 + $0x108] sm:$0xf]
    %v733 = vld [vmem:[#allocation5 + $0x10c] sm:$0xf]
    %v734 = vld [vmem:[#allocation5 + $0x110] sm:$0xf]
    %v735 = vld [vmem:[#allocation5 + $0x114] sm:$0xf]
    %v736 = vld [vmem:[#allocation5 + $0x118] sm:$0xf]
    %v737 = vld [vmem:[#allocation5 + $0x11c] sm:$0xf]
    %v738 = vld [vmem:[#allocation5 + $0x120] sm:$0xf]
    %v739 = vld [vmem:[#allocation5 + $0x124] sm:$0xf]
    %v740 = vld [vmem:[#allocation5 + $0x128] sm:$0xf]
    %v741 = vld [vmem:[#allocation5 + $0x12c] sm:$0xf]
    %v742 = vld [vmem:[#allocation5 + $0x130] sm:$0xf]
    %v743 = vld [vmem:[#allocation5 + $0x134] sm:$0xf]
    %v744 = vld [vmem:[#allocation5 + $0x138] sm:$0xf]
    %v745 = vld [vmem:[#allocation5 + $0x13c] sm:$0xf]
    %v746 = vld [vmem:[#allocation5 + $0x140] sm:$0xf]
    %v747 = vld [vmem:[#allocation5 + $0x144] sm:$0xf]
    %v748 = vld [vmem:[#allocation5 + $0x148] sm:$0xf]
    %v749 = vld [vmem:[#allocation5 + $0x14c] sm:$0xf]
    %v750 = vld [vmem:[#allocation5 + $0x150] sm:$0xf]
    %v751 = vld [vmem:[#allocation5 + $0x154] sm:$0xf]
    %v752 = vld [vmem:[#allocation5 + $0x158] sm:$0xf]
    %v753 = vld [vmem:[#allocation5 + $0x15c] sm:$0xf]
    %v754 = vld [vmem:[#allocation5 + $0x160] sm:$0xf]
    %v755 = vld [vmem:[#allocation5 + $0x164] sm:$0xf]
    %v756 = vld [vmem:[#allocation5 + $0x168] sm:$0xf]
    %v757 = vld [vmem:[#allocation5 + $0x16c] sm:$0xf]
    %v758 = vld [vmem:[#allocation5 + $0x170] sm:$0xf]
    %v759 = vld [vmem:[#allocation5 + $0x174] sm:$0xf]
    %v760 = vld [vmem:[#allocation5 + $0x178] sm:$0xf]
    %v761 = vld [vmem:[#allocation5 + $0x17c] sm:$0xf]
    %v762 = vld [vmem:[#allocation5 + $0x180] sm:$0xf]
    %v763 = vld [vmem:[#allocation5 + $0x184] sm:$0xf]
    %v764 = vld [vmem:[#allocation5 + $0x188] sm:$0xf]
    %v765 = vld [vmem:[#allocation5 + $0x18c] sm:$0xf]
    %v766 = vld [vmem:[#allocation5 + $0x190] sm:$0xf]
    %v767 = vld [vmem:[#allocation5 + $0x194] sm:$0xf]
    %v768 = vld [vmem:[#allocation5 + $0x198] sm:$0xf]
    %v769 = vld [vmem:[#allocation5 + $0x19c] sm:$0xf]
    %v770 = vld [vmem:[#allocation5 + $0x1a0] sm:$0xf]
    %v771 = vld [vmem:[#allocation5 + $0x1a4] sm:$0xf]
    %v772 = vld [vmem:[#allocation5 + $0x1a8] sm:$0xf]
    %v773 = vld [vmem:[#allocation5 + $0x1ac] sm:$0xf]
    %v774 = vld [vmem:[#allocation5 + $0x1b0] sm:$0xf]
    %v775 = vld [vmem:[#allocation5 + $0x1b4] sm:$0xf]
    %v776 = vld [vmem:[#allocation5 + $0x1b8] sm:$0xf]
    %v777 = vld [vmem:[#allocation5 + $0x1bc] sm:$0xf]
    %v778 = vld [vmem:[#allocation5 + $0x1c0] sm:$0xf]
    %v779 = vld [vmem:[#allocation5 + $0x1c4] sm:$0xf]
    %v780 = vld [vmem:[#allocation5 + $0x1c8] sm:$0xf]
    %v781 = vld [vmem:[#allocation5 + $0x1cc] sm:$0xf]
    %v782 = vld [vmem:[#allocation5 + $0x1d0] sm:$0xf]
    %v783 = vld [vmem:[#allocation5 + $0x1d4] sm:$0xf]
    %v784 = vld [vmem:[#allocation5 + $0x1d8] sm:$0xf]
    %v785 = vld [vmem:[#allocation5 + $0x1dc] sm:$0xf]
    %v786 = vld [vmem:[#allocation5 + $0x1e0] sm:$0xf]
    %v787 = vld [vmem:[#allocation5 + $0x1e4] sm:$0xf]
    %v788 = vld [vmem:[#allocation5 + $0x1e8] sm:$0xf]
    %v789 = vld [vmem:[#allocation5 + $0x1ec] sm:$0xf]
    %v790 = vld [vmem:[#allocation5 + $0x1f0] sm:$0xf]
    %v791 = vld [vmem:[#allocation5 + $0x1f4] sm:$0xf]
    %v792 = vld [vmem:[#allocation5 + $0x1f8] sm:$0xf]
    %v793 = vld [vmem:[#allocation5 + $0x1fc] sm:$0xf]
    %v794 = vld [vmem:[#allocation5 + $0x200] sm:$0xf]
    %v795 = vld [vmem:[#allocation5 + $0x204] sm:$0xf]
    %v796 = vld [vmem:[#allocation5 + $0x208] sm:$0xf]
    %v797 = vld [vmem:[#allocation5 + $0x20c] sm:$0xf]
    %v798 = vld [vmem:[#allocation5 + $0x210] sm:$0xf]
    %v799 = vld [vmem:[#allocation5 + $0x214] sm:$0xf]
    %v800 = vld [vmem:[#allocation5 + $0x218] sm:$0xf]
    %v801 = vld [vmem:[#allocation5 + $0x21c] sm:$0xf]
    %v802 = vld [vmem:[#allocation5 + $0x220] sm:$0xf]
    %v803 = vld [vmem:[#allocation5 + $0x224] sm:$0xf]
    %v804 = vld [vmem:[#allocation5 + $0x228] sm:$0xf]
    %v805 = vld [vmem:[#allocation5 + $0x22c] sm:$0xf]
    %v806 = vld [vmem:[#allocation5 + $0x230] sm:$0xf]
    %v807 = vld [vmem:[#allocation5 + $0x234] sm:$0xf]
    %v808 = vld [vmem:[#allocation5 + $0x238] sm:$0xf]
    %v809 = vld [vmem:[#allocation5 + $0x23c] sm:$0xf]
    %v954 = vunpack.c.l.b16 %v666
    %v955 = vunpack.c.l.b16 %v667
    %v956 = vunpack.c.l.b16 %v668
    %v957 = vunpack.c.l.b16 %v669
    %v958 = vunpack.c.l.b16 %v670
    %v959 = vunpack.c.l.b16 %v671
    %v960 = vunpack.c.l.b16 %v672
    %v961 = vunpack.c.l.b16 %v673
    %v962 = vunpack.c.l.b16 %v674
    %v963 = vunpack.c.l.b16 %v675
    %v964 = vunpack.c.l.b16 %v676
    %v965 = vunpack.c.l.b16 %v677
    %v966 = vunpack.c.l.b16 %v678
    %v967 = vunpack.c.l.b16 %v679
    %v968 = vunpack.c.l.b16 %v680
    %v969 = vunpack.c.l.b16 %v681
    %v970 = vunpack.c.l.b16 %v682
    %v971 = vunpack.c.l.b16 %v683
    %v972 = vunpack.c.l.b16 %v684
    %v973 = vunpack.c.l.b16 %v685
    %v974 = vunpack.c.l.b16 %v686
    %v975 = vunpack.c.l.b16 %v687
    %v976 = vunpack.c.l.b16 %v688
    %v977 = vunpack.c.l.b16 %v689
    %v978 = vunpack.c.l.b16 %v690
    %v979 = vunpack.c.l.b16 %v691
    %v980 = vunpack.c.l.b16 %v692
    %v981 = vunpack.c.l.b16 %v693
    %v982 = vunpack.c.l.b16 %v694
    %v983 = vunpack.c.l.b16 %v695
    %v984 = vunpack.c.l.b16 %v696
    %v985 = vunpack.c.l.b16 %v697
    %v986 = vunpack.c.l.b16 %v698
    %v987 = vunpack.c.l.b16 %v699
    %v988 = vunpack.c.l.b16 %v700
    %v989 = vunpack.c.l.b16 %v701
    %v990 = vunpack.c.l.b16 %v702
    %v991 = vunpack.c.l.b16 %v703
    %v992 = vunpack.c.l.b16 %v704
    %v993 = vunpack.c.l.b16 %v705
    %v994 = vunpack.c.l.b16 %v706
    %v995 = vunpack.c.l.b16 %v707
    %v996 = vunpack.c.l.b16 %v708
    %v997 = vunpack.c.l.b16 %v709
    %v998 = vunpack.c.l.b16 %v710
    %v999 = vunpack.c.l.b16 %v711
    %v1000 = vunpack.c.l.b16 %v712
    %v1001 = vunpack.c.l.b16 %v713
    %v1002 = vunpack.c.l.b16 %v714
    %v1003 = vunpack.c.l.b16 %v715
    %v1004 = vunpack.c.l.b16 %v716
    %v1005 = vunpack.c.l.b16 %v717
    %v1006 = vunpack.c.l.b16 %v718
    %v1007 = vunpack.c.l.b16 %v719
    %v1008 = vunpack.c.l.b16 %v720
    %v1009 = vunpack.c.l.b16 %v721
    %v1010 = vunpack.c.l.b16 %v722
    %v1011 = vunpack.c.l.b16 %v723
    %v1012 = vunpack.c.l.b16 %v724
    %v1013 = vunpack.c.l.b16 %v725
    %v1014 = vunpack.c.l.b16 %v726
    %v1015 = vunpack.c.l.b16 %v727
    %v1016 = vunpack.c.l.b16 %v728
    %v1017 = vunpack.c.l.b16 %v729
    %v1018 = vunpack.c.l.b16 %v730
    %v1019 = vunpack.c.l.b16 %v731
    %v1020 = vunpack.c.l.b16 %v732
    %v1021 = vunpack.c.l.b16 %v733
    %v1022 = vunpack.c.l.b16 %v734
    %v1023 = vunpack.c.l.b16 %v735
    %v1024 = vunpack.c.l.b16 %v736
    %v1025 = vunpack.c.l.b16 %v737
    %v1026 = vunpack.c.l.b16 %v738
    %v1027 = vunpack.c.l.b16 %v739
    %v1028 = vunpack.c.l.b16 %v740
    %v1029 = vunpack.c.l.b16 %v741
    %v1030 = vunpack.c.l.b16 %v742
    %v1031 = vunpack.c.l.b16 %v743
    %v1032 = vunpack.c.l.b16 %v744
    %v1033 = vunpack.c.l.b16 %v745
    %v1034 = vunpack.c.l.b16 %v746
    %v1035 = vunpack.c.l.b16 %v747
    %v1036 = vunpack.c.l.b16 %v748
    %v1037 = vunpack.c.l.b16 %v749
    %v1038 = vunpack.c.l.b16 %v750
    %v1039 = vunpack.c.l.b16 %v751
    %v1040 = vunpack.c.l.b16 %v752
    %v1041 = vunpack.c.l.b16 %v753
    %v1042 = vunpack.c.l.b16 %v754
    %v1043 = vunpack.c.l.b16 %v755
    %v1044 = vunpack.c.l.b16 %v756
    %v1045 = vunpack.c.l.b16 %v757
    %v1046 = vunpack.c.l.b16 %v758
    %v1047 = vunpack.c.l.b16 %v759
    %v1048 = vunpack.c.l.b16 %v760
    %v1049 = vunpack.c.l.b16 %v761
    %v1050 = vunpack.c.l.b16 %v762
    %v1051 = vunpack.c.l.b16 %v763
    %v1052 = vunpack.c.l.b16 %v764
    %v1053 = vunpack.c.l.b16 %v765
    %v1054 = vunpack.c.l.b16 %v766
    %v1055 = vunpack.c.l.b16 %v767
    %v1056 = vunpack.c.l.b16 %v768
    %v1057 = vunpack.c.l.b16 %v769
    %v1058 = vunpack.c.l.b16 %v770
    %v1059 = vunpack.c.l.b16 %v771
    %v1060 = vunpack.c.l.b16 %v772
    %v1061 = vunpack.c.l.b16 %v773
    %v1062 = vunpack.c.l.b16 %v774
    %v1063 = vunpack.c.l.b16 %v775
    %v1064 = vunpack.c.l.b16 %v776
    %v1065 = vunpack.c.l.b16 %v777
    %v1066 = vunpack.c.l.b16 %v778
    %v1067 = vunpack.c.l.b16 %v779
    %v1068 = vunpack.c.l.b16 %v780
    %v1069 = vunpack.c.l.b16 %v781
    %v1070 = vunpack.c.l.b16 %v782
    %v1071 = vunpack.c.l.b16 %v783
    %v1072 = vunpack.c.l.b16 %v784
    %v1073 = vunpack.c.l.b16 %v785
    %v1074 = vunpack.c.l.b16 %v786
    %v1075 = vunpack.c.l.b16 %v787
    %v1076 = vunpack.c.l.b16 %v788
    %v1077 = vunpack.c.l.b16 %v789
    %v1078 = vunpack.c.l.b16 %v790
    %v1079 = vunpack.c.l.b16 %v791
    %v1080 = vunpack.c.l.b16 %v792
    %v1081 = vunpack.c.l.b16 %v793
    %v1082 = vunpack.c.l.b16 %v794
    %v1083 = vunpack.c.l.b16 %v795
    %v1084 = vunpack.c.l.b16 %v796
    %v1085 = vunpack.c.l.b16 %v797
    %v1086 = vunpack.c.l.b16 %v798
    %v1087 = vunpack.c.l.b16 %v799
    %v1088 = vunpack.c.l.b16 %v800
    %v1089 = vunpack.c.l.b16 %v801
    %v1090 = vunpack.c.l.b16 %v802
    %v1091 = vunpack.c.l.b16 %v803
    %v1092 = vunpack.c.l.b16 %v804
    %v1093 = vunpack.c.l.b16 %v805
    %v1094 = vunpack.c.l.b16 %v806
    %v1095 = vunpack.c.l.b16 %v807
    %v1096 = vunpack.c.l.b16 %v808
    %v1097 = vunpack.c.l.b16 %v809
    %v1098 = vpack.c.b16 %v955, %v954
    %v1099 = vpack.c.b16 %v957, %v956
    %v1100 = vpack.c.b16 %v959, %v958
    %v1101 = vpack.c.b16 %v961, %v960
    %v1102 = vpack.c.b16 %v963, %v962
    %v1103 = vpack.c.b16 %v965, %v964
    %v1104 = vpack.c.b16 %v967, %v966
    %v1105 = vpack.c.b16 %v969, %v968
    %v1106 = vpack.c.b16 %v971, %v970
    %v1107 = vpack.c.b16 %v973, %v972
    %v1108 = vpack.c.b16 %v975, %v974
    %v1109 = vpack.c.b16 %v977, %v976
    %v1110 = vpack.c.b16 %v979, %v978
    %v1111 = vpack.c.b16 %v981, %v980
    %v1112 = vpack.c.b16 %v983, %v982
    %v1113 = vpack.c.b16 %v985, %v984
    %v1114 = vpack.c.b16 %v987, %v986
    %v1115 = vpack.c.b16 %v989, %v988
    %v1116 = vpack.c.b16 %v991, %v990
    %v1117 = vpack.c.b16 %v993, %v992
    %v1118 = vpack.c.b16 %v995, %v994
    %v1119 = vpack.c.b16 %v997, %v996
    %v1120 = vpack.c.b16 %v999, %v998
    %v1121 = vpack.c.b16 %v1001, %v1000
    %v1122 = vpack.c.b16 %v1003, %v1002
    %v1123 = vpack.c.b16 %v1005, %v1004
    %v1124 = vpack.c.b16 %v1007, %v1006
    %v1125 = vpack.c.b16 %v1009, %v1008
    %v1126 = vpack.c.b16 %v1011, %v1010
    %v1127 = vpack.c.b16 %v1013, %v1012
    %v1128 = vpack.c.b16 %v1015, %v1014
    %v1129 = vpack.c.b16 %v1017, %v1016
    %v1130 = vpack.c.b16 %v1019, %v1018
    %v1131 = vpack.c.b16 %v1021, %v1020
    %v1132 = vpack.c.b16 %v1023, %v1022
    %v1133 = vpack.c.b16 %v1025, %v1024
    %v1134 = vpack.c.b16 %v1027, %v1026
    %v1135 = vpack.c.b16 %v1029, %v1028
    %v1136 = vpack.c.b16 %v1031, %v1030
    %v1137 = vpack.c.b16 %v1033, %v1032
    %v1138 = vpack.c.b16 %v1035, %v1034
    %v1139 = vpack.c.b16 %v1037, %v1036
    %v1140 = vpack.c.b16 %v1039, %v1038
    %v1141 = vpack.c.b16 %v1041, %v1040
    %v1142 = vpack.c.b16 %v1043, %v1042
    %v1143 = vpack.c.b16 %v1045, %v1044
    %v1144 = vpack.c.b16 %v1047, %v1046
    %v1145 = vpack.c.b16 %v1049, %v1048
    %v1146 = vpack.c.b16 %v1051, %v1050
    %v1147 = vpack.c.b16 %v1053, %v1052
    %v1148 = vpack.c.b16 %v1055, %v1054
    %v1149 = vpack.c.b16 %v1057, %v1056
    %v1150 = vpack.c.b16 %v1059, %v1058
    %v1151 = vpack.c.b16 %v1061, %v1060
    %v1152 = vpack.c.b16 %v1063, %v1062
    %v1153 = vpack.c.b16 %v1065, %v1064
    %v1154 = vpack.c.b16 %v1067, %v1066
    %v1155 = vpack.c.b16 %v1069, %v1068
    %v1156 = vpack.c.b16 %v1071, %v1070
    %v1157 = vpack.c.b16 %v1073, %v1072
    %v1158 = vpack.c.b16 %v1075, %v1074
    %v1159 = vpack.c.b16 %v1077, %v1076
    %v1160 = vpack.c.b16 %v1079, %v1078
    %v1161 = vpack.c.b16 %v1081, %v1080
    %v1162 = vpack.c.b16 %v1083, %v1082
    %v1163 = vpack.c.b16 %v1085, %v1084
    %v1164 = vpack.c.b16 %v1087, %v1086
    %v1165 = vpack.c.b16 %v1089, %v1088
    %v1166 = vpack.c.b16 %v1091, %v1090
    %v1167 = vpack.c.b16 %v1093, %v1092
    %v1168 = vpack.c.b16 %v1095, %v1094
    %v1169 = vpack.c.b16 %v1097, %v1096
    %1242 = vmatprep.subr.bf16.mxu0 0
    %1243 = vmatpush1.bf16.msra.mxu0 %v1098
    %1244 = vmatprep.subr.bf16.mxu0 0
    %1245 = vmatpush1.bf16.msra.mxu0 %v1099
    %1246 = vmatprep.subr.bf16.mxu0 0
    %1247 = vmatpush1.bf16.msra.mxu0 %v1100
    %1248 = vmatprep.subr.bf16.mxu0 0
    %1249 = vmatpush1.bf16.msra.mxu0 %v1101
    %1250 = vmatprep.subr.bf16.mxu0 0
    %1251 = vmatpush1.bf16.msra.mxu0 %v1102
    %1252 = vmatprep.subr.bf16.mxu0 0
    %1253 = vmatpush1.bf16.msra.mxu0 %v1103
    %1254 = vmatprep.subr.bf16.mxu0 0
    %1255 = vmatpush1.bf16.msra.mxu0 %v1104
    %1256 = vmatprep.subr.bf16.mxu0 0
    %1257 = vmatpush1.bf16.msra.mxu0 %v1105
    %1258 = vmatprep.subr.bf16.mxu0 0
    %1259 = vmatpush1.bf16.msra.mxu0 %v1106
    %1260 = vmatprep.subr.bf16.mxu0 0
    %1261 = vmatpush1.bf16.msra.mxu0 %v1107
    %1262 = vmatprep.subr.bf16.mxu0 0
    %1263 = vmatpush1.bf16.msra.mxu0 %v1108
    %1264 = vmatprep.subr.bf16.mxu0 0
    %1265 = vmatpush1.bf16.msra.mxu0 %v1109
    %1266 = vmatprep.subr.bf16.mxu0 0
    %1267 = vmatpush1.bf16.msra.mxu0 %v1110
    %1268 = vmatprep.subr.bf16.mxu0 0
    %1269 = vmatpush1.bf16.msra.mxu0 %v1111
    %1270 = vmatprep.subr.bf16.mxu0 0
    %1271 = vmatpush1.bf16.msra.mxu0 %v1112
    %1272 = vmatprep.subr.bf16.mxu0 0
    %1273 = vmatpush1.bf16.msra.mxu0 %v1113
    %1274 = vmatprep.mubr.bf16.mxu0 %v631
    %1275 = vmatmul.mubr.bf16.gmra.mrb[0].mxu0 %v630
    %v1276 = vpop.f32.mrb[0].mxu0
    %v1277 = vadd.f32 0.0, %v1276
    %v1278 = vpop.f32.mrb[0].mxu0
    %v1279 = vpop.f32.mrb[0].mxu0
    %v1280 = vadd.f32 0.0, %v1279
    %v1281 = vpop.f32.mrb[0].mxu0
    %1282 = vmatprep.mubr.bf16.mxu0 %v640
    %1283 = vmatmul.mubr.bf16.gmra.mrb[0].mxu0 %v639
    %v1284 = vpop.f32.mrb[0].mxu0
    %v1285 = vadd.f32 0.0, %v1284
    %v1286 = vpop.f32.mrb[0].mxu0
    %v1287 = vpop.f32.mrb[0].mxu0
    %v1288 = vadd.f32 0.0, %v1287
    %v1289 = vpop.f32.mrb[0].mxu0
    %1290 = vmatprep.mubr.bf16.mxu0 %v649
    %1291 = vmatmul.mubr.bf16.gmra.mrb[0].mxu0 %v648
    %v1292 = vpop.f32.mrb[0].mxu0
    %v1293 = vadd.f32 0.0, %v1292
    %v1294 = vpop.f32.mrb[0].mxu0
    %v1295 = vpop.f32.mrb[0].mxu0
    %v1296 = vadd.f32 0.0, %v1295
    %v1297 = vpop.f32.mrb[0].mxu0
    %1298 = vmatprep.mubr.bf16.mxu0 %v658
    %1299 = vmatmul.mubr.bf16.gmra.mrb[0].mxu0 %v657
    %v1300 = vpop.f32.mrb[0].mxu0
    %v1301 = vadd.f32 0.0, %v1300
    %v1302 = vpop.f32.mrb[0].mxu0
    %v1303 = vpop.f32.mrb[0].mxu0
    %v1304 = vadd.f32 0.0, %v1303
    %v1305 = vpop.f32.mrb[0].mxu0
    %1306 = vdwg.mxu0
    %1307 = vmatprep.subr.bf16.mxu0 0
    %1308 = vmatpush1.bf16.msra.mxu0 %v1114
    %1309 = vmatprep.subr.bf16.mxu0 0
    %1310 = vmatpush1.bf16.msra.mxu0 %v1115
    %1311 = vmatprep.subr.bf16.mxu0 0
    %1312 = vmatpush1.bf16.msra.mxu0 %v1116
    %1313 = vmatprep.subr.bf16.mxu0 0
    %1314 = vmatpush1.bf16.msra.mxu0 %v1117
    %1315 = vmatprep.subr.bf16.mxu0 0
    %1316 = vmatpush1.bf16.msra.mxu0 %v1118
    %1317 = vmatprep.subr.bf16.mxu0 0
    %1318 = vmatpush1.bf16.msra.mxu0 %v1119
    %1319 = vmatprep.subr.bf16.mxu0 0
    %1320 = vmatpush1.bf16.msra.mxu0 %v1120
    %1321 = vmatprep.subr.bf16.mxu0 0
    %1322 = vmatpush1.bf16.msra.mxu0 %v1121
    %1323 = vmatprep.subr.bf16.mxu0 0
    %1324 = vmatpush1.bf16.msra.mxu0 %v1122
    %1325 = vmatprep.subr.bf16.mxu0 0
    %1326 = vmatpush1.bf16.msra.mxu0 %v1123
    %1327 = vmatprep.subr.bf16.mxu0 0
    %1328 = vmatpush1.bf16.msra.mxu0 %v1124
    %1329 = vmatprep.subr.bf16.mxu0 0
    %1330 = vmatpush1.bf16.msra.mxu0 %v1125
    %1331 = vmatprep.subr.bf16.mxu0 0
    %1332 = vmatpush1.bf16.msra.mxu0 %v1126
    %1333 = vmatprep.subr.bf16.mxu0 0
    %1334 = vmatpush1.bf16.msra.mxu0 %v1127
    %1335 = vmatprep.subr.bf16.mxu0 0
    %1336 = vmatpush1.bf16.msra.mxu0 %v1128
    %1337 = vmatprep.subr.bf16.mxu0 0
    %1338 = vmatpush1.bf16.msra.mxu0 %v1129
    %1339 = vmatprep.mubr.bf16.mxu0 %v633
    %1340 = vmatmul.mubr.bf16.gmra.mrb[0].mxu0 %v632
    %v1341 = vpop.f32.mrb[0].mxu0
    %v1342 = vadd.f32 %v1277, %v1341
    %v1343 = vpop.f32.mrb[0].mxu0
    %v1344 = vpop.f32.mrb[0].mxu0
    %v1345 = vadd.f32 %v1280, %v1344
    %v1346 = vpop.f32.mrb[0].mxu0
    %1347 = vmatprep.mubr.bf16.mxu0 %v642
    %1348 = vmatmul.mubr.bf16.gmra.mrb[0].mxu0 %v641
    %v1349 = vpop.f32.mrb[0].mxu0
    %v1350 = vadd.f32 %v1285, %v1349
    %v1351 = vpop.f32.mrb[0].mxu0
    %v1352 = vpop.f32.mrb[0].mxu0
    %v1353 = vadd.f32 %v1288, %v1352
    %v1354 = vpop.f32.mrb[0].mxu0
    %1355 = vmatprep.mubr.bf16.mxu0 %v651
    %1356 = vmatmul.mubr.bf16.gmra.mrb[0].mxu0 %v650
    %v1357 = vpop.f32.mrb[0].mxu0
    %v1358 = vadd.f32 %v1293, %v1357
    %v1359 = vpop.f32.mrb[0].mxu0
    %v1360 = vpop.f32.mrb[0].mxu0
    %v1361 = vadd.f32 %v1296, %v1360
    %v1362 = vpop.f32.mrb[0].mxu0
    %1363 = vmatprep.mubr.bf16.mxu0 %v660
    %1364 = vmatmul.mubr.bf16.gmra.mrb[0].mxu0 %v659
    %v1365 = vpop.f32.mrb[0].mxu0
    %v1366 = vadd.f32 %v1301, %v1365
    %v1367 = vpop.f32.mrb[0].mxu0
    %v1368 = vpop.f32.mrb[0].mxu0
    %v1369 = vadd.f32 %v1304, %v1368
    %v1370 = vpop.f32.mrb[0].mxu0
    %1371 = vdwg.mxu0
    %1372 = vmatprep.subr.bf16.mxu0 0
    %1373 = vmatpush1.bf16.msra.mxu0 %v1130
    %1374 = vmatprep.subr.bf16.mxu0 0
    %1375 = vmatpush1.bf16.msra.mxu0 %v1131
    %1376 = vmatprep.subr.bf16.mxu0 0
    %1377 = vmatpush1.bf16.msra.mxu0 %v1132
    %1378 = vmatprep.subr.bf16.mxu0 0
    %1379 = vmatpush1.bf16.msra.mxu0 %v1133
    %1380 = vmatprep.subr.bf16.mxu0 0
    %1381 = vmatpush1.bf16.msra.mxu0 %v1134
    %1382 = vmatprep.subr.bf16.mxu0 0
    %1383 = vmatpush1.bf16.msra.mxu0 %v1135
    %1384 = vmatprep.subr.bf16.mxu0 0
    %1385 = vmatpush1.bf16.msra.mxu0 %v1136
    %1386 = vmatprep.subr.bf16.mxu0 0
    %1387 = vmatpush1.bf16.msra.mxu0 %v1137
    %1388 = vmatprep.subr.bf16.mxu0 0
    %1389 = vmatpush1.bf16.msra.mxu0 %v1138
    %1390 = vmatprep.subr.bf16.mxu0 0
    %1391 = vmatpush1.bf16.msra.mxu0 %v1139
    %1392 = vmatprep.subr.bf16.mxu0 0
    %1393 = vmatpush1.bf16.msra.mxu0 %v1140
    %1394 = vmatprep.subr.bf16.mxu0 0
    %1395 = vmatpush1.bf16.msra.mxu0 %v1141
    %1396 = vmatprep.subr.bf16.mxu0 0
    %1397 = vmatpush1.bf16.msra.mxu0 %v1142
    %1398 = vmatprep.subr.bf16.mxu0 0
    %1399 = vmatpush1.bf16.msra.mxu0 %v1143
    %1400 = vmatprep.subr.bf16.mxu0 0
    %1401 = vmatpush1.bf16.msra.mxu0 %v1144
    %1402 = vmatprep.subr.bf16.mxu0 0
    %1403 = vmatpush1.bf16.msra.mxu0 %v1145
    %1404 = vmatprep.mubr.bf16.mxu0 %v635
    %1405 = vmatmul.mubr.bf16.gmra.mrb[0].mxu0 %v634
    %v1406 = vpop.f32.mrb[0].mxu0
    %v1407 = vadd.f32 %v1342, %v1406
    %v1408 = vpop.f32.mrb[0].mxu0
    %v1409 = vpop.f32.mrb[0].mxu0
    %v1410 = vadd.f32 %v1345, %v1409
    %v1411 = vpop.f32.mrb[0].mxu0
    %1412 = vmatprep.mubr.bf16.mxu0 %v644
    %1413 = vmatmul.mubr.bf16.gmra.mrb[0].mxu0 %v643
    %v1414 = vpop.f32.mrb[0].mxu0
    %v1415 = vadd.f32 %v1350, %v1414
    %v1416 = vpop.f32.mrb[0].mxu0
    %v1417 = vpop.f32.mrb[0].mxu0
    %v1418 = vadd.f32 %v1353, %v1417
    %v1419 = vpop.f32.mrb[0].mxu0
    %1420 = vmatprep.mubr.bf16.mxu0 %v653
    %1421 = vmatmul.mubr.bf16.gmra.mrb[0].mxu0 %v652
    %v1422 = vpop.f32.mrb[0].mxu0
    %v1423 = vadd.f32 %v1358, %v1422
    %v1424 = vpop.f32.mrb[0].mxu0
    %v1425 = vpop.f32.mrb[0].mxu0
    %v1426 = vadd.f32 %v1361, %v1425
    %v1427 = vpop.f32.mrb[0].mxu0
    %1428 = vmatprep.mubr.bf16.mxu0 %v662
    %1429 = vmatmul.mubr.bf16.gmra.mrb[0].mxu0 %v661
    %v1430 = vpop.f32.mrb[0].mxu0
    %v1431 = vadd.f32 %v1366, %v1430
    %v1432 = vpop.f32.mrb[0].mxu0
    %v1433 = vpop.f32.mrb[0].mxu0
    %v1434 = vadd.f32 %v1369, %v1433
    %v1435 = vpop.f32.mrb[0].mxu0
    %1436 = vdwg.mxu0
    %1437 = vmatprep.subr.bf16.mxu0 0
    %1438 = vmatpush1.bf16.msra.mxu0 %v1146
    %1439 = vmatprep.subr.bf16.mxu0 0
    %1440 = vmatpush1.bf16.msra.mxu0 %v1147
    %1441 = vmatprep.subr.bf16.mxu0 0
    %1442 = vmatpush1.bf16.msra.mxu0 %v1148
    %1443 = vmatprep.subr.bf16.mxu0 0
    %1444 = vmatpush1.bf16.msra.mxu0 %v1149
    %1445 = vmatprep.subr.bf16.mxu0 0
    %1446 = vmatpush1.bf16.msra.mxu0 %v1150
    %1447 = vmatprep.subr.bf16.mxu0 0
    %1448 = vmatpush1.bf16.msra.mxu0 %v1151
    %1449 = vmatprep.subr.bf16.mxu0 0
    %1450 = vmatpush1.bf16.msra.mxu0 %v1152
    %1451 = vmatprep.subr.bf16.mxu0 0
    %1452 = vmatpush1.bf16.msra.mxu0 %v1153
    %1453 = vmatprep.subr.bf16.mxu0 0
    %1454 = vmatpush1.bf16.msra.mxu0 %v1154
    %1455 = vmatprep.subr.bf16.mxu0 0
    %1456 = vmatpush1.bf16.msra.mxu0 %v1155
    %1457 = vmatprep.subr.bf16.mxu0 0
    %1458 = vmatpush1.bf16.msra.mxu0 %v1156
    %1459 = vmatprep.subr.bf16.mxu0 0
    %1460 = vmatpush1.bf16.msra.mxu0 %v1157
    %1461 = vmatprep.subr.bf16.mxu0 0
    %1462 = vmatpush1.bf16.msra.mxu0 %v1158
    %1463 = vmatprep.subr.bf16.mxu0 0
    %1464 = vmatpush1.bf16.msra.mxu0 %v1159
    %1465 = vmatprep.subr.bf16.mxu0 0
    %1466 = vmatpush1.bf16.msra.mxu0 %v1160
    %1467 = vmatprep.subr.bf16.mxu0 0
    %1468 = vmatpush1.bf16.msra.mxu0 %v1161
    %1469 = vmatprep.mubr.bf16.mxu0 %v637
    %1470 = vmatmul.mubr.bf16.gmra.mrb[0].mxu0 %v636
    %v1471 = vpop.f32.mrb[0].mxu0
    %v1472 = vadd.f32 %v1407, %v1471
    %v1473 = vpop.f32.mrb[0].mxu0
    %v1474 = vpop.f32.mrb[0].mxu0
    %v1475 = vadd.f32 %v1410, %v1474
    %v1476 = vpop.f32.mrb[0].mxu0
    %1477 = vmatprep.mubr.bf16.mxu0 %v646
    %1478 = vmatmul.mubr.bf16.gmra.mrb[0].mxu0 %v645
    %v1479 = vpop.f32.mrb[0].mxu0
    %v1480 = vadd.f32 %v1415, %v1479
    %v1481 = vpop.f32.mrb[0].mxu0
    %v1482 = vpop.f32.mrb[0].mxu0
    %v1483 = vadd.f32 %v1418, %v1482
    %v1484 = vpop.f32.mrb[0].mxu0
    %1485 = vmatprep.mubr.bf16.mxu0 %v655
    %1486 = vmatmul.mubr.bf16.gmra.mrb[0].mxu0 %v654
    %v1487 = vpop.f32.mrb[0].mxu0
    %v1488 = vadd.f32 %v1423, %v1487
    %v1489 = vpop.f32.mrb[0].mxu0
    %v1490 = vpop.f32.mrb[0].mxu0
    %v1491 = vadd.f32 %v1426, %v1490
    %v1492 = vpop.f32.mrb[0].mxu0
    %1493 = vmatprep.mubr.bf16.mxu0 %v664
    %1494 = vmatmul.mubr.bf16.gmra.mrb[0].mxu0 %v663
    %v1495 = vpop.f32.mrb[0].mxu0
    %v1496 = vadd.f32 %v1431, %v1495
    %v1497 = vpop.f32.mrb[0].mxu0
    %v1498 = vpop.f32.mrb[0].mxu0
    %v1499 = vadd.f32 %v1434, %v1498
    %v1500 = vpop.f32.mrb[0].mxu0
    %1501 = vdwg.mxu0
    %1502 = vmatprep.subr.bf16.mxu0 0
    %1503 = vmatpush1.bf16.msra.mxu0 %v1162
    %1504 = vmatprep.subr.bf16.mxu0 0
    %1505 = vmatpush1.bf16.msra.mxu0 %v1163
    %1506 = vmatprep.subr.bf16.mxu0 0
    %1507 = vmatpush1.bf16.msra.mxu0 %v1164
    %1508 = vmatprep.subr.bf16.mxu0 0
    %1509 = vmatpush1.bf16.msra.mxu0 %v1165
    %1510 = vmatprep.subr.bf16.mxu0 0
    %1511 = vmatpush1.bf16.msra.mxu0 %v1166
    %1512 = vmatprep.subr.bf16.mxu0 0
    %1513 = vmatpush1.bf16.msra.mxu0 %v1167
    %1514 = vmatprep.subr.bf16.mxu0 0
    %1515 = vmatpush1.bf16.msra.mxu0 %v1168
    %1516 = vmatprep.subr.bf16.mxu0 0
    %1517 = vmatpush1.bf16.msra.mxu0 %v1169
    %1518 = vmatprep.subr.bf16.mxu0 0
    %1519 = vmatpush1.bf16.msra.mxu0 0
    %1520 = vmatprep.subr.bf16.mxu0 0
    %1521 = vmatpush1.bf16.msra.mxu0 0
    %1522 = vmatprep.subr.bf16.mxu0 0
    %1523 = vmatpush1.bf16.msra.mxu0 0
    %1524 = vmatprep.subr.bf16.mxu0 0
    %1525 = vmatpush1.bf16.msra.mxu0 0
    %1526 = vmatprep.subr.bf16.mxu0 0
    %1527 = vmatpush1.bf16.msra.mxu0 0
    %1528 = vmatprep.subr.bf16.mxu0 0
    %1529 = vmatpush1.bf16.msra.mxu0 0
    %1530 = vmatprep.subr.bf16.mxu0 0
    %1531 = vmatpush1.bf16.msra.mxu0 0
    %1532 = vmatprep.subr.bf16.mxu0 0
    %1533 = vmatpush1.bf16.msra.mxu0 0
    %1534 = vmatprep.mubr.bf16.mxu0 0
    %1535 = vmatmul.mubr.bf16.gmra.mrb[0].mxu0 %v638
    %v1536 = vpop.f32.mrb[0].mxu0
    %v1537 = vadd.f32 %v1472, %v1536
    %v1538 = vpop.f32.mrb[0].mxu0
    %v1539 = vpop.f32.mrb[0].mxu0
    %v1540 = vadd.f32 %v1475, %v1539
    %v1541 = vpop.f32.mrb[0].mxu0
    %1542 = vmatprep.mubr.bf16.mxu0 0
    %1543 = vmatmul.mubr.bf16.gmra.mrb[0].mxu0 %v647
    %v1544 = vpop.f32.mrb[0].mxu0
    %v1545 = vadd.f32 %v1480, %v1544
    %v1546 = vpop.f32.mrb[0].mxu0
    %v1547 = vpop.f32.mrb[0].mxu0
    %v1548 = vadd.f32 %v1483, %v1547
    %v1549 = vpop.f32.mrb[0].mxu0
    %1550 = vmatprep.mubr.bf16.mxu0 0
    %1551 = vmatmul.mubr.bf16.gmra.mrb[0].mxu0 %v656
    %v1552 = vpop.f32.mrb[0].mxu0
    %v1553 = vadd.f32 %v1488, %v1552
    %v1554 = vpop.f32.mrb[0].mxu0
    %v1555 = vpop.f32.mrb[0].mxu0
    %v1556 = vadd.f32 %v1491, %v1555
    %v1557 = vpop.f32.mrb[0].mxu0
    %1558 = vmatprep.mubr.bf16.mxu0 0
    %1559 = vmatmul.mubr.bf16.gmra.mrb[0].mxu0 %v665
    %v1560 = vpop.f32.mrb[0].mxu0
    %v1561 = vadd.f32 %v1496, %v1560
    %v1562 = vpop.f32.mrb[0].mxu0
    %v1563 = vpop.f32.mrb[0].mxu0
    %v1564 = vadd.f32 %v1499, %v1563
    %v1565 = vpop.f32.mrb[0].mxu0
    %1566 = vdwg.mxu0
    %v1567 = vadd.f32 %v1537, %v1540
    %v1568 = vadd.f32 %v1567, %v1545
    %v1569 = vadd.f32 %v1568, %v1548
    %v1570 = vadd.f32 %v1569, %v1553
    %v1571 = vadd.f32 %v1570, %v1556
    %v1572 = vadd.f32 %v1571, %v1561
    %v1573 = vadd.f32 %v1572, %v1564
    %v1574 = vrot.slane %v1573, 4
    %v1575 = vadd.f32 %v1573, %v1574
    %v1576 = vrot.slane %v1575, 2
    %v1577 = vadd.f32 %v1575, %v1576
    %v1578 = vrot.slane %v1577, 1
    %v1579 = vadd.f32 %v1577, %v1578
    %v1580 = vmul.f32 %v1537, %v1537
    %v1581 = vmul.f32 %v1540, %v1540
    %v1582 = vmul.f32 %v1545, %v1545
    %v1583 = vmul.f32 %v1548, %v1548
    %v1584 = vmul.f32 %v1553, %v1553
    %v1585 = vmul.f32 %v1556, %v1556
    %v1586 = vmul.f32 %v1561, %v1561
    %v1587 = vmul.f32 %v1564, %v1564
    %v1588 = vadd.f32 %v1580, %v1581
    %v1589 = vadd.f32 %v1588, %v1582
    %v1590 = vadd.f32 %v1589, %v1583
    %v1591 = vadd.f32 %v1590, %v1584
    %v1592 = vadd.f32 %v1591, %v1585
    %v1593 = vadd.f32 %v1592, %v1586
    %v1594 = vadd.f32 %v1593, %v1587
    %v1595 = vrot.slane %v1594, 4
    %v1596 = vadd.f32 %v1594, %v1595
    %v1597 = vrot.slane %v1596, 2
    %v1598 = vadd.f32 %v1596, %v1597
    %v1599 = vrot.slane %v1598, 1
    %v1600 = vadd.f32 %v1598, %v1599
    %v1601 = vmul.f32 %v1579, 0.015625
    %v1602 = vmul.f32 %v1600, 0.015625
    %v1603 = vmul.f32 %v1601, %v1601
    %v1604 = vsub.f32 %v1602, %v1603
    %v1605 = vsub.f32 %v1537, %v1601
    %v1606 = vsub.f32 %v1540, %v1601
    %v1607 = vsub.f32 %v1545, %v1601
    %v1608 = vsub.f32 %v1548, %v1601
    %v1609 = vsub.f32 %v1553, %v1601
    %v1610 = vsub.f32 %v1556, %v1601
    %v1611 = vsub.f32 %v1561, %v1601
    %v1612 = vsub.f32 %v1564, %v1601
    %v1613 = vadd.f32 %v1604, 1e-05
    %v1614 = vrsqrt.pop %v1613
    %v1615 = vmul.f32 %v1605, %v1614
    %v1616 = vmul.f32 %v1606, %v1614
    %v1617 = vmul.f32 %v1607, %v1614
    %v1618 = vmul.f32 %v1608, %v1614
    %v1619 = vmul.f32 %v1609, %v1614
    %v1620 = vmul.f32 %v1610, %v1614
    %v1621 = vmul.f32 %v1611, %v1614
    %v1622 = vmul.f32 %v1612, %v1614
    %v1623 = vld [vmem:[#allocation8] sm:$0x1]
    %v1625 = vlaneseq
    %v1626 = vshrl.u32 %v1625, 7
    %v1627 = vsub.s32 0, %v1626
    %v1628 = vrot.slane %v1623, %v1627
    %v1630 = vmul.f32 %v1628, %v1615
    %v1631 = vmul.f32 %v1628, %v1616
    %v1632 = vmul.f32 %v1628, %v1617
    %v1633 = vmul.f32 %v1628, %v1618
    %v1634 = vmul.f32 %v1628, %v1619
    %v1635 = vmul.f32 %v1628, %v1620
    %v1636 = vmul.f32 %v1628, %v1621
    %v1637 = vmul.f32 %v1628, %v1622
    %v1638 = vld [vmem:[#allocation10] sm:$0x1]
    %v1640 = vlaneseq
    %v1641 = vshrl.u32 %v1640, 7
    %v1642 = vsub.s32 0, %v1641
    %v1643 = vrot.slane %v1638, %v1642
    %v1645 = vadd.f32 %v1630, %v1643
    %v1646 = vadd.f32 %v1631, %v1643
    %v1647 = vadd.f32 %v1632, %v1643
    %v1648 = vadd.f32 %v1633, %v1643
    %v1649 = vadd.f32 %v1634, %v1643
    %v1650 = vadd.f32 %v1635, %v1643
    %v1651 = vadd.f32 %v1636, %v1643
    %v1652 = vadd.f32 %v1637, %v1643
    %v1653 = vmax.f32 %v1645, 0.0
    %v1654 = vmax.f32 %v1646, 0.0
    %v1655 = vmax.f32 %v1647, 0.0
    %v1656 = vmax.f32 %v1648, 0.0
    %v1657 = vmax.f32 %v1649, 0.0
    %v1658 = vmax.f32 %v1650, 0.0
    %v1659 = vmax.f32 %v1651, 0.0
    %v1660 = vmax.f32 %v1652, 0.0
    %v1661 = vrot.slane %v1653, 7
    %v1662 = vrot.slane %v1654, 7
    %v1663 = vrot.slane %v1655, 7
    %v1664 = vrot.slane %v1656, 7
    %v1665 = vrot.slane %v1657, 7
    %v1666 = vrot.slane %v1658, 7
    %v1667 = vrot.slane %v1659, 7
    %v1668 = vrot.slane %v1660, 7
    %v1669 = vsel %vm540, %v1667, %v1668
    %v1670 = vsel %vm540, %v1666, %v1667
    %v1671 = vsel %vm540, %v1665, %v1666
    %v1672 = vsel %vm540, %v1664, %v1665
    %v1673 = vsel %vm540, %v1663, %v1664
    %v1674 = vsel %vm540, %v1662, %v1663
    %v1675 = vsel %vm540, %v1661, %v1662
    %v1676 = vsel %vm540, %v1668, %v1661
    %v1677 = vmul.f32 %v1669, %v142
    %v1678 = vmul.f32 %v1676, %v147
    %v1679 = vmul.f32 %v1675, %v152
    %v1680 = vmul.f32 %v1674, %v157
    %v1681 = vmul.f32 %v1673, %v162
    %v1682 = vmul.f32 %v1672, %v167
    %v1683 = vmul.f32 %v1671, %v172
    %v1684 = vmul.f32 %v1670, %v177
    %v1685 = vmul.f32 %v1660, %v191
    %v1686 = vmul.f32 %v1653, %v196
    %v1687 = vmul.f32 %v1654, %v201
    %v1688 = vmul.f32 %v1655, %v206
    %v1689 = vmul.f32 %v1656, %v211
    %v1690 = vmul.f32 %v1657, %v216
    %v1691 = vmul.f32 %v1658, %v221
    %v1692 = vmul.f32 %v1659, %v226
    %v1693 = vrot.slane %v1653, 1
    %v1694 = vrot.slane %v1654, 1
    %v1695 = vrot.slane %v1655, 1
    %v1696 = vrot.slane %v1656, 1
    %v1697 = vrot.slane %v1657, 1
    %v1698 = vrot.slane %v1658, 1
    %v1699 = vrot.slane %v1659, 1
    %v1700 = vrot.slane %v1660, 1
    %v1701 = vsel %vm573, %v1699, %v1700
    %v1702 = vsel %vm573, %v1698, %v1699
    %v1703 = vsel %vm573, %v1697, %v1698
    %v1704 = vsel %vm573, %v1696, %v1697
    %v1705 = vsel %vm573, %v1695, %v1696
    %v1706 = vsel %vm573, %v1694, %v1695
    %v1707 = vsel %vm573, %v1693, %v1694
    %v1708 = vsel %vm573, %v1700, %v1693
    %v1709 = vmul.f32 %v1708, %v240
    %v1710 = vmul.f32 %v1707, %v245
    %v1711 = vmul.f32 %v1706, %v250
    %v1712 = vmul.f32 %v1705, %v255
    %v1713 = vmul.f32 %v1704, %v260
    %v1714 = vmul.f32 %v1703, %v265
    %v1715 = vmul.f32 %v1702, %v270
    %v1716 = vmul.f32 %v1701, %v275
    %v1717 = vmul.f32 %v1676, %v289
    %v1718 = vmul.f32 %v1675, %v294
    %v1719 = vmul.f32 %v1674, %v299
    %v1720 = vmul.f32 %v1673, %v304
    %v1721 = vmul.f32 %v1672, %v309
    %v1722 = vmul.f32 %v1671, %v314
    %v1723 = vmul.f32 %v1670, %v319
    %v1724 = vmul.f32 %v1669, %v324
    %v1725 = vmul.f32 %v1707, %v338
    %v1726 = vmul.f32 %v1706, %v343
    %v1727 = vmul.f32 %v1705, %v348
    %v1728 = vmul.f32 %v1704, %v353
    %v1729 = vmul.f32 %v1703, %v358
    %v1730 = vmul.f32 %v1702, %v363
    %v1731 = vmul.f32 %v1701, %v368
    %v1732 = vmul.f32 %v1708, %v373
    %v1733 = vmul.f32 %v1675, %v387
    %v1734 = vmul.f32 %v1674, %v392
    %v1735 = vmul.f32 %v1673, %v397
    %v1736 = vmul.f32 %v1672, %v402
    %v1737 = vmul.f32 %v1671, %v407
    %v1738 = vmul.f32 %v1670, %v412
    %v1739 = vmul.f32 %v1669, %v417
    %v1740 = vmul.f32 %v1676, %v422
    %v1741 = vmul.f32 %v1654, %v436
    %v1742 = vmul.f32 %v1655, %v441
    %v1743 = vmul.f32 %v1656, %v446
    %v1744 = vmul.f32 %v1657, %v451
    %v1745 = vmul.f32 %v1658, %v456
    %v1746 = vmul.f32 %v1659, %v461
    %v1747 = vmul.f32 %v1660, %v466
    %v1748 = vmul.f32 %v1653, %v471
    %v1749 = vmul.f32 %v1706, %v485
    %v1750 = vmul.f32 %v1705, %v490
    %v1751 = vmul.f32 %v1704, %v495
    %v1752 = vmul.f32 %v1703, %v500
    %v1753 = vmul.f32 %v1702, %v505
    %v1754 = vmul.f32 %v1701, %v510
    %v1755 = vmul.f32 %v1708, %v515
    %v1756 = vmul.f32 %v1707, %v520
    %v1757 = vpack.c.bf16 %v1678, %v1677
    %v1758 = vpack.c.bf16 %v1686, %v1685
    %v1759 = vpack.c.bf16 %v1710, %v1709
    %v1760 = vpack.c.bf16 %v1718, %v1717
    %v1761 = vpack.c.bf16 %v1654, %v1653
    %v1762 = vpack.c.bf16 %v1726, %v1725
    %v1763 = vpack.c.bf16 %v1734, %v1733
    %v1764 = vpack.c.bf16 %v1742, %v1741
    %v1765 = vpack.c.bf16 %v1750, %v1749
    %v1766 = vpack.c.bf16 %v1680, %v1679
    %v1767 = vpack.c.bf16 %v1688, %v1687
    %v1768 = vpack.c.bf16 %v1712, %v1711
    %v1769 = vpack.c.bf16 %v1720, %v1719
    %v1770 = vpack.c.bf16 %v1656, %v1655
    %v1771 = vpack.c.bf16 %v1728, %v1727
    %v1772 = vpack.c.bf16 %v1736, %v1735
    %v1773 = vpack.c.bf16 %v1744, %v1743
    %v1774 = vpack.c.bf16 %v1752, %v1751
    %v1775 = vpack.c.bf16 %v1682, %v1681
    %v1776 = vpack.c.bf16 %v1690, %v1689
    %v1777 = vpack.c.bf16 %v1714, %v1713
    %v1778 = vpack.c.bf16 %v1722, %v1721
    %v1779 = vpack.c.bf16 %v1658, %v1657
    %v1780 = vpack.c.bf16 %v1730, %v1729
    %v1781 = vpack.c.bf16 %v1738, %v1737
    %v1782 = vpack.c.bf16 %v1746, %v1745
    %v1783 = vpack.c.bf16 %v1754, %v1753
    %v1784 = vpack.c.bf16 %v1684, %v1683
    %v1785 = vpack.c.bf16 %v1692, %v1691
    %v1786 = vpack.c.bf16 %v1716, %v1715
    %v1787 = vpack.c.bf16 %v1724, %v1723
    %v1788 = vpack.c.bf16 %v1660, %v1659
    %v1789 = vpack.c.bf16 %v1732, %v1731
    %v1790 = vpack.c.bf16 %v1740, %v1739
    %v1791 = vpack.c.bf16 %v1748, %v1747
    %v1792 = vpack.c.bf16 %v1756, %v1755
    %s1793 = scalar_lea.vmem [#allocation5], 576
    %v1794 = vld [vmem:[%s1793] sm:$0xf]
    %v1795 = vld [vmem:[%s1793 + $0x4] sm:$0xf]
    %v1796 = vld [vmem:[%s1793 + $0x8] sm:$0xf]
    %v1797 = vld [vmem:[%s1793 + $0xc] sm:$0xf]
    %v1798 = vld [vmem:[%s1793 + $0x10] sm:$0xf]
    %v1799 = vld [vmem:[%s1793 + $0x14] sm:$0xf]
    %v1800 = vld [vmem:[%s1793 + $0x18] sm:$0xf]
    %v1801 = vld [vmem:[%s1793 + $0x1c] sm:$0xf]
    %v1802 = vld [vmem:[%s1793 + $0x20] sm:$0xf]
    %v1803 = vld [vmem:[%s1793 + $0x24] sm:$0xf]
    %v1804 = vld [vmem:[%s1793 + $0x28] sm:$0xf]
    %v1805 = vld [vmem:[%s1793 + $0x2c] sm:$0xf]
    %v1806 = vld [vmem:[%s1793 + $0x30] sm:$0xf]
    %v1807 = vld [vmem:[%s1793 + $0x34] sm:$0xf]
    %v1808 = vld [vmem:[%s1793 + $0x38] sm:$0xf]
    %v1809 = vld [vmem:[%s1793 + $0x3c] sm:$0xf]
    %v1810 = vld [vmem:[%s1793 + $0x40] sm:$0xf]
    %v1811 = vld [vmem:[%s1793 + $0x44] sm:$0xf]
    %v1812 = vld [vmem:[%s1793 + $0x48] sm:$0xf]
    %v1813 = vld [vmem:[%s1793 + $0x4c] sm:$0xf]
    %v1814 = vld [vmem:[%s1793 + $0x50] sm:$0xf]
    %v1815 = vld [vmem:[%s1793 + $0x54] sm:$0xf]
    %v1816 = vld [vmem:[%s1793 + $0x58] sm:$0xf]
    %v1817 = vld [vmem:[%s1793 + $0x5c] sm:$0xf]
    %v1818 = vld [vmem:[%s1793 + $0x60] sm:$0xf]
    %v1819 = vld [vmem:[%s1793 + $0x64] sm:$0xf]
    %v1820 = vld [vmem:[%s1793 + $0x68] sm:$0xf]
    %v1821 = vld [vmem:[%s1793 + $0x6c] sm:$0xf]
    %v1822 = vld [vmem:[%s1793 + $0x70] sm:$0xf]
    %v1823 = vld [vmem:[%s1793 + $0x74] sm:$0xf]
    %v1824 = vld [vmem:[%s1793 + $0x78] sm:$0xf]
    %v1825 = vld [vmem:[%s1793 + $0x7c] sm:$0xf]
    %v1826 = vld [vmem:[%s1793 + $0x80] sm:$0xf]
    %v1827 = vld [vmem:[%s1793 + $0x84] sm:$0xf]
    %v1828 = vld [vmem:[%s1793 + $0x88] sm:$0xf]
    %v1829 = vld [vmem:[%s1793 + $0x8c] sm:$0xf]
    %v1830 = vld [vmem:[%s1793 + $0x90] sm:$0xf]
    %v1831 = vld [vmem:[%s1793 + $0x94] sm:$0xf]
    %v1832 = vld [vmem:[%s1793 + $0x98] sm:$0xf]
    %v1833 = vld [vmem:[%s1793 + $0x9c] sm:$0xf]
    %v1834 = vld [vmem:[%s1793 + $0xa0] sm:$0xf]
    %v1835 = vld [vmem:[%s1793 + $0xa4] sm:$0xf]
    %v1836 = vld [vmem:[%s1793 + $0xa8] sm:$0xf]
    %v1837 = vld [vmem:[%s1793 + $0xac] sm:$0xf]
    %v1838 = vld [vmem:[%s1793 + $0xb0] sm:$0xf]
    %v1839 = vld [vmem:[%s1793 + $0xb4] sm:$0xf]
    %v1840 = vld [vmem:[%s1793 + $0xb8] sm:$0xf]
    %v1841 = vld [vmem:[%s1793 + $0xbc] sm:$0xf]
    %v1842 = vld [vmem:[%s1793 + $0xc0] sm:$0xf]
    %v1843 = vld [vmem:[%s1793 + $0xc4] sm:$0xf]
    %v1844 = vld [vmem:[%s1793 + $0xc8] sm:$0xf]
    %v1845 = vld [vmem:[%s1793 + $0xcc] sm:$0xf]
    %v1846 = vld [vmem:[%s1793 + $0xd0] sm:$0xf]
    %v1847 = vld [vmem:[%s1793 + $0xd4] sm:$0xf]
    %v1848 = vld [vmem:[%s1793 + $0xd8] sm:$0xf]
    %v1849 = vld [vmem:[%s1793 + $0xdc] sm:$0xf]
    %v1850 = vld [vmem:[%s1793 + $0xe0] sm:$0xf]
    %v1851 = vld [vmem:[%s1793 + $0xe4] sm:$0xf]
    %v1852 = vld [vmem:[%s1793 + $0xe8] sm:$0xf]
    %v1853 = vld [vmem:[%s1793 + $0xec] sm:$0xf]
    %v1854 = vld [vmem:[%s1793 + $0xf0] sm:$0xf]
    %v1855 = vld [vmem:[%s1793 + $0xf4] sm:$0xf]
    %v1856 = vld [vmem:[%s1793 + $0xf8] sm:$0xf]
    %v1857 = vld [vmem:[%s1793 + $0xfc] sm:$0xf]
    %v1858 = vld [vmem:[%s1793 + $0x100] sm:$0xf]
    %v1859 = vld [vmem:[%s1793 + $0x104] sm:$0xf]
    %v1860 = vld [vmem:[%s1793 + $0x108] sm:$0xf]
    %v1861 = vld [vmem:[%s1793 + $0x10c] sm:$0xf]
    %v1862 = vld [vmem:[%s1793 + $0x110] sm:$0xf]
    %v1863 = vld [vmem:[%s1793 + $0x114] sm:$0xf]
    %v1864 = vld [vmem:[%s1793 + $0x118] sm:$0xf]
    %v1865 = vld [vmem:[%s1793 + $0x11c] sm:$0xf]
    %v1866 = vld [vmem:[%s1793 + $0x120] sm:$0xf]
    %v1867 = vld [vmem:[%s1793 + $0x124] sm:$0xf]
    %v1868 = vld [vmem:[%s1793 + $0x128] sm:$0xf]
    %v1869 = vld [vmem:[%s1793 + $0x12c] sm:$0xf]
    %v1870 = vld [vmem:[%s1793 + $0x130] sm:$0xf]
    %v1871 = vld [vmem:[%s1793 + $0x134] sm:$0xf]
    %v1872 = vld [vmem:[%s1793 + $0x138] sm:$0xf]
    %v1873 = vld [vmem:[%s1793 + $0x13c] sm:$0xf]
    %v1874 = vld [vmem:[%s1793 + $0x140] sm:$0xf]
    %v1875 = vld [vmem:[%s1793 + $0x144] sm:$0xf]
    %v1876 = vld [vmem:[%s1793 + $0x148] sm:$0xf]
    %v1877 = vld [vmem:[%s1793 + $0x14c] sm:$0xf]
    %v1878 = vld [vmem:[%s1793 + $0x150] sm:$0xf]
    %v1879 = vld [vmem:[%s1793 + $0x154] sm:$0xf]
    %v1880 = vld [vmem:[%s1793 + $0x158] sm:$0xf]
    %v1881 = vld [vmem:[%s1793 + $0x15c] sm:$0xf]
    %v1882 = vld [vmem:[%s1793 + $0x160] sm:$0xf]
    %v1883 = vld [vmem:[%s1793 + $0x164] sm:$0xf]
    %v1884 = vld [vmem:[%s1793 + $0x168] sm:$0xf]
    %v1885 = vld [vmem:[%s1793 + $0x16c] sm:$0xf]
    %v1886 = vld [vmem:[%s1793 + $0x170] sm:$0xf]
    %v1887 = vld [vmem:[%s1793 + $0x174] sm:$0xf]
    %v1888 = vld [vmem:[%s1793 + $0x178] sm:$0xf]
    %v1889 = vld [vmem:[%s1793 + $0x17c] sm:$0xf]
    %v1890 = vld [vmem:[%s1793 + $0x180] sm:$0xf]
    %v1891 = vld [vmem:[%s1793 + $0x184] sm:$0xf]
    %v1892 = vld [vmem:[%s1793 + $0x188] sm:$0xf]
    %v1893 = vld [vmem:[%s1793 + $0x18c] sm:$0xf]
    %v1894 = vld [vmem:[%s1793 + $0x190] sm:$0xf]
    %v1895 = vld [vmem:[%s1793 + $0x194] sm:$0xf]
    %v1896 = vld [vmem:[%s1793 + $0x198] sm:$0xf]
    %v1897 = vld [vmem:[%s1793 + $0x19c] sm:$0xf]
    %v1898 = vld [vmem:[%s1793 + $0x1a0] sm:$0xf]
    %v1899 = vld [vmem:[%s1793 + $0x1a4] sm:$0xf]
    %v1900 = vld [vmem:[%s1793 + $0x1a8] sm:$0xf]
    %v1901 = vld [vmem:[%s1793 + $0x1ac] sm:$0xf]
    %v1902 = vld [vmem:[%s1793 + $0x1b0] sm:$0xf]
    %v1903 = vld [vmem:[%s1793 + $0x1b4] sm:$0xf]
    %v1904 = vld [vmem:[%s1793 + $0x1b8] sm:$0xf]
    %v1905 = vld [vmem:[%s1793 + $0x1bc] sm:$0xf]
    %v1906 = vld [vmem:[%s1793 + $0x1c0] sm:$0xf]
    %v1907 = vld [vmem:[%s1793 + $0x1c4] sm:$0xf]
    %v1908 = vld [vmem:[%s1793 + $0x1c8] sm:$0xf]
    %v1909 = vld [vmem:[%s1793 + $0x1cc] sm:$0xf]
    %v1910 = vld [vmem:[%s1793 + $0x1d0] sm:$0xf]
    %v1911 = vld [vmem:[%s1793 + $0x1d4] sm:$0xf]
    %v1912 = vld [vmem:[%s1793 + $0x1d8] sm:$0xf]
    %v1913 = vld [vmem:[%s1793 + $0x1dc] sm:$0xf]
    %v1914 = vld [vmem:[%s1793 + $0x1e0] sm:$0xf]
    %v1915 = vld [vmem:[%s1793 + $0x1e4] sm:$0xf]
    %v1916 = vld [vmem:[%s1793 + $0x1e8] sm:$0xf]
    %v1917 = vld [vmem:[%s1793 + $0x1ec] sm:$0xf]
    %v1918 = vld [vmem:[%s1793 + $0x1f0] sm:$0xf]
    %v1919 = vld [vmem:[%s1793 + $0x1f4] sm:$0xf]
    %v1920 = vld [vmem:[%s1793 + $0x1f8] sm:$0xf]
    %v1921 = vld [vmem:[%s1793 + $0x1fc] sm:$0xf]
    %v1922 = vld [vmem:[%s1793 + $0x200] sm:$0xf]
    %v1923 = vld [vmem:[%s1793 + $0x204] sm:$0xf]
    %v1924 = vld [vmem:[%s1793 + $0x208] sm:$0xf]
    %v1925 = vld [vmem:[%s1793 + $0x20c] sm:$0xf]
    %v1926 = vld [vmem:[%s1793 + $0x210] sm:$0xf]
    %v1927 = vld [vmem:[%s1793 + $0x214] sm:$0xf]
    %v1928 = vld [vmem:[%s1793 + $0x218] sm:$0xf]
    %v1929 = vld [vmem:[%s1793 + $0x21c] sm:$0xf]
    %v1930 = vld [vmem:[%s1793 + $0x220] sm:$0xf]
    %v1931 = vld [vmem:[%s1793 + $0x224] sm:$0xf]
    %v1932 = vld [vmem:[%s1793 + $0x228] sm:$0xf]
    %v1933 = vld [vmem:[%s1793 + $0x22c] sm:$0xf]
    %v1934 = vld [vmem:[%s1793 + $0x230] sm:$0xf]
    %v1935 = vld [vmem:[%s1793 + $0x234] sm:$0xf]
    %v1936 = vld [vmem:[%s1793 + $0x238] sm:$0xf]
    %v1937 = vld [vmem:[%s1793 + $0x23c] sm:$0xf]
    %v2082 = vunpack.c.l.b16 %v1794
    %v2083 = vunpack.c.l.b16 %v1795
    %v2084 = vunpack.c.l.b16 %v1796
    %v2085 = vunpack.c.l.b16 %v1797
    %v2086 = vunpack.c.l.b16 %v1798
    %v2087 = vunpack.c.l.b16 %v1799
    %v2088 = vunpack.c.l.b16 %v1800
    %v2089 = vunpack.c.l.b16 %v1801
    %v2090 = vunpack.c.l.b16 %v1802
    %v2091 = vunpack.c.l.b16 %v1803
    %v2092 = vunpack.c.l.b16 %v1804
    %v2093 = vunpack.c.l.b16 %v1805
    %v2094 = vunpack.c.l.b16 %v1806
    %v2095 = vunpack.c.l.b16 %v1807
    %v2096 = vunpack.c.l.b16 %v1808
    %v2097 = vunpack.c.l.b16 %v1809
    %v2098 = vunpack.c.l.b16 %v1810
    %v2099 = vunpack.c.l.b16 %v1811
    %v2100 = vunpack.c.l.b16 %v1812
    %v2101 = vunpack.c.l.b16 %v1813
    %v2102 = vunpack.c.l.b16 %v1814
    %v2103 = vunpack.c.l.b16 %v1815
    %v2104 = vunpack.c.l.b16 %v1816
    %v2105 = vunpack.c.l.b16 %v1817
    %v2106 = vunpack.c.l.b16 %v1818
    %v2107 = vunpack.c.l.b16 %v1819
    %v2108 = vunpack.c.l.b16 %v1820
    %v2109 = vunpack.c.l.b16 %v1821
    %v2110 = vunpack.c.l.b16 %v1822
    %v2111 = vunpack.c.l.b16 %v1823
    %v2112 = vunpack.c.l.b16 %v1824
    %v2113 = vunpack.c.l.b16 %v1825
    %v2114 = vunpack.c.l.b16 %v1826
    %v2115 = vunpack.c.l.b16 %v1827
    %v2116 = vunpack.c.l.b16 %v1828
    %v2117 = vunpack.c.l.b16 %v1829
    %v2118 = vunpack.c.l.b16 %v1830
    %v2119 = vunpack.c.l.b16 %v1831
    %v2120 = vunpack.c.l.b16 %v1832
    %v2121 = vunpack.c.l.b16 %v1833
    %v2122 = vunpack.c.l.b16 %v1834
    %v2123 = vunpack.c.l.b16 %v1835
    %v2124 = vunpack.c.l.b16 %v1836
    %v2125 = vunpack.c.l.b16 %v1837
    %v2126 = vunpack.c.l.b16 %v1838
    %v2127 = vunpack.c.l.b16 %v1839
    %v2128 = vunpack.c.l.b16 %v1840
    %v2129 = vunpack.c.l.b16 %v1841
    %v2130 = vunpack.c.l.b16 %v1842
    %v2131 = vunpack.c.l.b16 %v1843
    %v2132 = vunpack.c.l.b16 %v1844
    %v2133 = vunpack.c.l.b16 %v1845
    %v2134 = vunpack.c.l.b16 %v1846
    %v2135 = vunpack.c.l.b16 %v1847
    %v2136 = vunpack.c.l.b16 %v1848
    %v2137 = vunpack.c.l.b16 %v1849
    %v2138 = vunpack.c.l.b16 %v1850
    %v2139 = vunpack.c.l.b16 %v1851
    %v2140 = vunpack.c.l.b16 %v1852
    %v2141 = vunpack.c.l.b16 %v1853
    %v2142 = vunpack.c.l.b16 %v1854
    %v2143 = vunpack.c.l.b16 %v1855
    %v2144 = vunpack.c.l.b16 %v1856
    %v2145 = vunpack.c.l.b16 %v1857
    %v2146 = vunpack.c.l.b16 %v1858
    %v2147 = vunpack.c.l.b16 %v1859
    %v2148 = vunpack.c.l.b16 %v1860
    %v2149 = vunpack.c.l.b16 %v1861
    %v2150 = vunpack.c.l.b16 %v1862
    %v2151 = vunpack.c.l.b16 %v1863
    %v2152 = vunpack.c.l.b16 %v1864
    %v2153 = vunpack.c.l.b16 %v1865
    %v2154 = vunpack.c.l.b16 %v1866
    %v2155 = vunpack.c.l.b16 %v1867
    %v2156 = vunpack.c.l.b16 %v1868
    %v2157 = vunpack.c.l.b16 %v1869
    %v2158 = vunpack.c.l.b16 %v1870
    %v2159 = vunpack.c.l.b16 %v1871
    %v2160 = vunpack.c.l.b16 %v1872
    %v2161 = vunpack.c.l.b16 %v1873
    %v2162 = vunpack.c.l.b16 %v1874
    %v2163 = vunpack.c.l.b16 %v1875
    %v2164 = vunpack.c.l.b16 %v1876
    %v2165 = vunpack.c.l.b16 %v1877
    %v2166 = vunpack.c.l.b16 %v1878
    %v2167 = vunpack.c.l.b16 %v1879
    %v2168 = vunpack.c.l.b16 %v1880
    %v2169 = vunpack.c.l.b16 %v1881
    %v2170 = vunpack.c.l.b16 %v1882
    %v2171 = vunpack.c.l.b16 %v1883
    %v2172 = vunpack.c.l.b16 %v1884
    %v2173 = vunpack.c.l.b16 %v1885
    %v2174 = vunpack.c.l.b16 %v1886
    %v2175 = vunpack.c.l.b16 %v1887
    %v2176 = vunpack.c.l.b16 %v1888
    %v2177 = vunpack.c.l.b16 %v1889
    %v2178 = vunpack.c.l.b16 %v1890
    %v2179 = vunpack.c.l.b16 %v1891
    %v2180 = vunpack.c.l.b16 %v1892
    %v2181 = vunpack.c.l.b16 %v1893
    %v2182 = vunpack.c.l.b16 %v1894
    %v2183 = vunpack.c.l.b16 %v1895
    %v2184 = vunpack.c.l.b16 %v1896
    %v2185 = vunpack.c.l.b16 %v1897
    %v2186 = vunpack.c.l.b16 %v1898
    %v2187 = vunpack.c.l.b16 %v1899
    %v2188 = vunpack.c.l.b16 %v1900
    %v2189 = vunpack.c.l.b16 %v1901
    %v2190 = vunpack.c.l.b16 %v1902
    %v2191 = vunpack.c.l.b16 %v1903
    %v2192 = vunpack.c.l.b16 %v1904
    %v2193 = vunpack.c.l.b16 %v1905
    %v2194 = vunpack.c.l.b16 %v1906
    %v2195 = vunpack.c.l.b16 %v1907
    %v2196 = vunpack.c.l.b16 %v1908
    %v2197 = vunpack.c.l.b16 %v1909
    %v2198 = vunpack.c.l.b16 %v1910
    %v2199 = vunpack.c.l.b16 %v1911
    %v2200 = vunpack.c.l.b16 %v1912
    %v2201 = vunpack.c.l.b16 %v1913
    %v2202 = vunpack.c.l.b16 %v1914
    %v2203 = vunpack.c.l.b16 %v1915
    %v2204 = vunpack.c.l.b16 %v1916
    %v2205 = vunpack.c.l.b16 %v1917
    %v2206 = vunpack.c.l.b16 %v1918
    %v2207 = vunpack.c.l.b16 %v1919
    %v2208 = vunpack.c.l.b16 %v1920
    %v2209 = vunpack.c.l.b16 %v1921
    %v2210 = vunpack.c.l.b16 %v1922
    %v2211 = vunpack.c.l.b16 %v1923
    %v2212 = vunpack.c.l.b16 %v1924
    %v2213 = vunpack.c.l.b16 %v1925
    %v2214 = vunpack.c.l.b16 %v1926
    %v2215 = vunpack.c.l.b16 %v1927
    %v2216 = vunpack.c.l.b16 %v1928
    %v2217 = vunpack.c.l.b16 %v1929
    %v2218 = vunpack.c.l.b16 %v1930
    %v2219 = vunpack.c.l.b16 %v1931
    %v2220 = vunpack.c.l.b16 %v1932
    %v2221 = vunpack.c.l.b16 %v1933
    %v2222 = vunpack.c.l.b16 %v1934
    %v2223 = vunpack.c.l.b16 %v1935
    %v2224 = vunpack.c.l.b16 %v1936
    %v2225 = vunpack.c.l.b16 %v1937
    %v2226 = vpack.c.b16 %v2083, %v2082
    %v2227 = vpack.c.b16 %v2085, %v2084
    %v2228 = vpack.c.b16 %v2087, %v2086
    %v2229 = vpack.c.b16 %v2089, %v2088
    %v2230 = vpack.c.b16 %v2091, %v2090
    %v2231 = vpack.c.b16 %v2093, %v2092
    %v2232 = vpack.c.b16 %v2095, %v2094
    %v2233 = vpack.c.b16 %v2097, %v2096
    %v2234 = vpack.c.b16 %v2099, %v2098
    %v2235 = vpack.c.b16 %v2101, %v2100
    %v2236 = vpack.c.b16 %v2103, %v2102
    %v2237 = vpack.c.b16 %v2105, %v2104
    %v2238 = vpack.c.b16 %v2107, %v2106
    %v2239 = vpack.c.b16 %v2109, %v2108
    %v2240 = vpack.c.b16 %v2111, %v2110
    %v2241 = vpack.c.b16 %v2113, %v2112
    %v2242 = vpack.c.b16 %v2115, %v2114
    %v2243 = vpack.c.b16 %v2117, %v2116
    %v2244 = vpack.c.b16 %v2119, %v2118
    %v2245 = vpack.c.b16 %v2121, %v2120
    %v2246 = vpack.c.b16 %v2123, %v2122
    %v2247 = vpack.c.b16 %v2125, %v2124
    %v2248 = vpack.c.b16 %v2127, %v2126
    %v2249 = vpack.c.b16 %v2129, %v2128
    %v2250 = vpack.c.b16 %v2131, %v2130
    %v2251 = vpack.c.b16 %v2133, %v2132
    %v2252 = vpack.c.b16 %v2135, %v2134
    %v2253 = vpack.c.b16 %v2137, %v2136
    %v2254 = vpack.c.b16 %v2139, %v2138
    %v2255 = vpack.c.b16 %v2141, %v2140
    %v2256 = vpack.c.b16 %v2143, %v2142
    %v2257 = vpack.c.b16 %v2145, %v2144
    %v2258 = vpack.c.b16 %v2147, %v2146
    %v2259 = vpack.c.b16 %v2149, %v2148
    %v2260 = vpack.c.b16 %v2151, %v2150
    %v2261 = vpack.c.b16 %v2153, %v2152
    %v2262 = vpack.c.b16 %v2155, %v2154
    %v2263 = vpack.c.b16 %v2157, %v2156
    %v2264 = vpack.c.b16 %v2159, %v2158
    %v2265 = vpack.c.b16 %v2161, %v2160
    %v2266 = vpack.c.b16 %v2163, %v2162
    %v2267 = vpack.c.b16 %v2165, %v2164
    %v2268 = vpack.c.b16 %v2167, %v2166
    %v2269 = vpack.c.b16 %v2169, %v2168
    %v2270 = vpack.c.b16 %v2171, %v2170
    %v2271 = vpack.c.b16 %v2173, %v2172
    %v2272 = vpack.c.b16 %v2175, %v2174
    %v2273 = vpack.c.b16 %v2177, %v2176
    %v2274 = vpack.c.b16 %v2179, %v2178
    %v2275 = vpack.c.b16 %v2181, %v2180
    %v2276 = vpack.c.b16 %v2183, %v2182
    %v2277 = vpack.c.b16 %v2185, %v2184
    %v2278 = vpack.c.b16 %v2187, %v2186
    %v2279 = vpack.c.b16 %v2189, %v2188
    %v2280 = vpack.c.b16 %v2191, %v2190
    %v2281 = vpack.c.b16 %v2193, %v2192
    %v2282 = vpack.c.b16 %v2195, %v2194
    %v2283 = vpack.c.b16 %v2197, %v2196
    %v2284 = vpack.c.b16 %v2199, %v2198
    %v2285 = vpack.c.b16 %v2201, %v2200
    %v2286 = vpack.c.b16 %v2203, %v2202
    %v2287 = vpack.c.b16 %v2205, %v2204
    %v2288 = vpack.c.b16 %v2207, %v2206
    %v2289 = vpack.c.b16 %v2209, %v2208
    %v2290 = vpack.c.b16 %v2211, %v2210
    %v2291 = vpack.c.b16 %v2213, %v2212
    %v2292 = vpack.c.b16 %v2215, %v2214
    %v2293 = vpack.c.b16 %v2217, %v2216
    %v2294 = vpack.c.b16 %v2219, %v2218
    %v2295 = vpack.c.b16 %v2221, %v2220
    %v2296 = vpack.c.b16 %v2223, %v2222
    %v2297 = vpack.c.b16 %v2225, %v2224
    %2370 = vmatprep.subr.bf16.mxu0 0
    %2371 = vmatpush1.bf16.msra.mxu0 %v2226
    %2372 = vmatprep.subr.bf16.mxu0 0
    %2373 = vmatpush1.bf16.msra.mxu0 %v2227
    %2374 = vmatprep.subr.bf16.mxu0 0
    %2375 = vmatpush1.bf16.msra.mxu0 %v2228
    %2376 = vmatprep.subr.bf16.mxu0 0
    %2377 = vmatpush1.bf16.msra.mxu0 %v2229
    %2378 = vmatprep.subr.bf16.mxu0 0
    %2379 = vmatpush1.bf16.msra.mxu0 %v2230
    %2380 = vmatprep.subr.bf16.mxu0 0
    %2381 = vmatpush1.bf16.msra.mxu0 %v2231
    %2382 = vmatprep.subr.bf16.mxu0 0
    %2383 = vmatpush1.bf16.msra.mxu0 %v2232
    %2384 = vmatprep.subr.bf16.mxu0 0
    %2385 = vmatpush1.bf16.msra.mxu0 %v2233
    %2386 = vmatprep.subr.bf16.mxu0 0
    %2387 = vmatpush1.bf16.msra.mxu0 %v2234
    %2388 = vmatprep.subr.bf16.mxu0 0
    %2389 = vmatpush1.bf16.msra.mxu0 %v2235
    %2390 = vmatprep.subr.bf16.mxu0 0
    %2391 = vmatpush1.bf16.msra.mxu0 %v2236
    %2392 = vmatprep.subr.bf16.mxu0 0
    %2393 = vmatpush1.bf16.msra.mxu0 %v2237
    %2394 = vmatprep.subr.bf16.mxu0 0
    %2395 = vmatpush1.bf16.msra.mxu0 %v2238
    %2396 = vmatprep.subr.bf16.mxu0 0
    %2397 = vmatpush1.bf16.msra.mxu0 %v2239
    %2398 = vmatprep.subr.bf16.mxu0 0
    %2399 = vmatpush1.bf16.msra.mxu0 %v2240
    %2400 = vmatprep.subr.bf16.mxu0 0
    %2401 = vmatpush1.bf16.msra.mxu0 %v2241
    %2402 = vmatprep.mubr.bf16.mxu0 %v1758
    %2403 = vmatmul.mubr.bf16.gmra.mrb[0].mxu0 %v1757
    %v2404 = vpop.f32.mrb[0].mxu0
    %v2405 = vadd.f32 0.0, %v2404
    %v2406 = vpop.f32.mrb[0].mxu0
    %v2407 = vpop.f32.mrb[0].mxu0
    %v2408 = vadd.f32 0.0, %v2407
    %v2409 = vpop.f32.mrb[0].mxu0
    %2410 = vmatprep.mubr.bf16.mxu0 %v1767
    %2411 = vmatmul.mubr.bf16.gmra.mrb[0].mxu0 %v1766
    %v2412 = vpop.f32.mrb[0].mxu0
    %v2413 = vadd.f32 0.0, %v2412
    %v2414 = vpop.f32.mrb[0].mxu0
    %v2415 = vpop.f32.mrb[0].mxu0
    %v2416 = vadd.f32 0.0, %v2415
    %v2417 = vpop.f32.mrb[0].mxu0
    %2418 = vmatprep.mubr.bf16.mxu0 %v1776
    %2419 = vmatmul.mubr.bf16.gmra.mrb[0].mxu0 %v1775
    %v2420 = vpop.f32.mrb[0].mxu0
    %v2421 = vadd.f32 0.0, %v2420
    %v2422 = vpop.f32.mrb[0].mxu0
    %v2423 = vpop.f32.mrb[0].mxu0
    %v2424 = vadd.f32 0.0, %v2423
    %v2425 = vpop.f32.mrb[0].mxu0
    %2426 = vmatprep.mubr.bf16.mxu0 %v1785
    %2427 = vmatmul.mubr.bf16.gmra.mrb[0].mxu0 %v1784
    %v2428 = vpop.f32.mrb[0].mxu0
    %v2429 = vadd.f32 0.0, %v2428
    %v2430 = vpop.f32.mrb[0].mxu0
    %v2431 = vpop.f32.mrb[0].mxu0
    %v2432 = vadd.f32 0.0, %v2431
    %v2433 = vpop.f32.mrb[0].mxu0
    %2434 = vdwg.mxu0
    %2435 = vmatprep.subr.bf16.mxu0 0
    %2436 = vmatpush1.bf16.msra.mxu0 %v2242
    %2437 = vmatprep.subr.bf16.mxu0 0
    %2438 = vmatpush1.bf16.msra.mxu0 %v2243
    %2439 = vmatprep.subr.bf16.mxu0 0
    %2440 = vmatpush1.bf16.msra.mxu0 %v2244
    %2441 = vmatprep.subr.bf16.mxu0 0
    %2442 = vmatpush1.bf16.msra.mxu0 %v2245
    %2443 = vmatprep.subr.bf16.mxu0 0
    %2444 = vmatpush1.bf16.msra.mxu0 %v2246
    %2445 = vmatprep.subr.bf16.mxu0 0
    %2446 = vmatpush1.bf16.msra.mxu0 %v2247
    %2447 = vmatprep.subr.bf16.mxu0 0
    %2448 = vmatpush1.bf16.msra.mxu0 %v2248
    %2449 = vmatprep.subr.bf16.mxu0 0
    %2450 = vmatpush1.bf16.msra.mxu0 %v2249
    %2451 = vmatprep.subr.bf16.mxu0 0
    %2452 = vmatpush1.bf16.msra.mxu0 %v2250
    %2453 = vmatprep.subr.bf16.mxu0 0
    %2454 = vmatpush1.bf16.msra.mxu0 %v2251
    %2455 = vmatprep.subr.bf16.mxu0 0
    %2456 = vmatpush1.bf16.msra.mxu0 %v2252
    %2457 = vmatprep.subr.bf16.mxu0 0
    %2458 = vmatpush1.bf16.msra.mxu0 %v2253
    %2459 = vmatprep.subr.bf16.mxu0 0
    %2460 = vmatpush1.bf16.msra.mxu0 %v2254
    %2461 = vmatprep.subr.bf16.mxu0 0
    %2462 = vmatpush1.bf16.msra.mxu0 %v2255
    %2463 = vmatprep.subr.bf16.mxu0 0
    %2464 = vmatpush1.bf16.msra.mxu0 %v2256
    %2465 = vmatprep.subr.bf16.mxu0 0
    %2466 = vmatpush1.bf16.msra.mxu0 %v2257
    %2467 = vmatprep.mubr.bf16.mxu0 %v1760
    %2468 = vmatmul.mubr.bf16.gmra.mrb[0].mxu0 %v1759
    %v2469 = vpop.f32.mrb[0].mxu0
    %v2470 = vadd.f32 %v2405, %v2469
    %v2471 = vpop.f32.mrb[0].mxu0
    %v2472 = vpop.f32.mrb[0].mxu0
    %v2473 = vadd.f32 %v2408, %v2472
    %v2474 = vpop.f32.mrb[0].mxu0
    %2475 = vmatprep.mubr.bf16.mxu0 %v1769
    %2476 = vmatmul.mubr.bf16.gmra.mrb[0].mxu0 %v1768
    %v2477 = vpop.f32.mrb[0].mxu0
    %v2478 = vadd.f32 %v2413, %v2477
    %v2479 = vpop.f32.mrb[0].mxu0
    %v2480 = vpop.f32.mrb[0].mxu0
    %v2481 = vadd.f32 %v2416, %v2480
    %v2482 = vpop.f32.mrb[0].mxu0
    %2483 = vmatprep.mubr.bf16.mxu0 %v1778
    %2484 = vmatmul.mubr.bf16.gmra.mrb[0].mxu0 %v1777
    %v2485 = vpop.f32.mrb[0].mxu0
    %v2486 = vadd.f32 %v2421, %v2485
    %v2487 = vpop.f32.mrb[0].mxu0
    %v2488 = vpop.f32.mrb[0].mxu0
    %v2489 = vadd.f32 %v2424, %v2488
    %v2490 = vpop.f32.mrb[0].mxu0
    %2491 = vmatprep.mubr.bf16.mxu0 %v1787
    %2492 = vmatmul.mubr.bf16.gmra.mrb[0].mxu0 %v1786
    %v2493 = vpop.f32.mrb[0].mxu0
    %v2494 = vadd.f32 %v2429, %v2493
    %v2495 = vpop.f32.mrb[0].mxu0
    %v2496 = vpop.f32.mrb[0].mxu0
    %v2497 = vadd.f32 %v2432, %v2496
    %v2498 = vpop.f32.mrb[0].mxu0
    %2499 = vdwg.mxu0
    %2500 = vmatprep.subr.bf16.mxu0 0
    %2501 = vmatpush1.bf16.msra.mxu0 %v2258
    %2502 = vmatprep.subr.bf16.mxu0 0
    %2503 = vmatpush1.bf16.msra.mxu0 %v2259
    %2504 = vmatprep.subr.bf16.mxu0 0
    %2505 = vmatpush1.bf16.msra.mxu0 %v2260
    %2506 = vmatprep.subr.bf16.mxu0 0
    %2507 = vmatpush1.bf16.msra.mxu0 %v2261
    %2508 = vmatprep.subr.bf16.mxu0 0
    %2509 = vmatpush1.bf16.msra.mxu0 %v2262
    %2510 = vmatprep.subr.bf16.mxu0 0
    %2511 = vmatpush1.bf16.msra.mxu0 %v2263
    %2512 = vmatprep.subr.bf16.mxu0 0
    %2513 = vmatpush1.bf16.msra.mxu0 %v2264
    %2514 = vmatprep.subr.bf16.mxu0 0
    %2515 = vmatpush1.bf16.msra.mxu0 %v2265
    %2516 = vmatprep.subr.bf16.mxu0 0
    %2517 = vmatpush1.bf16.msra.mxu0 %v2266
    %2518 = vmatprep.subr.bf16.mxu0 0
    %2519 = vmatpush1.bf16.msra.mxu0 %v2267
    %2520 = vmatprep.subr.bf16.mxu0 0
    %2521 = vmatpush1.bf16.msra.mxu0 %v2268
    %2522 = vmatprep.subr.bf16.mxu0 0
    %2523 = vmatpush1.bf16.msra.mxu0 %v2269
    %2524 = vmatprep.subr.bf16.mxu0 0
    %2525 = vmatpush1.bf16.msra.mxu0 %v2270
    %2526 = vmatprep.subr.bf16.mxu0 0
    %2527 = vmatpush1.bf16.msra.mxu0 %v2271
    %2528 = vmatprep.subr.bf16.mxu0 0
    %2529 = vmatpush1.bf16.msra.mxu0 %v2272
    %2530 = vmatprep.subr.bf16.mxu0 0
    %2531 = vmatpush1.bf16.msra.mxu0 %v2273
    %2532 = vmatprep.mubr.bf16.mxu0 %v1762
    %2533 = vmatmul.mubr.bf16.gmra.mrb[0].mxu0 %v1761
    %v2534 = vpop.f32.mrb[0].mxu0
    %v2535 = vadd.f32 %v2470, %v2534
    %v2536 = vpop.f32.mrb[0].mxu0
    %v2537 = vpop.f32.mrb[0].mxu0
    %v2538 = vadd.f32 %v2473, %v2537
    %v2539 = vpop.f32.mrb[0].mxu0
    %2540 = vmatprep.mubr.bf16.mxu0 %v1771
    %2541 = vmatmul.mubr.bf16.gmra.mrb[0].mxu0 %v1770
    %v2542 = vpop.f32.mrb[0].mxu0
    %v2543 = vadd.f32 %v2478, %v2542
    %v2544 = vpop.f32.mrb[0].mxu0
    %v2545 = vpop.f32.mrb[0].mxu0
    %v2546 = vadd.f32 %v2481, %v2545
    %v2547 = vpop.f32.mrb[0].mxu0
    %2548 = vmatprep.mubr.bf16.mxu0 %v1780
    %2549 = vmatmul.mubr.bf16.gmra.mrb[0].mxu0 %v1779
    %v2550 = vpop.f32.mrb[0].mxu0
    %v2551 = vadd.f32 %v2486, %v2550
    %v2552 = vpop.f32.mrb[0].mxu0
    %v2553 = vpop.f32.mrb[0].mxu0
    %v2554 = vadd.f32 %v2489, %v2553
    %v2555 = vpop.f32.mrb[0].mxu0
    %2556 = vmatprep.mubr.bf16.mxu0 %v1789
    %2557 = vmatmul.mubr.bf16.gmra.mrb[0].mxu0 %v1788
    %v2558 = vpop.f32.mrb[0].mxu0
    %v2559 = vadd.f32 %v2494, %v2558
    %v2560 = vpop.f32.mrb[0].mxu0
    %v2561 = vpop.f32.mrb[0].mxu0
    %v2562 = vadd.f32 %v2497, %v2561
    %v2563 = vpop.f32.mrb[0].mxu0
    %2564 = vdwg.mxu0
    %2565 = vmatprep.subr.bf16.mxu0 0
    %2566 = vmatpush1.bf16.msra.mxu0 %v2274
    %2567 = vmatprep.subr.bf16.mxu0 0
    %2568 = vmatpush1.bf16.msra.mxu0 %v2275
    %2569 = vmatprep.subr.bf16.mxu0 0
    %2570 = vmatpush1.bf16.msra.mxu0 %v2276
    %2571 = vmatprep.subr.bf16.mxu0 0
    %2572 = vmatpush1.bf16.msra.mxu0 %v2277
    %2573 = vmatprep.subr.bf16.mxu0 0
    %2574 = vmatpush1.bf16.msra.mxu0 %v2278
    %2575 = vmatprep.subr.bf16.mxu0 0
    %2576 = vmatpush1.bf16.msra.mxu0 %v2279
    %2577 = vmatprep.subr.bf16.mxu0 0
    %2578 = vmatpush1.bf16.msra.mxu0 %v2280
    %2579 = vmatprep.subr.bf16.mxu0 0
    %2580 = vmatpush1.bf16.msra.mxu0 %v2281
    %2581 = vmatprep.subr.bf16.mxu0 0
    %2582 = vmatpush1.bf16.msra.mxu0 %v2282
    %2583 = vmatprep.subr.bf16.mxu0 0
    %2584 = vmatpush1.bf16.msra.mxu0 %v2283
    %2585 = vmatprep.subr.bf16.mxu0 0
    %2586 = vmatpush1.bf16.msra.mxu0 %v2284
    %2587 = vmatprep.subr.bf16.mxu0 0
    %2588 = vmatpush1.bf16.msra.mxu0 %v2285
    %2589 = vmatprep.subr.bf16.mxu0 0
    %2590 = vmatpush1.bf16.msra.mxu0 %v2286
    %2591 = vmatprep.subr.bf16.mxu0 0
    %2592 = vmatpush1.bf16.msra.mxu0 %v2287
    %2593 = vmatprep.subr.bf16.mxu0 0
    %2594 = vmatpush1.bf16.msra.mxu0 %v2288
    %2595 = vmatprep.subr.bf16.mxu0 0
    %2596 = vmatpush1.bf16.msra.mxu0 %v2289
    %2597 = vmatprep.mubr.bf16.mxu0 %v1764
    %2598 = vmatmul.mubr.bf16.gmra.mrb[0].mxu0 %v1763
    %v2599 = vpop.f32.mrb[0].mxu0
    %v2600 = vadd.f32 %v2535, %v2599
    %v2601 = vpop.f32.mrb[0].mxu0
    %v2602 = vpop.f32.mrb[0].mxu0
    %v2603 = vadd.f32 %v2538, %v2602
    %v2604 = vpop.f32.mrb[0].mxu0
    %2605 = vmatprep.mubr.bf16.mxu0 %v1773
    %2606 = vmatmul.mubr.bf16.gmra.mrb[0].mxu0 %v1772
    %v2607 = vpop.f32.mrb[0].mxu0
    %v2608 = vadd.f32 %v2543, %v2607
    %v2609 = vpop.f32.mrb[0].mxu0
    %v2610 = vpop.f32.mrb[0].mxu0
    %v2611 = vadd.f32 %v2546, %v2610
    %v2612 = vpop.f32.mrb[0].mxu0
    %2613 = vmatprep.mubr.bf16.mxu0 %v1782
    %2614 = vmatmul.mubr.bf16.gmra.mrb[0].mxu0 %v1781
    %v2615 = vpop.f32.mrb[0].mxu0
    %v2616 = vadd.f32 %v2551, %v2615
    %v2617 = vpop.f32.mrb[0].mxu0
    %v2618 = vpop.f32.mrb[0].mxu0
    %v2619 = vadd.f32 %v2554, %v2618
    %v2620 = vpop.f32.mrb[0].mxu0
    %2621 = vmatprep.mubr.bf16.mxu0 %v1791
    %2622 = vmatmul.mubr.bf16.gmra.mrb[0].mxu0 %v1790
    %v2623 = vpop.f32.mrb[0].mxu0
    %v2624 = vadd.f32 %v2559, %v2623
    %v2625 = vpop.f32.mrb[0].mxu0
    %v2626 = vpop.f32.mrb[0].mxu0
    %v2627 = vadd.f32 %v2562, %v2626
    %v2628 = vpop.f32.mrb[0].mxu0
    %2629 = vdwg.mxu0
    %2630 = vmatprep.subr.bf16.mxu0 0
    %2631 = vmatpush1.bf16.msra.mxu0 %v2290
    %2632 = vmatprep.subr.bf16.mxu0 0
    %2633 = vmatpush1.bf16.msra.mxu0 %v2291
    %2634 = vmatprep.subr.bf16.mxu0 0
    %2635 = vmatpush1.bf16.msra.mxu0 %v2292
    %2636 = vmatprep.subr.bf16.mxu0 0
    %2637 = vmatpush1.bf16.msra.mxu0 %v2293
    %2638 = vmatprep.subr.bf16.mxu0 0
    %2639 = vmatpush1.bf16.msra.mxu0 %v2294
    %2640 = vmatprep.subr.bf16.mxu0 0
    %2641 = vmatpush1.bf16.msra.mxu0 %v2295
    %2642 = vmatprep.subr.bf16.mxu0 0
    %2643 = vmatpush1.bf16.msra.mxu0 %v2296
    %2644 = vmatprep.subr.bf16.mxu0 0
    %2645 = vmatpush1.bf16.msra.mxu0 %v2297
    %2646 = vmatprep.subr.bf16.mxu0 0
    %2647 = vmatpush1.bf16.msra.mxu0 0
    %2648 = vmatprep.subr.bf16.mxu0 0
    %2649 = vmatpush1.bf16.msra.mxu0 0
    %2650 = vmatprep.subr.bf16.mxu0 0
    %2651 = vmatpush1.bf16.msra.mxu0 0
    %2652 = vmatprep.subr.bf16.mxu0 0
    %2653 = vmatpush1.bf16.msra.mxu0 0
    %2654 = vmatprep.subr.bf16.mxu0 0
    %2655 = vmatpush1.bf16.msra.mxu0 0
    %2656 = vmatprep.subr.bf16.mxu0 0
    %2657 = vmatpush1.bf16.msra.mxu0 0
    %2658 = vmatprep.subr.bf16.mxu0 0
    %2659 = vmatpush1.bf16.msra.mxu0 0
    %2660 = vmatprep.subr.bf16.mxu0 0
    %2661 = vmatpush1.bf16.msra.mxu0 0
    %2662 = vmatprep.mubr.bf16.mxu0 0
    %2663 = vmatmul.mubr.bf16.gmra.mrb[0].mxu0 %v1765
    %v2664 = vpop.f32.mrb[0].mxu0
    %v2665 = vadd.f32 %v2600, %v2664
    %v2666 = vpop.f32.mrb[0].mxu0
    %v2667 = vpop.f32.mrb[0].mxu0
    %v2668 = vadd.f32 %v2603, %v2667
    %v2669 = vpop.f32.mrb[0].mxu0
    %2670 = vmatprep.mubr.bf16.mxu0 0
    %2671 = vmatmul.mubr.bf16.gmra.mrb[0].mxu0 %v1774
    %v2672 = vpop.f32.mrb[0].mxu0
    %v2673 = vadd.f32 %v2608, %v2672
    %v2674 = vpop.f32.mrb[0].mxu0
    %v2675 = vpop.f32.mrb[0].mxu0
    %v2676 = vadd.f32 %v2611, %v2675
    %v2677 = vpop.f32.mrb[0].mxu0
    %2678 = vmatprep.mubr.bf16.mxu0 0
    %2679 = vmatmul.mubr.bf16.gmra.mrb[0].mxu0 %v1783
    %v2680 = vpop.f32.mrb[0].mxu0
    %v2681 = vadd.f32 %v2616, %v2680
    %v2682 = vpop.f32.mrb[0].mxu0
    %v2683 = vpop.f32.mrb[0].mxu0
    %v2684 = vadd.f32 %v2619, %v2683
    %v2685 = vpop.f32.mrb[0].mxu0
    %2686 = vmatprep.mubr.bf16.mxu0 0
    %2687 = vmatmul.mubr.bf16.gmra.mrb[0].mxu0 %v1792
    %v2688 = vpop.f32.mrb[0].mxu0
    %v2689 = vadd.f32 %v2624, %v2688
    %v2690 = vpop.f32.mrb[0].mxu0
    %v2691 = vpop.f32.mrb[0].mxu0
    %v2692 = vadd.f32 %v2627, %v2691
    %v2693 = vpop.f32.mrb[0].mxu0
    %2694 = vdwg.mxu0
    %v2695 = vadd.f32 %v2665, %v2668
    %v2696 = vadd.f32 %v2695, %v2673
    %v2697 = vadd.f32 %v2696, %v2676
    %v2698 = vadd.f32 %v2697, %v2681
    %v2699 = vadd.f32 %v2698, %v2684
    %v2700 = vadd.f32 %v2699, %v2689
    %v2701 = vadd.f32 %v2700, %v2692
    %v2702 = vrot.slane %v2701, 4
    %v2703 = vadd.f32 %v2701, %v2702
    %v2704 = vrot.slane %v2703, 2
    %v2705 = vadd.f32 %v2703, %v2704
    %v2706 = vrot.slane %v2705, 1
    %v2707 = vadd.f32 %v2705, %v2706
    %v2708 = vmul.f32 %v2665, %v2665
    %v2709 = vmul.f32 %v2668, %v2668
    %v2710 = vmul.f32 %v2673, %v2673
    %v2711 = vmul.f32 %v2676, %v2676
    %v2712 = vmul.f32 %v2681, %v2681
    %v2713 = vmul.f32 %v2684, %v2684
    %v2714 = vmul.f32 %v2689, %v2689
    %v2715 = vmul.f32 %v2692, %v2692
    %v2716 = vadd.f32 %v2708, %v2709
    %v2717 = vadd.f32 %v2716, %v2710
    %v2718 = vadd.f32 %v2717, %v2711
    %v2719 = vadd.f32 %v2718, %v2712
    %v2720 = vadd.f32 %v2719, %v2713
    %v2721 = vadd.f32 %v2720, %v2714
    %v2722 = vadd.f32 %v2721, %v2715
    %v2723 = vrot.slane %v2722, 4
    %v2724 = vadd.f32 %v2722, %v2723
    %v2725 = vrot.slane %v2724, 2
    %v2726 = vadd.f32 %v2724, %v2725
    %v2727 = vrot.slane %v2726, 1
    %v2728 = vadd.f32 %v2726, %v2727
    %v2729 = vmul.f32 %v2707, 0.015625
    %v2730 = vmul.f32 %v2728, 0.015625
    %v2731 = vmul.f32 %v2729, %v2729
    %v2732 = vsub.f32 %v2730, %v2731
    %v2733 = vsub.f32 %v2665, %v2729
    %v2734 = vsub.f32 %v2668, %v2729
    %v2735 = vsub.f32 %v2673, %v2729
    %v2736 = vsub.f32 %v2676, %v2729
    %v2737 = vsub.f32 %v2681, %v2729
    %v2738 = vsub.f32 %v2684, %v2729
    %v2739 = vsub.f32 %v2689, %v2729
    %v2740 = vsub.f32 %v2692, %v2729
    %v2741 = vadd.f32 %v2732, 1e-05
    %v2742 = vrsqrt.pop %v2741
    %v2743 = vmul.f32 %v2733, %v2742
    %v2744 = vmul.f32 %v2734, %v2742
    %v2745 = vmul.f32 %v2735, %v2742
    %v2746 = vmul.f32 %v2736, %v2742
    %v2747 = vmul.f32 %v2737, %v2742
    %v2748 = vmul.f32 %v2738, %v2742
    %v2749 = vmul.f32 %v2739, %v2742
    %v2750 = vmul.f32 %v2740, %v2742
    %s2751 = scalar_lea.vmem [#allocation8], 1
    %v2752 = vld [vmem:[%s2751] sm:$0x1]
    %v2754 = vlaneseq
    %v2755 = vshrl.u32 %v2754, 7
    %v2756 = vsub.s32 0, %v2755
    %v2757 = vrot.slane %v2752, %v2756
    %v2759 = vmul.f32 %v2757, %v2743
    %v2760 = vmul.f32 %v2757, %v2744
    %v2761 = vmul.f32 %v2757, %v2745
    %v2762 = vmul.f32 %v2757, %v2746
    %v2763 = vmul.f32 %v2757, %v2747
    %v2764 = vmul.f32 %v2757, %v2748
    %v2765 = vmul.f32 %v2757, %v2749
    %v2766 = vmul.f32 %v2757, %v2750
    %s2767 = scalar_lea.vmem [#allocation10], 1
    %v2768 = vld [vmem:[%s2767] sm:$0x1]
    %v2770 = vlaneseq
    %v2771 = vshrl.u32 %v2770, 7
    %v2772 = vsub.s32 0, %v2771
    %v2773 = vrot.slane %v2768, %v2772
    %v2775 = vadd.f32 %v2759, %v2773
    %v2776 = vadd.f32 %v2760, %v2773
    %v2777 = vadd.f32 %v2761, %v2773
    %v2778 = vadd.f32 %v2762, %v2773
    %v2779 = vadd.f32 %v2763, %v2773
    %v2780 = vadd.f32 %v2764, %v2773
    %v2781 = vadd.f32 %v2765, %v2773
    %v2782 = vadd.f32 %v2766, %v2773
    %v2783 = vmax.f32 %v2775, 0.0
    %v2784 = vmax.f32 %v2776, 0.0
    %v2785 = vmax.f32 %v2777, 0.0
    %v2786 = vmax.f32 %v2778, 0.0
    %v2787 = vmax.f32 %v2779, 0.0
    %v2788 = vmax.f32 %v2780, 0.0
    %v2789 = vmax.f32 %v2781, 0.0
    %v2790 = vmax.f32 %v2782, 0.0
    %v2791 = vrot.slane %v2783, 7
    %v2792 = vrot.slane %v2784, 7
    %v2793 = vrot.slane %v2785, 7
    %v2794 = vrot.slane %v2786, 7
    %v2795 = vrot.slane %v2787, 7
    %v2796 = vrot.slane %v2788, 7
    %v2797 = vrot.slane %v2789, 7
    %v2798 = vrot.slane %v2790, 7
    %v2799 = vsel %vm540, %v2797, %v2798
    %v2800 = vsel %vm540, %v2796, %v2797
    %v2801 = vsel %vm540, %v2795, %v2796
    %v2802 = vsel %vm540, %v2794, %v2795
    %v2803 = vsel %vm540, %v2793, %v2794
    %v2804 = vsel %vm540, %v2792, %v2793
    %v2805 = vsel %vm540, %v2791, %v2792
    %v2806 = vsel %vm540, %v2798, %v2791
    %v2807 = vmul.f32 %v2799, %v142
    %v2808 = vmul.f32 %v2806, %v147
    %v2809 = vmul.f32 %v2805, %v152
    %v2810 = vmul.f32 %v2804, %v157
    %v2811 = vmul.f32 %v2803, %v162
    %v2812 = vmul.f32 %v2802, %v167
    %v2813 = vmul.f32 %v2801, %v172
    %v2814 = vmul.f32 %v2800, %v177
    %v2815 = vmul.f32 %v2790, %v191
    %v2816 = vmul.f32 %v2783, %v196
    %v2817 = vmul.f32 %v2784, %v201
    %v2818 = vmul.f32 %v2785, %v206
    %v2819 = vmul.f32 %v2786, %v211
    %v2820 = vmul.f32 %v2787, %v216
    %v2821 = vmul.f32 %v2788, %v221
    %v2822 = vmul.f32 %v2789, %v226
    %v2823 = vrot.slane %v2783, 1
    %v2824 = vrot.slane %v2784, 1
    %v2825 = vrot.slane %v2785, 1
    %v2826 = vrot.slane %v2786, 1
    %v2827 = vrot.slane %v2787, 1
    %v2828 = vrot.slane %v2788, 1
    %v2829 = vrot.slane %v2789, 1
    %v2830 = vrot.slane %v2790, 1
    %v2831 = vsel %vm573, %v2829, %v2830
    %v2832 = vsel %vm573, %v2828, %v2829
    %v2833 = vsel %vm573, %v2827, %v2828
    %v2834 = vsel %vm573, %v2826, %v2827
    %v2835 = vsel %vm573, %v2825, %v2826
    %v2836 = vsel %vm573, %v2824, %v2825
    %v2837 = vsel %vm573, %v2823, %v2824
    %v2838 = vsel %vm573, %v2830, %v2823
    %v2839 = vmul.f32 %v2838, %v240
    %v2840 = vmul.f32 %v2837, %v245
    %v2841 = vmul.f32 %v2836, %v250
    %v2842 = vmul.f32 %v2835, %v255
    %v2843 = vmul.f32 %v2834, %v260
    %v2844 = vmul.f32 %v2833, %v265
    %v2845 = vmul.f32 %v2832, %v270
    %v2846 = vmul.f32 %v2831, %v275
    %v2847 = vmul.f32 %v2806, %v289
    %v2848 = vmul.f32 %v2805, %v294
    %v2849 = vmul.f32 %v2804, %v299
    %v2850 = vmul.f32 %v2803, %v304
    %v2851 = vmul.f32 %v2802, %v309
    %v2852 = vmul.f32 %v2801, %v314
    %v2853 = vmul.f32 %v2800, %v319
    %v2854 = vmul.f32 %v2799, %v324
    %v2855 = vmul.f32 %v2837, %v338
    %v2856 = vmul.f32 %v2836, %v343
    %v2857 = vmul.f32 %v2835, %v348
    %v2858 = vmul.f32 %v2834, %v353
    %v2859 = vmul.f32 %v2833, %v358
    %v2860 = vmul.f32 %v2832, %v363
    %v2861 = vmul.f32 %v2831, %v368
    %v2862 = vmul.f32 %v2838, %v373
    %v2863 = vmul.f32 %v2805, %v387
    %v2864 = vmul.f32 %v2804, %v392
    %v2865 = vmul.f32 %v2803, %v397
    %v2866 = vmul.f32 %v2802, %v402
    %v2867 = vmul.f32 %v2801, %v407
    %v2868 = vmul.f32 %v2800, %v412
    %v2869 = vmul.f32 %v2799, %v417
    %v2870 = vmul.f32 %v2806, %v422
    %v2871 = vmul.f32 %v2784, %v436
    %v2872 = vmul.f32 %v2785, %v441
    %v2873 = vmul.f32 %v2786, %v446
    %v2874 = vmul.f32 %v2787, %v451
    %v2875 = vmul.f32 %v2788, %v456
    %v2876 = vmul.f32 %v2789, %v461
    %v2877 = vmul.f32 %v2790, %v466
    %v2878 = vmul.f32 %v2783, %v471
    %v2879 = vmul.f32 %v2836, %v485
    %v2880 = vmul.f32 %v2835, %v490
    %v2881 = vmul.f32 %v2834, %v495
    %v2882 = vmul.f32 %v2833, %v500
    %v2883 = vmul.f32 %v2832, %v505
    %v2884 = vmul.f32 %v2831, %v510
    %v2885 = vmul.f32 %v2838, %v515
    %v2886 = vmul.f32 %v2837, %v520
    %v2887 = vpack.c.bf16 %v2808, %v2807
    %v2888 = vpack.c.bf16 %v2816, %v2815
    %v2889 = vpack.c.bf16 %v2840, %v2839
    %v2890 = vpack.c.bf16 %v2848, %v2847
    %v2891 = vpack.c.bf16 %v2784, %v2783
    %v2892 = vpack.c.bf16 %v2856, %v2855
    %v2893 = vpack.c.bf16 %v2864, %v2863
    %v2894 = vpack.c.bf16 %v2872, %v2871
    %v2895 = vpack.c.bf16 %v2880, %v2879
    %v2896 = vpack.c.bf16 %v2810, %v2809
    %v2897 = vpack.c.bf16 %v2818, %v2817
    %v2898 = vpack.c.bf16 %v2842, %v2841
    %v2899 = vpack.c.bf16 %v2850, %v2849
    %v2900 = vpack.c.bf16 %v2786, %v2785
    %v2901 = vpack.c.bf16 %v2858, %v2857
    %v2902 = vpack.c.bf16 %v2866, %v2865
    %v2903 = vpack.c.bf16 %v2874, %v2873
    %v2904 = vpack.c.bf16 %v2882, %v2881
    %v2905 = vpack.c.bf16 %v2812, %v2811
    %v2906 = vpack.c.bf16 %v2820, %v2819
    %v2907 = vpack.c.bf16 %v2844, %v2843
    %v2908 = vpack.c.bf16 %v2852, %v2851
    %v2909 = vpack.c.bf16 %v2788, %v2787
    %v2910 = vpack.c.bf16 %v2860, %v2859
    %v2911 = vpack.c.bf16 %v2868, %v2867
    %v2912 = vpack.c.bf16 %v2876, %v2875
    %v2913 = vpack.c.bf16 %v2884, %v2883
    %v2914 = vpack.c.bf16 %v2814, %v2813
    %v2915 = vpack.c.bf16 %v2822, %v2821
    %v2916 = vpack.c.bf16 %v2846, %v2845
    %v2917 = vpack.c.bf16 %v2854, %v2853
    %v2918 = vpack.c.bf16 %v2790, %v2789
    %v2919 = vpack.c.bf16 %v2862, %v2861
    %v2920 = vpack.c.bf16 %v2870, %v2869
    %v2921 = vpack.c.bf16 %v2878, %v2877
    %v2922 = vpack.c.bf16 %v2886, %v2885
    %s2923 = scalar_lea.vmem [#allocation5], 1152
    %v2924 = vld [vmem:[%s2923] sm:$0xf]
    %v2925 = vld [vmem:[%s2923 + $0x4] sm:$0xf]
    %v2926 = vld [vmem:[%s2923 + $0x8] sm:$0xf]
    %v2927 = vld [vmem:[%s2923 + $0xc] sm:$0xf]
    %v2928 = vld [vmem:[%s2923 + $0x10] sm:$0xf]
    %v2929 = vld [vmem:[%s2923 + $0x14] sm:$0xf]
    %v2930 = vld [vmem:[%s2923 + $0x18] sm:$0xf]
    %v2931 = vld [vmem:[%s2923 + $0x1c] sm:$0xf]
    %v2932 = vld [vmem:[%s2923 + $0x20] sm:$0xf]
    %v2933 = vld [vmem:[%s2923 + $0x24] sm:$0xf]
    %v2934 = vld [vmem:[%s2923 + $0x28] sm:$0xf]
    %v2935 = vld [vmem:[%s2923 + $0x2c] sm:$0xf]
    %v2936 = vld [vmem:[%s2923 + $0x30] sm:$0xf]
    %v2937 = vld [vmem:[%s2923 + $0x34] sm:$0xf]
    %v2938 = vld [vmem:[%s2923 + $0x38] sm:$0xf]
    %v2939 = vld [vmem:[%s2923 + $0x3c] sm:$0xf]
    %v2940 = vld [vmem:[%s2923 + $0x40] sm:$0xf]
    %v2941 = vld [vmem:[%s2923 + $0x44] sm:$0xf]
    %v2942 = vld [vmem:[%s2923 + $0x48] sm:$0xf]
    %v2943 = vld [vmem:[%s2923 + $0x4c] sm:$0xf]
    %v2944 = vld [vmem:[%s2923 + $0x50] sm:$0xf]
    %v2945 = vld [vmem:[%s2923 + $0x54] sm:$0xf]
    %v2946 = vld [vmem:[%s2923 + $0x58] sm:$0xf]
    %v2947 = vld [vmem:[%s2923 + $0x5c] sm:$0xf]
    %v2948 = vld [vmem:[%s2923 + $0x60] sm:$0xf]
    %v2949 = vld [vmem:[%s2923 + $0x64] sm:$0xf]
    %v2950 = vld [vmem:[%s2923 + $0x68] sm:$0xf]
    %v2951 = vld [vmem:[%s2923 + $0x6c] sm:$0xf]
    %v2952 = vld [vmem:[%s2923 + $0x70] sm:$0xf]
    %v2953 = vld [vmem:[%s2923 + $0x74] sm:$0xf]
    %v2954 = vld [vmem:[%s2923 + $0x78] sm:$0xf]
    %v2955 = vld [vmem:[%s2923 + $0x7c] sm:$0xf]
    %v2956 = vld [vmem:[%s2923 + $0x80] sm:$0xf]
    %v2957 = vld [vmem:[%s2923 + $0x84] sm:$0xf]
    %v2958 = vld [vmem:[%s2923 + $0x88] sm:$0xf]
    %v2959 = vld [vmem:[%s2923 + $0x8c] sm:$0xf]
    %v2960 = vld [vmem:[%s2923 + $0x90] sm:$0xf]
    %v2961 = vld [vmem:[%s2923 + $0x94] sm:$0xf]
    %v2962 = vld [vmem:[%s2923 + $0x98] sm:$0xf]
    %v2963 = vld [vmem:[%s2923 + $0x9c] sm:$0xf]
    %v2964 = vld [vmem:[%s2923 + $0xa0] sm:$0xf]
    %v2965 = vld [vmem:[%s2923 + $0xa4] sm:$0xf]
    %v2966 = vld [vmem:[%s2923 + $0xa8] sm:$0xf]
    %v2967 = vld [vmem:[%s2923 + $0xac] sm:$0xf]
    %v2968 = vld [vmem:[%s2923 + $0xb0] sm:$0xf]
    %v2969 = vld [vmem:[%s2923 + $0xb4] sm:$0xf]
    %v2970 = vld [vmem:[%s2923 + $0xb8] sm:$0xf]
    %v2971 = vld [vmem:[%s2923 + $0xbc] sm:$0xf]
    %v2972 = vld [vmem:[%s2923 + $0xc0] sm:$0xf]
    %v2973 = vld [vmem:[%s2923 + $0xc4] sm:$0xf]
    %v2974 = vld [vmem:[%s2923 + $0xc8] sm:$0xf]
    %v2975 = vld [vmem:[%s2923 + $0xcc] sm:$0xf]
    %v2976 = vld [vmem:[%s2923 + $0xd0] sm:$0xf]
    %v2977 = vld [vmem:[%s2923 + $0xd4] sm:$0xf]
    %v2978 = vld [vmem:[%s2923 + $0xd8] sm:$0xf]
    %v2979 = vld [vmem:[%s2923 + $0xdc] sm:$0xf]
    %v2980 = vld [vmem:[%s2923 + $0xe0] sm:$0xf]
    %v2981 = vld [vmem:[%s2923 + $0xe4] sm:$0xf]
    %v2982 = vld [vmem:[%s2923 + $0xe8] sm:$0xf]
    %v2983 = vld [vmem:[%s2923 + $0xec] sm:$0xf]
    %v2984 = vld [vmem:[%s2923 + $0xf0] sm:$0xf]
    %v2985 = vld [vmem:[%s2923 + $0xf4] sm:$0xf]
    %v2986 = vld [vmem:[%s2923 + $0xf8] sm:$0xf]
    %v2987 = vld [vmem:[%s2923 + $0xfc] sm:$0xf]
    %v2988 = vld [vmem:[%s2923 + $0x100] sm:$0xf]
    %v2989 = vld [vmem:[%s2923 + $0x104] sm:$0xf]
    %v2990 = vld [vmem:[%s2923 + $0x108] sm:$0xf]
    %v2991 = vld [vmem:[%s2923 + $0x10c] sm:$0xf]
    %v2992 = vld [vmem:[%s2923 + $0x110] sm:$0xf]
    %v2993 = vld [vmem:[%s2923 + $0x114] sm:$0xf]
    %v2994 = vld [vmem:[%s2923 + $0x118] sm:$0xf]
    %v2995 = vld [vmem:[%s2923 + $0x11c] sm:$0xf]
    %v2996 = vld [vmem:[%s2923 + $0x120] sm:$0xf]
    %v2997 = vld [vmem:[%s2923 + $0x124] sm:$0xf]
    %v2998 = vld [vmem:[%s2923 + $0x128] sm:$0xf]
    %v2999 = vld [vmem:[%s2923 + $0x12c] sm:$0xf]
    %v3000 = vld [vmem:[%s2923 + $0x130] sm:$0xf]
    %v3001 = vld [vmem:[%s2923 + $0x134] sm:$0xf]
    %v3002 = vld [vmem:[%s2923 + $0x138] sm:$0xf]
    %v3003 = vld [vmem:[%s2923 + $0x13c] sm:$0xf]
    %v3004 = vld [vmem:[%s2923 + $0x140] sm:$0xf]
    %v3005 = vld [vmem:[%s2923 + $0x144] sm:$0xf]
    %v3006 = vld [vmem:[%s2923 + $0x148] sm:$0xf]
    %v3007 = vld [vmem:[%s2923 + $0x14c] sm:$0xf]
    %v3008 = vld [vmem:[%s2923 + $0x150] sm:$0xf]
    %v3009 = vld [vmem:[%s2923 + $0x154] sm:$0xf]
    %v3010 = vld [vmem:[%s2923 + $0x158] sm:$0xf]
    %v3011 = vld [vmem:[%s2923 + $0x15c] sm:$0xf]
    %v3012 = vld [vmem:[%s2923 + $0x160] sm:$0xf]
    %v3013 = vld [vmem:[%s2923 + $0x164] sm:$0xf]
    %v3014 = vld [vmem:[%s2923 + $0x168] sm:$0xf]
    %v3015 = vld [vmem:[%s2923 + $0x16c] sm:$0xf]
    %v3016 = vld [vmem:[%s2923 + $0x170] sm:$0xf]
    %v3017 = vld [vmem:[%s2923 + $0x174] sm:$0xf]
    %v3018 = vld [vmem:[%s2923 + $0x178] sm:$0xf]
    %v3019 = vld [vmem:[%s2923 + $0x17c] sm:$0xf]
    %v3020 = vld [vmem:[%s2923 + $0x180] sm:$0xf]
    %v3021 = vld [vmem:[%s2923 + $0x184] sm:$0xf]
    %v3022 = vld [vmem:[%s2923 + $0x188] sm:$0xf]
    %v3023 = vld [vmem:[%s2923 + $0x18c] sm:$0xf]
    %v3024 = vld [vmem:[%s2923 + $0x190] sm:$0xf]
    %v3025 = vld [vmem:[%s2923 + $0x194] sm:$0xf]
    %v3026 = vld [vmem:[%s2923 + $0x198] sm:$0xf]
    %v3027 = vld [vmem:[%s2923 + $0x19c] sm:$0xf]
    %v3028 = vld [vmem:[%s2923 + $0x1a0] sm:$0xf]
    %v3029 = vld [vmem:[%s2923 + $0x1a4] sm:$0xf]
    %v3030 = vld [vmem:[%s2923 + $0x1a8] sm:$0xf]
    %v3031 = vld [vmem:[%s2923 + $0x1ac] sm:$0xf]
    %v3032 = vld [vmem:[%s2923 + $0x1b0] sm:$0xf]
    %v3033 = vld [vmem:[%s2923 + $0x1b4] sm:$0xf]
    %v3034 = vld [vmem:[%s2923 + $0x1b8] sm:$0xf]
    %v3035 = vld [vmem:[%s2923 + $0x1bc] sm:$0xf]
    %v3036 = vld [vmem:[%s2923 + $0x1c0] sm:$0xf]
    %v3037 = vld [vmem:[%s2923 + $0x1c4] sm:$0xf]
    %v3038 = vld [vmem:[%s2923 + $0x1c8] sm:$0xf]
    %v3039 = vld [vmem:[%s2923 + $0x1cc] sm:$0xf]
    %v3040 = vld [vmem:[%s2923 + $0x1d0] sm:$0xf]
    %v3041 = vld [vmem:[%s2923 + $0x1d4] sm:$0xf]
    %v3042 = vld [vmem:[%s2923 + $0x1d8] sm:$0xf]
    %v3043 = vld [vmem:[%s2923 + $0x1dc] sm:$0xf]
    %v3044 = vld [vmem:[%s2923 + $0x1e0] sm:$0xf]
    %v3045 = vld [vmem:[%s2923 + $0x1e4] sm:$0xf]
    %v3046 = vld [vmem:[%s2923 + $0x1e8] sm:$0xf]
    %v3047 = vld [vmem:[%s2923 + $0x1ec] sm:$0xf]
    %v3048 = vld [vmem:[%s2923 + $0x1f0] sm:$0xf]
    %v3049 = vld [vmem:[%s2923 + $0x1f4] sm:$0xf]
    %v3050 = vld [vmem:[%s2923 + $0x1f8] sm:$0xf]
    %v3051 = vld [vmem:[%s2923 + $0x1fc] sm:$0xf]
    %v3052 = vld [vmem:[%s2923 + $0x200] sm:$0xf]
    %v3053 = vld [vmem:[%s2923 + $0x204] sm:$0xf]
    %v3054 = vld [vmem:[%s2923 + $0x208] sm:$0xf]
    %v3055 = vld [vmem:[%s2923 + $0x20c] sm:$0xf]
    %v3056 = vld [vmem:[%s2923 + $0x210] sm:$0xf]
    %v3057 = vld [vmem:[%s2923 + $0x214] sm:$0xf]
    %v3058 = vld [vmem:[%s2923 + $0x218] sm:$0xf]
    %v3059 = vld [vmem:[%s2923 + $0x21c] sm:$0xf]
    %v3060 = vld [vmem:[%s2923 + $0x220] sm:$0xf]
    %v3061 = vld [vmem:[%s2923 + $0x224] sm:$0xf]
    %v3062 = vld [vmem:[%s2923 + $0x228] sm:$0xf]
    %v3063 = vld [vmem:[%s2923 + $0x22c] sm:$0xf]
    %v3064 = vld [vmem:[%s2923 + $0x230] sm:$0xf]
    %v3065 = vld [vmem:[%s2923 + $0x234] sm:$0xf]
    %v3066 = vld [vmem:[%s2923 + $0x238] sm:$0xf]
    %v3067 = vld [vmem:[%s2923 + $0x23c] sm:$0xf]
    %v3212 = vunpack.c.l.b16 %v2924
    %v3213 = vunpack.c.l.b16 %v2925
    %v3214 = vunpack.c.l.b16 %v2926
    %v3215 = vunpack.c.l.b16 %v2927
    %v3216 = vunpack.c.l.b16 %v2928
    %v3217 = vunpack.c.l.b16 %v2929
    %v3218 = vunpack.c.l.b16 %v2930
    %v3219 = vunpack.c.l.b16 %v2931
    %v3220 = vunpack.c.l.b16 %v2932
    %v3221 = vunpack.c.l.b16 %v2933
    %v3222 = vunpack.c.l.b16 %v2934
    %v3223 = vunpack.c.l.b16 %v2935
    %v3224 = vunpack.c.l.b16 %v2936
    %v3225 = vunpack.c.l.b16 %v2937
    %v3226 = vunpack.c.l.b16 %v2938
    %v3227 = vunpack.c.l.b16 %v2939
    %v3228 = vunpack.c.l.b16 %v2940
    %v3229 = vunpack.c.l.b16 %v2941
    %v3230 = vunpack.c.l.b16 %v2942
    %v3231 = vunpack.c.l.b16 %v2943
    %v3232 = vunpack.c.l.b16 %v2944
    %v3233 = vunpack.c.l.b16 %v2945
    %v3234 = vunpack.c.l.b16 %v2946
    %v3235 = vunpack.c.l.b16 %v2947
    %v3236 = vunpack.c.l.b16 %v2948
    %v3237 = vunpack.c.l.b16 %v2949
    %v3238 = vunpack.c.l.b16 %v2950
    %v3239 = vunpack.c.l.b16 %v2951
    %v3240 = vunpack.c.l.b16 %v2952
    %v3241 = vunpack.c.l.b16 %v2953
    %v3242 = vunpack.c.l.b16 %v2954
    %v3243 = vunpack.c.l.b16 %v2955
    %v3244 = vunpack.c.l.b16 %v2956
    %v3245 = vunpack.c.l.b16 %v2957
    %v3246 = vunpack.c.l.b16 %v2958
    %v3247 = vunpack.c.l.b16 %v2959
    %v3248 = vunpack.c.l.b16 %v2960
    %v3249 = vunpack.c.l.b16 %v2961
    %v3250 = vunpack.c.l.b16 %v2962
    %v3251 = vunpack.c.l.b16 %v2963
    %v3252 = vunpack.c.l.b16 %v2964
    %v3253 = vunpack.c.l.b16 %v2965
    %v3254 = vunpack.c.l.b16 %v2966
    %v3255 = vunpack.c.l.b16 %v2967
    %v3256 = vunpack.c.l.b16 %v2968
    %v3257 = vunpack.c.l.b16 %v2969
    %v3258 = vunpack.c.l.b16 %v2970
    %v3259 = vunpack.c.l.b16 %v2971
    %v3260 = vunpack.c.l.b16 %v2972
    %v3261 = vunpack.c.l.b16 %v2973
    %v3262 = vunpack.c.l.b16 %v2974
    %v3263 = vunpack.c.l.b16 %v2975
    %v3264 = vunpack.c.l.b16 %v2976
    %v3265 = vunpack.c.l.b16 %v2977
    %v3266 = vunpack.c.l.b16 %v2978
    %v3267 = vunpack.c.l.b16 %v2979
    %v3268 = vunpack.c.l.b16 %v2980
    %v3269 = vunpack.c.l.b16 %v2981
    %v3270 = vunpack.c.l.b16 %v2982
    %v3271 = vunpack.c.l.b16 %v2983
    %v3272 = vunpack.c.l.b16 %v2984
    %v3273 = vunpack.c.l.b16 %v2985
    %v3274 = vunpack.c.l.b16 %v2986
    %v3275 = vunpack.c.l.b16 %v2987
    %v3276 = vunpack.c.l.b16 %v2988
    %v3277 = vunpack.c.l.b16 %v2989
    %v3278 = vunpack.c.l.b16 %v2990
    %v3279 = vunpack.c.l.b16 %v2991
    %v3280 = vunpack.c.l.b16 %v2992
    %v3281 = vunpack.c.l.b16 %v2993
    %v3282 = vunpack.c.l.b16 %v2994
    %v3283 = vunpack.c.l.b16 %v2995
    %v3284 = vunpack.c.l.b16 %v2996
    %v3285 = vunpack.c.l.b16 %v2997
    %v3286 = vunpack.c.l.b16 %v2998
    %v3287 = vunpack.c.l.b16 %v2999
    %v3288 = vunpack.c.l.b16 %v3000
    %v3289 = vunpack.c.l.b16 %v3001
    %v3290 = vunpack.c.l.b16 %v3002
    %v3291 = vunpack.c.l.b16 %v3003
    %v3292 = vunpack.c.l.b16 %v3004
    %v3293 = vunpack.c.l.b16 %v3005
    %v3294 = vunpack.c.l.b16 %v3006
    %v3295 = vunpack.c.l.b16 %v3007
    %v3296 = vunpack.c.l.b16 %v3008
    %v3297 = vunpack.c.l.b16 %v3009
    %v3298 = vunpack.c.l.b16 %v3010
    %v3299 = vunpack.c.l.b16 %v3011
    %v3300 = vunpack.c.l.b16 %v3012
    %v3301 = vunpack.c.l.b16 %v3013
    %v3302 = vunpack.c.l.b16 %v3014
    %v3303 = vunpack.c.l.b16 %v3015
    %v3304 = vunpack.c.l.b16 %v3016
    %v3305 = vunpack.c.l.b16 %v3017
    %v3306 = vunpack.c.l.b16 %v3018
    %v3307 = vunpack.c.l.b16 %v3019
    %v3308 = vunpack.c.l.b16 %v3020
    %v3309 = vunpack.c.l.b16 %v3021
    %v3310 = vunpack.c.l.b16 %v3022
    %v3311 = vunpack.c.l.b16 %v3023
    %v3312 = vunpack.c.l.b16 %v3024
    %v3313 = vunpack.c.l.b16 %v3025
    %v3314 = vunpack.c.l.b16 %v3026
    %v3315 = vunpack.c.l.b16 %v3027
    %v3316 = vunpack.c.l.b16 %v3028
    %v3317 = vunpack.c.l.b16 %v3029
    %v3318 = vunpack.c.l.b16 %v3030
    %v3319 = vunpack.c.l.b16 %v3031
    %v3320 = vunpack.c.l.b16 %v3032
    %v3321 = vunpack.c.l.b16 %v3033
    %v3322 = vunpack.c.l.b16 %v3034
    %v3323 = vunpack.c.l.b16 %v3035
    %v3324 = vunpack.c.l.b16 %v3036
    %v3325 = vunpack.c.l.b16 %v3037
    %v3326 = vunpack.c.l.b16 %v3038
    %v3327 = vunpack.c.l.b16 %v3039
    %v3328 = vunpack.c.l.b16 %v3040
    %v3329 = vunpack.c.l.b16 %v3041
    %v3330 = vunpack.c.l.b16 %v3042
    %v3331 = vunpack.c.l.b16 %v3043
    %v3332 = vunpack.c.l.b16 %v3044
    %v3333 = vunpack.c.l.b16 %v3045
    %v3334 = vunpack.c.l.b16 %v3046
    %v3335 = vunpack.c.l.b16 %v3047
    %v3336 = vunpack.c.l.b16 %v3048
    %v3337 = vunpack.c.l.b16 %v3049
    %v3338 = vunpack.c.l.b16 %v3050
    %v3339 = vunpack.c.l.b16 %v3051
    %v3340 = vunpack.c.l.b16 %v3052
    %v3341 = vunpack.c.l.b16 %v3053
    %v3342 = vunpack.c.l.b16 %v3054
    %v3343 = vunpack.c.l.b16 %v3055
    %v3344 = vunpack.c.l.b16 %v3056
    %v3345 = vunpack.c.l.b16 %v3057
    %v3346 = vunpack.c.l.b16 %v3058
    %v3347 = vunpack.c.l.b16 %v3059
    %v3348 = vunpack.c.l.b16 %v3060
    %v3349 = vunpack.c.l.b16 %v3061
    %v3350 = vunpack.c.l.b16 %v3062
    %v3351 = vunpack.c.l.b16 %v3063
    %v3352 = vunpack.c.l.b16 %v3064
    %v3353 = vunpack.c.l.b16 %v3065
    %v3354 = vunpack.c.l.b16 %v3066
    %v3355 = vunpack.c.l.b16 %v3067
    %v3356 = vpack.c.b16 %v3213, %v3212
    %v3357 = vpack.c.b16 %v3215, %v3214
    %v3358 = vpack.c.b16 %v3217, %v3216
    %v3359 = vpack.c.b16 %v3219, %v3218
    %v3360 = vpack.c.b16 %v3221, %v3220
    %v3361 = vpack.c.b16 %v3223, %v3222
    %v3362 = vpack.c.b16 %v3225, %v3224
    %v3363 = vpack.c.b16 %v3227, %v3226
    %v3364 = vpack.c.b16 %v3229, %v3228
    %v3365 = vpack.c.b16 %v3231, %v3230
    %v3366 = vpack.c.b16 %v3233, %v3232
    %v3367 = vpack.c.b16 %v3235, %v3234
    %v3368 = vpack.c.b16 %v3237, %v3236
    %v3369 = vpack.c.b16 %v3239, %v3238
    %v3370 = vpack.c.b16 %v3241, %v3240
    %v3371 = vpack.c.b16 %v3243, %v3242
    %v3372 = vpack.c.b16 %v3245, %v3244
    %v3373 = vpack.c.b16 %v3247, %v3246
    %v3374 = vpack.c.b16 %v3249, %v3248
    %v3375 = vpack.c.b16 %v3251, %v3250
    %v3376 = vpack.c.b16 %v3253, %v3252
    %v3377 = vpack.c.b16 %v3255, %v3254
    %v3378 = vpack.c.b16 %v3257, %v3256
    %v3379 = vpack.c.b16 %v3259, %v3258
    %v3380 = vpack.c.b16 %v3261, %v3260
    %v3381 = vpack.c.b16 %v3263, %v3262
    %v3382 = vpack.c.b16 %v3265, %v3264
    %v3383 = vpack.c.b16 %v3267, %v3266
    %v3384 = vpack.c.b16 %v3269, %v3268
    %v3385 = vpack.c.b16 %v3271, %v3270
    %v3386 = vpack.c.b16 %v3273, %v3272
    %v3387 = vpack.c.b16 %v3275, %v3274
    %v3388 = vpack.c.b16 %v3277, %v3276
    %v3389 = vpack.c.b16 %v3279, %v3278
    %v3390 = vpack.c.b16 %v3281, %v3280
    %v3391 = vpack.c.b16 %v3283, %v3282
    %v3392 = vpack.c.b16 %v3285, %v3284
    %v3393 = vpack.c.b16 %v3287, %v3286
    %v3394 = vpack.c.b16 %v3289, %v3288
    %v3395 = vpack.c.b16 %v3291, %v3290
    %v3396 = vpack.c.b16 %v3293, %v3292
    %v3397 = vpack.c.b16 %v3295, %v3294
    %v3398 = vpack.c.b16 %v3297, %v3296
    %v3399 = vpack.c.b16 %v3299, %v3298
    %v3400 = vpack.c.b16 %v3301, %v3300
    %v3401 = vpack.c.b16 %v3303, %v3302
    %v3402 = vpack.c.b16 %v3305, %v3304
    %v3403 = vpack.c.b16 %v3307, %v3306
    %v3404 = vpack.c.b16 %v3309, %v3308
    %v3405 = vpack.c.b16 %v3311, %v3310
    %v3406 = vpack.c.b16 %v3313, %v3312
    %v3407 = vpack.c.b16 %v3315, %v3314
    %v3408 = vpack.c.b16 %v3317, %v3316
    %v3409 = vpack.c.b16 %v3319, %v3318
    %v3410 = vpack.c.b16 %v3321, %v3320
    %v3411 = vpack.c.b16 %v3323, %v3322
    %v3412 = vpack.c.b16 %v3325, %v3324
    %v3413 = vpack.c.b16 %v3327, %v3326
    %v3414 = vpack.c.b16 %v3329, %v3328
    %v3415 = vpack.c.b16 %v3331, %v3330
    %v3416 = vpack.c.b16 %v3333, %v3332
    %v3417 = vpack.c.b16 %v3335, %v3334
    %v3418 = vpack.c.b16 %v3337, %v3336
    %v3419 = vpack.c.b16 %v3339, %v3338
    %v3420 = vpack.c.b16 %v3341, %v3340
    %v3421 = vpack.c.b16 %v3343, %v3342
    %v3422 = vpack.c.b16 %v3345, %v3344
    %v3423 = vpack.c.b16 %v3347, %v3346
    %v3424 = vpack.c.b16 %v3349, %v3348
    %v3425 = vpack.c.b16 %v3351, %v3350
    %v3426 = vpack.c.b16 %v3353, %v3352
    %v3427 = vpack.c.b16 %v3355, %v3354
    %3500 = vmatprep.subr.bf16.mxu0 0
    %3501 = vmatpush1.bf16.msra.mxu0 %v3356
    %3502 = vmatprep.subr.bf16.mxu0 0
    %3503 = vmatpush1.bf16.msra.mxu0 %v3357
    %3504 = vmatprep.subr.bf16.mxu0 0
    %3505 = vmatpush1.bf16.msra.mxu0 %v3358
    %3506 = vmatprep.subr.bf16.mxu0 0
    %3507 = vmatpush1.bf16.msra.mxu0 %v3359
    %3508 = vmatprep.subr.bf16.mxu0 0
    %3509 = vmatpush1.bf16.msra.mxu0 %v3360
    %3510 = vmatprep.subr.bf16.mxu0 0
    %3511 = vmatpush1.bf16.msra.mxu0 %v3361
    %3512 = vmatprep.subr.bf16.mxu0 0
    %3513 = vmatpush1.bf16.msra.mxu0 %v3362
    %3514 = vmatprep.subr.bf16.mxu0 0
    %3515 = vmatpush1.bf16.msra.mxu0 %v3363
    %3516 = vmatprep.subr.bf16.mxu0 0
    %3517 = vmatpush1.bf16.msra.mxu0 %v3364
    %3518 = vmatprep.subr.bf16.mxu0 0
    %3519 = vmatpush1.bf16.msra.mxu0 %v3365
    %3520 = vmatprep.subr.bf16.mxu0 0
    %3521 = vmatpush1.bf16.msra.mxu0 %v3366
    %3522 = vmatprep.subr.bf16.mxu0 0
    %3523 = vmatpush1.bf16.msra.mxu0 %v3367
    %3524 = vmatprep.subr.bf16.mxu0 0
    %3525 = vmatpush1.bf16.msra.mxu0 %v3368
    %3526 = vmatprep.subr.bf16.mxu0 0
    %3527 = vmatpush1.bf16.msra.mxu0 %v3369
    %3528 = vmatprep.subr.bf16.mxu0 0
    %3529 = vmatpush1.bf16.msra.mxu0 %v3370
    %3530 = vmatprep.subr.bf16.mxu0 0
    %3531 = vmatpush1.bf16.msra.mxu0 %v3371
    %3532 = vmatprep.mubr.bf16.mxu0 %v2888
    %3533 = vmatmul.mubr.bf16.gmra.mrb[0].mxu0 %v2887
    %v3534 = vpop.f32.mrb[0].mxu0
    %v3535 = vadd.f32 0.0, %v3534
    %v3536 = vpop.f32.mrb[0].mxu0
    %v3537 = vpop.f32.mrb[0].mxu0
    %v3538 = vadd.f32 0.0, %v3537
    %v3539 = vpop.f32.mrb[0].mxu0
    %3540 = vmatprep.mubr.bf16.mxu0 %v2897
    %3541 = vmatmul.mubr.bf16.gmra.mrb[0].mxu0 %v2896
    %v3542 = vpop.f32.mrb[0].mxu0
    %v3543 = vadd.f32 0.0, %v3542
    %v3544 = vpop.f32.mrb[0].mxu0
    %v3545 = vpop.f32.mrb[0].mxu0
    %v3546 = vadd.f32 0.0, %v3545
    %v3547 = vpop.f32.mrb[0].mxu0
    %3548 = vmatprep.mubr.bf16.mxu0 %v2906
    %3549 = vmatmul.mubr.bf16.gmra.mrb[0].mxu0 %v2905
    %v3550 = vpop.f32.mrb[0].mxu0
    %v3551 = vadd.f32 0.0, %v3550
    %v3552 = vpop.f32.mrb[0].mxu0
    %v3553 = vpop.f32.mrb[0].mxu0
    %v3554 = vadd.f32 0.0, %v3553
    %v3555 = vpop.f32.mrb[0].mxu0
    %3556 = vmatprep.mubr.bf16.mxu0 %v2915
    %3557 = vmatmul.mubr.bf16.gmra.mrb[0].mxu0 %v2914
    %v3558 = vpop.f32.mrb[0].mxu0
    %v3559 = vadd.f32 0.0, %v3558
    %v3560 = vpop.f32.mrb[0].mxu0
    %v3561 = vpop.f32.mrb[0].mxu0
    %v3562 = vadd.f32 0.0, %v3561
    %v3563 = vpop.f32.mrb[0].mxu0
    %3564 = vdwg.mxu0
    %3565 = vmatprep.subr.bf16.mxu0 0
    %3566 = vmatpush1.bf16.msra.mxu0 %v3372
    %3567 = vmatprep.subr.bf16.mxu0 0
    %3568 = vmatpush1.bf16.msra.mxu0 %v3373
    %3569 = vmatprep.subr.bf16.mxu0 0
    %3570 = vmatpush1.bf16.msra.mxu0 %v3374
    %3571 = vmatprep.subr.bf16.mxu0 0
    %3572 = vmatpush1.bf16.msra.mxu0 %v3375
    %3573 = vmatprep.subr.bf16.mxu0 0
    %3574 = vmatpush1.bf16.msra.mxu0 %v3376
    %3575 = vmatprep.subr.bf16.mxu0 0
    %3576 = vmatpush1.bf16.msra.mxu0 %v3377
    %3577 = vmatprep.subr.bf16.mxu0 0
    %3578 = vmatpush1.bf16.msra.mxu0 %v3378
    %3579 = vmatprep.subr.bf16.mxu0 0
    %3580 = vmatpush1.bf16.msra.mxu0 %v3379
    %3581 = vmatprep.subr.bf16.mxu0 0
    %3582 = vmatpush1.bf16.msra.mxu0 %v3380
    %3583 = vmatprep.subr.bf16.mxu0 0
    %3584 = vmatpush1.bf16.msra.mxu0 %v3381
    %3585 = vmatprep.subr.bf16.mxu0 0
    %3586 = vmatpush1.bf16.msra.mxu0 %v3382
    %3587 = vmatprep.subr.bf16.mxu0 0
    %3588 = vmatpush1.bf16.msra.mxu0 %v3383
    %3589 = vmatprep.subr.bf16.mxu0 0
    %3590 = vmatpush1.bf16.msra.mxu0 %v3384
    %3591 = vmatprep.subr.bf16.mxu0 0
    %3592 = vmatpush1.bf16.msra.mxu0 %v3385
    %3593 = vmatprep.subr.bf16.mxu0 0
    %3594 = vmatpush1.bf16.msra.mxu0 %v3386
    %3595 = vmatprep.subr.bf16.mxu0 0
    %3596 = vmatpush1.bf16.msra.mxu0 %v3387
    %3597 = vmatprep.mubr.bf16.mxu0 %v2890
    %3598 = vmatmul.mubr.bf16.gmra.mrb[0].mxu0 %v2889
    %v3599 = vpop.f32.mrb[0].mxu0
    %v3600 = vadd.f32 %v3535, %v3599
    %v3601 = vpop.f32.mrb[0].mxu0
    %v3602 = vpop.f32.mrb[0].mxu0
    %v3603 = vadd.f32 %v3538, %v3602
    %v3604 = vpop.f32.mrb[0].mxu0
    %3605 = vmatprep.mubr.bf16.mxu0 %v2899
    %3606 = vmatmul.mubr.bf16.gmra.mrb[0].mxu0 %v2898
    %v3607 = vpop.f32.mrb[0].mxu0
    %v3608 = vadd.f32 %v3543, %v3607
    %v3609 = vpop.f32.mrb[0].mxu0
    %v3610 = vpop.f32.mrb[0].mxu0
    %v3611 = vadd.f32 %v3546, %v3610
    %v3612 = vpop.f32.mrb[0].mxu0
    %3613 = vmatprep.mubr.bf16.mxu0 %v2908
    %3614 = vmatmul.mubr.bf16.gmra.mrb[0].mxu0 %v2907
    %v3615 = vpop.f32.mrb[0].mxu0
    %v3616 = vadd.f32 %v3551, %v3615
    %v3617 = vpop.f32.mrb[0].mxu0
    %v3618 = vpop.f32.mrb[0].mxu0
    %v3619 = vadd.f32 %v3554, %v3618
    %v3620 = vpop.f32.mrb[0].mxu0
    %3621 = vmatprep.mubr.bf16.mxu0 %v2917
    %3622 = vmatmul.mubr.bf16.gmra.mrb[0].mxu0 %v2916
    %v3623 = vpop.f32.mrb[0].mxu0
    %v3624 = vadd.f32 %v3559, %v3623
    %v3625 = vpop.f32.mrb[0].mxu0
    %v3626 = vpop.f32.mrb[0].mxu0
    %v3627 = vadd.f32 %v3562, %v3626
    %v3628 = vpop.f32.mrb[0].mxu0
    %3629 = vdwg.mxu0
    %3630 = vmatprep.subr.bf16.mxu0 0
    %3631 = vmatpush1.bf16.msra.mxu0 %v3388
    %3632 = vmatprep.subr.bf16.mxu0 0
    %3633 = vmatpush1.bf16.msra.mxu0 %v3389
    %3634 = vmatprep.subr.bf16.mxu0 0
    %3635 = vmatpush1.bf16.msra.mxu0 %v3390
    %3636 = vmatprep.subr.bf16.mxu0 0
    %3637 = vmatpush1.bf16.msra.mxu0 %v3391
    %3638 = vmatprep.subr.bf16.mxu0 0
    %3639 = vmatpush1.bf16.msra.mxu0 %v3392
    %3640 = vmatprep.subr.bf16.mxu0 0
    %3641 = vmatpush1.bf16.msra.mxu0 %v3393
    %3642 = vmatprep.subr.bf16.mxu0 0
    %3643 = vmatpush1.bf16.msra.mxu0 %v3394
    %3644 = vmatprep.subr.bf16.mxu0 0
    %3645 = vmatpush1.bf16.msra.mxu0 %v3395
    %3646 = vmatprep.subr.bf16.mxu0 0
    %3647 = vmatpush1.bf16.msra.mxu0 %v3396
    %3648 = vmatprep.subr.bf16.mxu0 0
    %3649 = vmatpush1.bf16.msra.mxu0 %v3397
    %3650 = vmatprep.subr.bf16.mxu0 0
    %3651 = vmatpush1.bf16.msra.mxu0 %v3398
    %3652 = vmatprep.subr.bf16.mxu0 0
    %3653 = vmatpush1.bf16.msra.mxu0 %v3399
    %3654 = vmatprep.subr.bf16.mxu0 0
    %3655 = vmatpush1.bf16.msra.mxu0 %v3400
    %3656 = vmatprep.subr.bf16.mxu0 0
    %3657 = vmatpush1.bf16.msra.mxu0 %v3401
    %3658 = vmatprep.subr.bf16.mxu0 0
    %3659 = vmatpush1.bf16.msra.mxu0 %v3402
    %3660 = vmatprep.subr.bf16.mxu0 0
    %3661 = vmatpush1.bf16.msra.mxu0 %v3403
    %3662 = vmatprep.mubr.bf16.mxu0 %v2892
    %3663 = vmatmul.mubr.bf16.gmra.mrb[0].mxu0 %v2891
    %v3664 = vpop.f32.mrb[0].mxu0
    %v3665 = vadd.f32 %v3600, %v3664
    %v3666 = vpop.f32.mrb[0].mxu0
    %v3667 = vpop.f32.mrb[0].mxu0
    %v3668 = vadd.f32 %v3603, %v3667
    %v3669 = vpop.f32.mrb[0].mxu0
    %3670 = vmatprep.mubr.bf16.mxu0 %v2901
    %3671 = vmatmul.mubr.bf16.gmra.mrb[0].mxu0 %v2900
    %v3672 = vpop.f32.mrb[0].mxu0
    %v3673 = vadd.f32 %v3608, %v3672
    %v3674 = vpop.f32.mrb[0].mxu0
    %v3675 = vpop.f32.mrb[0].mxu0
    %v3676 = vadd.f32 %v3611, %v3675
    %v3677 = vpop.f32.mrb[0].mxu0
    %3678 = vmatprep.mubr.bf16.mxu0 %v2910
    %3679 = vmatmul.mubr.bf16.gmra.mrb[0].mxu0 %v2909
    %v3680 = vpop.f32.mrb[0].mxu0
    %v3681 = vadd.f32 %v3616, %v3680
    %v3682 = vpop.f32.mrb[0].mxu0
    %v3683 = vpop.f32.mrb[0].mxu0
    %v3684 = vadd.f32 %v3619, %v3683
    %v3685 = vpop.f32.mrb[0].mxu0
    %3686 = vmatprep.mubr.bf16.mxu0 %v2919
    %3687 = vmatmul.mubr.bf16.gmra.mrb[0].mxu0 %v2918
    %v3688 = vpop.f32.mrb[0].mxu0
    %v3689 = vadd.f32 %v3624, %v3688
    %v3690 = vpop.f32.mrb[0].mxu0
    %v3691 = vpop.f32.mrb[0].mxu0
    %v3692 = vadd.f32 %v3627, %v3691
    %v3693 = vpop.f32.mrb[0].mxu0
    %3694 = vdwg.mxu0
    %3695 = vmatprep.subr.bf16.mxu0 0
    %3696 = vmatpush1.bf16.msra.mxu0 %v3404
    %3697 = vmatprep.subr.bf16.mxu0 0
    %3698 = vmatpush1.bf16.msra.mxu0 %v3405
    %3699 = vmatprep.subr.bf16.mxu0 0
    %3700 = vmatpush1.bf16.msra.mxu0 %v3406
    %3701 = vmatprep.subr.bf16.mxu0 0
    %3702 = vmatpush1.bf16.msra.mxu0 %v3407
    %3703 = vmatprep.subr.bf16.mxu0 0
    %3704 = vmatpush1.bf16.msra.mxu0 %v3408
    %3705 = vmatprep.subr.bf16.mxu0 0
    %3706 = vmatpush1.bf16.msra.mxu0 %v3409
    %3707 = vmatprep.subr.bf16.mxu0 0
    %3708 = vmatpush1.bf16.msra.mxu0 %v3410
    %3709 = vmatprep.subr.bf16.mxu0 0
    %3710 = vmatpush1.bf16.msra.mxu0 %v3411
    %3711 = vmatprep.subr.bf16.mxu0 0
    %3712 = vmatpush1.bf16.msra.mxu0 %v3412
    %3713 = vmatprep.subr.bf16.mxu0 0
    %3714 = vmatpush1.bf16.msra.mxu0 %v3413
    %3715 = vmatprep.subr.bf16.mxu0 0
    %3716 = vmatpush1.bf16.msra.mxu0 %v3414
    %3717 = vmatprep.subr.bf16.mxu0 0
    %3718 = vmatpush1.bf16.msra.mxu0 %v3415
    %3719 = vmatprep.subr.bf16.mxu0 0
    %3720 = vmatpush1.bf16.msra.mxu0 %v3416
    %3721 = vmatprep.subr.bf16.mxu0 0
    %3722 = vmatpush1.bf16.msra.mxu0 %v3417
    %3723 = vmatprep.subr.bf16.mxu0 0
    %3724 = vmatpush1.bf16.msra.mxu0 %v3418
    %3725 = vmatprep.subr.bf16.mxu0 0
    %3726 = vmatpush1.bf16.msra.mxu0 %v3419
    %3727 = vmatprep.mubr.bf16.mxu0 %v2894
    %3728 = vmatmul.mubr.bf16.gmra.mrb[0].mxu0 %v2893
    %v3729 = vpop.f32.mrb[0].mxu0
    %v3730 = vadd.f32 %v3665, %v3729
    %v3731 = vpop.f32.mrb[0].mxu0
    %v3732 = vpop.f32.mrb[0].mxu0
    %v3733 = vadd.f32 %v3668, %v3732
    %v3734 = vpop.f32.mrb[0].mxu0
    %3735 = vmatprep.mubr.bf16.mxu0 %v2903
    %3736 = vmatmul.mubr.bf16.gmra.mrb[0].mxu0 %v2902
    %v3737 = vpop.f32.mrb[0].mxu0
    %v3738 = vadd.f32 %v3673, %v3737
    %v3739 = vpop.f32.mrb[0].mxu0
    %v3740 = vpop.f32.mrb[0].mxu0
    %v3741 = vadd.f32 %v3676, %v3740
    %v3742 = vpop.f32.mrb[0].mxu0
    %3743 = vmatprep.mubr.bf16.mxu0 %v2912
    %3744 = vmatmul.mubr.bf16.gmra.mrb[0].mxu0 %v2911
    %v3745 = vpop.f32.mrb[0].mxu0
    %v3746 = vadd.f32 %v3681, %v3745
    %v3747 = vpop.f32.mrb[0].mxu0
    %v3748 = vpop.f32.mrb[0].mxu0
    %v3749 = vadd.f32 %v3684, %v3748
    %v3750 = vpop.f32.mrb[0].mxu0
    %3751 = vmatprep.mubr.bf16.mxu0 %v2921
    %3752 = vmatmul.mubr.bf16.gmra.mrb[0].mxu0 %v2920
    %v3753 = vpop.f32.mrb[0].mxu0
    %v3754 = vadd.f32 %v3689, %v3753
    %v3755 = vpop.f32.mrb[0].mxu0
    %v3756 = vpop.f32.mrb[0].mxu0
    %v3757 = vadd.f32 %v3692, %v3756
    %v3758 = vpop.f32.mrb[0].mxu0
    %3759 = vdwg.mxu0
    %3760 = vmatprep.subr.bf16.mxu0 0
    %3761 = vmatpush1.bf16.msra.mxu0 %v3420
    %3762 = vmatprep.subr.bf16.mxu0 0
    %3763 = vmatpush1.bf16.msra.mxu0 %v3421
    %3764 = vmatprep.subr.bf16.mxu0 0
    %3765 = vmatpush1.bf16.msra.mxu0 %v3422
    %3766 = vmatprep.subr.bf16.mxu0 0
    %3767 = vmatpush1.bf16.msra.mxu0 %v3423
    %3768 = vmatprep.subr.bf16.mxu0 0
    %3769 = vmatpush1.bf16.msra.mxu0 %v3424
    %3770 = vmatprep.subr.bf16.mxu0 0
    %3771 = vmatpush1.bf16.msra.mxu0 %v3425
    %3772 = vmatprep.subr.bf16.mxu0 0
    %3773 = vmatpush1.bf16.msra.mxu0 %v3426
    %3774 = vmatprep.subr.bf16.mxu0 0
    %3775 = vmatpush1.bf16.msra.mxu0 %v3427
    %3776 = vmatprep.subr.bf16.mxu0 0
    %3777 = vmatpush1.bf16.msra.mxu0 0
    %3778 = vmatprep.subr.bf16.mxu0 0
    %3779 = vmatpush1.bf16.msra.mxu0 0
    %3780 = vmatprep.subr.bf16.mxu0 0
    %3781 = vmatpush1.bf16.msra.mxu0 0
    %3782 = vmatprep.subr.bf16.mxu0 0
    %3783 = vmatpush1.bf16.msra.mxu0 0
    %3784 = vmatprep.subr.bf16.mxu0 0
    %3785 = vmatpush1.bf16.msra.mxu0 0
    %3786 = vmatprep.subr.bf16.mxu0 0
    %3787 = vmatpush1.bf16.msra.mxu0 0
    %3788 = vmatprep.subr.bf16.mxu0 0
    %3789 = vmatpush1.bf16.msra.mxu0 0
    %3790 = vmatprep.subr.bf16.mxu0 0
    %3791 = vmatpush1.bf16.msra.mxu0 0
    %3792 = vmatprep.mubr.bf16.mxu0 0
    %3793 = vmatmul.mubr.bf16.gmra.mrb[0].mxu0 %v2895
    %v3794 = vpop.f32.mrb[0].mxu0
    %v3795 = vadd.f32 %v3730, %v3794
    %v3796 = vpop.f32.mrb[0].mxu0
    %v3797 = vpop.f32.mrb[0].mxu0
    %v3798 = vadd.f32 %v3733, %v3797
    %v3799 = vpop.f32.mrb[0].mxu0
    %3800 = vmatprep.mubr.bf16.mxu0 0
    %3801 = vmatmul.mubr.bf16.gmra.mrb[0].mxu0 %v2904
    %v3802 = vpop.f32.mrb[0].mxu0
    %v3803 = vadd.f32 %v3738, %v3802
    %v3804 = vpop.f32.mrb[0].mxu0
    %v3805 = vpop.f32.mrb[0].mxu0
    %v3806 = vadd.f32 %v3741, %v3805
    %v3807 = vpop.f32.mrb[0].mxu0
    %3808 = vmatprep.mubr.bf16.mxu0 0
    %3809 = vmatmul.mubr.bf16.gmra.mrb[0].mxu0 %v2913
    %v3810 = vpop.f32.mrb[0].mxu0
    %v3811 = vadd.f32 %v3746, %v3810
    %v3812 = vpop.f32.mrb[0].mxu0
    %v3813 = vpop.f32.mrb[0].mxu0
    %v3814 = vadd.f32 %v3749, %v3813
    %v3815 = vpop.f32.mrb[0].mxu0
    %3816 = vmatprep.mubr.bf16.mxu0 0
    %3817 = vmatmul.mubr.bf16.gmra.mrb[0].mxu0 %v2922
    %v3818 = vpop.f32.mrb[0].mxu0
    %v3819 = vadd.f32 %v3754, %v3818
    %v3820 = vpop.f32.mrb[0].mxu0
    %v3821 = vpop.f32.mrb[0].mxu0
    %v3822 = vadd.f32 %v3757, %v3821
    %v3823 = vpop.f32.mrb[0].mxu0
    %3824 = vdwg.mxu0
    %v3825 = vadd.f32 %v3795, %v3798
    %v3826 = vadd.f32 %v3825, %v3803
    %v3827 = vadd.f32 %v3826, %v3806
    %v3828 = vadd.f32 %v3827, %v3811
    %v3829 = vadd.f32 %v3828, %v3814
    %v3830 = vadd.f32 %v3829, %v3819
    %v3831 = vadd.f32 %v3830, %v3822
    %v3832 = vrot.slane %v3831, 4
    %v3833 = vadd.f32 %v3831, %v3832
    %v3834 = vrot.slane %v3833, 2
    %v3835 = vadd.f32 %v3833, %v3834
    %v3836 = vrot.slane %v3835, 1
    %v3837 = vadd.f32 %v3835, %v3836
    %v3838 = vmul.f32 %v3795, %v3795
    %v3839 = vmul.f32 %v3798, %v3798
    %v3840 = vmul.f32 %v3803, %v3803
    %v3841 = vmul.f32 %v3806, %v3806
    %v3842 = vmul.f32 %v3811, %v3811
    %v3843 = vmul.f32 %v3814, %v3814
    %v3844 = vmul.f32 %v3819, %v3819
    %v3845 = vmul.f32 %v3822, %v3822
    %v3846 = vadd.f32 %v3838, %v3839
    %v3847 = vadd.f32 %v3846, %v3840
    %v3848 = vadd.f32 %v3847, %v3841
    %v3849 = vadd.f32 %v3848, %v3842
    %v3850 = vadd.f32 %v3849, %v3843
    %v3851 = vadd.f32 %v3850, %v3844
    %v3852 = vadd.f32 %v3851, %v3845
    %v3853 = vrot.slane %v3852, 4
    %v3854 = vadd.f32 %v3852, %v3853
    %v3855 = vrot.slane %v3854, 2
    %v3856 = vadd.f32 %v3854, %v3855
    %v3857 = vrot.slane %v3856, 1
    %v3858 = vadd.f32 %v3856, %v3857
    %v3859 = vmul.f32 %v3837, 0.015625
    %v3860 = vmul.f32 %v3858, 0.015625
    %v3861 = vmul.f32 %v3859, %v3859
    %v3862 = vsub.f32 %v3860, %v3861
    %v3863 = vsub.f32 %v3795, %v3859
    %v3864 = vsub.f32 %v3798, %v3859
    %v3865 = vsub.f32 %v3803, %v3859
    %v3866 = vsub.f32 %v3806, %v3859
    %v3867 = vsub.f32 %v3811, %v3859
    %v3868 = vsub.f32 %v3814, %v3859
    %v3869 = vsub.f32 %v3819, %v3859
    %v3870 = vsub.f32 %v3822, %v3859
    %v3871 = vadd.f32 %v3862, 1e-05
    %v3872 = vrsqrt.pop %v3871
    %v3873 = vmul.f32 %v3863, %v3872
    %v3874 = vmul.f32 %v3864, %v3872
    %v3875 = vmul.f32 %v3865, %v3872
    %v3876 = vmul.f32 %v3866, %v3872
    %v3877 = vmul.f32 %v3867, %v3872
    %v3878 = vmul.f32 %v3868, %v3872
    %v3879 = vmul.f32 %v3869, %v3872
    %v3880 = vmul.f32 %v3870, %v3872
    %s3881 = scalar_lea.vmem [#allocation8], 2
    %v3882 = vld [vmem:[%s3881] sm:$0x1]
    %v3884 = vlaneseq
    %v3885 = vshrl.u32 %v3884, 7
    %v3886 = vsub.s32 0, %v3885
    %v3887 = vrot.slane %v3882, %v3886
    %v3889 = vmul.f32 %v3887, %v3873
    %v3890 = vmul.f32 %v3887, %v3874
    %v3891 = vmul.f32 %v3887, %v3875
    %v3892 = vmul.f32 %v3887, %v3876
    %v3893 = vmul.f32 %v3887, %v3877
    %v3894 = vmul.f32 %v3887, %v3878
    %v3895 = vmul.f32 %v3887, %v3879
    %v3896 = vmul.f32 %v3887, %v3880
    %s3897 = scalar_lea.vmem [#allocation10], 2
    %v3898 = vld [vmem:[%s3897] sm:$0x1]
    %v3900 = vlaneseq
    %v3901 = vshrl.u32 %v3900, 7
    %v3902 = vsub.s32 0, %v3901
    %v3903 = vrot.slane %v3898, %v3902
    %v3905 = vadd.f32 %v3889, %v3903
    %v3906 = vadd.f32 %v3890, %v3903
    %v3907 = vadd.f32 %v3891, %v3903
    %v3908 = vadd.f32 %v3892, %v3903
    %v3909 = vadd.f32 %v3893, %v3903
    %v3910 = vadd.f32 %v3894, %v3903
    %v3911 = vadd.f32 %v3895, %v3903
    %v3912 = vadd.f32 %v3896, %v3903
    %v3913 = vmax.f32 %v3905, 0.0
    %v3914 = vmax.f32 %v3906, 0.0
    %v3915 = vmax.f32 %v3907, 0.0
    %v3916 = vmax.f32 %v3908, 0.0
    %v3917 = vmax.f32 %v3909, 0.0
    %v3918 = vmax.f32 %v3910, 0.0
    %v3919 = vmax.f32 %v3911, 0.0
    %v3920 = vmax.f32 %v3912, 0.0
    %v3921 = vrot.slane %v3913, 7
    %v3922 = vrot.slane %v3914, 7
    %v3923 = vrot.slane %v3915, 7
    %v3924 = vrot.slane %v3916, 7
    %v3925 = vrot.slane %v3917, 7
    %v3926 = vrot.slane %v3918, 7
    %v3927 = vrot.slane %v3919, 7
    %v3928 = vrot.slane %v3920, 7
    %v3929 = vsel %vm540, %v3927, %v3928
    %v3930 = vsel %vm540, %v3926, %v3927
    %v3931 = vsel %vm540, %v3925, %v3926
    %v3932 = vsel %vm540, %v3924, %v3925
    %v3933 = vsel %vm540, %v3923, %v3924
    %v3934 = vsel %vm540, %v3922, %v3923
    %v3935 = vsel %vm540, %v3921, %v3922
    %v3936 = vsel %vm540, %v3928, %v3921
    %v3937 = vmul.f32 %v3929, %v142
    %v3938 = vmul.f32 %v3936, %v147
    %v3939 = vmul.f32 %v3935, %v152
    %v3940 = vmul.f32 %v3934, %v157
    %v3941 = vmul.f32 %v3933, %v162
    %v3942 = vmul.f32 %v3932, %v167
    %v3943 = vmul.f32 %v3931, %v172
    %v3944 = vmul.f32 %v3930, %v177
    %v3945 = vmul.f32 %v3920, %v191
    %v3946 = vmul.f32 %v3913, %v196
    %v3947 = vmul.f32 %v3914, %v201
    %v3948 = vmul.f32 %v3915, %v206
    %v3949 = vmul.f32 %v3916, %v211
    %v3950 = vmul.f32 %v3917, %v216
    %v3951 = vmul.f32 %v3918, %v221
    %v3952 = vmul.f32 %v3919, %v226
    %v3953 = vrot.slane %v3913, 1
    %v3954 = vrot.slane %v3914, 1
    %v3955 = vrot.slane %v3915, 1
    %v3956 = vrot.slane %v3916, 1
    %v3957 = vrot.slane %v3917, 1
    %v3958 = vrot.slane %v3918, 1
    %v3959 = vrot.slane %v3919, 1
    %v3960 = vrot.slane %v3920, 1
    %v3961 = vsel %vm573, %v3959, %v3960
    %v3962 = vsel %vm573, %v3958, %v3959
    %v3963 = vsel %vm573, %v3957, %v3958
    %v3964 = vsel %vm573, %v3956, %v3957
    %v3965 = vsel %vm573, %v3955, %v3956
    %v3966 = vsel %vm573, %v3954, %v3955
    %v3967 = vsel %vm573, %v3953, %v3954
    %v3968 = vsel %vm573, %v3960, %v3953
    %v3969 = vmul.f32 %v3968, %v240
    %v3970 = vmul.f32 %v3967, %v245
    %v3971 = vmul.f32 %v3966, %v250
    %v3972 = vmul.f32 %v3965, %v255
    %v3973 = vmul.f32 %v3964, %v260
    %v3974 = vmul.f32 %v3963, %v265
    %v3975 = vmul.f32 %v3962, %v270
    %v3976 = vmul.f32 %v3961, %v275
    %v3977 = vmul.f32 %v3936, %v289
    %v3978 = vmul.f32 %v3935, %v294
    %v3979 = vmul.f32 %v3934, %v299
    %v3980 = vmul.f32 %v3933, %v304
    %v3981 = vmul.f32 %v3932, %v309
    %v3982 = vmul.f32 %v3931, %v314
    %v3983 = vmul.f32 %v3930, %v319
    %v3984 = vmul.f32 %v3929, %v324
    %v3985 = vmul.f32 %v3967, %v338
    %v3986 = vmul.f32 %v3966, %v343
    %v3987 = vmul.f32 %v3965, %v348
    %v3988 = vmul.f32 %v3964, %v353
    %v3989 = vmul.f32 %v3963, %v358
    %v3990 = vmul.f32 %v3962, %v363
    %v3991 = vmul.f32 %v3961, %v368
    %v3992 = vmul.f32 %v3968, %v373
    %v3993 = vmul.f32 %v3935, %v387
    %v3994 = vmul.f32 %v3934, %v392
    %v3995 = vmul.f32 %v3933, %v397
    %v3996 = vmul.f32 %v3932, %v402
    %v3997 = vmul.f32 %v3931, %v407
    %v3998 = vmul.f32 %v3930, %v412
    %v3999 = vmul.f32 %v3929, %v417
    %v4000 = vmul.f32 %v3936, %v422
    %v4001 = vmul.f32 %v3914, %v436
    %v4002 = vmul.f32 %v3915, %v441
    %v4003 = vmul.f32 %v3916, %v446
    %v4004 = vmul.f32 %v3917, %v451
    %v4005 = vmul.f32 %v3918, %v456
    %v4006 = vmul.f32 %v3919, %v461
    %v4007 = vmul.f32 %v3920, %v466
    %v4008 = vmul.f32 %v3913, %v471
    %v4009 = vmul.f32 %v3966, %v485
    %v4010 = vmul.f32 %v3965, %v490
    %v4011 = vmul.f32 %v3964, %v495
    %v4012 = vmul.f32 %v3963, %v500
    %v4013 = vmul.f32 %v3962, %v505
    %v4014 = vmul.f32 %v3961, %v510
    %v4015 = vmul.f32 %v3968, %v515
    %v4016 = vmul.f32 %v3967, %v520
    %v4017 = vpack.c.bf16 %v3938, %v3937
    %v4018 = vpack.c.bf16 %v3946, %v3945
    %v4019 = vpack.c.bf16 %v3970, %v3969
    %v4020 = vpack.c.bf16 %v3978, %v3977
    %v4021 = vpack.c.bf16 %v3914, %v3913
    %v4022 = vpack.c.bf16 %v3986, %v3985
    %v4023 = vpack.c.bf16 %v3994, %v3993
    %v4024 = vpack.c.bf16 %v4002, %v4001
    %v4025 = vpack.c.bf16 %v4010, %v4009
    %v4026 = vpack.c.bf16 %v3940, %v3939
    %v4027 = vpack.c.bf16 %v3948, %v3947
    %v4028 = vpack.c.bf16 %v3972, %v3971
    %v4029 = vpack.c.bf16 %v3980, %v3979
    %v4030 = vpack.c.bf16 %v3916, %v3915
    %v4031 = vpack.c.bf16 %v3988, %v3987
    %v4032 = vpack.c.bf16 %v3996, %v3995
    %v4033 = vpack.c.bf16 %v4004, %v4003
    %v4034 = vpack.c.bf16 %v4012, %v4011
    %v4035 = vpack.c.bf16 %v3942, %v3941
    %v4036 = vpack.c.bf16 %v3950, %v3949
    %v4037 = vpack.c.bf16 %v3974, %v3973
    %v4038 = vpack.c.bf16 %v3982, %v3981
    %v4039 = vpack.c.bf16 %v3918, %v3917
    %v4040 = vpack.c.bf16 %v3990, %v3989
    %v4041 = vpack.c.bf16 %v3998, %v3997
    %v4042 = vpack.c.bf16 %v4006, %v4005
    %v4043 = vpack.c.bf16 %v4014, %v4013
    %v4044 = vpack.c.bf16 %v3944, %v3943
    %v4045 = vpack.c.bf16 %v3952, %v3951
    %v4046 = vpack.c.bf16 %v3976, %v3975
    %v4047 = vpack.c.bf16 %v3984, %v3983
    %v4048 = vpack.c.bf16 %v3920, %v3919
    %v4049 = vpack.c.bf16 %v3992, %v3991
    %v4050 = vpack.c.bf16 %v4000, %v3999
    %v4051 = vpack.c.bf16 %v4008, %v4007
    %v4052 = vpack.c.bf16 %v4016, %v4015
    %s4053 = scalar_lea.vmem [#allocation5], 1728
    %v4054 = vld [vmem:[%s4053] sm:$0xf]
    %v4055 = vld [vmem:[%s4053 + $0x4] sm:$0xf]
    %v4056 = vld [vmem:[%s4053 + $0x8] sm:$0xf]
    %v4057 = vld [vmem:[%s4053 + $0xc] sm:$0xf]
    %v4058 = vld [vmem:[%s4053 + $0x10] sm:$0xf]
    %v4059 = vld [vmem:[%s4053 + $0x14] sm:$0xf]
    %v4060 = vld [vmem:[%s4053 + $0x18] sm:$0xf]
    %v4061 = vld [vmem:[%s4053 + $0x1c] sm:$0xf]
    %v4062 = vld [vmem:[%s4053 + $0x20] sm:$0xf]
    %v4063 = vld [vmem:[%s4053 + $0x24] sm:$0xf]
    %v4064 = vld [vmem:[%s4053 + $0x28] sm:$0xf]
    %v4065 = vld [vmem:[%s4053 + $0x2c] sm:$0xf]
    %v4066 = vld [vmem:[%s4053 + $0x30] sm:$0xf]
    %v4067 = vld [vmem:[%s4053 + $0x34] sm:$0xf]
    %v4068 = vld [vmem:[%s4053 + $0x38] sm:$0xf]
    %v4069 = vld [vmem:[%s4053 + $0x3c] sm:$0xf]
    %v4070 = vld [vmem:[%s4053 + $0x40] sm:$0xf]
    %v4071 = vld [vmem:[%s4053 + $0x44] sm:$0xf]
    %v4072 = vld [vmem:[%s4053 + $0x48] sm:$0xf]
    %v4073 = vld [vmem:[%s4053 + $0x4c] sm:$0xf]
    %v4074 = vld [vmem:[%s4053 + $0x50] sm:$0xf]
    %v4075 = vld [vmem:[%s4053 + $0x54] sm:$0xf]
    %v4076 = vld [vmem:[%s4053 + $0x58] sm:$0xf]
    %v4077 = vld [vmem:[%s4053 + $0x5c] sm:$0xf]
    %v4078 = vld [vmem:[%s4053 + $0x60] sm:$0xf]
    %v4079 = vld [vmem:[%s4053 + $0x64] sm:$0xf]
    %v4080 = vld [vmem:[%s4053 + $0x68] sm:$0xf]
    %v4081 = vld [vmem:[%s4053 + $0x6c] sm:$0xf]
    %v4082 = vld [vmem:[%s4053 + $0x70] sm:$0xf]
    %v4083 = vld [vmem:[%s4053 + $0x74] sm:$0xf]
    %v4084 = vld [vmem:[%s4053 + $0x78] sm:$0xf]
    %v4085 = vld [vmem:[%s4053 + $0x7c] sm:$0xf]
    %v4086 = vld [vmem:[%s4053 + $0x80] sm:$0xf]
    %v4087 = vld [vmem:[%s4053 + $0x84] sm:$0xf]
    %v4088 = vld [vmem:[%s4053 + $0x88] sm:$0xf]
    %v4089 = vld [vmem:[%s4053 + $0x8c] sm:$0xf]
    %v4090 = vld [vmem:[%s4053 + $0x90] sm:$0xf]
    %v4091 = vld [vmem:[%s4053 + $0x94] sm:$0xf]
    %v4092 = vld [vmem:[%s4053 + $0x98] sm:$0xf]
    %v4093 = vld [vmem:[%s4053 + $0x9c] sm:$0xf]
    %v4094 = vld [vmem:[%s4053 + $0xa0] sm:$0xf]
    %v4095 = vld [vmem:[%s4053 + $0xa4] sm:$0xf]
    %v4096 = vld [vmem:[%s4053 + $0xa8] sm:$0xf]
    %v4097 = vld [vmem:[%s4053 + $0xac] sm:$0xf]
    %v4098 = vld [vmem:[%s4053 + $0xb0] sm:$0xf]
    %v4099 = vld [vmem:[%s4053 + $0xb4] sm:$0xf]
    %v4100 = vld [vmem:[%s4053 + $0xb8] sm:$0xf]
    %v4101 = vld [vmem:[%s4053 + $0xbc] sm:$0xf]
    %v4102 = vld [vmem:[%s4053 + $0xc0] sm:$0xf]
    %v4103 = vld [vmem:[%s4053 + $0xc4] sm:$0xf]
    %v4104 = vld [vmem:[%s4053 + $0xc8] sm:$0xf]
    %v4105 = vld [vmem:[%s4053 + $0xcc] sm:$0xf]
    %v4106 = vld [vmem:[%s4053 + $0xd0] sm:$0xf]
    %v4107 = vld [vmem:[%s4053 + $0xd4] sm:$0xf]
    %v4108 = vld [vmem:[%s4053 + $0xd8] sm:$0xf]
    %v4109 = vld [vmem:[%s4053 + $0xdc] sm:$0xf]
    %v4110 = vld [vmem:[%s4053 + $0xe0] sm:$0xf]
    %v4111 = vld [vmem:[%s4053 + $0xe4] sm:$0xf]
    %v4112 = vld [vmem:[%s4053 + $0xe8] sm:$0xf]
    %v4113 = vld [vmem:[%s4053 + $0xec] sm:$0xf]
    %v4114 = vld [vmem:[%s4053 + $0xf0] sm:$0xf]
    %v4115 = vld [vmem:[%s4053 + $0xf4] sm:$0xf]
    %v4116 = vld [vmem:[%s4053 + $0xf8] sm:$0xf]
    %v4117 = vld [vmem:[%s4053 + $0xfc] sm:$0xf]
    %v4118 = vld [vmem:[%s4053 + $0x100] sm:$0xf]
    %v4119 = vld [vmem:[%s4053 + $0x104] sm:$0xf]
    %v4120 = vld [vmem:[%s4053 + $0x108] sm:$0xf]
    %v4121 = vld [vmem:[%s4053 + $0x10c] sm:$0xf]
    %v4122 = vld [vmem:[%s4053 + $0x110] sm:$0xf]
    %v4123 = vld [vmem:[%s4053 + $0x114] sm:$0xf]
    %v4124 = vld [vmem:[%s4053 + $0x118] sm:$0xf]
    %v4125 = vld [vmem:[%s4053 + $0x11c] sm:$0xf]
    %v4126 = vld [vmem:[%s4053 + $0x120] sm:$0xf]
    %v4127 = vld [vmem:[%s4053 + $0x124] sm:$0xf]
    %v4128 = vld [vmem:[%s4053 + $0x128] sm:$0xf]
    %v4129 = vld [vmem:[%s4053 + $0x12c] sm:$0xf]
    %v4130 = vld [vmem:[%s4053 + $0x130] sm:$0xf]
    %v4131 = vld [vmem:[%s4053 + $0x134] sm:$0xf]
    %v4132 = vld [vmem:[%s4053 + $0x138] sm:$0xf]
    %v4133 = vld [vmem:[%s4053 + $0x13c] sm:$0xf]
    %v4134 = vld [vmem:[%s4053 + $0x140] sm:$0xf]
    %v4135 = vld [vmem:[%s4053 + $0x144] sm:$0xf]
    %v4136 = vld [vmem:[%s4053 + $0x148] sm:$0xf]
    %v4137 = vld [vmem:[%s4053 + $0x14c] sm:$0xf]
    %v4138 = vld [vmem:[%s4053 + $0x150] sm:$0xf]
    %v4139 = vld [vmem:[%s4053 + $0x154] sm:$0xf]
    %v4140 = vld [vmem:[%s4053 + $0x158] sm:$0xf]
    %v4141 = vld [vmem:[%s4053 + $0x15c] sm:$0xf]
    %v4142 = vld [vmem:[%s4053 + $0x160] sm:$0xf]
    %v4143 = vld [vmem:[%s4053 + $0x164] sm:$0xf]
    %v4144 = vld [vmem:[%s4053 + $0x168] sm:$0xf]
    %v4145 = vld [vmem:[%s4053 + $0x16c] sm:$0xf]
    %v4146 = vld [vmem:[%s4053 + $0x170] sm:$0xf]
    %v4147 = vld [vmem:[%s4053 + $0x174] sm:$0xf]
    %v4148 = vld [vmem:[%s4053 + $0x178] sm:$0xf]
    %v4149 = vld [vmem:[%s4053 + $0x17c] sm:$0xf]
    %v4150 = vld [vmem:[%s4053 + $0x180] sm:$0xf]
    %v4151 = vld [vmem:[%s4053 + $0x184] sm:$0xf]
    %v4152 = vld [vmem:[%s4053 + $0x188] sm:$0xf]
    %v4153 = vld [vmem:[%s4053 + $0x18c] sm:$0xf]
    %v4154 = vld [vmem:[%s4053 + $0x190] sm:$0xf]
    %v4155 = vld [vmem:[%s4053 + $0x194] sm:$0xf]
    %v4156 = vld [vmem:[%s4053 + $0x198] sm:$0xf]
    %v4157 = vld [vmem:[%s4053 + $0x19c] sm:$0xf]
    %v4158 = vld [vmem:[%s4053 + $0x1a0] sm:$0xf]
    %v4159 = vld [vmem:[%s4053 + $0x1a4] sm:$0xf]
    %v4160 = vld [vmem:[%s4053 + $0x1a8] sm:$0xf]
    %v4161 = vld [vmem:[%s4053 + $0x1ac] sm:$0xf]
    %v4162 = vld [vmem:[%s4053 + $0x1b0] sm:$0xf]
    %v4163 = vld [vmem:[%s4053 + $0x1b4] sm:$0xf]
    %v4164 = vld [vmem:[%s4053 + $0x1b8] sm:$0xf]
    %v4165 = vld [vmem:[%s4053 + $0x1bc] sm:$0xf]
    %v4166 = vld [vmem:[%s4053 + $0x1c0] sm:$0xf]
    %v4167 = vld [vmem:[%s4053 + $0x1c4] sm:$0xf]
    %v4168 = vld [vmem:[%s4053 + $0x1c8] sm:$0xf]
    %v4169 = vld [vmem:[%s4053 + $0x1cc] sm:$0xf]
    %v4170 = vld [vmem:[%s4053 + $0x1d0] sm:$0xf]
    %v4171 = vld [vmem:[%s4053 + $0x1d4] sm:$0xf]
    %v4172 = vld [vmem:[%s4053 + $0x1d8] sm:$0xf]
    %v4173 = vld [vmem:[%s4053 + $0x1dc] sm:$0xf]
    %v4174 = vld [vmem:[%s4053 + $0x1e0] sm:$0xf]
    %v4175 = vld [vmem:[%s4053 + $0x1e4] sm:$0xf]
    %v4176 = vld [vmem:[%s4053 + $0x1e8] sm:$0xf]
    %v4177 = vld [vmem:[%s4053 + $0x1ec] sm:$0xf]
    %v4178 = vld [vmem:[%s4053 + $0x1f0] sm:$0xf]
    %v4179 = vld [vmem:[%s4053 + $0x1f4] sm:$0xf]
    %v4180 = vld [vmem:[%s4053 + $0x1f8] sm:$0xf]
    %v4181 = vld [vmem:[%s4053 + $0x1fc] sm:$0xf]
    %v4182 = vld [vmem:[%s4053 + $0x200] sm:$0xf]
    %v4183 = vld [vmem:[%s4053 + $0x204] sm:$0xf]
    %v4184 = vld [vmem:[%s4053 + $0x208] sm:$0xf]
    %v4185 = vld [vmem:[%s4053 + $0x20c] sm:$0xf]
    %v4186 = vld [vmem:[%s4053 + $0x210] sm:$0xf]
    %v4187 = vld [vmem:[%s4053 + $0x214] sm:$0xf]
    %v4188 = vld [vmem:[%s4053 + $0x218] sm:$0xf]
    %v4189 = vld [vmem:[%s4053 + $0x21c] sm:$0xf]
    %v4190 = vld [vmem:[%s4053 + $0x220] sm:$0xf]
    %v4191 = vld [vmem:[%s4053 + $0x224] sm:$0xf]
    %v4192 = vld [vmem:[%s4053 + $0x228] sm:$0xf]
    %v4193 = vld [vmem:[%s4053 + $0x22c] sm:$0xf]
    %v4194 = vld [vmem:[%s4053 + $0x230] sm:$0xf]
    %v4195 = vld [vmem:[%s4053 + $0x234] sm:$0xf]
    %v4196 = vld [vmem:[%s4053 + $0x238] sm:$0xf]
    %v4197 = vld [vmem:[%s4053 + $0x23c] sm:$0xf]
    %v4342 = vunpack.c.l.b16 %v4054
    %v4343 = vunpack.c.l.b16 %v4055
    %v4344 = vunpack.c.l.b16 %v4056
    %v4345 = vunpack.c.l.b16 %v4057
    %v4346 = vunpack.c.l.b16 %v4058
    %v4347 = vunpack.c.l.b16 %v4059
    %v4348 = vunpack.c.l.b16 %v4060
    %v4349 = vunpack.c.l.b16 %v4061
    %v4350 = vunpack.c.l.b16 %v4062
    %v4351 = vunpack.c.l.b16 %v4063
    %v4352 = vunpack.c.l.b16 %v4064
    %v4353 = vunpack.c.l.b16 %v4065
    %v4354 = vunpack.c.l.b16 %v4066
    %v4355 = vunpack.c.l.b16 %v4067
    %v4356 = vunpack.c.l.b16 %v4068
    %v4357 = vunpack.c.l.b16 %v4069
    %v4358 = vunpack.c.l.b16 %v4070
    %v4359 = vunpack.c.l.b16 %v4071
    %v4360 = vunpack.c.l.b16 %v4072
    %v4361 = vunpack.c.l.b16 %v4073
    %v4362 = vunpack.c.l.b16 %v4074
    %v4363 = vunpack.c.l.b16 %v4075
    %v4364 = vunpack.c.l.b16 %v4076
    %v4365 = vunpack.c.l.b16 %v4077
    %v4366 = vunpack.c.l.b16 %v4078
    %v4367 = vunpack.c.l.b16 %v4079
    %v4368 = vunpack.c.l.b16 %v4080
    %v4369 = vunpack.c.l.b16 %v4081
    %v4370 = vunpack.c.l.b16 %v4082
    %v4371 = vunpack.c.l.b16 %v4083
    %v4372 = vunpack.c.l.b16 %v4084
    %v4373 = vunpack.c.l.b16 %v4085
    %v4374 = vunpack.c.l.b16 %v4086
    %v4375 = vunpack.c.l.b16 %v4087
    %v4376 = vunpack.c.l.b16 %v4088
    %v4377 = vunpack.c.l.b16 %v4089
    %v4378 = vunpack.c.l.b16 %v4090
    %v4379 = vunpack.c.l.b16 %v4091
    %v4380 = vunpack.c.l.b16 %v4092
    %v4381 = vunpack.c.l.b16 %v4093
    %v4382 = vunpack.c.l.b16 %v4094
    %v4383 = vunpack.c.l.b16 %v4095
    %v4384 = vunpack.c.l.b16 %v4096
    %v4385 = vunpack.c.l.b16 %v4097
    %v4386 = vunpack.c.l.b16 %v4098
    %v4387 = vunpack.c.l.b16 %v4099
    %v4388 = vunpack.c.l.b16 %v4100
    %v4389 = vunpack.c.l.b16 %v4101
    %v4390 = vunpack.c.l.b16 %v4102
    %v4391 = vunpack.c.l.b16 %v4103
    %v4392 = vunpack.c.l.b16 %v4104
    %v4393 = vunpack.c.l.b16 %v4105
    %v4394 = vunpack.c.l.b16 %v4106
    %v4395 = vunpack.c.l.b16 %v4107
    %v4396 = vunpack.c.l.b16 %v4108
    %v4397 = vunpack.c.l.b16 %v4109
    %v4398 = vunpack.c.l.b16 %v4110
    %v4399 = vunpack.c.l.b16 %v4111
    %v4400 = vunpack.c.l.b16 %v4112
    %v4401 = vunpack.c.l.b16 %v4113
    %v4402 = vunpack.c.l.b16 %v4114
    %v4403 = vunpack.c.l.b16 %v4115
    %v4404 = vunpack.c.l.b16 %v4116
    %v4405 = vunpack.c.l.b16 %v4117
    %v4406 = vunpack.c.l.b16 %v4118
    %v4407 = vunpack.c.l.b16 %v4119
    %v4408 = vunpack.c.l.b16 %v4120
    %v4409 = vunpack.c.l.b16 %v4121
    %v4410 = vunpack.c.l.b16 %v4122
    %v4411 = vunpack.c.l.b16 %v4123
    %v4412 = vunpack.c.l.b16 %v4124
    %v4413 = vunpack.c.l.b16 %v4125
    %v4414 = vunpack.c.l.b16 %v4126
    %v4415 = vunpack.c.l.b16 %v4127
    %v4416 = vunpack.c.l.b16 %v4128
    %v4417 = vunpack.c.l.b16 %v4129
    %v4418 = vunpack.c.l.b16 %v4130
    %v4419 = vunpack.c.l.b16 %v4131
    %v4420 = vunpack.c.l.b16 %v4132
    %v4421 = vunpack.c.l.b16 %v4133
    %v4422 = vunpack.c.l.b16 %v4134
    %v4423 = vunpack.c.l.b16 %v4135
    %v4424 = vunpack.c.l.b16 %v4136
    %v4425 = vunpack.c.l.b16 %v4137
    %v4426 = vunpack.c.l.b16 %v4138
    %v4427 = vunpack.c.l.b16 %v4139
    %v4428 = vunpack.c.l.b16 %v4140
    %v4429 = vunpack.c.l.b16 %v4141
    %v4430 = vunpack.c.l.b16 %v4142
    %v4431 = vunpack.c.l.b16 %v4143
    %v4432 = vunpack.c.l.b16 %v4144
    %v4433 = vunpack.c.l.b16 %v4145
    %v4434 = vunpack.c.l.b16 %v4146
    %v4435 = vunpack.c.l.b16 %v4147
    %v4436 = vunpack.c.l.b16 %v4148
    %v4437 = vunpack.c.l.b16 %v4149
    %v4438 = vunpack.c.l.b16 %v4150
    %v4439 = vunpack.c.l.b16 %v4151
    %v4440 = vunpack.c.l.b16 %v4152
    %v4441 = vunpack.c.l.b16 %v4153
    %v4442 = vunpack.c.l.b16 %v4154
    %v4443 = vunpack.c.l.b16 %v4155
    %v4444 = vunpack.c.l.b16 %v4156
    %v4445 = vunpack.c.l.b16 %v4157
    %v4446 = vunpack.c.l.b16 %v4158
    %v4447 = vunpack.c.l.b16 %v4159
    %v4448 = vunpack.c.l.b16 %v4160
    %v4449 = vunpack.c.l.b16 %v4161
    %v4450 = vunpack.c.l.b16 %v4162
    %v4451 = vunpack.c.l.b16 %v4163
    %v4452 = vunpack.c.l.b16 %v4164
    %v4453 = vunpack.c.l.b16 %v4165
    %v4454 = vunpack.c.l.b16 %v4166
    %v4455 = vunpack.c.l.b16 %v4167
    %v4456 = vunpack.c.l.b16 %v4168
    %v4457 = vunpack.c.l.b16 %v4169
    %v4458 = vunpack.c.l.b16 %v4170
    %v4459 = vunpack.c.l.b16 %v4171
    %v4460 = vunpack.c.l.b16 %v4172
    %v4461 = vunpack.c.l.b16 %v4173
    %v4462 = vunpack.c.l.b16 %v4174
    %v4463 = vunpack.c.l.b16 %v4175
    %v4464 = vunpack.c.l.b16 %v4176
    %v4465 = vunpack.c.l.b16 %v4177
    %v4466 = vunpack.c.l.b16 %v4178
    %v4467 = vunpack.c.l.b16 %v4179
    %v4468 = vunpack.c.l.b16 %v4180
    %v4469 = vunpack.c.l.b16 %v4181
    %v4470 = vunpack.c.l.b16 %v4182
    %v4471 = vunpack.c.l.b16 %v4183
    %v4472 = vunpack.c.l.b16 %v4184
    %v4473 = vunpack.c.l.b16 %v4185
    %v4474 = vunpack.c.l.b16 %v4186
    %v4475 = vunpack.c.l.b16 %v4187
    %v4476 = vunpack.c.l.b16 %v4188
    %v4477 = vunpack.c.l.b16 %v4189
    %v4478 = vunpack.c.l.b16 %v4190
    %v4479 = vunpack.c.l.b16 %v4191
    %v4480 = vunpack.c.l.b16 %v4192
    %v4481 = vunpack.c.l.b16 %v4193
    %v4482 = vunpack.c.l.b16 %v4194
    %v4483 = vunpack.c.l.b16 %v4195
    %v4484 = vunpack.c.l.b16 %v4196
    %v4485 = vunpack.c.l.b16 %v4197
    %v4486 = vpack.c.b16 %v4343, %v4342
    %v4487 = vpack.c.b16 %v4345, %v4344
    %v4488 = vpack.c.b16 %v4347, %v4346
    %v4489 = vpack.c.b16 %v4349, %v4348
    %v4490 = vpack.c.b16 %v4351, %v4350
    %v4491 = vpack.c.b16 %v4353, %v4352
    %v4492 = vpack.c.b16 %v4355, %v4354
    %v4493 = vpack.c.b16 %v4357, %v4356
    %v4494 = vpack.c.b16 %v4359, %v4358
    %v4495 = vpack.c.b16 %v4361, %v4360
    %v4496 = vpack.c.b16 %v4363, %v4362
    %v4497 = vpack.c.b16 %v4365, %v4364
    %v4498 = vpack.c.b16 %v4367, %v4366
    %v4499 = vpack.c.b16 %v4369, %v4368
    %v4500 = vpack.c.b16 %v4371, %v4370
    %v4501 = vpack.c.b16 %v4373, %v4372
    %v4502 = vpack.c.b16 %v4375, %v4374
    %v4503 = vpack.c.b16 %v4377, %v4376
    %v4504 = vpack.c.b16 %v4379, %v4378
    %v4505 = vpack.c.b16 %v4381, %v4380
    %v4506 = vpack.c.b16 %v4383, %v4382
    %v4507 = vpack.c.b16 %v4385, %v4384
    %v4508 = vpack.c.b16 %v4387, %v4386
    %v4509 = vpack.c.b16 %v4389, %v4388
    %v4510 = vpack.c.b16 %v4391, %v4390
    %v4511 = vpack.c.b16 %v4393, %v4392
    %v4512 = vpack.c.b16 %v4395, %v4394
    %v4513 = vpack.c.b16 %v4397, %v4396
    %v4514 = vpack.c.b16 %v4399, %v4398
    %v4515 = vpack.c.b16 %v4401, %v4400
    %v4516 = vpack.c.b16 %v4403, %v4402
    %v4517 = vpack.c.b16 %v4405, %v4404
    %v4518 = vpack.c.b16 %v4407, %v4406
    %v4519 = vpack.c.b16 %v4409, %v4408
    %v4520 = vpack.c.b16 %v4411, %v4410
    %v4521 = vpack.c.b16 %v4413, %v4412
    %v4522 = vpack.c.b16 %v4415, %v4414
    %v4523 = vpack.c.b16 %v4417, %v4416
    %v4524 = vpack.c.b16 %v4419, %v4418
    %v4525 = vpack.c.b16 %v4421, %v4420
    %v4526 = vpack.c.b16 %v4423, %v4422
    %v4527 = vpack.c.b16 %v4425, %v4424
    %v4528 = vpack.c.b16 %v4427, %v4426
    %v4529 = vpack.c.b16 %v4429, %v4428
    %v4530 = vpack.c.b16 %v4431, %v4430
    %v4531 = vpack.c.b16 %v4433, %v4432
    %v4532 = vpack.c.b16 %v4435, %v4434
    %v4533 = vpack.c.b16 %v4437, %v4436
    %v4534 = vpack.c.b16 %v4439, %v4438
    %v4535 = vpack.c.b16 %v4441, %v4440
    %v4536 = vpack.c.b16 %v4443, %v4442
    %v4537 = vpack.c.b16 %v4445, %v4444
    %v4538 = vpack.c.b16 %v4447, %v4446
    %v4539 = vpack.c.b16 %v4449, %v4448
    %v4540 = vpack.c.b16 %v4451, %v4450
    %v4541 = vpack.c.b16 %v4453, %v4452
    %v4542 = vpack.c.b16 %v4455, %v4454
    %v4543 = vpack.c.b16 %v4457, %v4456
    %v4544 = vpack.c.b16 %v4459, %v4458
    %v4545 = vpack.c.b16 %v4461, %v4460
    %v4546 = vpack.c.b16 %v4463, %v4462
    %v4547 = vpack.c.b16 %v4465, %v4464
    %v4548 = vpack.c.b16 %v4467, %v4466
    %v4549 = vpack.c.b16 %v4469, %v4468
    %v4550 = vpack.c.b16 %v4471, %v4470
    %v4551 = vpack.c.b16 %v4473, %v4472
    %v4552 = vpack.c.b16 %v4475, %v4474
    %v4553 = vpack.c.b16 %v4477, %v4476
    %v4554 = vpack.c.b16 %v4479, %v4478
    %v4555 = vpack.c.b16 %v4481, %v4480
    %v4556 = vpack.c.b16 %v4483, %v4482
    %v4557 = vpack.c.b16 %v4485, %v4484
    %4630 = vmatprep.subr.bf16.mxu0 0
    %4631 = vmatpush1.bf16.msra.mxu0 %v4486
    %4632 = vmatprep.subr.bf16.mxu0 0
    %4633 = vmatpush1.bf16.msra.mxu0 %v4487
    %4634 = vmatprep.subr.bf16.mxu0 0
    %4635 = vmatpush1.bf16.msra.mxu0 %v4488
    %4636 = vmatprep.subr.bf16.mxu0 0
    %4637 = vmatpush1.bf16.msra.mxu0 %v4489
    %4638 = vmatprep.subr.bf16.mxu0 0
    %4639 = vmatpush1.bf16.msra.mxu0 %v4490
    %4640 = vmatprep.subr.bf16.mxu0 0
    %4641 = vmatpush1.bf16.msra.mxu0 %v4491
    %4642 = vmatprep.subr.bf16.mxu0 0
    %4643 = vmatpush1.bf16.msra.mxu0 %v4492
    %4644 = vmatprep.subr.bf16.mxu0 0
    %4645 = vmatpush1.bf16.msra.mxu0 %v4493
    %4646 = vmatprep.subr.bf16.mxu0 0
    %4647 = vmatpush1.bf16.msra.mxu0 %v4494
    %4648 = vmatprep.subr.bf16.mxu0 0
    %4649 = vmatpush1.bf16.msra.mxu0 %v4495
    %4650 = vmatprep.subr.bf16.mxu0 0
    %4651 = vmatpush1.bf16.msra.mxu0 %v4496
    %4652 = vmatprep.subr.bf16.mxu0 0
    %4653 = vmatpush1.bf16.msra.mxu0 %v4497
    %4654 = vmatprep.subr.bf16.mxu0 0
    %4655 = vmatpush1.bf16.msra.mxu0 %v4498
    %4656 = vmatprep.subr.bf16.mxu0 0
    %4657 = vmatpush1.bf16.msra.mxu0 %v4499
    %4658 = vmatprep.subr.bf16.mxu0 0
    %4659 = vmatpush1.bf16.msra.mxu0 %v4500
    %4660 = vmatprep.subr.bf16.mxu0 0
    %4661 = vmatpush1.bf16.msra.mxu0 %v4501
    %4662 = vmatprep.mubr.bf16.mxu0 %v4018
    %4663 = vmatmul.mubr.bf16.gmra.mrb[0].mxu0 %v4017
    %v4664 = vpop.f32.mrb[0].mxu0
    %v4665 = vadd.f32 0.0, %v4664
    %v4666 = vpop.f32.mrb[0].mxu0
    %v4667 = vpop.f32.mrb[0].mxu0
    %v4668 = vadd.f32 0.0, %v4667
    %v4669 = vpop.f32.mrb[0].mxu0
    %4670 = vmatprep.mubr.bf16.mxu0 %v4027
    %4671 = vmatmul.mubr.bf16.gmra.mrb[0].mxu0 %v4026
    %v4672 = vpop.f32.mrb[0].mxu0
    %v4673 = vadd.f32 0.0, %v4672
    %v4674 = vpop.f32.mrb[0].mxu0
    %v4675 = vpop.f32.mrb[0].mxu0
    %v4676 = vadd.f32 0.0, %v4675
    %v4677 = vpop.f32.mrb[0].mxu0
    %4678 = vmatprep.mubr.bf16.mxu0 %v4036
    %4679 = vmatmul.mubr.bf16.gmra.mrb[0].mxu0 %v4035
    %v4680 = vpop.f32.mrb[0].mxu0
    %v4681 = vadd.f32 0.0, %v4680
    %v4682 = vpop.f32.mrb[0].mxu0
    %v4683 = vpop.f32.mrb[0].mxu0
    %v4684 = vadd.f32 0.0, %v4683
    %v4685 = vpop.f32.mrb[0].mxu0
    %4686 = vmatprep.mubr.bf16.mxu0 %v4045
    %4687 = vmatmul.mubr.bf16.gmra.mrb[0].mxu0 %v4044
    %v4688 = vpop.f32.mrb[0].mxu0
    %v4689 = vadd.f32 0.0, %v4688
    %v4690 = vpop.f32.mrb[0].mxu0
    %v4691 = vpop.f32.mrb[0].mxu0
    %v4692 = vadd.f32 0.0, %v4691
    %v4693 = vpop.f32.mrb[0].mxu0
    %4694 = vdwg.mxu0
    %4695 = vmatprep.subr.bf16.mxu0 0
    %4696 = vmatpush1.bf16.msra.mxu0 %v4502
    %4697 = vmatprep.subr.bf16.mxu0 0
    %4698 = vmatpush1.bf16.msra.mxu0 %v4503
    %4699 = vmatprep.subr.bf16.mxu0 0
    %4700 = vmatpush1.bf16.msra.mxu0 %v4504
    %4701 = vmatprep.subr.bf16.mxu0 0
    %4702 = vmatpush1.bf16.msra.mxu0 %v4505
    %4703 = vmatprep.subr.bf16.mxu0 0
    %4704 = vmatpush1.bf16.msra.mxu0 %v4506
    %4705 = vmatprep.subr.bf16.mxu0 0
    %4706 = vmatpush1.bf16.msra.mxu0 %v4507
    %4707 = vmatprep.subr.bf16.mxu0 0
    %4708 = vmatpush1.bf16.msra.mxu0 %v4508
    %4709 = vmatprep.subr.bf16.mxu0 0
    %4710 = vmatpush1.bf16.msra.mxu0 %v4509
    %4711 = vmatprep.subr.bf16.mxu0 0
    %4712 = vmatpush1.bf16.msra.mxu0 %v4510
    %4713 = vmatprep.subr.bf16.mxu0 0
    %4714 = vmatpush1.bf16.msra.mxu0 %v4511
    %4715 = vmatprep.subr.bf16.mxu0 0
    %4716 = vmatpush1.bf16.msra.mxu0 %v4512
    %4717 = vmatprep.subr.bf16.mxu0 0
    %4718 = vmatpush1.bf16.msra.mxu0 %v4513
    %4719 = vmatprep.subr.bf16.mxu0 0
    %4720 = vmatpush1.bf16.msra.mxu0 %v4514
    %4721 = vmatprep.subr.bf16.mxu0 0
    %4722 = vmatpush1.bf16.msra.mxu0 %v4515
    %4723 = vmatprep.subr.bf16.mxu0 0
    %4724 = vmatpush1.bf16.msra.mxu0 %v4516
    %4725 = vmatprep.subr.bf16.mxu0 0
    %4726 = vmatpush1.bf16.msra.mxu0 %v4517
    %4727 = vmatprep.mubr.bf16.mxu0 %v4020
    %4728 = vmatmul.mubr.bf16.gmra.mrb[0].mxu0 %v4019
    %v4729 = vpop.f32.mrb[0].mxu0
    %v4730 = vadd.f32 %v4665, %v4729
    %v4731 = vpop.f32.mrb[0].mxu0
    %v4732 = vpop.f32.mrb[0].mxu0
    %v4733 = vadd.f32 %v4668, %v4732
    %v4734 = vpop.f32.mrb[0].mxu0
    %4735 = vmatprep.mubr.bf16.mxu0 %v4029
    %4736 = vmatmul.mubr.bf16.gmra.mrb[0].mxu0 %v4028
    %v4737 = vpop.f32.mrb[0].mxu0
    %v4738 = vadd.f32 %v4673, %v4737
    %v4739 = vpop.f32.mrb[0].mxu0
    %v4740 = vpop.f32.mrb[0].mxu0
    %v4741 = vadd.f32 %v4676, %v4740
    %v4742 = vpop.f32.mrb[0].mxu0
    %4743 = vmatprep.mubr.bf16.mxu0 %v4038
    %4744 = vmatmul.mubr.bf16.gmra.mrb[0].mxu0 %v4037
    %v4745 = vpop.f32.mrb[0].mxu0
    %v4746 = vadd.f32 %v4681, %v4745
    %v4747 = vpop.f32.mrb[0].mxu0
    %v4748 = vpop.f32.mrb[0].mxu0
    %v4749 = vadd.f32 %v4684, %v4748
    %v4750 = vpop.f32.mrb[0].mxu0
    %4751 = vmatprep.mubr.bf16.mxu0 %v4047
    %4752 = vmatmul.mubr.bf16.gmra.mrb[0].mxu0 %v4046
    %v4753 = vpop.f32.mrb[0].mxu0
    %v4754 = vadd.f32 %v4689, %v4753
    %v4755 = vpop.f32.mrb[0].mxu0
    %v4756 = vpop.f32.mrb[0].mxu0
    %v4757 = vadd.f32 %v4692, %v4756
    %v4758 = vpop.f32.mrb[0].mxu0
    %4759 = vdwg.mxu0
    %4760 = vmatprep.subr.bf16.mxu0 0
    %4761 = vmatpush1.bf16.msra.mxu0 %v4518
    %4762 = vmatprep.subr.bf16.mxu0 0
    %4763 = vmatpush1.bf16.msra.mxu0 %v4519
    %4764 = vmatprep.subr.bf16.mxu0 0
    %4765 = vmatpush1.bf16.msra.mxu0 %v4520
    %4766 = vmatprep.subr.bf16.mxu0 0
    %4767 = vmatpush1.bf16.msra.mxu0 %v4521
    %4768 = vmatprep.subr.bf16.mxu0 0
    %4769 = vmatpush1.bf16.msra.mxu0 %v4522
    %4770 = vmatprep.subr.bf16.mxu0 0
    %4771 = vmatpush1.bf16.msra.mxu0 %v4523
    %4772 = vmatprep.subr.bf16.mxu0 0
    %4773 = vmatpush1.bf16.msra.mxu0 %v4524
    %4774 = vmatprep.subr.bf16.mxu0 0
    %4775 = vmatpush1.bf16.msra.mxu0 %v4525
    %4776 = vmatprep.subr.bf16.mxu0 0
    %4777 = vmatpush1.bf16.msra.mxu0 %v4526
    %4778 = vmatprep.subr.bf16.mxu0 0
    %4779 = vmatpush1.bf16.msra.mxu0 %v4527
    %4780 = vmatprep.subr.bf16.mxu0 0
    %4781 = vmatpush1.bf16.msra.mxu0 %v4528
    %4782 = vmatprep.subr.bf16.mxu0 0
    %4783 = vmatpush1.bf16.msra.mxu0 %v4529
    %4784 = vmatprep.subr.bf16.mxu0 0
    %4785 = vmatpush1.bf16.msra.mxu0 %v4530
    %4786 = vmatprep.subr.bf16.mxu0 0
    %4787 = vmatpush1.bf16.msra.mxu0 %v4531
    %4788 = vmatprep.subr.bf16.mxu0 0
    %4789 = vmatpush1.bf16.msra.mxu0 %v4532
    %4790 = vmatprep.subr.bf16.mxu0 0
    %4791 = vmatpush1.bf16.msra.mxu0 %v4533
    %4792 = vmatprep.mubr.bf16.mxu0 %v4022
    %4793 = vmatmul.mubr.bf16.gmra.mrb[0].mxu0 %v4021
    %v4794 = vpop.f32.mrb[0].mxu0
    %v4795 = vadd.f32 %v4730, %v4794
    %v4796 = vpop.f32.mrb[0].mxu0
    %v4797 = vpop.f32.mrb[0].mxu0
    %v4798 = vadd.f32 %v4733, %v4797
    %v4799 = vpop.f32.mrb[0].mxu0
    %4800 = vmatprep.mubr.bf16.mxu0 %v4031
    %4801 = vmatmul.mubr.bf16.gmra.mrb[0].mxu0 %v4030
    %v4802 = vpop.f32.mrb[0].mxu0
    %v4803 = vadd.f32 %v4738, %v4802
    %v4804 = vpop.f32.mrb[0].mxu0
    %v4805 = vpop.f32.mrb[0].mxu0
    %v4806 = vadd.f32 %v4741, %v4805
    %v4807 = vpop.f32.mrb[0].mxu0
    %4808 = vmatprep.mubr.bf16.mxu0 %v4040
    %4809 = vmatmul.mubr.bf16.gmra.mrb[0].mxu0 %v4039
    %v4810 = vpop.f32.mrb[0].mxu0
    %v4811 = vadd.f32 %v4746, %v4810
    %v4812 = vpop.f32.mrb[0].mxu0
    %v4813 = vpop.f32.mrb[0].mxu0
    %v4814 = vadd.f32 %v4749, %v4813
    %v4815 = vpop.f32.mrb[0].mxu0
    %4816 = vmatprep.mubr.bf16.mxu0 %v4049
    %4817 = vmatmul.mubr.bf16.gmra.mrb[0].mxu0 %v4048
    %v4818 = vpop.f32.mrb[0].mxu0
    %v4819 = vadd.f32 %v4754, %v4818
    %v4820 = vpop.f32.mrb[0].mxu0
    %v4821 = vpop.f32.mrb[0].mxu0
    %v4822 = vadd.f32 %v4757, %v4821
    %v4823 = vpop.f32.mrb[0].mxu0
    %4824 = vdwg.mxu0
    %4825 = vmatprep.subr.bf16.mxu0 0
    %4826 = vmatpush1.bf16.msra.mxu0 %v4534
    %4827 = vmatprep.subr.bf16.mxu0 0
    %4828 = vmatpush1.bf16.msra.mxu0 %v4535
    %4829 = vmatprep.subr.bf16.mxu0 0
    %4830 = vmatpush1.bf16.msra.mxu0 %v4536
    %4831 = vmatprep.subr.bf16.mxu0 0
    %4832 = vmatpush1.bf16.msra.mxu0 %v4537
    %4833 = vmatprep.subr.bf16.mxu0 0
    %4834 = vmatpush1.bf16.msra.mxu0 %v4538
    %4835 = vmatprep.subr.bf16.mxu0 0
    %4836 = vmatpush1.bf16.msra.mxu0 %v4539
    %4837 = vmatprep.subr.bf16.mxu0 0
    %4838 = vmatpush1.bf16.msra.mxu0 %v4540
    %4839 = vmatprep.subr.bf16.mxu0 0
    %4840 = vmatpush1.bf16.msra.mxu0 %v4541
    %4841 = vmatprep.subr.bf16.mxu0 0
    %4842 = vmatpush1.bf16.msra.mxu0 %v4542
    %4843 = vmatprep.subr.bf16.mxu0 0
    %4844 = vmatpush1.bf16.msra.mxu0 %v4543
    %4845 = vmatprep.subr.bf16.mxu0 0
    %4846 = vmatpush1.bf16.msra.mxu0 %v4544
    %4847 = vmatprep.subr.bf16.mxu0 0
    %4848 = vmatpush1.bf16.msra.mxu0 %v4545
    %4849 = vmatprep.subr.bf16.mxu0 0
    %4850 = vmatpush1.bf16.msra.mxu0 %v4546
    %4851 = vmatprep.subr.bf16.mxu0 0
    %4852 = vmatpush1.bf16.msra.mxu0 %v4547
    %4853 = vmatprep.subr.bf16.mxu0 0
    %4854 = vmatpush1.bf16.msra.mxu0 %v4548
    %4855 = vmatprep.subr.bf16.mxu0 0
    %4856 = vmatpush1.bf16.msra.mxu0 %v4549
    %4857 = vmatprep.mubr.bf16.mxu0 %v4024
    %4858 = vmatmul.mubr.bf16.gmra.mrb[0].mxu0 %v4023
    %v4859 = vpop.f32.mrb[0].mxu0
    %v4860 = vadd.f32 %v4795, %v4859
    %v4861 = vpop.f32.mrb[0].mxu0
    %v4862 = vpop.f32.mrb[0].mxu0
    %v4863 = vadd.f32 %v4798, %v4862
    %v4864 = vpop.f32.mrb[0].mxu0
    %4865 = vmatprep.mubr.bf16.mxu0 %v4033
    %4866 = vmatmul.mubr.bf16.gmra.mrb[0].mxu0 %v4032
    %v4867 = vpop.f32.mrb[0].mxu0
    %v4868 = vadd.f32 %v4803, %v4867
    %v4869 = vpop.f32.mrb[0].mxu0
    %v4870 = vpop.f32.mrb[0].mxu0
    %v4871 = vadd.f32 %v4806, %v4870
    %v4872 = vpop.f32.mrb[0].mxu0
    %4873 = vmatprep.mubr.bf16.mxu0 %v4042
    %4874 = vmatmul.mubr.bf16.gmra.mrb[0].mxu0 %v4041
    %v4875 = vpop.f32.mrb[0].mxu0
    %v4876 = vadd.f32 %v4811, %v4875
    %v4877 = vpop.f32.mrb[0].mxu0
    %v4878 = vpop.f32.mrb[0].mxu0
    %v4879 = vadd.f32 %v4814, %v4878
    %v4880 = vpop.f32.mrb[0].mxu0
    %4881 = vmatprep.mubr.bf16.mxu0 %v4051
    %4882 = vmatmul.mubr.bf16.gmra.mrb[0].mxu0 %v4050
    %v4883 = vpop.f32.mrb[0].mxu0
    %v4884 = vadd.f32 %v4819, %v4883
    %v4885 = vpop.f32.mrb[0].mxu0
    %v4886 = vpop.f32.mrb[0].mxu0
    %v4887 = vadd.f32 %v4822, %v4886
    %v4888 = vpop.f32.mrb[0].mxu0
    %4889 = vdwg.mxu0
    %4890 = vmatprep.subr.bf16.mxu0 0
    %4891 = vmatpush1.bf16.msra.mxu0 %v4550
    %4892 = vmatprep.subr.bf16.mxu0 0
    %4893 = vmatpush1.bf16.msra.mxu0 %v4551
    %4894 = vmatprep.subr.bf16.mxu0 0
    %4895 = vmatpush1.bf16.msra.mxu0 %v4552
    %4896 = vmatprep.subr.bf16.mxu0 0
    %4897 = vmatpush1.bf16.msra.mxu0 %v4553
    %4898 = vmatprep.subr.bf16.mxu0 0
    %4899 = vmatpush1.bf16.msra.mxu0 %v4554
    %4900 = vmatprep.subr.bf16.mxu0 0
    %4901 = vmatpush1.bf16.msra.mxu0 %v4555
    %4902 = vmatprep.subr.bf16.mxu0 0
    %4903 = vmatpush1.bf16.msra.mxu0 %v4556
    %4904 = vmatprep.subr.bf16.mxu0 0
    %4905 = vmatpush1.bf16.msra.mxu0 %v4557
    %4906 = vmatprep.subr.bf16.mxu0 0
    %4907 = vmatpush1.bf16.msra.mxu0 0
    %4908 = vmatprep.subr.bf16.mxu0 0
    %4909 = vmatpush1.bf16.msra.mxu0 0
    %4910 = vmatprep.subr.bf16.mxu0 0
    %4911 = vmatpush1.bf16.msra.mxu0 0
    %4912 = vmatprep.subr.bf16.mxu0 0
    %4913 = vmatpush1.bf16.msra.mxu0 0
    %4914 = vmatprep.subr.bf16.mxu0 0
    %4915 = vmatpush1.bf16.msra.mxu0 0
    %4916 = vmatprep.subr.bf16.mxu0 0
    %4917 = vmatpush1.bf16.msra.mxu0 0
    %4918 = vmatprep.subr.bf16.mxu0 0
    %4919 = vmatpush1.bf16.msra.mxu0 0
    %4920 = vmatprep.subr.bf16.mxu0 0
    %4921 = vmatpush1.bf16.msra.mxu0 0
    %4922 = vmatprep.mubr.bf16.mxu0 0
    %4923 = vmatmul.mubr.bf16.gmra.mrb[0].mxu0 %v4025
    %v4924 = vpop.f32.mrb[0].mxu0
    %v4925 = vadd.f32 %v4860, %v4924
    %v4926 = vpop.f32.mrb[0].mxu0
    %v4927 = vpop.f32.mrb[0].mxu0
    %v4928 = vadd.f32 %v4863, %v4927
    %v4929 = vpop.f32.mrb[0].mxu0
    %4930 = vmatprep.mubr.bf16.mxu0 0
    %4931 = vmatmul.mubr.bf16.gmra.mrb[0].mxu0 %v4034
    %v4932 = vpop.f32.mrb[0].mxu0
    %v4933 = vadd.f32 %v4868, %v4932
    %v4934 = vpop.f32.mrb[0].mxu0
    %v4935 = vpop.f32.mrb[0].mxu0
    %v4936 = vadd.f32 %v4871, %v4935
    %v4937 = vpop.f32.mrb[0].mxu0
    %4938 = vmatprep.mubr.bf16.mxu0 0
    %4939 = vmatmul.mubr.bf16.gmra.mrb[0].mxu0 %v4043
    %v4940 = vpop.f32.mrb[0].mxu0
    %v4941 = vadd.f32 %v4876, %v4940
    %v4942 = vpop.f32.mrb[0].mxu0
    %v4943 = vpop.f32.mrb[0].mxu0
    %v4944 = vadd.f32 %v4879, %v4943
    %v4945 = vpop.f32.mrb[0].mxu0
    %4946 = vmatprep.mubr.bf16.mxu0 0
    %4947 = vmatmul.mubr.bf16.gmra.mrb[0].mxu0 %v4052
    %v4948 = vpop.f32.mrb[0].mxu0
    %v4949 = vadd.f32 %v4884, %v4948
    %v4950 = vpop.f32.mrb[0].mxu0
    %v4951 = vpop.f32.mrb[0].mxu0
    %v4952 = vadd.f32 %v4887, %v4951
    %v4953 = vpop.f32.mrb[0].mxu0
    %4954 = vdwg.mxu0
    %v4955 = vadd.f32 %v4925, %v4928
    %v4956 = vadd.f32 %v4955, %v4933
    %v4957 = vadd.f32 %v4956, %v4936
    %v4958 = vadd.f32 %v4957, %v4941
    %v4959 = vadd.f32 %v4958, %v4944
    %v4960 = vadd.f32 %v4959, %v4949
    %v4961 = vadd.f32 %v4960, %v4952
    %v4962 = vrot.slane %v4961, 4
    %v4963 = vadd.f32 %v4961, %v4962
    %v4964 = vrot.slane %v4963, 2
    %v4965 = vadd.f32 %v4963, %v4964
    %v4966 = vrot.slane %v4965, 1
    %v4967 = vadd.f32 %v4965, %v4966
    %v4968 = vmul.f32 %v4925, %v4925
    %v4969 = vmul.f32 %v4928, %v4928
    %v4970 = vmul.f32 %v4933, %v4933
    %v4971 = vmul.f32 %v4936, %v4936
    %v4972 = vmul.f32 %v4941, %v4941
    %v4973 = vmul.f32 %v4944, %v4944
    %v4974 = vmul.f32 %v4949, %v4949
    %v4975 = vmul.f32 %v4952, %v4952
    %v4976 = vadd.f32 %v4968, %v4969
    %v4977 = vadd.f32 %v4976, %v4970
    %v4978 = vadd.f32 %v4977, %v4971
    %v4979 = vadd.f32 %v4978, %v4972
    %v4980 = vadd.f32 %v4979, %v4973
    %v4981 = vadd.f32 %v4980, %v4974
    %v4982 = vadd.f32 %v4981, %v4975
    %v4983 = vrot.slane %v4982, 4
    %v4984 = vadd.f32 %v4982, %v4983
    %v4985 = vrot.slane %v4984, 2
    %v4986 = vadd.f32 %v4984, %v4985
    %v4987 = vrot.slane %v4986, 1
    %v4988 = vadd.f32 %v4986, %v4987
    %v4989 = vmul.f32 %v4967, 0.015625
    %v4990 = vmul.f32 %v4988, 0.015625
    %v4991 = vmul.f32 %v4989, %v4989
    %v4992 = vsub.f32 %v4990, %v4991
    %v4993 = vsub.f32 %v4925, %v4989
    %v4994 = vsub.f32 %v4928, %v4989
    %v4995 = vsub.f32 %v4933, %v4989
    %v4996 = vsub.f32 %v4936, %v4989
    %v4997 = vsub.f32 %v4941, %v4989
    %v4998 = vsub.f32 %v4944, %v4989
    %v4999 = vsub.f32 %v4949, %v4989
    %v5000 = vsub.f32 %v4952, %v4989
    %v5001 = vadd.f32 %v4992, 1e-05
    %v5002 = vrsqrt.pop %v5001
    %v5003 = vmul.f32 %v4993, %v5002
    %v5004 = vmul.f32 %v4994, %v5002
    %v5005 = vmul.f32 %v4995, %v5002
    %v5006 = vmul.f32 %v4996, %v5002
    %v5007 = vmul.f32 %v4997, %v5002
    %v5008 = vmul.f32 %v4998, %v5002
    %v5009 = vmul.f32 %v4999, %v5002
    %v5010 = vmul.f32 %v5000, %v5002
    %s5011 = scalar_lea.vmem [#allocation8], 3
    %v5012 = vld [vmem:[%s5011] sm:$0x1]
    %v5014 = vlaneseq
    %v5015 = vshrl.u32 %v5014, 7
    %v5016 = vsub.s32 0, %v5015
    %v5017 = vrot.slane %v5012, %v5016
    %v5019 = vmul.f32 %v5017, %v5003
    %v5020 = vmul.f32 %v5017, %v5004
    %v5021 = vmul.f32 %v5017, %v5005
    %v5022 = vmul.f32 %v5017, %v5006
    %v5023 = vmul.f32 %v5017, %v5007
    %v5024 = vmul.f32 %v5017, %v5008
    %v5025 = vmul.f32 %v5017, %v5009
    %v5026 = vmul.f32 %v5017, %v5010
    %s5027 = scalar_lea.vmem [#allocation10], 3
    %v5028 = vld [vmem:[%s5027] sm:$0x1]
    %v5030 = vlaneseq
    %v5031 = vshrl.u32 %v5030, 7
    %v5032 = vsub.s32 0, %v5031
    %v5033 = vrot.slane %v5028, %v5032
    %v5035 = vadd.f32 %v5019, %v5033
    %v5036 = vadd.f32 %v5020, %v5033
    %v5037 = vadd.f32 %v5021, %v5033
    %v5038 = vadd.f32 %v5022, %v5033
    %v5039 = vadd.f32 %v5023, %v5033
    %v5040 = vadd.f32 %v5024, %v5033
    %v5041 = vadd.f32 %v5025, %v5033
    %v5042 = vadd.f32 %v5026, %v5033
    %v5043 = vmax.f32 %v5035, 0.0
    %v5044 = vmax.f32 %v5036, 0.0
    %v5045 = vmax.f32 %v5037, 0.0
    %v5046 = vmax.f32 %v5038, 0.0
    %v5047 = vmax.f32 %v5039, 0.0
    %v5048 = vmax.f32 %v5040, 0.0
    %v5049 = vmax.f32 %v5041, 0.0
    %v5050 = vmax.f32 %v5042, 0.0
    %v5051 = vadd.f32 %v5043, %v2783
    %v5052 = vadd.f32 %v5044, %v2784
    %v5053 = vadd.f32 %v5045, %v2785
    %v5054 = vadd.f32 %v5046, %v2786
    %v5055 = vadd.f32 %v5047, %v2787
    %v5056 = vadd.f32 %v5048, %v2788
    %v5057 = vadd.f32 %v5049, %v2789
    %v5058 = vadd.f32 %v5050, %v2790
    %v5059 = vrot.slane %v5051, 7
    %v5060 = vrot.slane %v5052, 7
    %v5061 = vrot.slane %v5053, 7
    %v5062 = vrot.slane %v5054, 7
    %v5063 = vrot.slane %v5055, 7
    %v5064 = vrot.slane %v5056, 7
    %v5065 = vrot.slane %v5057, 7
    %v5066 = vrot.slane %v5058, 7
    %v5067 = vsel %vm540, %v5065, %v5066
    %v5068 = vsel %vm540, %v5064, %v5065
    %v5069 = vsel %vm540, %v5063, %v5064
    %v5070 = vsel %vm540, %v5062, %v5063
    %v5071 = vsel %vm540, %v5061, %v5062
    %v5072 = vsel %vm540, %v5060, %v5061
    %v5073 = vsel %vm540, %v5059, %v5060
    %v5074 = vsel %vm540, %v5066, %v5059
    %v5075 = vmul.f32 %v5067, %v142
    %v5076 = vmul.f32 %v5074, %v147
    %v5077 = vmul.f32 %v5073, %v152
    %v5078 = vmul.f32 %v5072, %v157
    %v5079 = vmul.f32 %v5071, %v162
    %v5080 = vmul.f32 %v5070, %v167
    %v5081 = vmul.f32 %v5069, %v172
    %v5082 = vmul.f32 %v5068, %v177
    %v5083 = vmul.f32 %v5058, %v191
    %v5084 = vmul.f32 %v5051, %v196
    %v5085 = vmul.f32 %v5052, %v201
    %v5086 = vmul.f32 %v5053, %v206
    %v5087 = vmul.f32 %v5054, %v211
    %v5088 = vmul.f32 %v5055, %v216
    %v5089 = vmul.f32 %v5056, %v221
    %v5090 = vmul.f32 %v5057, %v226
    %v5091 = vrot.slane %v5051, 1
    %v5092 = vrot.slane %v5052, 1
    %v5093 = vrot.slane %v5053, 1
    %v5094 = vrot.slane %v5054, 1
    %v5095 = vrot.slane %v5055, 1
    %v5096 = vrot.slane %v5056, 1
    %v5097 = vrot.slane %v5057, 1
    %v5098 = vrot.slane %v5058, 1
    %v5099 = vsel %vm573, %v5097, %v5098
    %v5100 = vsel %vm573, %v5096, %v5097
    %v5101 = vsel %vm573, %v5095, %v5096
    %v5102 = vsel %vm573, %v5094, %v5095
    %v5103 = vsel %vm573, %v5093, %v5094
    %v5104 = vsel %vm573, %v5092, %v5093
    %v5105 = vsel %vm573, %v5091, %v5092
    %v5106 = vsel %vm573, %v5098, %v5091
    %v5107 = vmul.f32 %v5106, %v240
    %v5108 = vmul.f32 %v5105, %v245
    %v5109 = vmul.f32 %v5104, %v250
    %v5110 = vmul.f32 %v5103, %v255
    %v5111 = vmul.f32 %v5102, %v260
    %v5112 = vmul.f32 %v5101, %v265
    %v5113 = vmul.f32 %v5100, %v270
    %v5114 = vmul.f32 %v5099, %v275
    %v5115 = vmul.f32 %v5074, %v289
    %v5116 = vmul.f32 %v5073, %v294
    %v5117 = vmul.f32 %v5072, %v299
    %v5118 = vmul.f32 %v5071, %v304
    %v5119 = vmul.f32 %v5070, %v309
    %v5120 = vmul.f32 %v5069, %v314
    %v5121 = vmul.f32 %v5068, %v319
    %v5122 = vmul.f32 %v5067, %v324
    %v5123 = vmul.f32 %v5105, %v338
    %v5124 = vmul.f32 %v5104, %v343
    %v5125 = vmul.f32 %v5103, %v348
    %v5126 = vmul.f32 %v5102, %v353
    %v5127 = vmul.f32 %v5101, %v358
    %v5128 = vmul.f32 %v5100, %v363
    %v5129 = vmul.f32 %v5099, %v368
    %v5130 = vmul.f32 %v5106, %v373
    %v5131 = vmul.f32 %v5073, %v387
    %v5132 = vmul.f32 %v5072, %v392
    %v5133 = vmul.f32 %v5071, %v397
    %v5134 = vmul.f32 %v5070, %v402
    %v5135 = vmul.f32 %v5069, %v407
    %v5136 = vmul.f32 %v5068, %v412
    %v5137 = vmul.f32 %v5067, %v417
    %v5138 = vmul.f32 %v5074, %v422
    %v5139 = vmul.f32 %v5052, %v436
    %v5140 = vmul.f32 %v5053, %v441
    %v5141 = vmul.f32 %v5054, %v446
    %v5142 = vmul.f32 %v5055, %v451
    %v5143 = vmul.f32 %v5056, %v456
    %v5144 = vmul.f32 %v5057, %v461
    %v5145 = vmul.f32 %v5058, %v466
    %v5146 = vmul.f32 %v5051, %v471
    %v5147 = vmul.f32 %v5104, %v485
    %v5148 = vmul.f32 %v5103, %v490
    %v5149 = vmul.f32 %v5102, %v495
    %v5150 = vmul.f32 %v5101, %v500
    %v5151 = vmul.f32 %v5100, %v505
    %v5152 = vmul.f32 %v5099, %v510
    %v5153 = vmul.f32 %v5106, %v515
    %v5154 = vmul.f32 %v5105, %v520
    %v5155 = vpack.c.bf16 %v5076, %v5075
    %v5156 = vpack.c.bf16 %v5084, %v5083
    %v5157 = vpack.c.bf16 %v5108, %v5107
    %v5158 = vpack.c.bf16 %v5116, %v5115
    %v5159 = vpack.c.bf16 %v5052, %v5051
    %v5160 = vpack.c.bf16 %v5124, %v5123
    %v5161 = vpack.c.bf16 %v5132, %v5131
    %v5162 = vpack.c.bf16 %v5140, %v5139
    %v5163 = vpack.c.bf16 %v5148, %v5147
    %v5164 = vpack.c.bf16 %v5078, %v5077
    %v5165 = vpack.c.bf16 %v5086, %v5085
    %v5166 = vpack.c.bf16 %v5110, %v5109
    %v5167 = vpack.c.bf16 %v5118, %v5117
    %v5168 = vpack.c.bf16 %v5054, %v5053
    %v5169 = vpack.c.bf16 %v5126, %v5125
    %v5170 = vpack.c.bf16 %v5134, %v5133
    %v5171 = vpack.c.bf16 %v5142, %v5141
    %v5172 = vpack.c.bf16 %v5150, %v5149
    %v5173 = vpack.c.bf16 %v5080, %v5079
    %v5174 = vpack.c.bf16 %v5088, %v5087
    %v5175 = vpack.c.bf16 %v5112, %v5111
    %v5176 = vpack.c.bf16 %v5120, %v5119
    %v5177 = vpack.c.bf16 %v5056, %v5055
    %v5178 = vpack.c.bf16 %v5128, %v5127
    %v5179 = vpack.c.bf16 %v5136, %v5135
    %v5180 = vpack.c.bf16 %v5144, %v5143
    %v5181 = vpack.c.bf16 %v5152, %v5151
    %v5182 = vpack.c.bf16 %v5082, %v5081
    %v5183 = vpack.c.bf16 %v5090, %v5089
    %v5184 = vpack.c.bf16 %v5114, %v5113
    %v5185 = vpack.c.bf16 %v5122, %v5121
    %v5186 = vpack.c.bf16 %v5058, %v5057
    %v5187 = vpack.c.bf16 %v5130, %v5129
    %v5188 = vpack.c.bf16 %v5138, %v5137
    %v5189 = vpack.c.bf16 %v5146, %v5145
    %v5190 = vpack.c.bf16 %v5154, %v5153
    %s5191 = scalar_lea.vmem [#allocation5], 2304
    %v5192 = vld [vmem:[%s5191] sm:$0xf]
    %v5193 = vld [vmem:[%s5191 + $0x4] sm:$0xf]
    %v5194 = vld [vmem:[%s5191 + $0x8] sm:$0xf]
    %v5195 = vld [vmem:[%s5191 + $0xc] sm:$0xf]
    %v5196 = vld [vmem:[%s5191 + $0x10] sm:$0xf]
    %v5197 = vld [vmem:[%s5191 + $0x14] sm:$0xf]
    %v5198 = vld [vmem:[%s5191 + $0x18] sm:$0xf]
    %v5199 = vld [vmem:[%s5191 + $0x1c] sm:$0xf]
    %v5200 = vld [vmem:[%s5191 + $0x20] sm:$0xf]
    %v5201 = vld [vmem:[%s5191 + $0x24] sm:$0xf]
    %v5202 = vld [vmem:[%s5191 + $0x28] sm:$0xf]
    %v5203 = vld [vmem:[%s5191 + $0x2c] sm:$0xf]
    %v5204 = vld [vmem:[%s5191 + $0x30] sm:$0xf]
    %v5205 = vld [vmem:[%s5191 + $0x34] sm:$0xf]
    %v5206 = vld [vmem:[%s5191 + $0x38] sm:$0xf]
    %v5207 = vld [vmem:[%s5191 + $0x3c] sm:$0xf]
    %v5208 = vld [vmem:[%s5191 + $0x40] sm:$0xf]
    %v5209 = vld [vmem:[%s5191 + $0x44] sm:$0xf]
    %v5210 = vld [vmem:[%s5191 + $0x48] sm:$0xf]
    %v5211 = vld [vmem:[%s5191 + $0x4c] sm:$0xf]
    %v5212 = vld [vmem:[%s5191 + $0x50] sm:$0xf]
    %v5213 = vld [vmem:[%s5191 + $0x54] sm:$0xf]
    %v5214 = vld [vmem:[%s5191 + $0x58] sm:$0xf]
    %v5215 = vld [vmem:[%s5191 + $0x5c] sm:$0xf]
    %v5216 = vld [vmem:[%s5191 + $0x60] sm:$0xf]
    %v5217 = vld [vmem:[%s5191 + $0x64] sm:$0xf]
    %v5218 = vld [vmem:[%s5191 + $0x68] sm:$0xf]
    %v5219 = vld [vmem:[%s5191 + $0x6c] sm:$0xf]
    %v5220 = vld [vmem:[%s5191 + $0x70] sm:$0xf]
    %v5221 = vld [vmem:[%s5191 + $0x74] sm:$0xf]
    %v5222 = vld [vmem:[%s5191 + $0x78] sm:$0xf]
    %v5223 = vld [vmem:[%s5191 + $0x7c] sm:$0xf]
    %v5224 = vld [vmem:[%s5191 + $0x80] sm:$0xf]
    %v5225 = vld [vmem:[%s5191 + $0x84] sm:$0xf]
    %v5226 = vld [vmem:[%s5191 + $0x88] sm:$0xf]
    %v5227 = vld [vmem:[%s5191 + $0x8c] sm:$0xf]
    %v5228 = vld [vmem:[%s5191 + $0x90] sm:$0xf]
    %v5229 = vld [vmem:[%s5191 + $0x94] sm:$0xf]
    %v5230 = vld [vmem:[%s5191 + $0x98] sm:$0xf]
    %v5231 = vld [vmem:[%s5191 + $0x9c] sm:$0xf]
    %v5232 = vld [vmem:[%s5191 + $0xa0] sm:$0xf]
    %v5233 = vld [vmem:[%s5191 + $0xa4] sm:$0xf]
    %v5234 = vld [vmem:[%s5191 + $0xa8] sm:$0xf]
    %v5235 = vld [vmem:[%s5191 + $0xac] sm:$0xf]
    %v5236 = vld [vmem:[%s5191 + $0xb0] sm:$0xf]
    %v5237 = vld [vmem:[%s5191 + $0xb4] sm:$0xf]
    %v5238 = vld [vmem:[%s5191 + $0xb8] sm:$0xf]
    %v5239 = vld [vmem:[%s5191 + $0xbc] sm:$0xf]
    %v5240 = vld [vmem:[%s5191 + $0xc0] sm:$0xf]
    %v5241 = vld [vmem:[%s5191 + $0xc4] sm:$0xf]
    %v5242 = vld [vmem:[%s5191 + $0xc8] sm:$0xf]
    %v5243 = vld [vmem:[%s5191 + $0xcc] sm:$0xf]
    %v5244 = vld [vmem:[%s5191 + $0xd0] sm:$0xf]
    %v5245 = vld [vmem:[%s5191 + $0xd4] sm:$0xf]
    %v5246 = vld [vmem:[%s5191 + $0xd8] sm:$0xf]
    %v5247 = vld [vmem:[%s5191 + $0xdc] sm:$0xf]
    %v5248 = vld [vmem:[%s5191 + $0xe0] sm:$0xf]
    %v5249 = vld [vmem:[%s5191 + $0xe4] sm:$0xf]
    %v5250 = vld [vmem:[%s5191 + $0xe8] sm:$0xf]
    %v5251 = vld [vmem:[%s5191 + $0xec] sm:$0xf]
    %v5252 = vld [vmem:[%s5191 + $0xf0] sm:$0xf]
    %v5253 = vld [vmem:[%s5191 + $0xf4] sm:$0xf]
    %v5254 = vld [vmem:[%s5191 + $0xf8] sm:$0xf]
    %v5255 = vld [vmem:[%s5191 + $0xfc] sm:$0xf]
    %v5256 = vld [vmem:[%s5191 + $0x100] sm:$0xf]
    %v5257 = vld [vmem:[%s5191 + $0x104] sm:$0xf]
    %v5258 = vld [vmem:[%s5191 + $0x108] sm:$0xf]
    %v5259 = vld [vmem:[%s5191 + $0x10c] sm:$0xf]
    %v5260 = vld [vmem:[%s5191 + $0x110] sm:$0xf]
    %v5261 = vld [vmem:[%s5191 + $0x114] sm:$0xf]
    %v5262 = vld [vmem:[%s5191 + $0x118] sm:$0xf]
    %v5263 = vld [vmem:[%s5191 + $0x11c] sm:$0xf]
    %v5264 = vld [vmem:[%s5191 + $0x120] sm:$0xf]
    %v5265 = vld [vmem:[%s5191 + $0x124] sm:$0xf]
    %v5266 = vld [vmem:[%s5191 + $0x128] sm:$0xf]
    %v5267 = vld [vmem:[%s5191 + $0x12c] sm:$0xf]
    %v5268 = vld [vmem:[%s5191 + $0x130] sm:$0xf]
    %v5269 = vld [vmem:[%s5191 + $0x134] sm:$0xf]
    %v5270 = vld [vmem:[%s5191 + $0x138] sm:$0xf]
    %v5271 = vld [vmem:[%s5191 + $0x13c] sm:$0xf]
    %v5272 = vld [vmem:[%s5191 + $0x140] sm:$0xf]
    %v5273 = vld [vmem:[%s5191 + $0x144] sm:$0xf]
    %v5274 = vld [vmem:[%s5191 + $0x148] sm:$0xf]
    %v5275 = vld [vmem:[%s5191 + $0x14c] sm:$0xf]
    %v5276 = vld [vmem:[%s5191 + $0x150] sm:$0xf]
    %v5277 = vld [vmem:[%s5191 + $0x154] sm:$0xf]
    %v5278 = vld [vmem:[%s5191 + $0x158] sm:$0xf]
    %v5279 = vld [vmem:[%s5191 + $0x15c] sm:$0xf]
    %v5280 = vld [vmem:[%s5191 + $0x160] sm:$0xf]
    %v5281 = vld [vmem:[%s5191 + $0x164] sm:$0xf]
    %v5282 = vld [vmem:[%s5191 + $0x168] sm:$0xf]
    %v5283 = vld [vmem:[%s5191 + $0x16c] sm:$0xf]
    %v5284 = vld [vmem:[%s5191 + $0x170] sm:$0xf]
    %v5285 = vld [vmem:[%s5191 + $0x174] sm:$0xf]
    %v5286 = vld [vmem:[%s5191 + $0x178] sm:$0xf]
    %v5287 = vld [vmem:[%s5191 + $0x17c] sm:$0xf]
    %v5288 = vld [vmem:[%s5191 + $0x180] sm:$0xf]
    %v5289 = vld [vmem:[%s5191 + $0x184] sm:$0xf]
    %v5290 = vld [vmem:[%s5191 + $0x188] sm:$0xf]
    %v5291 = vld [vmem:[%s5191 + $0x18c] sm:$0xf]
    %v5292 = vld [vmem:[%s5191 + $0x190] sm:$0xf]
    %v5293 = vld [vmem:[%s5191 + $0x194] sm:$0xf]
    %v5294 = vld [vmem:[%s5191 + $0x198] sm:$0xf]
    %v5295 = vld [vmem:[%s5191 + $0x19c] sm:$0xf]
    %v5296 = vld [vmem:[%s5191 + $0x1a0] sm:$0xf]
    %v5297 = vld [vmem:[%s5191 + $0x1a4] sm:$0xf]
    %v5298 = vld [vmem:[%s5191 + $0x1a8] sm:$0xf]
    %v5299 = vld [vmem:[%s5191 + $0x1ac] sm:$0xf]
    %v5300 = vld [vmem:[%s5191 + $0x1b0] sm:$0xf]
    %v5301 = vld [vmem:[%s5191 + $0x1b4] sm:$0xf]
    %v5302 = vld [vmem:[%s5191 + $0x1b8] sm:$0xf]
    %v5303 = vld [vmem:[%s5191 + $0x1bc] sm:$0xf]
    %v5304 = vld [vmem:[%s5191 + $0x1c0] sm:$0xf]
    %v5305 = vld [vmem:[%s5191 + $0x1c4] sm:$0xf]
    %v5306 = vld [vmem:[%s5191 + $0x1c8] sm:$0xf]
    %v5307 = vld [vmem:[%s5191 + $0x1cc] sm:$0xf]
    %v5308 = vld [vmem:[%s5191 + $0x1d0] sm:$0xf]
    %v5309 = vld [vmem:[%s5191 + $0x1d4] sm:$0xf]
    %v5310 = vld [vmem:[%s5191 + $0x1d8] sm:$0xf]
    %v5311 = vld [vmem:[%s5191 + $0x1dc] sm:$0xf]
    %v5312 = vld [vmem:[%s5191 + $0x1e0] sm:$0xf]
    %v5313 = vld [vmem:[%s5191 + $0x1e4] sm:$0xf]
    %v5314 = vld [vmem:[%s5191 + $0x1e8] sm:$0xf]
    %v5315 = vld [vmem:[%s5191 + $0x1ec] sm:$0xf]
    %v5316 = vld [vmem:[%s5191 + $0x1f0] sm:$0xf]
    %v5317 = vld [vmem:[%s5191 + $0x1f4] sm:$0xf]
    %v5318 = vld [vmem:[%s5191 + $0x1f8] sm:$0xf]
    %v5319 = vld [vmem:[%s5191 + $0x1fc] sm:$0xf]
    %v5320 = vld [vmem:[%s5191 + $0x200] sm:$0xf]
    %v5321 = vld [vmem:[%s5191 + $0x204] sm:$0xf]
    %v5322 = vld [vmem:[%s5191 + $0x208] sm:$0xf]
    %v5323 = vld [vmem:[%s5191 + $0x20c] sm:$0xf]
    %v5324 = vld [vmem:[%s5191 + $0x210] sm:$0xf]
    %v5325 = vld [vmem:[%s5191 + $0x214] sm:$0xf]
    %v5326 = vld [vmem:[%s5191 + $0x218] sm:$0xf]
    %v5327 = vld [vmem:[%s5191 + $0x21c] sm:$0xf]
    %v5328 = vld [vmem:[%s5191 + $0x220] sm:$0xf]
    %v5329 = vld [vmem:[%s5191 + $0x224] sm:$0xf]
    %v5330 = vld [vmem:[%s5191 + $0x228] sm:$0xf]
    %v5331 = vld [vmem:[%s5191 + $0x22c] sm:$0xf]
    %v5332 = vld [vmem:[%s5191 + $0x230] sm:$0xf]
    %v5333 = vld [vmem:[%s5191 + $0x234] sm:$0xf]
    %v5334 = vld [vmem:[%s5191 + $0x238] sm:$0xf]
    %v5335 = vld [vmem:[%s5191 + $0x23c] sm:$0xf]
    %v5480 = vunpack.c.l.b16 %v5192
    %v5481 = vunpack.c.l.b16 %v5193
    %v5482 = vunpack.c.l.b16 %v5194
    %v5483 = vunpack.c.l.b16 %v5195
    %v5484 = vunpack.c.l.b16 %v5196
    %v5485 = vunpack.c.l.b16 %v5197
    %v5486 = vunpack.c.l.b16 %v5198
    %v5487 = vunpack.c.l.b16 %v5199
    %v5488 = vunpack.c.l.b16 %v5200
    %v5489 = vunpack.c.l.b16 %v5201
    %v5490 = vunpack.c.l.b16 %v5202
    %v5491 = vunpack.c.l.b16 %v5203
    %v5492 = vunpack.c.l.b16 %v5204
    %v5493 = vunpack.c.l.b16 %v5205
    %v5494 = vunpack.c.l.b16 %v5206
    %v5495 = vunpack.c.l.b16 %v5207
    %v5496 = vunpack.c.l.b16 %v5208
    %v5497 = vunpack.c.l.b16 %v5209
    %v5498 = vunpack.c.l.b16 %v5210
    %v5499 = vunpack.c.l.b16 %v5211
    %v5500 = vunpack.c.l.b16 %v5212
    %v5501 = vunpack.c.l.b16 %v5213
    %v5502 = vunpack.c.l.b16 %v5214
    %v5503 = vunpack.c.l.b16 %v5215
    %v5504 = vunpack.c.l.b16 %v5216
    %v5505 = vunpack.c.l.b16 %v5217
    %v5506 = vunpack.c.l.b16 %v5218
    %v5507 = vunpack.c.l.b16 %v5219
    %v5508 = vunpack.c.l.b16 %v5220
    %v5509 = vunpack.c.l.b16 %v5221
    %v5510 = vunpack.c.l.b16 %v5222
    %v5511 = vunpack.c.l.b16 %v5223
    %v5512 = vunpack.c.l.b16 %v5224
    %v5513 = vunpack.c.l.b16 %v5225
    %v5514 = vunpack.c.l.b16 %v5226
    %v5515 = vunpack.c.l.b16 %v5227
    %v5516 = vunpack.c.l.b16 %v5228
    %v5517 = vunpack.c.l.b16 %v5229
    %v5518 = vunpack.c.l.b16 %v5230
    %v5519 = vunpack.c.l.b16 %v5231
    %v5520 = vunpack.c.l.b16 %v5232
    %v5521 = vunpack.c.l.b16 %v5233
    %v5522 = vunpack.c.l.b16 %v5234
    %v5523 = vunpack.c.l.b16 %v5235
    %v5524 = vunpack.c.l.b16 %v5236
    %v5525 = vunpack.c.l.b16 %v5237
    %v5526 = vunpack.c.l.b16 %v5238
    %v5527 = vunpack.c.l.b16 %v5239
    %v5528 = vunpack.c.l.b16 %v5240
    %v5529 = vunpack.c.l.b16 %v5241
    %v5530 = vunpack.c.l.b16 %v5242
    %v5531 = vunpack.c.l.b16 %v5243
    %v5532 = vunpack.c.l.b16 %v5244
    %v5533 = vunpack.c.l.b16 %v5245
    %v5534 = vunpack.c.l.b16 %v5246
    %v5535 = vunpack.c.l.b16 %v5247
    %v5536 = vunpack.c.l.b16 %v5248
    %v5537 = vunpack.c.l.b16 %v5249
    %v5538 = vunpack.c.l.b16 %v5250
    %v5539 = vunpack.c.l.b16 %v5251
    %v5540 = vunpack.c.l.b16 %v5252
    %v5541 = vunpack.c.l.b16 %v5253
    %v5542 = vunpack.c.l.b16 %v5254
    %v5543 = vunpack.c.l.b16 %v5255
    %v5544 = vunpack.c.l.b16 %v5256
    %v5545 = vunpack.c.l.b16 %v5257
    %v5546 = vunpack.c.l.b16 %v5258
    %v5547 = vunpack.c.l.b16 %v5259
    %v5548 = vunpack.c.l.b16 %v5260
    %v5549 = vunpack.c.l.b16 %v5261
    %v5550 = vunpack.c.l.b16 %v5262
    %v5551 = vunpack.c.l.b16 %v5263
    %v5552 = vunpack.c.l.b16 %v5264
    %v5553 = vunpack.c.l.b16 %v5265
    %v5554 = vunpack.c.l.b16 %v5266
    %v5555 = vunpack.c.l.b16 %v5267
    %v5556 = vunpack.c.l.b16 %v5268
    %v5557 = vunpack.c.l.b16 %v5269
    %v5558 = vunpack.c.l.b16 %v5270
    %v5559 = vunpack.c.l.b16 %v5271
    %v5560 = vunpack.c.l.b16 %v5272
    %v5561 = vunpack.c.l.b16 %v5273
    %v5562 = vunpack.c.l.b16 %v5274
    %v5563 = vunpack.c.l.b16 %v5275
    %v5564 = vunpack.c.l.b16 %v5276
    %v5565 = vunpack.c.l.b16 %v5277
    %v5566 = vunpack.c.l.b16 %v5278
    %v5567 = vunpack.c.l.b16 %v5279
    %v5568 = vunpack.c.l.b16 %v5280
    %v5569 = vunpack.c.l.b16 %v5281
    %v5570 = vunpack.c.l.b16 %v5282
    %v5571 = vunpack.c.l.b16 %v5283
    %v5572 = vunpack.c.l.b16 %v5284
    %v5573 = vunpack.c.l.b16 %v5285
    %v5574 = vunpack.c.l.b16 %v5286
    %v5575 = vunpack.c.l.b16 %v5287
    %v5576 = vunpack.c.l.b16 %v5288
    %v5577 = vunpack.c.l.b16 %v5289
    %v5578 = vunpack.c.l.b16 %v5290
    %v5579 = vunpack.c.l.b16 %v5291
    %v5580 = vunpack.c.l.b16 %v5292
    %v5581 = vunpack.c.l.b16 %v5293
    %v5582 = vunpack.c.l.b16 %v5294
    %v5583 = vunpack.c.l.b16 %v5295
    %v5584 = vunpack.c.l.b16 %v5296
    %v5585 = vunpack.c.l.b16 %v5297
    %v5586 = vunpack.c.l.b16 %v5298
    %v5587 = vunpack.c.l.b16 %v5299
    %v5588 = vunpack.c.l.b16 %v5300
    %v5589 = vunpack.c.l.b16 %v5301
    %v5590 = vunpack.c.l.b16 %v5302
    %v5591 = vunpack.c.l.b16 %v5303
    %v5592 = vunpack.c.l.b16 %v5304
    %v5593 = vunpack.c.l.b16 %v5305
    %v5594 = vunpack.c.l.b16 %v5306
    %v5595 = vunpack.c.l.b16 %v5307
    %v5596 = vunpack.c.l.b16 %v5308
    %v5597 = vunpack.c.l.b16 %v5309
    %v5598 = vunpack.c.l.b16 %v5310
    %v5599 = vunpack.c.l.b16 %v5311
    %v5600 = vunpack.c.l.b16 %v5312
    %v5601 = vunpack.c.l.b16 %v5313
    %v5602 = vunpack.c.l.b16 %v5314
    %v5603 = vunpack.c.l.b16 %v5315
    %v5604 = vunpack.c.l.b16 %v5316
    %v5605 = vunpack.c.l.b16 %v5317
    %v5606 = vunpack.c.l.b16 %v5318
    %v5607 = vunpack.c.l.b16 %v5319
    %v5608 = vunpack.c.l.b16 %v5320
    %v5609 = vunpack.c.l.b16 %v5321
    %v5610 = vunpack.c.l.b16 %v5322
    %v5611 = vunpack.c.l.b16 %v5323
    %v5612 = vunpack.c.l.b16 %v5324
    %v5613 = vunpack.c.l.b16 %v5325
    %v5614 = vunpack.c.l.b16 %v5326
    %v5615 = vunpack.c.l.b16 %v5327
    %v5616 = vunpack.c.l.b16 %v5328
    %v5617 = vunpack.c.l.b16 %v5329
    %v5618 = vunpack.c.l.b16 %v5330
    %v5619 = vunpack.c.l.b16 %v5331
    %v5620 = vunpack.c.l.b16 %v5332
    %v5621 = vunpack.c.l.b16 %v5333
    %v5622 = vunpack.c.l.b16 %v5334
    %v5623 = vunpack.c.l.b16 %v5335
    %v5624 = vpack.c.b16 %v5481, %v5480
    %v5625 = vpack.c.b16 %v5483, %v5482
    %v5626 = vpack.c.b16 %v5485, %v5484
    %v5627 = vpack.c.b16 %v5487, %v5486
    %v5628 = vpack.c.b16 %v5489, %v5488
    %v5629 = vpack.c.b16 %v5491, %v5490
    %v5630 = vpack.c.b16 %v5493, %v5492
    %v5631 = vpack.c.b16 %v5495, %v5494
    %v5632 = vpack.c.b16 %v5497, %v5496
    %v5633 = vpack.c.b16 %v5499, %v5498
    %v5634 = vpack.c.b16 %v5501, %v5500
    %v5635 = vpack.c.b16 %v5503, %v5502
    %v5636 = vpack.c.b16 %v5505, %v5504
    %v5637 = vpack.c.b16 %v5507, %v5506
    %v5638 = vpack.c.b16 %v5509, %v5508
    %v5639 = vpack.c.b16 %v5511, %v5510
    %v5640 = vpack.c.b16 %v5513, %v5512
    %v5641 = vpack.c.b16 %v5515, %v5514
    %v5642 = vpack.c.b16 %v5517, %v5516
    %v5643 = vpack.c.b16 %v5519, %v5518
    %v5644 = vpack.c.b16 %v5521, %v5520
    %v5645 = vpack.c.b16 %v5523, %v5522
    %v5646 = vpack.c.b16 %v5525, %v5524
    %v5647 = vpack.c.b16 %v5527, %v5526
    %v5648 = vpack.c.b16 %v5529, %v5528
    %v5649 = vpack.c.b16 %v5531, %v5530
    %v5650 = vpack.c.b16 %v5533, %v5532
    %v5651 = vpack.c.b16 %v5535, %v5534
    %v5652 = vpack.c.b16 %v5537, %v5536
    %v5653 = vpack.c.b16 %v5539, %v5538
    %v5654 = vpack.c.b16 %v5541, %v5540
    %v5655 = vpack.c.b16 %v5543, %v5542
    %v5656 = vpack.c.b16 %v5545, %v5544
    %v5657 = vpack.c.b16 %v5547, %v5546
    %v5658 = vpack.c.b16 %v5549, %v5548
    %v5659 = vpack.c.b16 %v5551, %v5550
    %v5660 = vpack.c.b16 %v5553, %v5552
    %v5661 = vpack.c.b16 %v5555, %v5554
    %v5662 = vpack.c.b16 %v5557, %v5556
    %v5663 = vpack.c.b16 %v5559, %v5558
    %v5664 = vpack.c.b16 %v5561, %v5560
    %v5665 = vpack.c.b16 %v5563, %v5562
    %v5666 = vpack.c.b16 %v5565, %v5564
    %v5667 = vpack.c.b16 %v5567, %v5566
    %v5668 = vpack.c.b16 %v5569, %v5568
    %v5669 = vpack.c.b16 %v5571, %v5570
    %v5670 = vpack.c.b16 %v5573, %v5572
    %v5671 = vpack.c.b16 %v5575, %v5574
    %v5672 = vpack.c.b16 %v5577, %v5576
    %v5673 = vpack.c.b16 %v5579, %v5578
    %v5674 = vpack.c.b16 %v5581, %v5580
    %v5675 = vpack.c.b16 %v5583, %v5582
    %v5676 = vpack.c.b16 %v5585, %v5584
    %v5677 = vpack.c.b16 %v5587, %v5586
    %v5678 = vpack.c.b16 %v5589, %v5588
    %v5679 = vpack.c.b16 %v5591, %v5590
    %v5680 = vpack.c.b16 %v5593, %v5592
    %v5681 = vpack.c.b16 %v5595, %v5594
    %v5682 = vpack.c.b16 %v5597, %v5596
    %v5683 = vpack.c.b16 %v5599, %v5598
    %v5684 = vpack.c.b16 %v5601, %v5600
    %v5685 = vpack.c.b16 %v5603, %v5602
    %v5686 = vpack.c.b16 %v5605, %v5604
    %v5687 = vpack.c.b16 %v5607, %v5606
    %v5688 = vpack.c.b16 %v5609, %v5608
    %v5689 = vpack.c.b16 %v5611, %v5610
    %v5690 = vpack.c.b16 %v5613, %v5612
    %v5691 = vpack.c.b16 %v5615, %v5614
    %v5692 = vpack.c.b16 %v5617, %v5616
    %v5693 = vpack.c.b16 %v5619, %v5618
    %v5694 = vpack.c.b16 %v5621, %v5620
    %v5695 = vpack.c.b16 %v5623, %v5622
    %5768 = vmatprep.subr.bf16.mxu0 0
    %5769 = vmatpush1.bf16.msra.mxu0 %v5624
    %5770 = vmatprep.subr.bf16.mxu0 0
    %5771 = vmatpush1.bf16.msra.mxu0 %v5625
    %5772 = vmatprep.subr.bf16.mxu0 0
    %5773 = vmatpush1.bf16.msra.mxu0 %v5626
    %5774 = vmatprep.subr.bf16.mxu0 0
    %5775 = vmatpush1.bf16.msra.mxu0 %v5627
    %5776 = vmatprep.subr.bf16.mxu0 0
    %5777 = vmatpush1.bf16.msra.mxu0 %v5628
    %5778 = vmatprep.subr.bf16.mxu0 0
    %5779 = vmatpush1.bf16.msra.mxu0 %v5629
    %5780 = vmatprep.subr.bf16.mxu0 0
    %5781 = vmatpush1.bf16.msra.mxu0 %v5630
    %5782 = vmatprep.subr.bf16.mxu0 0
    %5783 = vmatpush1.bf16.msra.mxu0 %v5631
    %5784 = vmatprep.subr.bf16.mxu0 0
    %5785 = vmatpush1.bf16.msra.mxu0 %v5632
    %5786 = vmatprep.subr.bf16.mxu0 0
    %5787 = vmatpush1.bf16.msra.mxu0 %v5633
    %5788 = vmatprep.subr.bf16.mxu0 0
    %5789 = vmatpush1.bf16.msra.mxu0 %v5634
    %5790 = vmatprep.subr.bf16.mxu0 0
    %5791 = vmatpush1.bf16.msra.mxu0 %v5635
    %5792 = vmatprep.subr.bf16.mxu0 0
    %5793 = vmatpush1.bf16.msra.mxu0 %v5636
    %5794 = vmatprep.subr.bf16.mxu0 0
    %5795 = vmatpush1.bf16.msra.mxu0 %v5637
    %5796 = vmatprep.subr.bf16.mxu0 0
    %5797 = vmatpush1.bf16.msra.mxu0 %v5638
    %5798 = vmatprep.subr.bf16.mxu0 0
    %5799 = vmatpush1.bf16.msra.mxu0 %v5639
    %5800 = vmatprep.mubr.bf16.mxu0 %v5156
    %5801 = vmatmul.mubr.bf16.gmra.mrb[0].mxu0 %v5155
    %v5802 = vpop.f32.mrb[0].mxu0
    %v5803 = vadd.f32 0.0, %v5802
    %v5804 = vpop.f32.mrb[0].mxu0
    %v5805 = vpop.f32.mrb[0].mxu0
    %v5806 = vadd.f32 0.0, %v5805
    %v5807 = vpop.f32.mrb[0].mxu0
    %5808 = vmatprep.mubr.bf16.mxu0 %v5165
    %5809 = vmatmul.mubr.bf16.gmra.mrb[0].mxu0 %v5164
    %v5810 = vpop.f32.mrb[0].mxu0
    %v5811 = vadd.f32 0.0, %v5810
    %v5812 = vpop.f32.mrb[0].mxu0
    %v5813 = vpop.f32.mrb[0].mxu0
    %v5814 = vadd.f32 0.0, %v5813
    %v5815 = vpop.f32.mrb[0].mxu0
    %5816 = vmatprep.mubr.bf16.mxu0 %v5174
    %5817 = vmatmul.mubr.bf16.gmra.mrb[0].mxu0 %v5173
    %v5818 = vpop.f32.mrb[0].mxu0
    %v5819 = vadd.f32 0.0, %v5818
    %v5820 = vpop.f32.mrb[0].mxu0
    %v5821 = vpop.f32.mrb[0].mxu0
    %v5822 = vadd.f32 0.0, %v5821
    %v5823 = vpop.f32.mrb[0].mxu0
    %5824 = vmatprep.mubr.bf16.mxu0 %v5183
    %5825 = vmatmul.mubr.bf16.gmra.mrb[0].mxu0 %v5182
    %v5826 = vpop.f32.mrb[0].mxu0
    %v5827 = vadd.f32 0.0, %v5826
    %v5828 = vpop.f32.mrb[0].mxu0
    %v5829 = vpop.f32.mrb[0].mxu0
    %v5830 = vadd.f32 0.0, %v5829
    %v5831 = vpop.f32.mrb[0].mxu0
    %5832 = vdwg.mxu0
    %5833 = vmatprep.subr.bf16.mxu0 0
    %5834 = vmatpush1.bf16.msra.mxu0 %v5640
    %5835 = vmatprep.subr.bf16.mxu0 0
    %5836 = vmatpush1.bf16.msra.mxu0 %v5641
    %5837 = vmatprep.subr.bf16.mxu0 0
    %5838 = vmatpush1.bf16.msra.mxu0 %v5642
    %5839 = vmatprep.subr.bf16.mxu0 0
    %5840 = vmatpush1.bf16.msra.mxu0 %v5643
    %5841 = vmatprep.subr.bf16.mxu0 0
    %5842 = vmatpush1.bf16.msra.mxu0 %v5644
    %5843 = vmatprep.subr.bf16.mxu0 0
    %5844 = vmatpush1.bf16.msra.mxu0 %v5645
    %5845 = vmatprep.subr.bf16.mxu0 0
    %5846 = vmatpush1.bf16.msra.mxu0 %v5646
    %5847 = vmatprep.subr.bf16.mxu0 0
    %5848 = vmatpush1.bf16.msra.mxu0 %v5647
    %5849 = vmatprep.subr.bf16.mxu0 0
    %5850 = vmatpush1.bf16.msra.mxu0 %v5648
    %5851 = vmatprep.subr.bf16.mxu0 0
    %5852 = vmatpush1.bf16.msra.mxu0 %v5649
    %5853 = vmatprep.subr.bf16.mxu0 0
    %5854 = vmatpush1.bf16.msra.mxu0 %v5650
    %5855 = vmatprep.subr.bf16.mxu0 0
    %5856 = vmatpush1.bf16.msra.mxu0 %v5651
    %5857 = vmatprep.subr.bf16.mxu0 0
    %5858 = vmatpush1.bf16.msra.mxu0 %v5652
    %5859 = vmatprep.subr.bf16.mxu0 0
    %5860 = vmatpush1.bf16.msra.mxu0 %v5653
    %5861 = vmatprep.subr.bf16.mxu0 0
    %5862 = vmatpush1.bf16.msra.mxu0 %v5654
    %5863 = vmatprep.subr.bf16.mxu0 0
    %5864 = vmatpush1.bf16.msra.mxu0 %v5655
    %5865 = vmatprep.mubr.bf16.mxu0 %v5158
    %5866 = vmatmul.mubr.bf16.gmra.mrb[0].mxu0 %v5157
    %v5867 = vpop.f32.mrb[0].mxu0
    %v5868 = vadd.f32 %v5803, %v5867
    %v5869 = vpop.f32.mrb[0].mxu0
    %v5870 = vpop.f32.mrb[0].mxu0
    %v5871 = vadd.f32 %v5806, %v5870
    %v5872 = vpop.f32.mrb[0].mxu0
    %5873 = vmatprep.mubr.bf16.mxu0 %v5167
    %5874 = vmatmul.mubr.bf16.gmra.mrb[0].mxu0 %v5166
    %v5875 = vpop.f32.mrb[0].mxu0
    %v5876 = vadd.f32 %v5811, %v5875
    %v5877 = vpop.f32.mrb[0].mxu0
    %v5878 = vpop.f32.mrb[0].mxu0
    %v5879 = vadd.f32 %v5814, %v5878
    %v5880 = vpop.f32.mrb[0].mxu0
    %5881 = vmatprep.mubr.bf16.mxu0 %v5176
    %5882 = vmatmul.mubr.bf16.gmra.mrb[0].mxu0 %v5175
    %v5883 = vpop.f32.mrb[0].mxu0
    %v5884 = vadd.f32 %v5819, %v5883
    %v5885 = vpop.f32.mrb[0].mxu0
    %v5886 = vpop.f32.mrb[0].mxu0
    %v5887 = vadd.f32 %v5822, %v5886
    %v5888 = vpop.f32.mrb[0].mxu0
    %5889 = vmatprep.mubr.bf16.mxu0 %v5185
    %5890 = vmatmul.mubr.bf16.gmra.mrb[0].mxu0 %v5184
    %v5891 = vpop.f32.mrb[0].mxu0
    %v5892 = vadd.f32 %v5827, %v5891
    %v5893 = vpop.f32.mrb[0].mxu0
    %v5894 = vpop.f32.mrb[0].mxu0
    %v5895 = vadd.f32 %v5830, %v5894
    %v5896 = vpop.f32.mrb[0].mxu0
    %5897 = vdwg.mxu0
    %5898 = vmatprep.subr.bf16.mxu0 0
    %5899 = vmatpush1.bf16.msra.mxu0 %v5656
    %5900 = vmatprep.subr.bf16.mxu0 0
    %5901 = vmatpush1.bf16.msra.mxu0 %v5657
    %5902 = vmatprep.subr.bf16.mxu0 0
    %5903 = vmatpush1.bf16.msra.mxu0 %v5658
    %5904 = vmatprep.subr.bf16.mxu0 0
    %5905 = vmatpush1.bf16.msra.mxu0 %v5659
    %5906 = vmatprep.subr.bf16.mxu0 0
    %5907 = vmatpush1.bf16.msra.mxu0 %v5660
    %5908 = vmatprep.subr.bf16.mxu0 0
    %5909 = vmatpush1.bf16.msra.mxu0 %v5661
    %5910 = vmatprep.subr.bf16.mxu0 0
    %5911 = vmatpush1.bf16.msra.mxu0 %v5662
    %5912 = vmatprep.subr.bf16.mxu0 0
    %5913 = vmatpush1.bf16.msra.mxu0 %v5663
    %5914 = vmatprep.subr.bf16.mxu0 0
    %5915 = vmatpush1.bf16.msra.mxu0 %v5664
    %5916 = vmatprep.subr.bf16.mxu0 0
    %5917 = vmatpush1.bf16.msra.mxu0 %v5665
    %5918 = vmatprep.subr.bf16.mxu0 0
    %5919 = vmatpush1.bf16.msra.mxu0 %v5666
    %5920 = vmatprep.subr.bf16.mxu0 0
    %5921 = vmatpush1.bf16.msra.mxu0 %v5667
    %5922 = vmatprep.subr.bf16.mxu0 0
    %5923 = vmatpush1.bf16.msra.mxu0 %v5668
    %5924 = vmatprep.subr.bf16.mxu0 0
    %5925 = vmatpush1.bf16.msra.mxu0 %v5669
    %5926 = vmatprep.subr.bf16.mxu0 0
    %5927 = vmatpush1.bf16.msra.mxu0 %v5670
    %5928 = vmatprep.subr.bf16.mxu0 0
    %5929 = vmatpush1.bf16.msra.mxu0 %v5671
    %5930 = vmatprep.mubr.bf16.mxu0 %v5160
    %5931 = vmatmul.mubr.bf16.gmra.mrb[0].mxu0 %v5159
    %v5932 = vpop.f32.mrb[0].mxu0
    %v5933 = vadd.f32 %v5868, %v5932
    %v5934 = vpop.f32.mrb[0].mxu0
    %v5935 = vpop.f32.mrb[0].mxu0
    %v5936 = vadd.f32 %v5871, %v5935
    %v5937 = vpop.f32.mrb[0].mxu0
    %5938 = vmatprep.mubr.bf16.mxu0 %v5169
    %5939 = vmatmul.mubr.bf16.gmra.mrb[0].mxu0 %v5168
    %v5940 = vpop.f32.mrb[0].mxu0
    %v5941 = vadd.f32 %v5876, %v5940
    %v5942 = vpop.f32.mrb[0].mxu0
    %v5943 = vpop.f32.mrb[0].mxu0
    %v5944 = vadd.f32 %v5879, %v5943
    %v5945 = vpop.f32.mrb[0].mxu0
    %5946 = vmatprep.mubr.bf16.mxu0 %v5178
    %5947 = vmatmul.mubr.bf16.gmra.mrb[0].mxu0 %v5177
    %v5948 = vpop.f32.mrb[0].mxu0
    %v5949 = vadd.f32 %v5884, %v5948
    %v5950 = vpop.f32.mrb[0].mxu0
    %v5951 = vpop.f32.mrb[0].mxu0
    %v5952 = vadd.f32 %v5887, %v5951
    %v5953 = vpop.f32.mrb[0].mxu0
    %5954 = vmatprep.mubr.bf16.mxu0 %v5187
    %5955 = vmatmul.mubr.bf16.gmra.mrb[0].mxu0 %v5186
    %v5956 = vpop.f32.mrb[0].mxu0
    %v5957 = vadd.f32 %v5892, %v5956
    %v5958 = vpop.f32.mrb[0].mxu0
    %v5959 = vpop.f32.mrb[0].mxu0
    %v5960 = vadd.f32 %v5895, %v5959
    %v5961 = vpop.f32.mrb[0].mxu0
    %5962 = vdwg.mxu0
    %5963 = vmatprep.subr.bf16.mxu0 0
    %5964 = vmatpush1.bf16.msra.mxu0 %v5672
    %5965 = vmatprep.subr.bf16.mxu0 0
    %5966 = vmatpush1.bf16.msra.mxu0 %v5673
    %5967 = vmatprep.subr.bf16.mxu0 0
    %5968 = vmatpush1.bf16.msra.mxu0 %v5674
    %5969 = vmatprep.subr.bf16.mxu0 0
    %5970 = vmatpush1.bf16.msra.mxu0 %v5675
    %5971 = vmatprep.subr.bf16.mxu0 0
    %5972 = vmatpush1.bf16.msra.mxu0 %v5676
    %5973 = vmatprep.subr.bf16.mxu0 0
    %5974 = vmatpush1.bf16.msra.mxu0 %v5677
    %5975 = vmatprep.subr.bf16.mxu0 0
    %5976 = vmatpush1.bf16.msra.mxu0 %v5678
    %5977 = vmatprep.subr.bf16.mxu0 0
    %5978 = vmatpush1.bf16.msra.mxu0 %v5679
    %5979 = vmatprep.subr.bf16.mxu0 0
    %5980 = vmatpush1.bf16.msra.mxu0 %v5680
    %5981 = vmatprep.subr.bf16.mxu0 0
    %5982 = vmatpush1.bf16.msra.mxu0 %v5681
    %5983 = vmatprep.subr.bf16.mxu0 0
    %5984 = vmatpush1.bf16.msra.mxu0 %v5682
    %5985 = vmatprep.subr.bf16.mxu0 0
    %5986 = vmatpush1.bf16.msra.mxu0 %v5683
    %5987 = vmatprep.subr.bf16.mxu0 0
    %5988 = vmatpush1.bf16.msra.mxu0 %v5684
    %5989 = vmatprep.subr.bf16.mxu0 0
    %5990 = vmatpush1.bf16.msra.mxu0 %v5685
    %5991 = vmatprep.subr.bf16.mxu0 0
    %5992 = vmatpush1.bf16.msra.mxu0 %v5686
    %5993 = vmatprep.subr.bf16.mxu0 0
    %5994 = vmatpush1.bf16.msra.mxu0 %v5687
    %5995 = vmatprep.mubr.bf16.mxu0 %v5162
    %5996 = vmatmul.mubr.bf16.gmra.mrb[0].mxu0 %v5161
    %v5997 = vpop.f32.mrb[0].mxu0
    %v5998 = vadd.f32 %v5933, %v5997
    %v5999 = vpop.f32.mrb[0].mxu0
    %v6000 = vpop.f32.mrb[0].mxu0
    %v6001 = vadd.f32 %v5936, %v6000
    %v6002 = vpop.f32.mrb[0].mxu0
    %6003 = vmatprep.mubr.bf16.mxu0 %v5171
    %6004 = vmatmul.mubr.bf16.gmra.mrb[0].mxu0 %v5170
    %v6005 = vpop.f32.mrb[0].mxu0
    %v6006 = vadd.f32 %v5941, %v6005
    %v6007 = vpop.f32.mrb[0].mxu0
    %v6008 = vpop.f32.mrb[0].mxu0
    %v6009 = vadd.f32 %v5944, %v6008
    %v6010 = vpop.f32.mrb[0].mxu0
    %6011 = vmatprep.mubr.bf16.mxu0 %v5180
    %6012 = vmatmul.mubr.bf16.gmra.mrb[0].mxu0 %v5179
    %v6013 = vpop.f32.mrb[0].mxu0
    %v6014 = vadd.f32 %v5949, %v6013
    %v6015 = vpop.f32.mrb[0].mxu0
    %v6016 = vpop.f32.mrb[0].mxu0
    %v6017 = vadd.f32 %v5952, %v6016
    %v6018 = vpop.f32.mrb[0].mxu0
    %6019 = vmatprep.mubr.bf16.mxu0 %v5189
    %6020 = vmatmul.mubr.bf16.gmra.mrb[0].mxu0 %v5188
    %v6021 = vpop.f32.mrb[0].mxu0
    %v6022 = vadd.f32 %v5957, %v6021
    %v6023 = vpop.f32.mrb[0].mxu0
    %v6024 = vpop.f32.mrb[0].mxu0
    %v6025 = vadd.f32 %v5960, %v6024
    %v6026 = vpop.f32.mrb[0].mxu0
    %6027 = vdwg.mxu0
    %6028 = vmatprep.subr.bf16.mxu0 0
    %6029 = vmatpush1.bf16.msra.mxu0 %v5688
    %6030 = vmatprep.subr.bf16.mxu0 0
    %6031 = vmatpush1.bf16.msra.mxu0 %v5689
    %6032 = vmatprep.subr.bf16.mxu0 0
    %6033 = vmatpush1.bf16.msra.mxu0 %v5690
    %6034 = vmatprep.subr.bf16.mxu0 0
    %6035 = vmatpush1.bf16.msra.mxu0 %v5691
    %6036 = vmatprep.subr.bf16.mxu0 0
    %6037 = vmatpush1.bf16.msra.mxu0 %v5692
    %6038 = vmatprep.subr.bf16.mxu0 0
    %6039 = vmatpush1.bf16.msra.mxu0 %v5693
    %6040 = vmatprep.subr.bf16.mxu0 0
    %6041 = vmatpush1.bf16.msra.mxu0 %v5694
    %6042 = vmatprep.subr.bf16.mxu0 0
    %6043 = vmatpush1.bf16.msra.mxu0 %v5695
    %6044 = vmatprep.subr.bf16.mxu0 0
    %6045 = vmatpush1.bf16.msra.mxu0 0
    %6046 = vmatprep.subr.bf16.mxu0 0
    %6047 = vmatpush1.bf16.msra.mxu0 0
    %6048 = vmatprep.subr.bf16.mxu0 0
    %6049 = vmatpush1.bf16.msra.mxu0 0
    %6050 = vmatprep.subr.bf16.mxu0 0
    %6051 = vmatpush1.bf16.msra.mxu0 0
    %6052 = vmatprep.subr.bf16.mxu0 0
    %6053 = vmatpush1.bf16.msra.mxu0 0
    %6054 = vmatprep.subr.bf16.mxu0 0
    %6055 = vmatpush1.bf16.msra.mxu0 0
    %6056 = vmatprep.subr.bf16.mxu0 0
    %6057 = vmatpush1.bf16.msra.mxu0 0
    %6058 = vmatprep.subr.bf16.mxu0 0
    %6059 = vmatpush1.bf16.msra.mxu0 0
    %6060 = vmatprep.mubr.bf16.mxu0 0
    %6061 = vmatmul.mubr.bf16.gmra.mrb[0].mxu0 %v5163
    %v6062 = vpop.f32.mrb[0].mxu0
    %v6063 = vadd.f32 %v5998, %v6062
    %v6064 = vpop.f32.mrb[0].mxu0
    %v6065 = vpop.f32.mrb[0].mxu0
    %v6066 = vadd.f32 %v6001, %v6065
    %v6067 = vpop.f32.mrb[0].mxu0
    %6068 = vmatprep.mubr.bf16.mxu0 0
    %6069 = vmatmul.mubr.bf16.gmra.mrb[0].mxu0 %v5172
    %v6070 = vpop.f32.mrb[0].mxu0
    %v6071 = vadd.f32 %v6006, %v6070
    %v6072 = vpop.f32.mrb[0].mxu0
    %v6073 = vpop.f32.mrb[0].mxu0
    %v6074 = vadd.f32 %v6009, %v6073
    %v6075 = vpop.f32.mrb[0].mxu0
    %6076 = vmatprep.mubr.bf16.mxu0 0
    %6077 = vmatmul.mubr.bf16.gmra.mrb[0].mxu0 %v5181
    %v6078 = vpop.f32.mrb[0].mxu0
    %v6079 = vadd.f32 %v6014, %v6078
    %v6080 = vpop.f32.mrb[0].mxu0
    %v6081 = vpop.f32.mrb[0].mxu0
    %v6082 = vadd.f32 %v6017, %v6081
    %v6083 = vpop.f32.mrb[0].mxu0
    %6084 = vmatprep.mubr.bf16.mxu0 0
    %6085 = vmatmul.mubr.bf16.gmra.mrb[0].mxu0 %v5190
    %v6086 = vpop.f32.mrb[0].mxu0
    %v6087 = vadd.f32 %v6022, %v6086
    %v6088 = vpop.f32.mrb[0].mxu0
    %v6089 = vpop.f32.mrb[0].mxu0
    %v6090 = vadd.f32 %v6025, %v6089
    %v6091 = vpop.f32.mrb[0].mxu0
    %6092 = vdwg.mxu0
    %v6093 = vadd.f32 %v6063, %v6066
    %v6094 = vadd.f32 %v6093, %v6071
    %v6095 = vadd.f32 %v6094, %v6074
    %v6096 = vadd.f32 %v6095, %v6079
    %v6097 = vadd.f32 %v6096, %v6082
    %v6098 = vadd.f32 %v6097, %v6087
    %v6099 = vadd.f32 %v6098, %v6090
    %v6100 = vrot.slane %v6099, 4
    %v6101 = vadd.f32 %v6099, %v6100
    %v6102 = vrot.slane %v6101, 2
    %v6103 = vadd.f32 %v6101, %v6102
    %v6104 = vrot.slane %v6103, 1
    %v6105 = vadd.f32 %v6103, %v6104
    %v6106 = vmul.f32 %v6063, %v6063
    %v6107 = vmul.f32 %v6066, %v6066
    %v6108 = vmul.f32 %v6071, %v6071
    %v6109 = vmul.f32 %v6074, %v6074
    %v6110 = vmul.f32 %v6079, %v6079
    %v6111 = vmul.f32 %v6082, %v6082
    %v6112 = vmul.f32 %v6087, %v6087
    %v6113 = vmul.f32 %v6090, %v6090
    %v6114 = vadd.f32 %v6106, %v6107
    %v6115 = vadd.f32 %v6114, %v6108
    %v6116 = vadd.f32 %v6115, %v6109
    %v6117 = vadd.f32 %v6116, %v6110
    %v6118 = vadd.f32 %v6117, %v6111
    %v6119 = vadd.f32 %v6118, %v6112
    %v6120 = vadd.f32 %v6119, %v6113
    %v6121 = vrot.slane %v6120, 4
    %v6122 = vadd.f32 %v6120, %v6121
    %v6123 = vrot.slane %v6122, 2
    %v6124 = vadd.f32 %v6122, %v6123
    %v6125 = vrot.slane %v6124, 1
    %v6126 = vadd.f32 %v6124, %v6125
    %v6127 = vmul.f32 %v6105, 0.015625
    %v6128 = vmul.f32 %v6126, 0.015625
    %v6129 = vmul.f32 %v6127, %v6127
    %v6130 = vsub.f32 %v6128, %v6129
    %v6131 = vsub.f32 %v6063, %v6127
    %v6132 = vsub.f32 %v6066, %v6127
    %v6133 = vsub.f32 %v6071, %v6127
    %v6134 = vsub.f32 %v6074, %v6127
    %v6135 = vsub.f32 %v6079, %v6127
    %v6136 = vsub.f32 %v6082, %v6127
    %v6137 = vsub.f32 %v6087, %v6127
    %v6138 = vsub.f32 %v6090, %v6127
    %v6139 = vadd.f32 %v6130, 1e-05
    %v6140 = vrsqrt.pop %v6139
    %v6141 = vmul.f32 %v6131, %v6140
    %v6142 = vmul.f32 %v6132, %v6140
    %v6143 = vmul.f32 %v6133, %v6140
    %v6144 = vmul.f32 %v6134, %v6140
    %v6145 = vmul.f32 %v6135, %v6140
    %v6146 = vmul.f32 %v6136, %v6140
    %v6147 = vmul.f32 %v6137, %v6140
    %v6148 = vmul.f32 %v6138, %v6140
    %s6149 = scalar_lea.vmem [#allocation8], 4
    %v6150 = vld [vmem:[%s6149] sm:$0x1]
    %v6152 = vlaneseq
    %v6153 = vshrl.u32 %v6152, 7
    %v6154 = vsub.s32 0, %v6153
    %v6155 = vrot.slane %v6150, %v6154
    %v6157 = vmul.f32 %v6155, %v6141
    %v6158 = vmul.f32 %v6155, %v6142
    %v6159 = vmul.f32 %v6155, %v6143
    %v6160 = vmul.f32 %v6155, %v6144
    %v6161 = vmul.f32 %v6155, %v6145
    %v6162 = vmul.f32 %v6155, %v6146
    %v6163 = vmul.f32 %v6155, %v6147
    %v6164 = vmul.f32 %v6155, %v6148
    %s6165 = scalar_lea.vmem [#allocation10], 4
    %v6166 = vld [vmem:[%s6165] sm:$0x1]
    %v6168 = vlaneseq
    %v6169 = vshrl.u32 %v6168, 7
    %v6170 = vsub.s32 0, %v6169
    %v6171 = vrot.slane %v6166, %v6170
    %v6173 = vadd.f32 %v6157, %v6171
    %v6174 = vadd.f32 %v6158, %v6171
    %v6175 = vadd.f32 %v6159, %v6171
    %v6176 = vadd.f32 %v6160, %v6171
    %v6177 = vadd.f32 %v6161, %v6171
    %v6178 = vadd.f32 %v6162, %v6171
    %v6179 = vadd.f32 %v6163, %v6171
    %v6180 = vadd.f32 %v6164, %v6171
    %v6181 = vmax.f32 %v6173, 0.0
    %v6182 = vmax.f32 %v6174, 0.0
    %v6183 = vmax.f32 %v6175, 0.0
    %v6184 = vmax.f32 %v6176, 0.0
    %v6185 = vmax.f32 %v6177, 0.0
    %v6186 = vmax.f32 %v6178, 0.0
    %v6187 = vmax.f32 %v6179, 0.0
    %v6188 = vmax.f32 %v6180, 0.0
    %v6189 = vrot.slane %v6181, 7
    %v6190 = vrot.slane %v6182, 7
    %v6191 = vrot.slane %v6183, 7
    %v6192 = vrot.slane %v6184, 7
    %v6193 = vrot.slane %v6185, 7
    %v6194 = vrot.slane %v6186, 7
    %v6195 = vrot.slane %v6187, 7
    %v6196 = vrot.slane %v6188, 7
    %v6197 = vsel %vm540, %v6195, %v6196
    %v6198 = vsel %vm540, %v6194, %v6195
    %v6199 = vsel %vm540, %v6193, %v6194
    %v6200 = vsel %vm540, %v6192, %v6193
    %v6201 = vsel %vm540, %v6191, %v6192
    %v6202 = vsel %vm540, %v6190, %v6191
    %v6203 = vsel %vm540, %v6189, %v6190
    %v6204 = vsel %vm540, %v6196, %v6189
    %v6205 = vmul.f32 %v6197, %v142
    %v6206 = vmul.f32 %v6204, %v147
    %v6207 = vmul.f32 %v6203, %v152
    %v6208 = vmul.f32 %v6202, %v157
    %v6209 = vmul.f32 %v6201, %v162
    %v6210 = vmul.f32 %v6200, %v167
    %v6211 = vmul.f32 %v6199, %v172
    %v6212 = vmul.f32 %v6198, %v177
    %v6213 = vmul.f32 %v6188, %v191
    %v6214 = vmul.f32 %v6181, %v196
    %v6215 = vmul.f32 %v6182, %v201
    %v6216 = vmul.f32 %v6183, %v206
    %v6217 = vmul.f32 %v6184, %v211
    %v6218 = vmul.f32 %v6185, %v216
    %v6219 = vmul.f32 %v6186, %v221
    %v6220 = vmul.f32 %v6187, %v226
    %v6221 = vrot.slane %v6181, 1
    %v6222 = vrot.slane %v6182, 1
    %v6223 = vrot.slane %v6183, 1
    %v6224 = vrot.slane %v6184, 1
    %v6225 = vrot.slane %v6185, 1
    %v6226 = vrot.slane %v6186, 1
    %v6227 = vrot.slane %v6187, 1
    %v6228 = vrot.slane %v6188, 1
    %v6229 = vsel %vm573, %v6227, %v6228
    %v6230 = vsel %vm573, %v6226, %v6227
    %v6231 = vsel %vm573, %v6225, %v6226
    %v6232 = vsel %vm573, %v6224, %v6225
    %v6233 = vsel %vm573, %v6223, %v6224
    %v6234 = vsel %vm573, %v6222, %v6223
    %v6235 = vsel %vm573, %v6221, %v6222
    %v6236 = vsel %vm573, %v6228, %v6221
    %v6237 = vmul.f32 %v6236, %v240
    %v6238 = vmul.f32 %v6235, %v245
    %v6239 = vmul.f32 %v6234, %v250
    %v6240 = vmul.f32 %v6233, %v255
    %v6241 = vmul.f32 %v6232, %v260
    %v6242 = vmul.f32 %v6231, %v265
    %v6243 = vmul.f32 %v6230, %v270
    %v6244 = vmul.f32 %v6229, %v275
    %v6245 = vmul.f32 %v6204, %v289
    %v6246 = vmul.f32 %v6203, %v294
    %v6247 = vmul.f32 %v6202, %v299
    %v6248 = vmul.f32 %v6201, %v304
    %v6249 = vmul.f32 %v6200, %v309
    %v6250 = vmul.f32 %v6199, %v314
    %v6251 = vmul.f32 %v6198, %v319
    %v6252 = vmul.f32 %v6197, %v324
    %v6253 = vmul.f32 %v6235, %v338
    %v6254 = vmul.f32 %v6234, %v343
    %v6255 = vmul.f32 %v6233, %v348
    %v6256 = vmul.f32 %v6232, %v353
    %v6257 = vmul.f32 %v6231, %v358
    %v6258 = vmul.f32 %v6230, %v363
    %v6259 = vmul.f32 %v6229, %v368
    %v6260 = vmul.f32 %v6236, %v373
    %v6261 = vmul.f32 %v6203, %v387
    %v6262 = vmul.f32 %v6202, %v392
    %v6263 = vmul.f32 %v6201, %v397
    %v6264 = vmul.f32 %v6200, %v402
    %v6265 = vmul.f32 %v6199, %v407
    %v6266 = vmul.f32 %v6198, %v412
    %v6267 = vmul.f32 %v6197, %v417
    %v6268 = vmul.f32 %v6204, %v422
    %v6269 = vmul.f32 %v6182, %v436
    %v6270 = vmul.f32 %v6183, %v441
    %v6271 = vmul.f32 %v6184, %v446
    %v6272 = vmul.f32 %v6185, %v451
    %v6273 = vmul.f32 %v6186, %v456
    %v6274 = vmul.f32 %v6187, %v461
    %v6275 = vmul.f32 %v6188, %v466
    %v6276 = vmul.f32 %v6181, %v471
    %v6277 = vmul.f32 %v6234, %v485
    %v6278 = vmul.f32 %v6233, %v490
    %v6279 = vmul.f32 %v6232, %v495
    %v6280 = vmul.f32 %v6231, %v500
    %v6281 = vmul.f32 %v6230, %v505
    %v6282 = vmul.f32 %v6229, %v510
    %v6283 = vmul.f32 %v6236, %v515
    %v6284 = vmul.f32 %v6235, %v520
    %v6285 = vpack.c.bf16 %v6206, %v6205
    %v6286 = vpack.c.bf16 %v6214, %v6213
    %v6287 = vpack.c.bf16 %v6238, %v6237
    %v6288 = vpack.c.bf16 %v6246, %v6245
    %v6289 = vpack.c.bf16 %v6182, %v6181
    %v6290 = vpack.c.bf16 %v6254, %v6253
    %v6291 = vpack.c.bf16 %v6262, %v6261
    %v6292 = vpack.c.bf16 %v6270, %v6269
    %v6293 = vpack.c.bf16 %v6278, %v6277
    %v6294 = vpack.c.bf16 %v6208, %v6207
    %v6295 = vpack.c.bf16 %v6216, %v6215
    %v6296 = vpack.c.bf16 %v6240, %v6239
    %v6297 = vpack.c.bf16 %v6248, %v6247
    %v6298 = vpack.c.bf16 %v6184, %v6183
    %v6299 = vpack.c.bf16 %v6256, %v6255
    %v6300 = vpack.c.bf16 %v6264, %v6263
    %v6301 = vpack.c.bf16 %v6272, %v6271
    %v6302 = vpack.c.bf16 %v6280, %v6279
    %v6303 = vpack.c.bf16 %v6210, %v6209
    %v6304 = vpack.c.bf16 %v6218, %v6217
    %v6305 = vpack.c.bf16 %v6242, %v6241
    %v6306 = vpack.c.bf16 %v6250, %v6249
    %v6307 = vpack.c.bf16 %v6186, %v6185
    %v6308 = vpack.c.bf16 %v6258, %v6257
    %v6309 = vpack.c.bf16 %v6266, %v6265
    %v6310 = vpack.c.bf16 %v6274, %v6273
    %v6311 = vpack.c.bf16 %v6282, %v6281
    %v6312 = vpack.c.bf16 %v6212, %v6211
    %v6313 = vpack.c.bf16 %v6220, %v6219
    %v6314 = vpack.c.bf16 %v6244, %v6243
    %v6315 = vpack.c.bf16 %v6252, %v6251
    %v6316 = vpack.c.bf16 %v6188, %v6187
    %v6317 = vpack.c.bf16 %v6260, %v6259
    %v6318 = vpack.c.bf16 %v6268, %v6267
    %v6319 = vpack.c.bf16 %v6276, %v6275
    %v6320 = vpack.c.bf16 %v6284, %v6283
    %s6321 = scalar_lea.vmem [#allocation5], 2880
    %v6322 = vld [vmem:[%s6321] sm:$0xf]
    %v6323 = vld [vmem:[%s6321 + $0x4] sm:$0xf]
    %v6324 = vld [vmem:[%s6321 + $0x8] sm:$0xf]
    %v6325 = vld [vmem:[%s6321 + $0xc] sm:$0xf]
    %v6326 = vld [vmem:[%s6321 + $0x10] sm:$0xf]
    %v6327 = vld [vmem:[%s6321 + $0x14] sm:$0xf]
    %v6328 = vld [vmem:[%s6321 + $0x18] sm:$0xf]
    %v6329 = vld [vmem:[%s6321 + $0x1c] sm:$0xf]
    %v6330 = vld [vmem:[%s6321 + $0x20] sm:$0xf]
    %v6331 = vld [vmem:[%s6321 + $0x24] sm:$0xf]
    %v6332 = vld [vmem:[%s6321 + $0x28] sm:$0xf]
    %v6333 = vld [vmem:[%s6321 + $0x2c] sm:$0xf]
    %v6334 = vld [vmem:[%s6321 + $0x30] sm:$0xf]
    %v6335 = vld [vmem:[%s6321 + $0x34] sm:$0xf]
    %v6336 = vld [vmem:[%s6321 + $0x38] sm:$0xf]
    %v6337 = vld [vmem:[%s6321 + $0x3c] sm:$0xf]
    %v6338 = vld [vmem:[%s6321 + $0x40] sm:$0xf]
    %v6339 = vld [vmem:[%s6321 + $0x44] sm:$0xf]
    %v6340 = vld [vmem:[%s6321 + $0x48] sm:$0xf]
    %v6341 = vld [vmem:[%s6321 + $0x4c] sm:$0xf]
    %v6342 = vld [vmem:[%s6321 + $0x50] sm:$0xf]
    %v6343 = vld [vmem:[%s6321 + $0x54] sm:$0xf]
    %v6344 = vld [vmem:[%s6321 + $0x58] sm:$0xf]
    %v6345 = vld [vmem:[%s6321 + $0x5c] sm:$0xf]
    %v6346 = vld [vmem:[%s6321 + $0x60] sm:$0xf]
    %v6347 = vld [vmem:[%s6321 + $0x64] sm:$0xf]
    %v6348 = vld [vmem:[%s6321 + $0x68] sm:$0xf]
    %v6349 = vld [vmem:[%s6321 + $0x6c] sm:$0xf]
    %v6350 = vld [vmem:[%s6321 + $0x70] sm:$0xf]
    %v6351 = vld [vmem:[%s6321 + $0x74] sm:$0xf]
    %v6352 = vld [vmem:[%s6321 + $0x78] sm:$0xf]
    %v6353 = vld [vmem:[%s6321 + $0x7c] sm:$0xf]
    %v6354 = vld [vmem:[%s6321 + $0x80] sm:$0xf]
    %v6355 = vld [vmem:[%s6321 + $0x84] sm:$0xf]
    %v6356 = vld [vmem:[%s6321 + $0x88] sm:$0xf]
    %v6357 = vld [vmem:[%s6321 + $0x8c] sm:$0xf]
    %v6358 = vld [vmem:[%s6321 + $0x90] sm:$0xf]
    %v6359 = vld [vmem:[%s6321 + $0x94] sm:$0xf]
    %v6360 = vld [vmem:[%s6321 + $0x98] sm:$0xf]
    %v6361 = vld [vmem:[%s6321 + $0x9c] sm:$0xf]
    %v6362 = vld [vmem:[%s6321 + $0xa0] sm:$0xf]
    %v6363 = vld [vmem:[%s6321 + $0xa4] sm:$0xf]
    %v6364 = vld [vmem:[%s6321 + $0xa8] sm:$0xf]
    %v6365 = vld [vmem:[%s6321 + $0xac] sm:$0xf]
    %v6366 = vld [vmem:[%s6321 + $0xb0] sm:$0xf]
    %v6367 = vld [vmem:[%s6321 + $0xb4] sm:$0xf]
    %v6368 = vld [vmem:[%s6321 + $0xb8] sm:$0xf]
    %v6369 = vld [vmem:[%s6321 + $0xbc] sm:$0xf]
    %v6370 = vld [vmem:[%s6321 + $0xc0] sm:$0xf]
    %v6371 = vld [vmem:[%s6321 + $0xc4] sm:$0xf]
    %v6372 = vld [vmem:[%s6321 + $0xc8] sm:$0xf]
    %v6373 = vld [vmem:[%s6321 + $0xcc] sm:$0xf]
    %v6374 = vld [vmem:[%s6321 + $0xd0] sm:$0xf]
    %v6375 = vld [vmem:[%s6321 + $0xd4] sm:$0xf]
    %v6376 = vld [vmem:[%s6321 + $0xd8] sm:$0xf]
    %v6377 = vld [vmem:[%s6321 + $0xdc] sm:$0xf]
    %v6378 = vld [vmem:[%s6321 + $0xe0] sm:$0xf]
    %v6379 = vld [vmem:[%s6321 + $0xe4] sm:$0xf]
    %v6380 = vld [vmem:[%s6321 + $0xe8] sm:$0xf]
    %v6381 = vld [vmem:[%s6321 + $0xec] sm:$0xf]
    %v6382 = vld [vmem:[%s6321 + $0xf0] sm:$0xf]
    %v6383 = vld [vmem:[%s6321 + $0xf4] sm:$0xf]
    %v6384 = vld [vmem:[%s6321 + $0xf8] sm:$0xf]
    %v6385 = vld [vmem:[%s6321 + $0xfc] sm:$0xf]
    %v6386 = vld [vmem:[%s6321 + $0x100] sm:$0xf]
    %v6387 = vld [vmem:[%s6321 + $0x104] sm:$0xf]
    %v6388 = vld [vmem:[%s6321 + $0x108] sm:$0xf]
    %v6389 = vld [vmem:[%s6321 + $0x10c] sm:$0xf]
    %v6390 = vld [vmem:[%s6321 + $0x110] sm:$0xf]
    %v6391 = vld [vmem:[%s6321 + $0x114] sm:$0xf]
    %v6392 = vld [vmem:[%s6321 + $0x118] sm:$0xf]
    %v6393 = vld [vmem:[%s6321 + $0x11c] sm:$0xf]
    %v6394 = vld [vmem:[%s6321 + $0x120] sm:$0xf]
    %v6395 = vld [vmem:[%s6321 + $0x124] sm:$0xf]
    %v6396 = vld [vmem:[%s6321 + $0x128] sm:$0xf]
    %v6397 = vld [vmem:[%s6321 + $0x12c] sm:$0xf]
    %v6398 = vld [vmem:[%s6321 + $0x130] sm:$0xf]
    %v6399 = vld [vmem:[%s6321 + $0x134] sm:$0xf]
    %v6400 = vld [vmem:[%s6321 + $0x138] sm:$0xf]
    %v6401 = vld [vmem:[%s6321 + $0x13c] sm:$0xf]
    %v6402 = vld [vmem:[%s6321 + $0x140] sm:$0xf]
    %v6403 = vld [vmem:[%s6321 + $0x144] sm:$0xf]
    %v6404 = vld [vmem:[%s6321 + $0x148] sm:$0xf]
    %v6405 = vld [vmem:[%s6321 + $0x14c] sm:$0xf]
    %v6406 = vld [vmem:[%s6321 + $0x150] sm:$0xf]
    %v6407 = vld [vmem:[%s6321 + $0x154] sm:$0xf]
    %v6408 = vld [vmem:[%s6321 + $0x158] sm:$0xf]
    %v6409 = vld [vmem:[%s6321 + $0x15c] sm:$0xf]
    %v6410 = vld [vmem:[%s6321 + $0x160] sm:$0xf]
    %v6411 = vld [vmem:[%s6321 + $0x164] sm:$0xf]
    %v6412 = vld [vmem:[%s6321 + $0x168] sm:$0xf]
    %v6413 = vld [vmem:[%s6321 + $0x16c] sm:$0xf]
    %v6414 = vld [vmem:[%s6321 + $0x170] sm:$0xf]
    %v6415 = vld [vmem:[%s6321 + $0x174] sm:$0xf]
    %v6416 = vld [vmem:[%s6321 + $0x178] sm:$0xf]
    %v6417 = vld [vmem:[%s6321 + $0x17c] sm:$0xf]
    %v6418 = vld [vmem:[%s6321 + $0x180] sm:$0xf]
    %v6419 = vld [vmem:[%s6321 + $0x184] sm:$0xf]
    %v6420 = vld [vmem:[%s6321 + $0x188] sm:$0xf]
    %v6421 = vld [vmem:[%s6321 + $0x18c] sm:$0xf]
    %v6422 = vld [vmem:[%s6321 + $0x190] sm:$0xf]
    %v6423 = vld [vmem:[%s6321 + $0x194] sm:$0xf]
    %v6424 = vld [vmem:[%s6321 + $0x198] sm:$0xf]
    %v6425 = vld [vmem:[%s6321 + $0x19c] sm:$0xf]
    %v6426 = vld [vmem:[%s6321 + $0x1a0] sm:$0xf]
    %v6427 = vld [vmem:[%s6321 + $0x1a4] sm:$0xf]
    %v6428 = vld [vmem:[%s6321 + $0x1a8] sm:$0xf]
    %v6429 = vld [vmem:[%s6321 + $0x1ac] sm:$0xf]
    %v6430 = vld [vmem:[%s6321 + $0x1b0] sm:$0xf]
    %v6431 = vld [vmem:[%s6321 + $0x1b4] sm:$0xf]
    %v6432 = vld [vmem:[%s6321 + $0x1b8] sm:$0xf]
    %v6433 = vld [vmem:[%s6321 + $0x1bc] sm:$0xf]
    %v6434 = vld [vmem:[%s6321 + $0x1c0] sm:$0xf]
    %v6435 = vld [vmem:[%s6321 + $0x1c4] sm:$0xf]
    %v6436 = vld [vmem:[%s6321 + $0x1c8] sm:$0xf]
    %v6437 = vld [vmem:[%s6321 + $0x1cc] sm:$0xf]
    %v6438 = vld [vmem:[%s6321 + $0x1d0] sm:$0xf]
    %v6439 = vld [vmem:[%s6321 + $0x1d4] sm:$0xf]
    %v6440 = vld [vmem:[%s6321 + $0x1d8] sm:$0xf]
    %v6441 = vld [vmem:[%s6321 + $0x1dc] sm:$0xf]
    %v6442 = vld [vmem:[%s6321 + $0x1e0] sm:$0xf]
    %v6443 = vld [vmem:[%s6321 + $0x1e4] sm:$0xf]
    %v6444 = vld [vmem:[%s6321 + $0x1e8] sm:$0xf]
    %v6445 = vld [vmem:[%s6321 + $0x1ec] sm:$0xf]
    %v6446 = vld [vmem:[%s6321 + $0x1f0] sm:$0xf]
    %v6447 = vld [vmem:[%s6321 + $0x1f4] sm:$0xf]
    %v6448 = vld [vmem:[%s6321 + $0x1f8] sm:$0xf]
    %v6449 = vld [vmem:[%s6321 + $0x1fc] sm:$0xf]
    %v6450 = vld [vmem:[%s6321 + $0x200] sm:$0xf]
    %v6451 = vld [vmem:[%s6321 + $0x204] sm:$0xf]
    %v6452 = vld [vmem:[%s6321 + $0x208] sm:$0xf]
    %v6453 = vld [vmem:[%s6321 + $0x20c] sm:$0xf]
    %v6454 = vld [vmem:[%s6321 + $0x210] sm:$0xf]
    %v6455 = vld [vmem:[%s6321 + $0x214] sm:$0xf]
    %v6456 = vld [vmem:[%s6321 + $0x218] sm:$0xf]
    %v6457 = vld [vmem:[%s6321 + $0x21c] sm:$0xf]
    %v6458 = vld [vmem:[%s6321 + $0x220] sm:$0xf]
    %v6459 = vld [vmem:[%s6321 + $0x224] sm:$0xf]
    %v6460 = vld [vmem:[%s6321 + $0x228] sm:$0xf]
    %v6461 = vld [vmem:[%s6321 + $0x22c] sm:$0xf]
    %v6462 = vld [vmem:[%s6321 + $0x230] sm:$0xf]
    %v6463 = vld [vmem:[%s6321 + $0x234] sm:$0xf]
    %v6464 = vld [vmem:[%s6321 + $0x238] sm:$0xf]
    %v6465 = vld [vmem:[%s6321 + $0x23c] sm:$0xf]
    %v6610 = vunpack.c.l.b16 %v6322
    %v6611 = vunpack.c.l.b16 %v6323
    %v6612 = vunpack.c.l.b16 %v6324
    %v6613 = vunpack.c.l.b16 %v6325
    %v6614 = vunpack.c.l.b16 %v6326
    %v6615 = vunpack.c.l.b16 %v6327
    %v6616 = vunpack.c.l.b16 %v6328
    %v6617 = vunpack.c.l.b16 %v6329
    %v6618 = vunpack.c.l.b16 %v6330
    %v6619 = vunpack.c.l.b16 %v6331
    %v6620 = vunpack.c.l.b16 %v6332
    %v6621 = vunpack.c.l.b16 %v6333
    %v6622 = vunpack.c.l.b16 %v6334
    %v6623 = vunpack.c.l.b16 %v6335
    %v6624 = vunpack.c.l.b16 %v6336
    %v6625 = vunpack.c.l.b16 %v6337
    %v6626 = vunpack.c.l.b16 %v6338
    %v6627 = vunpack.c.l.b16 %v6339
    %v6628 = vunpack.c.l.b16 %v6340
    %v6629 = vunpack.c.l.b16 %v6341
    %v6630 = vunpack.c.l.b16 %v6342
    %v6631 = vunpack.c.l.b16 %v6343
    %v6632 = vunpack.c.l.b16 %v6344
    %v6633 = vunpack.c.l.b16 %v6345
    %v6634 = vunpack.c.l.b16 %v6346
    %v6635 = vunpack.c.l.b16 %v6347
    %v6636 = vunpack.c.l.b16 %v6348
    %v6637 = vunpack.c.l.b16 %v6349
    %v6638 = vunpack.c.l.b16 %v6350
    %v6639 = vunpack.c.l.b16 %v6351
    %v6640 = vunpack.c.l.b16 %v6352
    %v6641 = vunpack.c.l.b16 %v6353
    %v6642 = vunpack.c.l.b16 %v6354
    %v6643 = vunpack.c.l.b16 %v6355
    %v6644 = vunpack.c.l.b16 %v6356
    %v6645 = vunpack.c.l.b16 %v6357
    %v6646 = vunpack.c.l.b16 %v6358
    %v6647 = vunpack.c.l.b16 %v6359
    %v6648 = vunpack.c.l.b16 %v6360
    %v6649 = vunpack.c.l.b16 %v6361
    %v6650 = vunpack.c.l.b16 %v6362
    %v6651 = vunpack.c.l.b16 %v6363
    %v6652 = vunpack.c.l.b16 %v6364
    %v6653 = vunpack.c.l.b16 %v6365
    %v6654 = vunpack.c.l.b16 %v6366
    %v6655 = vunpack.c.l.b16 %v6367
    %v6656 = vunpack.c.l.b16 %v6368
    %v6657 = vunpack.c.l.b16 %v6369
    %v6658 = vunpack.c.l.b16 %v6370
    %v6659 = vunpack.c.l.b16 %v6371
    %v6660 = vunpack.c.l.b16 %v6372
    %v6661 = vunpack.c.l.b16 %v6373
    %v6662 = vunpack.c.l.b16 %v6374
    %v6663 = vunpack.c.l.b16 %v6375
    %v6664 = vunpack.c.l.b16 %v6376
    %v6665 = vunpack.c.l.b16 %v6377
    %v6666 = vunpack.c.l.b16 %v6378
    %v6667 = vunpack.c.l.b16 %v6379
    %v6668 = vunpack.c.l.b16 %v6380
    %v6669 = vunpack.c.l.b16 %v6381
    %v6670 = vunpack.c.l.b16 %v6382
    %v6671 = vunpack.c.l.b16 %v6383
    %v6672 = vunpack.c.l.b16 %v6384
    %v6673 = vunpack.c.l.b16 %v6385
    %v6674 = vunpack.c.l.b16 %v6386
    %v6675 = vunpack.c.l.b16 %v6387
    %v6676 = vunpack.c.l.b16 %v6388
    %v6677 = vunpack.c.l.b16 %v6389
    %v6678 = vunpack.c.l.b16 %v6390
    %v6679 = vunpack.c.l.b16 %v6391
    %v6680 = vunpack.c.l.b16 %v6392
    %v6681 = vunpack.c.l.b16 %v6393
    %v6682 = vunpack.c.l.b16 %v6394
    %v6683 = vunpack.c.l.b16 %v6395
    %v6684 = vunpack.c.l.b16 %v6396
    %v6685 = vunpack.c.l.b16 %v6397
    %v6686 = vunpack.c.l.b16 %v6398
    %v6687 = vunpack.c.l.b16 %v6399
    %v6688 = vunpack.c.l.b16 %v6400
    %v6689 = vunpack.c.l.b16 %v6401
    %v6690 = vunpack.c.l.b16 %v6402
    %v6691 = vunpack.c.l.b16 %v6403
    %v6692 = vunpack.c.l.b16 %v6404
    %v6693 = vunpack.c.l.b16 %v6405
    %v6694 = vunpack.c.l.b16 %v6406
    %v6695 = vunpack.c.l.b16 %v6407
    %v6696 = vunpack.c.l.b16 %v6408
    %v6697 = vunpack.c.l.b16 %v6409
    %v6698 = vunpack.c.l.b16 %v6410
    %v6699 = vunpack.c.l.b16 %v6411
    %v6700 = vunpack.c.l.b16 %v6412
    %v6701 = vunpack.c.l.b16 %v6413
    %v6702 = vunpack.c.l.b16 %v6414
    %v6703 = vunpack.c.l.b16 %v6415
    %v6704 = vunpack.c.l.b16 %v6416
    %v6705 = vunpack.c.l.b16 %v6417
    %v6706 = vunpack.c.l.b16 %v6418
    %v6707 = vunpack.c.l.b16 %v6419
    %v6708 = vunpack.c.l.b16 %v6420
    %v6709 = vunpack.c.l.b16 %v6421
    %v6710 = vunpack.c.l.b16 %v6422
    %v6711 = vunpack.c.l.b16 %v6423
    %v6712 = vunpack.c.l.b16 %v6424
    %v6713 = vunpack.c.l.b16 %v6425
    %v6714 = vunpack.c.l.b16 %v6426
    %v6715 = vunpack.c.l.b16 %v6427
    %v6716 = vunpack.c.l.b16 %v6428
    %v6717 = vunpack.c.l.b16 %v6429
    %v6718 = vunpack.c.l.b16 %v6430
    %v6719 = vunpack.c.l.b16 %v6431
    %v6720 = vunpack.c.l.b16 %v6432
    %v6721 = vunpack.c.l.b16 %v6433
    %v6722 = vunpack.c.l.b16 %v6434
    %v6723 = vunpack.c.l.b16 %v6435
    %v6724 = vunpack.c.l.b16 %v6436
    %v6725 = vunpack.c.l.b16 %v6437
    %v6726 = vunpack.c.l.b16 %v6438
    %v6727 = vunpack.c.l.b16 %v6439
    %v6728 = vunpack.c.l.b16 %v6440
    %v6729 = vunpack.c.l.b16 %v6441
    %v6730 = vunpack.c.l.b16 %v6442
    %v6731 = vunpack.c.l.b16 %v6443
    %v6732 = vunpack.c.l.b16 %v6444
    %v6733 = vunpack.c.l.b16 %v6445
    %v6734 = vunpack.c.l.b16 %v6446
    %v6735 = vunpack.c.l.b16 %v6447
    %v6736 = vunpack.c.l.b16 %v6448
    %v6737 = vunpack.c.l.b16 %v6449
    %v6738 = vunpack.c.l.b16 %v6450
    %v6739 = vunpack.c.l.b16 %v6451
    %v6740 = vunpack.c.l.b16 %v6452
    %v6741 = vunpack.c.l.b16 %v6453
    %v6742 = vunpack.c.l.b16 %v6454
    %v6743 = vunpack.c.l.b16 %v6455
    %v6744 = vunpack.c.l.b16 %v6456
    %v6745 = vunpack.c.l.b16 %v6457
    %v6746 = vunpack.c.l.b16 %v6458
    %v6747 = vunpack.c.l.b16 %v6459
    %v6748 = vunpack.c.l.b16 %v6460
    %v6749 = vunpack.c.l.b16 %v6461
    %v6750 = vunpack.c.l.b16 %v6462
    %v6751 = vunpack.c.l.b16 %v6463
    %v6752 = vunpack.c.l.b16 %v6464
    %v6753 = vunpack.c.l.b16 %v6465
    %v6754 = vpack.c.b16 %v6611, %v6610
    %v6755 = vpack.c.b16 %v6613, %v6612
    %v6756 = vpack.c.b16 %v6615, %v6614
    %v6757 = vpack.c.b16 %v6617, %v6616
    %v6758 = vpack.c.b16 %v6619, %v6618
    %v6759 = vpack.c.b16 %v6621, %v6620
    %v6760 = vpack.c.b16 %v6623, %v6622
    %v6761 = vpack.c.b16 %v6625, %v6624
    %v6762 = vpack.c.b16 %v6627, %v6626
    %v6763 = vpack.c.b16 %v6629, %v6628
    %v6764 = vpack.c.b16 %v6631, %v6630
    %v6765 = vpack.c.b16 %v6633, %v6632
    %v6766 = vpack.c.b16 %v6635, %v6634
    %v6767 = vpack.c.b16 %v6637, %v6636
    %v6768 = vpack.c.b16 %v6639, %v6638
    %v6769 = vpack.c.b16 %v6641, %v6640
    %v6770 = vpack.c.b16 %v6643, %v6642
    %v6771 = vpack.c.b16 %v6645, %v6644
    %v6772 = vpack.c.b16 %v6647, %v6646
    %v6773 = vpack.c.b16 %v6649, %v6648
    %v6774 = vpack.c.b16 %v6651, %v6650
    %v6775 = vpack.c.b16 %v6653, %v6652
    %v6776 = vpack.c.b16 %v6655, %v6654
    %v6777 = vpack.c.b16 %v6657, %v6656
    %v6778 = vpack.c.b16 %v6659, %v6658
    %v6779 = vpack.c.b16 %v6661, %v6660
    %v6780 = vpack.c.b16 %v6663, %v6662
    %v6781 = vpack.c.b16 %v6665, %v6664
    %v6782 = vpack.c.b16 %v6667, %v6666
    %v6783 = vpack.c.b16 %v6669, %v6668
    %v6784 = vpack.c.b16 %v6671, %v6670
    %v6785 = vpack.c.b16 %v6673, %v6672
    %v6786 = vpack.c.b16 %v6675, %v6674
    %v6787 = vpack.c.b16 %v6677, %v6676
    %v6788 = vpack.c.b16 %v6679, %v6678
    %v6789 = vpack.c.b16 %v6681, %v6680
    %v6790 = vpack.c.b16 %v6683, %v6682
    %v6791 = vpack.c.b16 %v6685, %v6684
    %v6792 = vpack.c.b16 %v6687, %v6686
    %v6793 = vpack.c.b16 %v6689, %v6688
    %v6794 = vpack.c.b16 %v6691, %v6690
    %v6795 = vpack.c.b16 %v6693, %v6692
    %v6796 = vpack.c.b16 %v6695, %v6694
    %v6797 = vpack.c.b16 %v6697, %v6696
    %v6798 = vpack.c.b16 %v6699, %v6698
    %v6799 = vpack.c.b16 %v6701, %v6700
    %v6800 = vpack.c.b16 %v6703, %v6702
    %v6801 = vpack.c.b16 %v6705, %v6704
    %v6802 = vpack.c.b16 %v6707, %v6706
    %v6803 = vpack.c.b16 %v6709, %v6708
    %v6804 = vpack.c.b16 %v6711, %v6710
    %v6805 = vpack.c.b16 %v6713, %v6712
    %v6806 = vpack.c.b16 %v6715, %v6714
    %v6807 = vpack.c.b16 %v6717, %v6716
    %v6808 = vpack.c.b16 %v6719, %v6718
    %v6809 = vpack.c.b16 %v6721, %v6720
    %v6810 = vpack.c.b16 %v6723, %v6722
    %v6811 = vpack.c.b16 %v6725, %v6724
    %v6812 = vpack.c.b16 %v6727, %v6726
    %v6813 = vpack.c.b16 %v6729, %v6728
    %v6814 = vpack.c.b16 %v6731, %v6730
    %v6815 = vpack.c.b16 %v6733, %v6732
    %v6816 = vpack.c.b16 %v6735, %v6734
    %v6817 = vpack.c.b16 %v6737, %v6736
    %v6818 = vpack.c.b16 %v6739, %v6738
    %v6819 = vpack.c.b16 %v6741, %v6740
    %v6820 = vpack.c.b16 %v6743, %v6742
    %v6821 = vpack.c.b16 %v6745, %v6744
    %v6822 = vpack.c.b16 %v6747, %v6746
    %v6823 = vpack.c.b16 %v6749, %v6748
    %v6824 = vpack.c.b16 %v6751, %v6750
    %v6825 = vpack.c.b16 %v6753, %v6752
    %6898 = vmatprep.subr.bf16.mxu0 0
    %6899 = vmatpush1.bf16.msra.mxu0 %v6754
    %6900 = vmatprep.subr.bf16.mxu0 0
    %6901 = vmatpush1.bf16.msra.mxu0 %v6755
    %6902 = vmatprep.subr.bf16.mxu0 0
    %6903 = vmatpush1.bf16.msra.mxu0 %v6756
    %6904 = vmatprep.subr.bf16.mxu0 0
    %6905 = vmatpush1.bf16.msra.mxu0 %v6757
    %6906 = vmatprep.subr.bf16.mxu0 0
    %6907 = vmatpush1.bf16.msra.mxu0 %v6758
    %6908 = vmatprep.subr.bf16.mxu0 0
    %6909 = vmatpush1.bf16.msra.mxu0 %v6759
    %6910 = vmatprep.subr.bf16.mxu0 0
    %6911 = vmatpush1.bf16.msra.mxu0 %v6760
    %6912 = vmatprep.subr.bf16.mxu0 0
    %6913 = vmatpush1.bf16.msra.mxu0 %v6761
    %6914 = vmatprep.subr.bf16.mxu0 0
    %6915 = vmatpush1.bf16.msra.mxu0 %v6762
    %6916 = vmatprep.subr.bf16.mxu0 0
    %6917 = vmatpush1.bf16.msra.mxu0 %v6763
    %6918 = vmatprep.subr.bf16.mxu0 0
    %6919 = vmatpush1.bf16.msra.mxu0 %v6764
    %6920 = vmatprep.subr.bf16.mxu0 0
    %6921 = vmatpush1.bf16.msra.mxu0 %v6765
    %6922 = vmatprep.subr.bf16.mxu0 0
    %6923 = vmatpush1.bf16.msra.mxu0 %v6766
    %6924 = vmatprep.subr.bf16.mxu0 0
    %6925 = vmatpush1.bf16.msra.mxu0 %v6767
    %6926 = vmatprep.subr.bf16.mxu0 0
    %6927 = vmatpush1.bf16.msra.mxu0 %v6768
    %6928 = vmatprep.subr.bf16.mxu0 0
    %6929 = vmatpush1.bf16.msra.mxu0 %v6769
    %6930 = vmatprep.mubr.bf16.mxu0 %v6286
    %6931 = vmatmul.mubr.bf16.gmra.mrb[0].mxu0 %v6285
    %v6932 = vpop.f32.mrb[0].mxu0
    %v6933 = vadd.f32 0.0, %v6932
    %v6934 = vpop.f32.mrb[0].mxu0
    %v6935 = vpop.f32.mrb[0].mxu0
    %v6936 = vadd.f32 0.0, %v6935
    %v6937 = vpop.f32.mrb[0].mxu0
    %6938 = vmatprep.mubr.bf16.mxu0 %v6295
    %6939 = vmatmul.mubr.bf16.gmra.mrb[0].mxu0 %v6294
    %v6940 = vpop.f32.mrb[0].mxu0
    %v6941 = vadd.f32 0.0, %v6940
    %v6942 = vpop.f32.mrb[0].mxu0
    %v6943 = vpop.f32.mrb[0].mxu0
    %v6944 = vadd.f32 0.0, %v6943
    %v6945 = vpop.f32.mrb[0].mxu0
    %6946 = vmatprep.mubr.bf16.mxu0 %v6304
    %6947 = vmatmul.mubr.bf16.gmra.mrb[0].mxu0 %v6303
    %v6948 = vpop.f32.mrb[0].mxu0
    %v6949 = vadd.f32 0.0, %v6948
    %v6950 = vpop.f32.mrb[0].mxu0
    %v6951 = vpop.f32.mrb[0].mxu0
    %v6952 = vadd.f32 0.0, %v6951
    %v6953 = vpop.f32.mrb[0].mxu0
    %6954 = vmatprep.mubr.bf16.mxu0 %v6313
    %6955 = vmatmul.mubr.bf16.gmra.mrb[0].mxu0 %v6312
    %v6956 = vpop.f32.mrb[0].mxu0
    %v6957 = vadd.f32 0.0, %v6956
    %v6958 = vpop.f32.mrb[0].mxu0
    %v6959 = vpop.f32.mrb[0].mxu0
    %v6960 = vadd.f32 0.0, %v6959
    %v6961 = vpop.f32.mrb[0].mxu0
    %6962 = vdwg.mxu0
    %6963 = vmatprep.subr.bf16.mxu0 0
    %6964 = vmatpush1.bf16.msra.mxu0 %v6770
    %6965 = vmatprep.subr.bf16.mxu0 0
    %6966 = vmatpush1.bf16.msra.mxu0 %v6771
    %6967 = vmatprep.subr.bf16.mxu0 0
    %6968 = vmatpush1.bf16.msra.mxu0 %v6772
    %6969 = vmatprep.subr.bf16.mxu0 0
    %6970 = vmatpush1.bf16.msra.mxu0 %v6773
    %6971 = vmatprep.subr.bf16.mxu0 0
    %6972 = vmatpush1.bf16.msra.mxu0 %v6774
    %6973 = vmatprep.subr.bf16.mxu0 0
    %6974 = vmatpush1.bf16.msra.mxu0 %v6775
    %6975 = vmatprep.subr.bf16.mxu0 0
    %6976 = vmatpush1.bf16.msra.mxu0 %v6776
    %6977 = vmatprep.subr.bf16.mxu0 0
    %6978 = vmatpush1.bf16.msra.mxu0 %v6777
    %6979 = vmatprep.subr.bf16.mxu0 0
    %6980 = vmatpush1.bf16.msra.mxu0 %v6778
    %6981 = vmatprep.subr.bf16.mxu0 0
    %6982 = vmatpush1.bf16.msra.mxu0 %v6779
    %6983 = vmatprep.subr.bf16.mxu0 0
    %6984 = vmatpush1.bf16.msra.mxu0 %v6780
    %6985 = vmatprep.subr.bf16.mxu0 0
    %6986 = vmatpush1.bf16.msra.mxu0 %v6781
    %6987 = vmatprep.subr.bf16.mxu0 0
    %6988 = vmatpush1.bf16.msra.mxu0 %v6782
    %6989 = vmatprep.subr.bf16.mxu0 0
    %6990 = vmatpush1.bf16.msra.mxu0 %v6783
    %6991 = vmatprep.subr.bf16.mxu0 0
    %6992 = vmatpush1.bf16.msra.mxu0 %v6784
    %6993 = vmatprep.subr.bf16.mxu0 0
    %6994 = vmatpush1.bf16.msra.mxu0 %v6785
    %6995 = vmatprep.mubr.bf16.mxu0 %v6288
    %6996 = vmatmul.mubr.bf16.gmra.mrb[0].mxu0 %v6287
    %v6997 = vpop.f32.mrb[0].mxu0
    %v6998 = vadd.f32 %v6933, %v6997
    %v6999 = vpop.f32.mrb[0].mxu0
    %v7000 = vpop.f32.mrb[0].mxu0
    %v7001 = vadd.f32 %v6936, %v7000
    %v7002 = vpop.f32.mrb[0].mxu0
    %7003 = vmatprep.mubr.bf16.mxu0 %v6297
    %7004 = vmatmul.mubr.bf16.gmra.mrb[0].mxu0 %v6296
    %v7005 = vpop.f32.mrb[0].mxu0
    %v7006 = vadd.f32 %v6941, %v7005
    %v7007 = vpop.f32.mrb[0].mxu0
    %v7008 = vpop.f32.mrb[0].mxu0
    %v7009 = vadd.f32 %v6944, %v7008
    %v7010 = vpop.f32.mrb[0].mxu0
    %7011 = vmatprep.mubr.bf16.mxu0 %v6306
    %7012 = vmatmul.mubr.bf16.gmra.mrb[0].mxu0 %v6305
    %v7013 = vpop.f32.mrb[0].mxu0
    %v7014 = vadd.f32 %v6949, %v7013
    %v7015 = vpop.f32.mrb[0].mxu0
    %v7016 = vpop.f32.mrb[0].mxu0
    %v7017 = vadd.f32 %v6952, %v7016
    %v7018 = vpop.f32.mrb[0].mxu0
    %7019 = vmatprep.mubr.bf16.mxu0 %v6315
    %7020 = vmatmul.mubr.bf16.gmra.mrb[0].mxu0 %v6314
    %v7021 = vpop.f32.mrb[0].mxu0
    %v7022 = vadd.f32 %v6957, %v7021
    %v7023 = vpop.f32.mrb[0].mxu0
    %v7024 = vpop.f32.mrb[0].mxu0
    %v7025 = vadd.f32 %v6960, %v7024
    %v7026 = vpop.f32.mrb[0].mxu0
    %7027 = vdwg.mxu0
    %7028 = vmatprep.subr.bf16.mxu0 0
    %7029 = vmatpush1.bf16.msra.mxu0 %v6786
    %7030 = vmatprep.subr.bf16.mxu0 0
    %7031 = vmatpush1.bf16.msra.mxu0 %v6787
    %7032 = vmatprep.subr.bf16.mxu0 0
    %7033 = vmatpush1.bf16.msra.mxu0 %v6788
    %7034 = vmatprep.subr.bf16.mxu0 0
    %7035 = vmatpush1.bf16.msra.mxu0 %v6789
    %7036 = vmatprep.subr.bf16.mxu0 0
    %7037 = vmatpush1.bf16.msra.mxu0 %v6790
    %7038 = vmatprep.subr.bf16.mxu0 0
    %7039 = vmatpush1.bf16.msra.mxu0 %v6791
    %7040 = vmatprep.subr.bf16.mxu0 0
    %7041 = vmatpush1.bf16.msra.mxu0 %v6792
    %7042 = vmatprep.subr.bf16.mxu0 0
    %7043 = vmatpush1.bf16.msra.mxu0 %v6793
    %7044 = vmatprep.subr.bf16.mxu0 0
    %7045 = vmatpush1.bf16.msra.mxu0 %v6794
    %7046 = vmatprep.subr.bf16.mxu0 0
    %7047 = vmatpush1.bf16.msra.mxu0 %v6795
    %7048 = vmatprep.subr.bf16.mxu0 0
    %7049 = vmatpush1.bf16.msra.mxu0 %v6796
    %7050 = vmatprep.subr.bf16.mxu0 0
    %7051 = vmatpush1.bf16.msra.mxu0 %v6797
    %7052 = vmatprep.subr.bf16.mxu0 0
    %7053 = vmatpush1.bf16.msra.mxu0 %v6798
    %7054 = vmatprep.subr.bf16.mxu0 0
    %7055 = vmatpush1.bf16.msra.mxu0 %v6799
    %7056 = vmatprep.subr.bf16.mxu0 0
    %7057 = vmatpush1.bf16.msra.mxu0 %v6800
    %7058 = vmatprep.subr.bf16.mxu0 0
    %7059 = vmatpush1.bf16.msra.mxu0 %v6801
    %7060 = vmatprep.mubr.bf16.mxu0 %v6290
    %7061 = vmatmul.mubr.bf16.gmra.mrb[0].mxu0 %v6289
    %v7062 = vpop.f32.mrb[0].mxu0
    %v7063 = vadd.f32 %v6998, %v7062
    %v7064 = vpop.f32.mrb[0].mxu0
    %v7065 = vpop.f32.mrb[0].mxu0
    %v7066 = vadd.f32 %v7001, %v7065
    %v7067 = vpop.f32.mrb[0].mxu0
    %7068 = vmatprep.mubr.bf16.mxu0 %v6299
    %7069 = vmatmul.mubr.bf16.gmra.mrb[0].mxu0 %v6298
    %v7070 = vpop.f32.mrb[0].mxu0
    %v7071 = vadd.f32 %v7006, %v7070
    %v7072 = vpop.f32.mrb[0].mxu0
    %v7073 = vpop.f32.mrb[0].mxu0
    %v7074 = vadd.f32 %v7009, %v7073
    %v7075 = vpop.f32.mrb[0].mxu0
    %7076 = vmatprep.mubr.bf16.mxu0 %v6308
    %7077 = vmatmul.mubr.bf16.gmra.mrb[0].mxu0 %v6307
    %v7078 = vpop.f32.mrb[0].mxu0
    %v7079 = vadd.f32 %v7014, %v7078
    %v7080 = vpop.f32.mrb[0].mxu0
    %v7081 = vpop.f32.mrb[0].mxu0
    %v7082 = vadd.f32 %v7017, %v7081
    %v7083 = vpop.f32.mrb[0].mxu0
    %7084 = vmatprep.mubr.bf16.mxu0 %v6317
    %7085 = vmatmul.mubr.bf16.gmra.mrb[0].mxu0 %v6316
    %v7086 = vpop.f32.mrb[0].mxu0
    %v7087 = vadd.f32 %v7022, %v7086
    %v7088 = vpop.f32.mrb[0].mxu0
    %v7089 = vpop.f32.mrb[0].mxu0
    %v7090 = vadd.f32 %v7025, %v7089
    %v7091 = vpop.f32.mrb[0].mxu0
    %7092 = vdwg.mxu0
    %7093 = vmatprep.subr.bf16.mxu0 0
    %7094 = vmatpush1.bf16.msra.mxu0 %v6802
    %7095 = vmatprep.subr.bf16.mxu0 0
    %7096 = vmatpush1.bf16.msra.mxu0 %v6803
    %7097 = vmatprep.subr.bf16.mxu0 0
    %7098 = vmatpush1.bf16.msra.mxu0 %v6804
    %7099 = vmatprep.subr.bf16.mxu0 0
    %7100 = vmatpush1.bf16.msra.mxu0 %v6805
    %7101 = vmatprep.subr.bf16.mxu0 0
    %7102 = vmatpush1.bf16.msra.mxu0 %v6806
    %7103 = vmatprep.subr.bf16.mxu0 0
    %7104 = vmatpush1.bf16.msra.mxu0 %v6807
    %7105 = vmatprep.subr.bf16.mxu0 0
    %7106 = vmatpush1.bf16.msra.mxu0 %v6808
    %7107 = vmatprep.subr.bf16.mxu0 0
    %7108 = vmatpush1.bf16.msra.mxu0 %v6809
    %7109 = vmatprep.subr.bf16.mxu0 0
    %7110 = vmatpush1.bf16.msra.mxu0 %v6810
    %7111 = vmatprep.subr.bf16.mxu0 0
    %7112 = vmatpush1.bf16.msra.mxu0 %v6811
    %7113 = vmatprep.subr.bf16.mxu0 0
    %7114 = vmatpush1.bf16.msra.mxu0 %v6812
    %7115 = vmatprep.subr.bf16.mxu0 0
    %7116 = vmatpush1.bf16.msra.mxu0 %v6813
    %7117 = vmatprep.subr.bf16.mxu0 0
    %7118 = vmatpush1.bf16.msra.mxu0 %v6814
    %7119 = vmatprep.subr.bf16.mxu0 0
    %7120 = vmatpush1.bf16.msra.mxu0 %v6815
    %7121 = vmatprep.subr.bf16.mxu0 0
    %7122 = vmatpush1.bf16.msra.mxu0 %v6816
    %7123 = vmatprep.subr.bf16.mxu0 0
    %7124 = vmatpush1.bf16.msra.mxu0 %v6817
    %7125 = vmatprep.mubr.bf16.mxu0 %v6292
    %7126 = vmatmul.mubr.bf16.gmra.mrb[0].mxu0 %v6291
    %v7127 = vpop.f32.mrb[0].mxu0
    %v7128 = vadd.f32 %v7063, %v7127
    %v7129 = vpop.f32.mrb[0].mxu0
    %v7130 = vpop.f32.mrb[0].mxu0
    %v7131 = vadd.f32 %v7066, %v7130
    %v7132 = vpop.f32.mrb[0].mxu0
    %7133 = vmatprep.mubr.bf16.mxu0 %v6301
    %7134 = vmatmul.mubr.bf16.gmra.mrb[0].mxu0 %v6300
    %v7135 = vpop.f32.mrb[0].mxu0
    %v7136 = vadd.f32 %v7071, %v7135
    %v7137 = vpop.f32.mrb[0].mxu0
    %v7138 = vpop.f32.mrb[0].mxu0
    %v7139 = vadd.f32 %v7074, %v7138
    %v7140 = vpop.f32.mrb[0].mxu0
    %7141 = vmatprep.mubr.bf16.mxu0 %v6310
    %7142 = vmatmul.mubr.bf16.gmra.mrb[0].mxu0 %v6309
    %v7143 = vpop.f32.mrb[0].mxu0
    %v7144 = vadd.f32 %v7079, %v7143
    %v7145 = vpop.f32.mrb[0].mxu0
    %v7146 = vpop.f32.mrb[0].mxu0
    %v7147 = vadd.f32 %v7082, %v7146
    %v7148 = vpop.f32.mrb[0].mxu0
    %7149 = vmatprep.mubr.bf16.mxu0 %v6319
    %7150 = vmatmul.mubr.bf16.gmra.mrb[0].mxu0 %v6318
    %v7151 = vpop.f32.mrb[0].mxu0
    %v7152 = vadd.f32 %v7087, %v7151
    %v7153 = vpop.f32.mrb[0].mxu0
    %v7154 = vpop.f32.mrb[0].mxu0
    %v7155 = vadd.f32 %v7090, %v7154
    %v7156 = vpop.f32.mrb[0].mxu0
    %7157 = vdwg.mxu0
    %7158 = vmatprep.subr.bf16.mxu0 0
    %7159 = vmatpush1.bf16.msra.mxu0 %v6818
    %7160 = vmatprep.subr.bf16.mxu0 0
    %7161 = vmatpush1.bf16.msra.mxu0 %v6819
    %7162 = vmatprep.subr.bf16.mxu0 0
    %7163 = vmatpush1.bf16.msra.mxu0 %v6820
    %7164 = vmatprep.subr.bf16.mxu0 0
    %7165 = vmatpush1.bf16.msra.mxu0 %v6821
    %7166 = vmatprep.subr.bf16.mxu0 0
    %7167 = vmatpush1.bf16.msra.mxu0 %v6822
    %7168 = vmatprep.subr.bf16.mxu0 0
    %7169 = vmatpush1.bf16.msra.mxu0 %v6823
    %7170 = vmatprep.subr.bf16.mxu0 0
    %7171 = vmatpush1.bf16.msra.mxu0 %v6824
    %7172 = vmatprep.subr.bf16.mxu0 0
    %7173 = vmatpush1.bf16.msra.mxu0 %v6825
    %7174 = vmatprep.subr.bf16.mxu0 0
    %7175 = vmatpush1.bf16.msra.mxu0 0
    %7176 = vmatprep.subr.bf16.mxu0 0
    %7177 = vmatpush1.bf16.msra.mxu0 0
    %7178 = vmatprep.subr.bf16.mxu0 0
    %7179 = vmatpush1.bf16.msra.mxu0 0
    %7180 = vmatprep.subr.bf16.mxu0 0
    %7181 = vmatpush1.bf16.msra.mxu0 0
    %7182 = vmatprep.subr.bf16.mxu0 0
    %7183 = vmatpush1.bf16.msra.mxu0 0
    %7184 = vmatprep.subr.bf16.mxu0 0
    %7185 = vmatpush1.bf16.msra.mxu0 0
    %7186 = vmatprep.subr.bf16.mxu0 0
    %7187 = vmatpush1.bf16.msra.mxu0 0
    %7188 = vmatprep.subr.bf16.mxu0 0
    %7189 = vmatpush1.bf16.msra.mxu0 0
    %7190 = vmatprep.mubr.bf16.mxu0 0
    %7191 = vmatmul.mubr.bf16.gmra.mrb[0].mxu0 %v6293
    %v7192 = vpop.f32.mrb[0].mxu0
    %v7193 = vadd.f32 %v7128, %v7192
    %v7194 = vpop.f32.mrb[0].mxu0
    %v7195 = vpop.f32.mrb[0].mxu0
    %v7196 = vadd.f32 %v7131, %v7195
    %v7197 = vpop.f32.mrb[0].mxu0
    %7198 = vmatprep.mubr.bf16.mxu0 0
    %7199 = vmatmul.mubr.bf16.gmra.mrb[0].mxu0 %v6302
    %v7200 = vpop.f32.mrb[0].mxu0
    %v7201 = vadd.f32 %v7136, %v7200
    %v7202 = vpop.f32.mrb[0].mxu0
    %v7203 = vpop.f32.mrb[0].mxu0
    %v7204 = vadd.f32 %v7139, %v7203
    %v7205 = vpop.f32.mrb[0].mxu0
    %7206 = vmatprep.mubr.bf16.mxu0 0
    %7207 = vmatmul.mubr.bf16.gmra.mrb[0].mxu0 %v6311
    %v7208 = vpop.f32.mrb[0].mxu0
    %v7209 = vadd.f32 %v7144, %v7208
    %v7210 = vpop.f32.mrb[0].mxu0
    %v7211 = vpop.f32.mrb[0].mxu0
    %v7212 = vadd.f32 %v7147, %v7211
    %v7213 = vpop.f32.mrb[0].mxu0
    %7214 = vmatprep.mubr.bf16.mxu0 0
    %7215 = vmatmul.mubr.bf16.gmra.mrb[0].mxu0 %v6320
    %v7216 = vpop.f32.mrb[0].mxu0
    %v7217 = vadd.f32 %v7152, %v7216
    %v7218 = vpop.f32.mrb[0].mxu0
    %v7219 = vpop.f32.mrb[0].mxu0
    %v7220 = vadd.f32 %v7155, %v7219
    %v7221 = vpop.f32.mrb[0].mxu0
    %7222 = vdwg.mxu0
    %v7223 = vadd.f32 %v7193, %v7196
    %v7224 = vadd.f32 %v7223, %v7201
    %v7225 = vadd.f32 %v7224, %v7204
    %v7226 = vadd.f32 %v7225, %v7209
    %v7227 = vadd.f32 %v7226, %v7212
    %v7228 = vadd.f32 %v7227, %v7217
    %v7229 = vadd.f32 %v7228, %v7220
    %v7230 = vrot.slane %v7229, 4
    %v7231 = vadd.f32 %v7229, %v7230
    %v7232 = vrot.slane %v7231, 2
    %v7233 = vadd.f32 %v7231, %v7232
    %v7234 = vrot.slane %v7233, 1
    %v7235 = vadd.f32 %v7233, %v7234
    %v7236 = vmul.f32 %v7193, %v7193
    %v7237 = vmul.f32 %v7196, %v7196
    %v7238 = vmul.f32 %v7201, %v7201
    %v7239 = vmul.f32 %v7204, %v7204
    %v7240 = vmul.f32 %v7209, %v7209
    %v7241 = vmul.f32 %v7212, %v7212
    %v7242 = vmul.f32 %v7217, %v7217
    %v7243 = vmul.f32 %v7220, %v7220
    %v7244 = vadd.f32 %v7236, %v7237
    %v7245 = vadd.f32 %v7244, %v7238
    %v7246 = vadd.f32 %v7245, %v7239
    %v7247 = vadd.f32 %v7246, %v7240
    %v7248 = vadd.f32 %v7247, %v7241
    %v7249 = vadd.f32 %v7248, %v7242
    %v7250 = vadd.f32 %v7249, %v7243
    %v7251 = vrot.slane %v7250, 4
    %v7252 = vadd.f32 %v7250, %v7251
    %v7253 = vrot.slane %v7252, 2
    %v7254 = vadd.f32 %v7252, %v7253
    %v7255 = vrot.slane %v7254, 1
    %v7256 = vadd.f32 %v7254, %v7255
    %v7257 = vmul.f32 %v7235, 0.015625
    %v7258 = vmul.f32 %v7256, 0.015625
    %v7259 = vmul.f32 %v7257, %v7257
    %v7260 = vsub.f32 %v7258, %v7259
    %v7261 = vsub.f32 %v7193, %v7257
    %v7262 = vsub.f32 %v7196, %v7257
    %v7263 = vsub.f32 %v7201, %v7257
    %v7264 = vsub.f32 %v7204, %v7257
    %v7265 = vsub.f32 %v7209, %v7257
    %v7266 = vsub.f32 %v7212, %v7257
    %v7267 = vsub.f32 %v7217, %v7257
    %v7268 = vsub.f32 %v7220, %v7257
    %v7269 = vadd.f32 %v7260, 1e-05
    %v7270 = vrsqrt.pop %v7269
    %v7271 = vmul.f32 %v7261, %v7270
    %v7272 = vmul.f32 %v7262, %v7270
    %v7273 = vmul.f32 %v7263, %v7270
    %v7274 = vmul.f32 %v7264, %v7270
    %v7275 = vmul.f32 %v7265, %v7270
    %v7276 = vmul.f32 %v7266, %v7270
    %v7277 = vmul.f32 %v7267, %v7270
    %v7278 = vmul.f32 %v7268, %v7270
    %s7279 = scalar_lea.vmem [#allocation8], 5
    %v7280 = vld [vmem:[%s7279] sm:$0x1]
    %v7282 = vlaneseq
    %v7283 = vshrl.u32 %v7282, 7
    %v7284 = vsub.s32 0, %v7283
    %v7285 = vrot.slane %v7280, %v7284
    %v7287 = vmul.f32 %v7285, %v7271
    %v7288 = vmul.f32 %v7285, %v7272
    %v7289 = vmul.f32 %v7285, %v7273
    %v7290 = vmul.f32 %v7285, %v7274
    %v7291 = vmul.f32 %v7285, %v7275
    %v7292 = vmul.f32 %v7285, %v7276
    %v7293 = vmul.f32 %v7285, %v7277
    %v7294 = vmul.f32 %v7285, %v7278
    %s7295 = scalar_lea.vmem [#allocation10], 5
    %v7296 = vld [vmem:[%s7295] sm:$0x1]
    %v7298 = vlaneseq
    %v7299 = vshrl.u32 %v7298, 7
    %v7300 = vsub.s32 0, %v7299
    %v7301 = vrot.slane %v7296, %v7300
    %v7303 = vadd.f32 %v7287, %v7301
    %v7304 = vadd.f32 %v7288, %v7301
    %v7305 = vadd.f32 %v7289, %v7301
    %v7306 = vadd.f32 %v7290, %v7301
    %v7307 = vadd.f32 %v7291, %v7301
    %v7308 = vadd.f32 %v7292, %v7301
    %v7309 = vadd.f32 %v7293, %v7301
    %v7310 = vadd.f32 %v7294, %v7301
    %v7311 = vmax.f32 %v7303, 0.0
    %v7312 = vmax.f32 %v7304, 0.0
    %v7313 = vmax.f32 %v7305, 0.0
    %v7314 = vmax.f32 %v7306, 0.0
    %v7315 = vmax.f32 %v7307, 0.0
    %v7316 = vmax.f32 %v7308, 0.0
    %v7317 = vmax.f32 %v7309, 0.0
    %v7318 = vmax.f32 %v7310, 0.0
    %v7319 = vadd.f32 %v7311, %v5051
    %v7320 = vadd.f32 %v7312, %v5052
    %v7321 = vadd.f32 %v7313, %v5053
    %v7322 = vadd.f32 %v7314, %v5054
    %v7323 = vadd.f32 %v7315, %v5055
    %v7324 = vadd.f32 %v7316, %v5056
    %v7325 = vadd.f32 %v7317, %v5057
    %v7326 = vadd.f32 %v7318, %v5058
    %v7327 = vrot.slane %v7319, 7
    %v7328 = vrot.slane %v7320, 7
    %v7329 = vrot.slane %v7321, 7
    %v7330 = vrot.slane %v7322, 7
    %v7331 = vrot.slane %v7323, 7
    %v7332 = vrot.slane %v7324, 7
    %v7333 = vrot.slane %v7325, 7
    %v7334 = vrot.slane %v7326, 7
    %v7335 = vsel %vm540, %v7333, %v7334
    %v7336 = vsel %vm540, %v7332, %v7333
    %v7337 = vsel %vm540, %v7331, %v7332
    %v7338 = vsel %vm540, %v7330, %v7331
    %v7339 = vsel %vm540, %v7329, %v7330
    %v7340 = vsel %vm540, %v7328, %v7329
    %v7341 = vsel %vm540, %v7327, %v7328
    %v7342 = vsel %vm540, %v7334, %v7327
    %v7343 = vmul.f32 %v7335, %v142
    %v7344 = vmul.f32 %v7342, %v147
    %v7345 = vmul.f32 %v7341, %v152
    %v7346 = vmul.f32 %v7340, %v157
    %v7347 = vmul.f32 %v7339, %v162
    %v7348 = vmul.f32 %v7338, %v167
    %v7349 = vmul.f32 %v7337, %v172
    %v7350 = vmul.f32 %v7336, %v177
    %v7351 = vmul.f32 %v7326, %v191
    %v7352 = vmul.f32 %v7319, %v196
    %v7353 = vmul.f32 %v7320, %v201
    %v7354 = vmul.f32 %v7321, %v206
    %v7355 = vmul.f32 %v7322, %v211
    %v7356 = vmul.f32 %v7323, %v216
    %v7357 = vmul.f32 %v7324, %v221
    %v7358 = vmul.f32 %v7325, %v226
    %v7359 = vrot.slane %v7319, 1
    %v7360 = vrot.slane %v7320, 1
    %v7361 = vrot.slane %v7321, 1
    %v7362 = vrot.slane %v7322, 1
    %v7363 = vrot.slane %v7323, 1
    %v7364 = vrot.slane %v7324, 1
    %v7365 = vrot.slane %v7325, 1
    %v7366 = vrot.slane %v7326, 1
    %v7367 = vsel %vm573, %v7365, %v7366
    %v7368 = vsel %vm573, %v7364, %v7365
    %v7369 = vsel %vm573, %v7363, %v7364
    %v7370 = vsel %vm573, %v7362, %v7363
    %v7371 = vsel %vm573, %v7361, %v7362
    %v7372 = vsel %vm573, %v7360, %v7361
    %v7373 = vsel %vm573, %v7359, %v7360
    %v7374 = vsel %vm573, %v7366, %v7359
    %v7375 = vmul.f32 %v7374, %v240
    %v7376 = vmul.f32 %v7373, %v245
    %v7377 = vmul.f32 %v7372, %v250
    %v7378 = vmul.f32 %v7371, %v255
    %v7379 = vmul.f32 %v7370, %v260
    %v7380 = vmul.f32 %v7369, %v265
    %v7381 = vmul.f32 %v7368, %v270
    %v7382 = vmul.f32 %v7367, %v275
    %v7383 = vmul.f32 %v7342, %v289
    %v7384 = vmul.f32 %v7341, %v294
    %v7385 = vmul.f32 %v7340, %v299
    %v7386 = vmul.f32 %v7339, %v304
    %v7387 = vmul.f32 %v7338, %v309
    %v7388 = vmul.f32 %v7337, %v314
    %v7389 = vmul.f32 %v7336, %v319
    %v7390 = vmul.f32 %v7335, %v324
    %v7391 = vmul.f32 %v7373, %v338
    %v7392 = vmul.f32 %v7372, %v343
    %v7393 = vmul.f32 %v7371, %v348
    %v7394 = vmul.f32 %v7370, %v353
    %v7395 = vmul.f32 %v7369, %v358
    %v7396 = vmul.f32 %v7368, %v363
    %v7397 = vmul.f32 %v7367, %v368
    %v7398 = vmul.f32 %v7374, %v373
    %v7399 = vmul.f32 %v7341, %v387
    %v7400 = vmul.f32 %v7340, %v392
    %v7401 = vmul.f32 %v7339, %v397
    %v7402 = vmul.f32 %v7338, %v402
    %v7403 = vmul.f32 %v7337, %v407
    %v7404 = vmul.f32 %v7336, %v412
    %v7405 = vmul.f32 %v7335, %v417
    %v7406 = vmul.f32 %v7342, %v422
    %v7407 = vmul.f32 %v7320, %v436
    %v7408 = vmul.f32 %v7321, %v441
    %v7409 = vmul.f32 %v7322, %v446
    %v7410 = vmul.f32 %v7323, %v451
    %v7411 = vmul.f32 %v7324, %v456
    %v7412 = vmul.f32 %v7325, %v461
    %v7413 = vmul.f32 %v7326, %v466
    %v7414 = vmul.f32 %v7319, %v471
    %v7415 = vmul.f32 %v7372, %v485
    %v7416 = vmul.f32 %v7371, %v490
    %v7417 = vmul.f32 %v7370, %v495
    %v7418 = vmul.f32 %v7369, %v500
    %v7419 = vmul.f32 %v7368, %v505
    %v7420 = vmul.f32 %v7367, %v510
    %v7421 = vmul.f32 %v7374, %v515
    %v7422 = vmul.f32 %v7373, %v520
    %v7423 = vpack.c.bf16 %v7344, %v7343
    %v7424 = vpack.c.bf16 %v7352, %v7351
    %v7425 = vpack.c.bf16 %v7376, %v7375
    %v7426 = vpack.c.bf16 %v7384, %v7383
    %v7427 = vpack.c.bf16 %v7320, %v7319
    %v7428 = vpack.c.bf16 %v7392, %v7391
    %v7429 = vpack.c.bf16 %v7400, %v7399
    %v7430 = vpack.c.bf16 %v7408, %v7407
    %v7431 = vpack.c.bf16 %v7416, %v7415
    %v7432 = vpack.c.bf16 %v7346, %v7345
    %v7433 = vpack.c.bf16 %v7354, %v7353
    %v7434 = vpack.c.bf16 %v7378, %v7377
    %v7435 = vpack.c.bf16 %v7386, %v7385
    %v7436 = vpack.c.bf16 %v7322, %v7321
    %v7437 = vpack.c.bf16 %v7394, %v7393
    %v7438 = vpack.c.bf16 %v7402, %v7401
    %v7439 = vpack.c.bf16 %v7410, %v7409
    %v7440 = vpack.c.bf16 %v7418, %v7417
    %v7441 = vpack.c.bf16 %v7348, %v7347
    %v7442 = vpack.c.bf16 %v7356, %v7355
    %v7443 = vpack.c.bf16 %v7380, %v7379
    %v7444 = vpack.c.bf16 %v7388, %v7387
    %v7445 = vpack.c.bf16 %v7324, %v7323
    %v7446 = vpack.c.bf16 %v7396, %v7395
    %v7447 = vpack.c.bf16 %v7404, %v7403
    %v7448 = vpack.c.bf16 %v7412, %v7411
    %v7449 = vpack.c.bf16 %v7420, %v7419
    %v7450 = vpack.c.bf16 %v7350, %v7349
    %v7451 = vpack.c.bf16 %v7358, %v7357
    %v7452 = vpack.c.bf16 %v7382, %v7381
    %v7453 = vpack.c.bf16 %v7390, %v7389
    %v7454 = vpack.c.bf16 %v7326, %v7325
    %v7455 = vpack.c.bf16 %v7398, %v7397
    %v7456 = vpack.c.bf16 %v7406, %v7405
    %v7457 = vpack.c.bf16 %v7414, %v7413
    %v7458 = vpack.c.bf16 %v7422, %v7421
    %s7459 = scalar_lea.vmem [#allocation5], 3456
    %v7460 = vld [vmem:[%s7459] sm:$0xf]
    %v7461 = vld [vmem:[%s7459 + $0x4] sm:$0xf]
    %v7462 = vld [vmem:[%s7459 + $0x8] sm:$0xf]
    %v7463 = vld [vmem:[%s7459 + $0xc] sm:$0xf]
    %v7464 = vld [vmem:[%s7459 + $0x10] sm:$0xf]
    %v7465 = vld [vmem:[%s7459 + $0x14] sm:$0xf]
    %v7466 = vld [vmem:[%s7459 + $0x18] sm:$0xf]
    %v7467 = vld [vmem:[%s7459 + $0x1c] sm:$0xf]
    %v7468 = vld [vmem:[%s7459 + $0x20] sm:$0xf]
    %v7469 = vld [vmem:[%s7459 + $0x24] sm:$0xf]
    %v7470 = vld [vmem:[%s7459 + $0x28] sm:$0xf]
    %v7471 = vld [vmem:[%s7459 + $0x2c] sm:$0xf]
    %v7472 = vld [vmem:[%s7459 + $0x30] sm:$0xf]
    %v7473 = vld [vmem:[%s7459 + $0x34] sm:$0xf]
    %v7474 = vld [vmem:[%s7459 + $0x38] sm:$0xf]
    %v7475 = vld [vmem:[%s7459 + $0x3c] sm:$0xf]
    %v7476 = vld [vmem:[%s7459 + $0x40] sm:$0xf]
    %v7477 = vld [vmem:[%s7459 + $0x44] sm:$0xf]
    %v7478 = vld [vmem:[%s7459 + $0x48] sm:$0xf]
    %v7479 = vld [vmem:[%s7459 + $0x4c] sm:$0xf]
    %v7480 = vld [vmem:[%s7459 + $0x50] sm:$0xf]
    %v7481 = vld [vmem:[%s7459 + $0x54] sm:$0xf]
    %v7482 = vld [vmem:[%s7459 + $0x58] sm:$0xf]
    %v7483 = vld [vmem:[%s7459 + $0x5c] sm:$0xf]
    %v7484 = vld [vmem:[%s7459 + $0x60] sm:$0xf]
    %v7485 = vld [vmem:[%s7459 + $0x64] sm:$0xf]
    %v7486 = vld [vmem:[%s7459 + $0x68] sm:$0xf]
    %v7487 = vld [vmem:[%s7459 + $0x6c] sm:$0xf]
    %v7488 = vld [vmem:[%s7459 + $0x70] sm:$0xf]
    %v7489 = vld [vmem:[%s7459 + $0x74] sm:$0xf]
    %v7490 = vld [vmem:[%s7459 + $0x78] sm:$0xf]
    %v7491 = vld [vmem:[%s7459 + $0x7c] sm:$0xf]
    %v7492 = vld [vmem:[%s7459 + $0x80] sm:$0xf]
    %v7493 = vld [vmem:[%s7459 + $0x84] sm:$0xf]
    %v7494 = vld [vmem:[%s7459 + $0x88] sm:$0xf]
    %v7495 = vld [vmem:[%s7459 + $0x8c] sm:$0xf]
    %v7496 = vld [vmem:[%s7459 + $0x90] sm:$0xf]
    %v7497 = vld [vmem:[%s7459 + $0x94] sm:$0xf]
    %v7498 = vld [vmem:[%s7459 + $0x98] sm:$0xf]
    %v7499 = vld [vmem:[%s7459 + $0x9c] sm:$0xf]
    %v7500 = vld [vmem:[%s7459 + $0xa0] sm:$0xf]
    %v7501 = vld [vmem:[%s7459 + $0xa4] sm:$0xf]
    %v7502 = vld [vmem:[%s7459 + $0xa8] sm:$0xf]
    %v7503 = vld [vmem:[%s7459 + $0xac] sm:$0xf]
    %v7504 = vld [vmem:[%s7459 + $0xb0] sm:$0xf]
    %v7505 = vld [vmem:[%s7459 + $0xb4] sm:$0xf]
    %v7506 = vld [vmem:[%s7459 + $0xb8] sm:$0xf]
    %v7507 = vld [vmem:[%s7459 + $0xbc] sm:$0xf]
    %v7508 = vld [vmem:[%s7459 + $0xc0] sm:$0xf]
    %v7509 = vld [vmem:[%s7459 + $0xc4] sm:$0xf]
    %v7510 = vld [vmem:[%s7459 + $0xc8] sm:$0xf]
    %v7511 = vld [vmem:[%s7459 + $0xcc] sm:$0xf]
    %v7512 = vld [vmem:[%s7459 + $0xd0] sm:$0xf]
    %v7513 = vld [vmem:[%s7459 + $0xd4] sm:$0xf]
    %v7514 = vld [vmem:[%s7459 + $0xd8] sm:$0xf]
    %v7515 = vld [vmem:[%s7459 + $0xdc] sm:$0xf]
    %v7516 = vld [vmem:[%s7459 + $0xe0] sm:$0xf]
    %v7517 = vld [vmem:[%s7459 + $0xe4] sm:$0xf]
    %v7518 = vld [vmem:[%s7459 + $0xe8] sm:$0xf]
    %v7519 = vld [vmem:[%s7459 + $0xec] sm:$0xf]
    %v7520 = vld [vmem:[%s7459 + $0xf0] sm:$0xf]
    %v7521 = vld [vmem:[%s7459 + $0xf4] sm:$0xf]
    %v7522 = vld [vmem:[%s7459 + $0xf8] sm:$0xf]
    %v7523 = vld [vmem:[%s7459 + $0xfc] sm:$0xf]
    %v7524 = vld [vmem:[%s7459 + $0x100] sm:$0xf]
    %v7525 = vld [vmem:[%s7459 + $0x104] sm:$0xf]
    %v7526 = vld [vmem:[%s7459 + $0x108] sm:$0xf]
    %v7527 = vld [vmem:[%s7459 + $0x10c] sm:$0xf]
    %v7528 = vld [vmem:[%s7459 + $0x110] sm:$0xf]
    %v7529 = vld [vmem:[%s7459 + $0x114] sm:$0xf]
    %v7530 = vld [vmem:[%s7459 + $0x118] sm:$0xf]
    %v7531 = vld [vmem:[%s7459 + $0x11c] sm:$0xf]
    %v7532 = vld [vmem:[%s7459 + $0x120] sm:$0xf]
    %v7533 = vld [vmem:[%s7459 + $0x124] sm:$0xf]
    %v7534 = vld [vmem:[%s7459 + $0x128] sm:$0xf]
    %v7535 = vld [vmem:[%s7459 + $0x12c] sm:$0xf]
    %v7536 = vld [vmem:[%s7459 + $0x130] sm:$0xf]
    %v7537 = vld [vmem:[%s7459 + $0x134] sm:$0xf]
    %v7538 = vld [vmem:[%s7459 + $0x138] sm:$0xf]
    %v7539 = vld [vmem:[%s7459 + $0x13c] sm:$0xf]
    %v7540 = vld [vmem:[%s7459 + $0x140] sm:$0xf]
    %v7541 = vld [vmem:[%s7459 + $0x144] sm:$0xf]
    %v7542 = vld [vmem:[%s7459 + $0x148] sm:$0xf]
    %v7543 = vld [vmem:[%s7459 + $0x14c] sm:$0xf]
    %v7544 = vld [vmem:[%s7459 + $0x150] sm:$0xf]
    %v7545 = vld [vmem:[%s7459 + $0x154] sm:$0xf]
    %v7546 = vld [vmem:[%s7459 + $0x158] sm:$0xf]
    %v7547 = vld [vmem:[%s7459 + $0x15c] sm:$0xf]
    %v7548 = vld [vmem:[%s7459 + $0x160] sm:$0xf]
    %v7549 = vld [vmem:[%s7459 + $0x164] sm:$0xf]
    %v7550 = vld [vmem:[%s7459 + $0x168] sm:$0xf]
    %v7551 = vld [vmem:[%s7459 + $0x16c] sm:$0xf]
    %v7552 = vld [vmem:[%s7459 + $0x170] sm:$0xf]
    %v7553 = vld [vmem:[%s7459 + $0x174] sm:$0xf]
    %v7554 = vld [vmem:[%s7459 + $0x178] sm:$0xf]
    %v7555 = vld [vmem:[%s7459 + $0x17c] sm:$0xf]
    %v7556 = vld [vmem:[%s7459 + $0x180] sm:$0xf]
    %v7557 = vld [vmem:[%s7459 + $0x184] sm:$0xf]
    %v7558 = vld [vmem:[%s7459 + $0x188] sm:$0xf]
    %v7559 = vld [vmem:[%s7459 + $0x18c] sm:$0xf]
    %v7560 = vld [vmem:[%s7459 + $0x190] sm:$0xf]
    %v7561 = vld [vmem:[%s7459 + $0x194] sm:$0xf]
    %v7562 = vld [vmem:[%s7459 + $0x198] sm:$0xf]
    %v7563 = vld [vmem:[%s7459 + $0x19c] sm:$0xf]
    %v7564 = vld [vmem:[%s7459 + $0x1a0] sm:$0xf]
    %v7565 = vld [vmem:[%s7459 + $0x1a4] sm:$0xf]
    %v7566 = vld [vmem:[%s7459 + $0x1a8] sm:$0xf]
    %v7567 = vld [vmem:[%s7459 + $0x1ac] sm:$0xf]
    %v7568 = vld [vmem:[%s7459 + $0x1b0] sm:$0xf]
    %v7569 = vld [vmem:[%s7459 + $0x1b4] sm:$0xf]
    %v7570 = vld [vmem:[%s7459 + $0x1b8] sm:$0xf]
    %v7571 = vld [vmem:[%s7459 + $0x1bc] sm:$0xf]
    %v7572 = vld [vmem:[%s7459 + $0x1c0] sm:$0xf]
    %v7573 = vld [vmem:[%s7459 + $0x1c4] sm:$0xf]
    %v7574 = vld [vmem:[%s7459 + $0x1c8] sm:$0xf]
    %v7575 = vld [vmem:[%s7459 + $0x1cc] sm:$0xf]
    %v7576 = vld [vmem:[%s7459 + $0x1d0] sm:$0xf]
    %v7577 = vld [vmem:[%s7459 + $0x1d4] sm:$0xf]
    %v7578 = vld [vmem:[%s7459 + $0x1d8] sm:$0xf]
    %v7579 = vld [vmem:[%s7459 + $0x1dc] sm:$0xf]
    %v7580 = vld [vmem:[%s7459 + $0x1e0] sm:$0xf]
    %v7581 = vld [vmem:[%s7459 + $0x1e4] sm:$0xf]
    %v7582 = vld [vmem:[%s7459 + $0x1e8] sm:$0xf]
    %v7583 = vld [vmem:[%s7459 + $0x1ec] sm:$0xf]
    %v7584 = vld [vmem:[%s7459 + $0x1f0] sm:$0xf]
    %v7585 = vld [vmem:[%s7459 + $0x1f4] sm:$0xf]
    %v7586 = vld [vmem:[%s7459 + $0x1f8] sm:$0xf]
    %v7587 = vld [vmem:[%s7459 + $0x1fc] sm:$0xf]
    %v7588 = vld [vmem:[%s7459 + $0x200] sm:$0xf]
    %v7589 = vld [vmem:[%s7459 + $0x204] sm:$0xf]
    %v7590 = vld [vmem:[%s7459 + $0x208] sm:$0xf]
    %v7591 = vld [vmem:[%s7459 + $0x20c] sm:$0xf]
    %v7592 = vld [vmem:[%s7459 + $0x210] sm:$0xf]
    %v7593 = vld [vmem:[%s7459 + $0x214] sm:$0xf]
    %v7594 = vld [vmem:[%s7459 + $0x218] sm:$0xf]
    %v7595 = vld [vmem:[%s7459 + $0x21c] sm:$0xf]
    %v7596 = vld [vmem:[%s7459 + $0x220] sm:$0xf]
    %v7597 = vld [vmem:[%s7459 + $0x224] sm:$0xf]
    %v7598 = vld [vmem:[%s7459 + $0x228] sm:$0xf]
    %v7599 = vld [vmem:[%s7459 + $0x22c] sm:$0xf]
    %v7600 = vld [vmem:[%s7459 + $0x230] sm:$0xf]
    %v7601 = vld [vmem:[%s7459 + $0x234] sm:$0xf]
    %v7602 = vld [vmem:[%s7459 + $0x238] sm:$0xf]
    %v7603 = vld [vmem:[%s7459 + $0x23c] sm:$0xf]
    %v7748 = vunpack.c.l.b16 %v7460
    %v7749 = vunpack.c.l.b16 %v7461
    %v7750 = vunpack.c.l.b16 %v7462
    %v7751 = vunpack.c.l.b16 %v7463
    %v7752 = vunpack.c.l.b16 %v7464
    %v7753 = vunpack.c.l.b16 %v7465
    %v7754 = vunpack.c.l.b16 %v7466
    %v7755 = vunpack.c.l.b16 %v7467
    %v7756 = vunpack.c.l.b16 %v7468
    %v7757 = vunpack.c.l.b16 %v7469
    %v7758 = vunpack.c.l.b16 %v7470
    %v7759 = vunpack.c.l.b16 %v7471
    %v7760 = vunpack.c.l.b16 %v7472
    %v7761 = vunpack.c.l.b16 %v7473
    %v7762 = vunpack.c.l.b16 %v7474
    %v7763 = vunpack.c.l.b16 %v7475
    %v7764 = vunpack.c.l.b16 %v7476
    %v7765 = vunpack.c.l.b16 %v7477
    %v7766 = vunpack.c.l.b16 %v7478
    %v7767 = vunpack.c.l.b16 %v7479
    %v7768 = vunpack.c.l.b16 %v7480
    %v7769 = vunpack.c.l.b16 %v7481
    %v7770 = vunpack.c.l.b16 %v7482
    %v7771 = vunpack.c.l.b16 %v7483
    %v7772 = vunpack.c.l.b16 %v7484
    %v7773 = vunpack.c.l.b16 %v7485
    %v7774 = vunpack.c.l.b16 %v7486
    %v7775 = vunpack.c.l.b16 %v7487
    %v7776 = vunpack.c.l.b16 %v7488
    %v7777 = vunpack.c.l.b16 %v7489
    %v7778 = vunpack.c.l.b16 %v7490
    %v7779 = vunpack.c.l.b16 %v7491
    %v7780 = vunpack.c.l.b16 %v7492
    %v7781 = vunpack.c.l.b16 %v7493
    %v7782 = vunpack.c.l.b16 %v7494
    %v7783 = vunpack.c.l.b16 %v7495
    %v7784 = vunpack.c.l.b16 %v7496
    %v7785 = vunpack.c.l.b16 %v7497
    %v7786 = vunpack.c.l.b16 %v7498
    %v7787 = vunpack.c.l.b16 %v7499
    %v7788 = vunpack.c.l.b16 %v7500
    %v7789 = vunpack.c.l.b16 %v7501
    %v7790 = vunpack.c.l.b16 %v7502
    %v7791 = vunpack.c.l.b16 %v7503
    %v7792 = vunpack.c.l.b16 %v7504
    %v7793 = vunpack.c.l.b16 %v7505
    %v7794 = vunpack.c.l.b16 %v7506
    %v7795 = vunpack.c.l.b16 %v7507
    %v7796 = vunpack.c.l.b16 %v7508
    %v7797 = vunpack.c.l.b16 %v7509
    %v7798 = vunpack.c.l.b16 %v7510
    %v7799 = vunpack.c.l.b16 %v7511
    %v7800 = vunpack.c.l.b16 %v7512
    %v7801 = vunpack.c.l.b16 %v7513
    %v7802 = vunpack.c.l.b16 %v7514
    %v7803 = vunpack.c.l.b16 %v7515
    %v7804 = vunpack.c.l.b16 %v7516
    %v7805 = vunpack.c.l.b16 %v7517
    %v7806 = vunpack.c.l.b16 %v7518
    %v7807 = vunpack.c.l.b16 %v7519
    %v7808 = vunpack.c.l.b16 %v7520
    %v7809 = vunpack.c.l.b16 %v7521
    %v7810 = vunpack.c.l.b16 %v7522
    %v7811 = vunpack.c.l.b16 %v7523
    %v7812 = vunpack.c.l.b16 %v7524
    %v7813 = vunpack.c.l.b16 %v7525
    %v7814 = vunpack.c.l.b16 %v7526
    %v7815 = vunpack.c.l.b16 %v7527
    %v7816 = vunpack.c.l.b16 %v7528
    %v7817 = vunpack.c.l.b16 %v7529
    %v7818 = vunpack.c.l.b16 %v7530
    %v7819 = vunpack.c.l.b16 %v7531
    %v7820 = vunpack.c.l.b16 %v7532
    %v7821 = vunpack.c.l.b16 %v7533
    %v7822 = vunpack.c.l.b16 %v7534
    %v7823 = vunpack.c.l.b16 %v7535
    %v7824 = vunpack.c.l.b16 %v7536
    %v7825 = vunpack.c.l.b16 %v7537
    %v7826 = vunpack.c.l.b16 %v7538
    %v7827 = vunpack.c.l.b16 %v7539
    %v7828 = vunpack.c.l.b16 %v7540
    %v7829 = vunpack.c.l.b16 %v7541
    %v7830 = vunpack.c.l.b16 %v7542
    %v7831 = vunpack.c.l.b16 %v7543
    %v7832 = vunpack.c.l.b16 %v7544
    %v7833 = vunpack.c.l.b16 %v7545
    %v7834 = vunpack.c.l.b16 %v7546
    %v7835 = vunpack.c.l.b16 %v7547
    %v7836 = vunpack.c.l.b16 %v7548
    %v7837 = vunpack.c.l.b16 %v7549
    %v7838 = vunpack.c.l.b16 %v7550
    %v7839 = vunpack.c.l.b16 %v7551
    %v7840 = vunpack.c.l.b16 %v7552
    %v7841 = vunpack.c.l.b16 %v7553
    %v7842 = vunpack.c.l.b16 %v7554
    %v7843 = vunpack.c.l.b16 %v7555
    %v7844 = vunpack.c.l.b16 %v7556
    %v7845 = vunpack.c.l.b16 %v7557
    %v7846 = vunpack.c.l.b16 %v7558
    %v7847 = vunpack.c.l.b16 %v7559
    %v7848 = vunpack.c.l.b16 %v7560
    %v7849 = vunpack.c.l.b16 %v7561
    %v7850 = vunpack.c.l.b16 %v7562
    %v7851 = vunpack.c.l.b16 %v7563
    %v7852 = vunpack.c.l.b16 %v7564
    %v7853 = vunpack.c.l.b16 %v7565
    %v7854 = vunpack.c.l.b16 %v7566
    %v7855 = vunpack.c.l.b16 %v7567
    %v7856 = vunpack.c.l.b16 %v7568
    %v7857 = vunpack.c.l.b16 %v7569
    %v7858 = vunpack.c.l.b16 %v7570
    %v7859 = vunpack.c.l.b16 %v7571
    %v7860 = vunpack.c.l.b16 %v7572
    %v7861 = vunpack.c.l.b16 %v7573
    %v7862 = vunpack.c.l.b16 %v7574
    %v7863 = vunpack.c.l.b16 %v7575
    %v7864 = vunpack.c.l.b16 %v7576
    %v7865 = vunpack.c.l.b16 %v7577
    %v7866 = vunpack.c.l.b16 %v7578
    %v7867 = vunpack.c.l.b16 %v7579
    %v7868 = vunpack.c.l.b16 %v7580
    %v7869 = vunpack.c.l.b16 %v7581
    %v7870 = vunpack.c.l.b16 %v7582
    %v7871 = vunpack.c.l.b16 %v7583
    %v7872 = vunpack.c.l.b16 %v7584
    %v7873 = vunpack.c.l.b16 %v7585
    %v7874 = vunpack.c.l.b16 %v7586
    %v7875 = vunpack.c.l.b16 %v7587
    %v7876 = vunpack.c.l.b16 %v7588
    %v7877 = vunpack.c.l.b16 %v7589
    %v7878 = vunpack.c.l.b16 %v7590
    %v7879 = vunpack.c.l.b16 %v7591
    %v7880 = vunpack.c.l.b16 %v7592
    %v7881 = vunpack.c.l.b16 %v7593
    %v7882 = vunpack.c.l.b16 %v7594
    %v7883 = vunpack.c.l.b16 %v7595
    %v7884 = vunpack.c.l.b16 %v7596
    %v7885 = vunpack.c.l.b16 %v7597
    %v7886 = vunpack.c.l.b16 %v7598
    %v7887 = vunpack.c.l.b16 %v7599
    %v7888 = vunpack.c.l.b16 %v7600
    %v7889 = vunpack.c.l.b16 %v7601
    %v7890 = vunpack.c.l.b16 %v7602
    %v7891 = vunpack.c.l.b16 %v7603
    %v7892 = vpack.c.b16 %v7749, %v7748
    %v7893 = vpack.c.b16 %v7751, %v7750
    %v7894 = vpack.c.b16 %v7753, %v7752
    %v7895 = vpack.c.b16 %v7755, %v7754
    %v7896 = vpack.c.b16 %v7757, %v7756
    %v7897 = vpack.c.b16 %v7759, %v7758
    %v7898 = vpack.c.b16 %v7761, %v7760
    %v7899 = vpack.c.b16 %v7763, %v7762
    %v7900 = vpack.c.b16 %v7765, %v7764
    %v7901 = vpack.c.b16 %v7767, %v7766
    %v7902 = vpack.c.b16 %v7769, %v7768
    %v7903 = vpack.c.b16 %v7771, %v7770
    %v7904 = vpack.c.b16 %v7773, %v7772
    %v7905 = vpack.c.b16 %v7775, %v7774
    %v7906 = vpack.c.b16 %v7777, %v7776
    %v7907 = vpack.c.b16 %v7779, %v7778
    %v7908 = vpack.c.b16 %v7781, %v7780
    %v7909 = vpack.c.b16 %v7783, %v7782
    %v7910 = vpack.c.b16 %v7785, %v7784
    %v7911 = vpack.c.b16 %v7787, %v7786
    %v7912 = vpack.c.b16 %v7789, %v7788
    %v7913 = vpack.c.b16 %v7791, %v7790
    %v7914 = vpack.c.b16 %v7793, %v7792
    %v7915 = vpack.c.b16 %v7795, %v7794
    %v7916 = vpack.c.b16 %v7797, %v7796
    %v7917 = vpack.c.b16 %v7799, %v7798
    %v7918 = vpack.c.b16 %v7801, %v7800
    %v7919 = vpack.c.b16 %v7803, %v7802
    %v7920 = vpack.c.b16 %v7805, %v7804
    %v7921 = vpack.c.b16 %v7807, %v7806
    %v7922 = vpack.c.b16 %v7809, %v7808
    %v7923 = vpack.c.b16 %v7811, %v7810
    %v7924 = vpack.c.b16 %v7813, %v7812
    %v7925 = vpack.c.b16 %v7815, %v7814
    %v7926 = vpack.c.b16 %v7817, %v7816
    %v7927 = vpack.c.b16 %v7819, %v7818
    %v7928 = vpack.c.b16 %v7821, %v7820
    %v7929 = vpack.c.b16 %v7823, %v7822
    %v7930 = vpack.c.b16 %v7825, %v7824
    %v7931 = vpack.c.b16 %v7827, %v7826
    %v7932 = vpack.c.b16 %v7829, %v7828
    %v7933 = vpack.c.b16 %v7831, %v7830
    %v7934 = vpack.c.b16 %v7833, %v7832
    %v7935 = vpack.c.b16 %v7835, %v7834
    %v7936 = vpack.c.b16 %v7837, %v7836
    %v7937 = vpack.c.b16 %v7839, %v7838
    %v7938 = vpack.c.b16 %v7841, %v7840
    %v7939 = vpack.c.b16 %v7843, %v7842
    %v7940 = vpack.c.b16 %v7845, %v7844
    %v7941 = vpack.c.b16 %v7847, %v7846
    %v7942 = vpack.c.b16 %v7849, %v7848
    %v7943 = vpack.c.b16 %v7851, %v7850
    %v7944 = vpack.c.b16 %v7853, %v7852
    %v7945 = vpack.c.b16 %v7855, %v7854
    %v7946 = vpack.c.b16 %v7857, %v7856
    %v7947 = vpack.c.b16 %v7859, %v7858
    %v7948 = vpack.c.b16 %v7861, %v7860
    %v7949 = vpack.c.b16 %v7863, %v7862
    %v7950 = vpack.c.b16 %v7865, %v7864
    %v7951 = vpack.c.b16 %v7867, %v7866
    %v7952 = vpack.c.b16 %v7869, %v7868
    %v7953 = vpack.c.b16 %v7871, %v7870
    %v7954 = vpack.c.b16 %v7873, %v7872
    %v7955 = vpack.c.b16 %v7875, %v7874
    %v7956 = vpack.c.b16 %v7877, %v7876
    %v7957 = vpack.c.b16 %v7879, %v7878
    %v7958 = vpack.c.b16 %v7881, %v7880
    %v7959 = vpack.c.b16 %v7883, %v7882
    %v7960 = vpack.c.b16 %v7885, %v7884
    %v7961 = vpack.c.b16 %v7887, %v7886
    %v7962 = vpack.c.b16 %v7889, %v7888
    %v7963 = vpack.c.b16 %v7891, %v7890
    %8036 = vmatprep.subr.bf16.mxu0 0
    %8037 = vmatpush1.bf16.msra.mxu0 %v7892
    %8038 = vmatprep.subr.bf16.mxu0 0
    %8039 = vmatpush1.bf16.msra.mxu0 %v7893
    %8040 = vmatprep.subr.bf16.mxu0 0
    %8041 = vmatpush1.bf16.msra.mxu0 %v7894
    %8042 = vmatprep.subr.bf16.mxu0 0
    %8043 = vmatpush1.bf16.msra.mxu0 %v7895
    %8044 = vmatprep.subr.bf16.mxu0 0
    %8045 = vmatpush1.bf16.msra.mxu0 %v7896
    %8046 = vmatprep.subr.bf16.mxu0 0
    %8047 = vmatpush1.bf16.msra.mxu0 %v7897
    %8048 = vmatprep.subr.bf16.mxu0 0
    %8049 = vmatpush1.bf16.msra.mxu0 %v7898
    %8050 = vmatprep.subr.bf16.mxu0 0
    %8051 = vmatpush1.bf16.msra.mxu0 %v7899
    %8052 = vmatprep.subr.bf16.mxu0 0
    %8053 = vmatpush1.bf16.msra.mxu0 %v7900
    %8054 = vmatprep.subr.bf16.mxu0 0
    %8055 = vmatpush1.bf16.msra.mxu0 %v7901
    %8056 = vmatprep.subr.bf16.mxu0 0
    %8057 = vmatpush1.bf16.msra.mxu0 %v7902
    %8058 = vmatprep.subr.bf16.mxu0 0
    %8059 = vmatpush1.bf16.msra.mxu0 %v7903
    %8060 = vmatprep.subr.bf16.mxu0 0
    %8061 = vmatpush1.bf16.msra.mxu0 %v7904
    %8062 = vmatprep.subr.bf16.mxu0 0
    %8063 = vmatpush1.bf16.msra.mxu0 %v7905
    %8064 = vmatprep.subr.bf16.mxu0 0
    %8065 = vmatpush1.bf16.msra.mxu0 %v7906
    %8066 = vmatprep.subr.bf16.mxu0 0
    %8067 = vmatpush1.bf16.msra.mxu0 %v7907
    %8068 = vmatprep.mubr.bf16.mxu0 %v7424
    %8069 = vmatmul.mubr.bf16.gmra.mrb[0].mxu0 %v7423
    %v8070 = vpop.f32.mrb[0].mxu0
    %v8071 = vadd.f32 0.0, %v8070
    %v8072 = vpop.f32.mrb[0].mxu0
    %v8073 = vpop.f32.mrb[0].mxu0
    %v8074 = vadd.f32 0.0, %v8073
    %v8075 = vpop.f32.mrb[0].mxu0
    %8076 = vmatprep.mubr.bf16.mxu0 %v7433
    %8077 = vmatmul.mubr.bf16.gmra.mrb[0].mxu0 %v7432
    %v8078 = vpop.f32.mrb[0].mxu0
    %v8079 = vadd.f32 0.0, %v8078
    %v8080 = vpop.f32.mrb[0].mxu0
    %v8081 = vpop.f32.mrb[0].mxu0
    %v8082 = vadd.f32 0.0, %v8081
    %v8083 = vpop.f32.mrb[0].mxu0
    %8084 = vmatprep.mubr.bf16.mxu0 %v7442
    %8085 = vmatmul.mubr.bf16.gmra.mrb[0].mxu0 %v7441
    %v8086 = vpop.f32.mrb[0].mxu0
    %v8087 = vadd.f32 0.0, %v8086
    %v8088 = vpop.f32.mrb[0].mxu0
    %v8089 = vpop.f32.mrb[0].mxu0
    %v8090 = vadd.f32 0.0, %v8089
    %v8091 = vpop.f32.mrb[0].mxu0
    %8092 = vmatprep.mubr.bf16.mxu0 %v7451
    %8093 = vmatmul.mubr.bf16.gmra.mrb[0].mxu0 %v7450
    %v8094 = vpop.f32.mrb[0].mxu0
    %v8095 = vadd.f32 0.0, %v8094
    %v8096 = vpop.f32.mrb[0].mxu0
    %v8097 = vpop.f32.mrb[0].mxu0
    %v8098 = vadd.f32 0.0, %v8097
    %v8099 = vpop.f32.mrb[0].mxu0
    %8100 = vdwg.mxu0
    %8101 = vmatprep.subr.bf16.mxu0 0
    %8102 = vmatpush1.bf16.msra.mxu0 %v7908
    %8103 = vmatprep.subr.bf16.mxu0 0
    %8104 = vmatpush1.bf16.msra.mxu0 %v7909
    %8105 = vmatprep.subr.bf16.mxu0 0
    %8106 = vmatpush1.bf16.msra.mxu0 %v7910
    %8107 = vmatprep.subr.bf16.mxu0 0
    %8108 = vmatpush1.bf16.msra.mxu0 %v7911
    %8109 = vmatprep.subr.bf16.mxu0 0
    %8110 = vmatpush1.bf16.msra.mxu0 %v7912
    %8111 = vmatprep.subr.bf16.mxu0 0
    %8112 = vmatpush1.bf16.msra.mxu0 %v7913
    %8113 = vmatprep.subr.bf16.mxu0 0
    %8114 = vmatpush1.bf16.msra.mxu0 %v7914
    %8115 = vmatprep.subr.bf16.mxu0 0
    %8116 = vmatpush1.bf16.msra.mxu0 %v7915
    %8117 = vmatprep.subr.bf16.mxu0 0
    %8118 = vmatpush1.bf16.msra.mxu0 %v7916
    %8119 = vmatprep.subr.bf16.mxu0 0
    %8120 = vmatpush1.bf16.msra.mxu0 %v7917
    %8121 = vmatprep.subr.bf16.mxu0 0
    %8122 = vmatpush1.bf16.msra.mxu0 %v7918
    %8123 = vmatprep.subr.bf16.mxu0 0
    %8124 = vmatpush1.bf16.msra.mxu0 %v7919
    %8125 = vmatprep.subr.bf16.mxu0 0
    %8126 = vmatpush1.bf16.msra.mxu0 %v7920
    %8127 = vmatprep.subr.bf16.mxu0 0
    %8128 = vmatpush1.bf16.msra.mxu0 %v7921
    %8129 = vmatprep.subr.bf16.mxu0 0
    %8130 = vmatpush1.bf16.msra.mxu0 %v7922
    %8131 = vmatprep.subr.bf16.mxu0 0
    %8132 = vmatpush1.bf16.msra.mxu0 %v7923
    %8133 = vmatprep.mubr.bf16.mxu0 %v7426
    %8134 = vmatmul.mubr.bf16.gmra.mrb[0].mxu0 %v7425
    %v8135 = vpop.f32.mrb[0].mxu0
    %v8136 = vadd.f32 %v8071, %v8135
    %v8137 = vpop.f32.mrb[0].mxu0
    %v8138 = vpop.f32.mrb[0].mxu0
    %v8139 = vadd.f32 %v8074, %v8138
    %v8140 = vpop.f32.mrb[0].mxu0
    %8141 = vmatprep.mubr.bf16.mxu0 %v7435
    %8142 = vmatmul.mubr.bf16.gmra.mrb[0].mxu0 %v7434
    %v8143 = vpop.f32.mrb[0].mxu0
    %v8144 = vadd.f32 %v8079, %v8143
    %v8145 = vpop.f32.mrb[0].mxu0
    %v8146 = vpop.f32.mrb[0].mxu0
    %v8147 = vadd.f32 %v8082, %v8146
    %v8148 = vpop.f32.mrb[0].mxu0
    %8149 = vmatprep.mubr.bf16.mxu0 %v7444
    %8150 = vmatmul.mubr.bf16.gmra.mrb[0].mxu0 %v7443
    %v8151 = vpop.f32.mrb[0].mxu0
    %v8152 = vadd.f32 %v8087, %v8151
    %v8153 = vpop.f32.mrb[0].mxu0
    %v8154 = vpop.f32.mrb[0].mxu0
    %v8155 = vadd.f32 %v8090, %v8154
    %v8156 = vpop.f32.mrb[0].mxu0
    %8157 = vmatprep.mubr.bf16.mxu0 %v7453
    %8158 = vmatmul.mubr.bf16.gmra.mrb[0].mxu0 %v7452
    %v8159 = vpop.f32.mrb[0].mxu0
    %v8160 = vadd.f32 %v8095, %v8159
    %v8161 = vpop.f32.mrb[0].mxu0
    %v8162 = vpop.f32.mrb[0].mxu0
    %v8163 = vadd.f32 %v8098, %v8162
    %v8164 = vpop.f32.mrb[0].mxu0
    %8165 = vdwg.mxu0
    %8166 = vmatprep.subr.bf16.mxu0 0
    %8167 = vmatpush1.bf16.msra.mxu0 %v7924
    %8168 = vmatprep.subr.bf16.mxu0 0
    %8169 = vmatpush1.bf16.msra.mxu0 %v7925
    %8170 = vmatprep.subr.bf16.mxu0 0
    %8171 = vmatpush1.bf16.msra.mxu0 %v7926
    %8172 = vmatprep.subr.bf16.mxu0 0
    %8173 = vmatpush1.bf16.msra.mxu0 %v7927
    %8174 = vmatprep.subr.bf16.mxu0 0
    %8175 = vmatpush1.bf16.msra.mxu0 %v7928
    %8176 = vmatprep.subr.bf16.mxu0 0
    %8177 = vmatpush1.bf16.msra.mxu0 %v7929
    %8178 = vmatprep.subr.bf16.mxu0 0
    %8179 = vmatpush1.bf16.msra.mxu0 %v7930
    %8180 = vmatprep.subr.bf16.mxu0 0
    %8181 = vmatpush1.bf16.msra.mxu0 %v7931
    %8182 = vmatprep.subr.bf16.mxu0 0
    %8183 = vmatpush1.bf16.msra.mxu0 %v7932
    %8184 = vmatprep.subr.bf16.mxu0 0
    %8185 = vmatpush1.bf16.msra.mxu0 %v7933
    %8186 = vmatprep.subr.bf16.mxu0 0
    %8187 = vmatpush1.bf16.msra.mxu0 %v7934
    %8188 = vmatprep.subr.bf16.mxu0 0
    %8189 = vmatpush1.bf16.msra.mxu0 %v7935
    %8190 = vmatprep.subr.bf16.mxu0 0
    %8191 = vmatpush1.bf16.msra.mxu0 %v7936
    %8192 = vmatprep.subr.bf16.mxu0 0
    %8193 = vmatpush1.bf16.msra.mxu0 %v7937
    %8194 = vmatprep.subr.bf16.mxu0 0
    %8195 = vmatpush1.bf16.msra.mxu0 %v7938
    %8196 = vmatprep.subr.bf16.mxu0 0
    %8197 = vmatpush1.bf16.msra.mxu0 %v7939
    %8198 = vmatprep.mubr.bf16.mxu0 %v7428
    %8199 = vmatmul.mubr.bf16.gmra.mrb[0].mxu0 %v7427
    %v8200 = vpop.f32.mrb[0].mxu0
    %v8201 = vadd.f32 %v8136, %v8200
    %v8202 = vpop.f32.mrb[0].mxu0
    %v8203 = vpop.f32.mrb[0].mxu0
    %v8204 = vadd.f32 %v8139, %v8203
    %v8205 = vpop.f32.mrb[0].mxu0
    %8206 = vmatprep.mubr.bf16.mxu0 %v7437
    %8207 = vmatmul.mubr.bf16.gmra.mrb[0].mxu0 %v7436
    %v8208 = vpop.f32.mrb[0].mxu0
    %v8209 = vadd.f32 %v8144, %v8208
    %v8210 = vpop.f32.mrb[0].mxu0
    %v8211 = vpop.f32.mrb[0].mxu0
    %v8212 = vadd.f32 %v8147, %v8211
    %v8213 = vpop.f32.mrb[0].mxu0
    %8214 = vmatprep.mubr.bf16.mxu0 %v7446
    %8215 = vmatmul.mubr.bf16.gmra.mrb[0].mxu0 %v7445
    %v8216 = vpop.f32.mrb[0].mxu0
    %v8217 = vadd.f32 %v8152, %v8216
    %v8218 = vpop.f32.mrb[0].mxu0
    %v8219 = vpop.f32.mrb[0].mxu0
    %v8220 = vadd.f32 %v8155, %v8219
    %v8221 = vpop.f32.mrb[0].mxu0
    %8222 = vmatprep.mubr.bf16.mxu0 %v7455
    %8223 = vmatmul.mubr.bf16.gmra.mrb[0].mxu0 %v7454
    %v8224 = vpop.f32.mrb[0].mxu0
    %v8225 = vadd.f32 %v8160, %v8224
    %v8226 = vpop.f32.mrb[0].mxu0
    %v8227 = vpop.f32.mrb[0].mxu0
    %v8228 = vadd.f32 %v8163, %v8227
    %v8229 = vpop.f32.mrb[0].mxu0
    %8230 = vdwg.mxu0
    %8231 = vmatprep.subr.bf16.mxu0 0
    %8232 = vmatpush1.bf16.msra.mxu0 %v7940
    %8233 = vmatprep.subr.bf16.mxu0 0
    %8234 = vmatpush1.bf16.msra.mxu0 %v7941
    %8235 = vmatprep.subr.bf16.mxu0 0
    %8236 = vmatpush1.bf16.msra.mxu0 %v7942
    %8237 = vmatprep.subr.bf16.mxu0 0
    %8238 = vmatpush1.bf16.msra.mxu0 %v7943
    %8239 = vmatprep.subr.bf16.mxu0 0
    %8240 = vmatpush1.bf16.msra.mxu0 %v7944
    %8241 = vmatprep.subr.bf16.mxu0 0
    %8242 = vmatpush1.bf16.msra.mxu0 %v7945
    %8243 = vmatprep.subr.bf16.mxu0 0
    %8244 = vmatpush1.bf16.msra.mxu0 %v7946
    %8245 = vmatprep.subr.bf16.mxu0 0
    %8246 = vmatpush1.bf16.msra.mxu0 %v7947
    %8247 = vmatprep.subr.bf16.mxu0 0
    %8248 = vmatpush1.bf16.msra.mxu0 %v7948
    %8249 = vmatprep.subr.bf16.mxu0 0
    %8250 = vmatpush1.bf16.msra.mxu0 %v7949
    %8251 = vmatprep.subr.bf16.mxu0 0
    %8252 = vmatpush1.bf16.msra.mxu0 %v7950
    %8253 = vmatprep.subr.bf16.mxu0 0
    %8254 = vmatpush1.bf16.msra.mxu0 %v7951
    %8255 = vmatprep.subr.bf16.mxu0 0
    %8256 = vmatpush1.bf16.msra.mxu0 %v7952
    %8257 = vmatprep.subr.bf16.mxu0 0
    %8258 = vmatpush1.bf16.msra.mxu0 %v7953
    %8259 = vmatprep.subr.bf16.mxu0 0
    %8260 = vmatpush1.bf16.msra.mxu0 %v7954
    %8261 = vmatprep.subr.bf16.mxu0 0
    %8262 = vmatpush1.bf16.msra.mxu0 %v7955
    %8263 = vmatprep.mubr.bf16.mxu0 %v7430
    %8264 = vmatmul.mubr.bf16.gmra.mrb[0].mxu0 %v7429
    %v8265 = vpop.f32.mrb[0].mxu0
    %v8266 = vadd.f32 %v8201, %v8265
    %v8267 = vpop.f32.mrb[0].mxu0
    %v8268 = vpop.f32.mrb[0].mxu0
    %v8269 = vadd.f32 %v8204, %v8268
    %v8270 = vpop.f32.mrb[0].mxu0
    %8271 = vmatprep.mubr.bf16.mxu0 %v7439
    %8272 = vmatmul.mubr.bf16.gmra.mrb[0].mxu0 %v7438
    %v8273 = vpop.f32.mrb[0].mxu0
    %v8274 = vadd.f32 %v8209, %v8273
    %v8275 = vpop.f32.mrb[0].mxu0
    %v8276 = vpop.f32.mrb[0].mxu0
    %v8277 = vadd.f32 %v8212, %v8276
    %v8278 = vpop.f32.mrb[0].mxu0
    %8279 = vmatprep.mubr.bf16.mxu0 %v7448
    %8280 = vmatmul.mubr.bf16.gmra.mrb[0].mxu0 %v7447
    %v8281 = vpop.f32.mrb[0].mxu0
    %v8282 = vadd.f32 %v8217, %v8281
    %v8283 = vpop.f32.mrb[0].mxu0
    %v8284 = vpop.f32.mrb[0].mxu0
    %v8285 = vadd.f32 %v8220, %v8284
    %v8286 = vpop.f32.mrb[0].mxu0
    %8287 = vmatprep.mubr.bf16.mxu0 %v7457
    %8288 = vmatmul.mubr.bf16.gmra.mrb[0].mxu0 %v7456
    %v8289 = vpop.f32.mrb[0].mxu0
    %v8290 = vadd.f32 %v8225, %v8289
    %v8291 = vpop.f32.mrb[0].mxu0
    %v8292 = vpop.f32.mrb[0].mxu0
    %v8293 = vadd.f32 %v8228, %v8292
    %v8294 = vpop.f32.mrb[0].mxu0
    %8295 = vdwg.mxu0
    %8296 = vmatprep.subr.bf16.mxu0 0
    %8297 = vmatpush1.bf16.msra.mxu0 %v7956
    %8298 = vmatprep.subr.bf16.mxu0 0
    %8299 = vmatpush1.bf16.msra.mxu0 %v7957
    %8300 = vmatprep.subr.bf16.mxu0 0
    %8301 = vmatpush1.bf16.msra.mxu0 %v7958
    %8302 = vmatprep.subr.bf16.mxu0 0
    %8303 = vmatpush1.bf16.msra.mxu0 %v7959
    %8304 = vmatprep.subr.bf16.mxu0 0
    %8305 = vmatpush1.bf16.msra.mxu0 %v7960
    %8306 = vmatprep.subr.bf16.mxu0 0
    %8307 = vmatpush1.bf16.msra.mxu0 %v7961
    %8308 = vmatprep.subr.bf16.mxu0 0
    %8309 = vmatpush1.bf16.msra.mxu0 %v7962
    %8310 = vmatprep.subr.bf16.mxu0 0
    %8311 = vmatpush1.bf16.msra.mxu0 %v7963
    %8312 = vmatprep.subr.bf16.mxu0 0
    %8313 = vmatpush1.bf16.msra.mxu0 0
    %8314 = vmatprep.subr.bf16.mxu0 0
    %8315 = vmatpush1.bf16.msra.mxu0 0
    %8316 = vmatprep.subr.bf16.mxu0 0
    %8317 = vmatpush1.bf16.msra.mxu0 0
    %8318 = vmatprep.subr.bf16.mxu0 0
    %8319 = vmatpush1.bf16.msra.mxu0 0
    %8320 = vmatprep.subr.bf16.mxu0 0
    %8321 = vmatpush1.bf16.msra.mxu0 0
    %8322 = vmatprep.subr.bf16.mxu0 0
    %8323 = vmatpush1.bf16.msra.mxu0 0
    %8324 = vmatprep.subr.bf16.mxu0 0
    %8325 = vmatpush1.bf16.msra.mxu0 0
    %8326 = vmatprep.subr.bf16.mxu0 0
    %8327 = vmatpush1.bf16.msra.mxu0 0
    %8328 = vmatprep.mubr.bf16.mxu0 0
    %8329 = vmatmul.mubr.bf16.gmra.mrb[0].mxu0 %v7431
    %v8330 = vpop.f32.mrb[0].mxu0
    %v8331 = vadd.f32 %v8266, %v8330
    %v8332 = vpop.f32.mrb[0].mxu0
    %v8333 = vpop.f32.mrb[0].mxu0
    %v8334 = vadd.f32 %v8269, %v8333
    %v8335 = vpop.f32.mrb[0].mxu0
    %8336 = vmatprep.mubr.bf16.mxu0 0
    %8337 = vmatmul.mubr.bf16.gmra.mrb[0].mxu0 %v7440
    %v8338 = vpop.f32.mrb[0].mxu0
    %v8339 = vadd.f32 %v8274, %v8338
    %v8340 = vpop.f32.mrb[0].mxu0
    %v8341 = vpop.f32.mrb[0].mxu0
    %v8342 = vadd.f32 %v8277, %v8341
    %v8343 = vpop.f32.mrb[0].mxu0
    %8344 = vmatprep.mubr.bf16.mxu0 0
    %8345 = vmatmul.mubr.bf16.gmra.mrb[0].mxu0 %v7449
    %v8346 = vpop.f32.mrb[0].mxu0
    %v8347 = vadd.f32 %v8282, %v8346
    %v8348 = vpop.f32.mrb[0].mxu0
    %v8349 = vpop.f32.mrb[0].mxu0
    %v8350 = vadd.f32 %v8285, %v8349
    %v8351 = vpop.f32.mrb[0].mxu0
    %8352 = vmatprep.mubr.bf16.mxu0 0
    %8353 = vmatmul.mubr.bf16.gmra.mrb[0].mxu0 %v7458
    %v8354 = vpop.f32.mrb[0].mxu0
    %v8355 = vadd.f32 %v8290, %v8354
    %v8356 = vpop.f32.mrb[0].mxu0
    %v8357 = vpop.f32.mrb[0].mxu0
    %v8358 = vadd.f32 %v8293, %v8357
    %v8359 = vpop.f32.mrb[0].mxu0
    %8360 = vdwg.mxu0
    %v8361 = vadd.f32 %v8331, %v8334
    %v8362 = vadd.f32 %v8361, %v8339
    %v8363 = vadd.f32 %v8362, %v8342
    %v8364 = vadd.f32 %v8363, %v8347
    %v8365 = vadd.f32 %v8364, %v8350
    %v8366 = vadd.f32 %v8365, %v8355
    %v8367 = vadd.f32 %v8366, %v8358
    %v8368 = vrot.slane %v8367, 4
    %v8369 = vadd.f32 %v8367, %v8368
    %v8370 = vrot.slane %v8369, 2
    %v8371 = vadd.f32 %v8369, %v8370
    %v8372 = vrot.slane %v8371, 1
    %v8373 = vadd.f32 %v8371, %v8372
    %v8374 = vmul.f32 %v8331, %v8331
    %v8375 = vmul.f32 %v8334, %v8334
    %v8376 = vmul.f32 %v8339, %v8339
    %v8377 = vmul.f32 %v8342, %v8342
    %v8378 = vmul.f32 %v8347, %v8347
    %v8379 = vmul.f32 %v8350, %v8350
    %v8380 = vmul.f32 %v8355, %v8355
    %v8381 = vmul.f32 %v8358, %v8358
    %v8382 = vadd.f32 %v8374, %v8375
    %v8383 = vadd.f32 %v8382, %v8376
    %v8384 = vadd.f32 %v8383, %v8377
    %v8385 = vadd.f32 %v8384, %v8378
    %v8386 = vadd.f32 %v8385, %v8379
    %v8387 = vadd.f32 %v8386, %v8380
    %v8388 = vadd.f32 %v8387, %v8381
    %v8389 = vrot.slane %v8388, 4
    %v8390 = vadd.f32 %v8388, %v8389
    %v8391 = vrot.slane %v8390, 2
    %v8392 = vadd.f32 %v8390, %v8391
    %v8393 = vrot.slane %v8392, 1
    %v8394 = vadd.f32 %v8392, %v8393
    %v8395 = vmul.f32 %v8373, 0.015625
    %v8396 = vmul.f32 %v8394, 0.015625
    %v8397 = vmul.f32 %v8395, %v8395
    %v8398 = vsub.f32 %v8396, %v8397
    %v8399 = vsub.f32 %v8331, %v8395
    %v8400 = vsub.f32 %v8334, %v8395
    %v8401 = vsub.f32 %v8339, %v8395
    %v8402 = vsub.f32 %v8342, %v8395
    %v8403 = vsub.f32 %v8347, %v8395
    %v8404 = vsub.f32 %v8350, %v8395
    %v8405 = vsub.f32 %v8355, %v8395
    %v8406 = vsub.f32 %v8358, %v8395
    %v8407 = vadd.f32 %v8398, 1e-05
    %v8408 = vrsqrt.pop %v8407
    %v8409 = vmul.f32 %v8399, %v8408
    %v8410 = vmul.f32 %v8400, %v8408
    %v8411 = vmul.f32 %v8401, %v8408
    %v8412 = vmul.f32 %v8402, %v8408
    %v8413 = vmul.f32 %v8403, %v8408
    %v8414 = vmul.f32 %v8404, %v8408
    %v8415 = vmul.f32 %v8405, %v8408
    %v8416 = vmul.f32 %v8406, %v8408
    %s8417 = scalar_lea.vmem [#allocation8], 6
    %v8418 = vld [vmem:[%s8417] sm:$0x1]
    %v8420 = vlaneseq
    %v8421 = vshrl.u32 %v8420, 7
    %v8422 = vsub.s32 0, %v8421
    %v8423 = vrot.slane %v8418, %v8422
    %v8425 = vmul.f32 %v8423, %v8409
    %v8426 = vmul.f32 %v8423, %v8410
    %v8427 = vmul.f32 %v8423, %v8411
    %v8428 = vmul.f32 %v8423, %v8412
    %v8429 = vmul.f32 %v8423, %v8413
    %v8430 = vmul.f32 %v8423, %v8414
    %v8431 = vmul.f32 %v8423, %v8415
    %v8432 = vmul.f32 %v8423, %v8416
    %s8433 = scalar_lea.vmem [#allocation10], 6
    %v8434 = vld [vmem:[%s8433] sm:$0x1]
    %v8436 = vlaneseq
    %v8437 = vshrl.u32 %v8436, 7
    %v8438 = vsub.s32 0, %v8437
    %v8439 = vrot.slane %v8434, %v8438
    %v8441 = vadd.f32 %v8425, %v8439
    %v8442 = vadd.f32 %v8426, %v8439
    %v8443 = vadd.f32 %v8427, %v8439
    %v8444 = vadd.f32 %v8428, %v8439
    %v8445 = vadd.f32 %v8429, %v8439
    %v8446 = vadd.f32 %v8430, %v8439
    %v8447 = vadd.f32 %v8431, %v8439
    %v8448 = vadd.f32 %v8432, %v8439
    %v8449 = vmax.f32 %v8441, 0.0
    %v8450 = vmax.f32 %v8442, 0.0
    %v8451 = vmax.f32 %v8443, 0.0
    %v8452 = vmax.f32 %v8444, 0.0
    %v8453 = vmax.f32 %v8445, 0.0
    %v8454 = vmax.f32 %v8446, 0.0
    %v8455 = vmax.f32 %v8447, 0.0
    %v8456 = vmax.f32 %v8448, 0.0
    %v8457 = vrot.slane %v8449, 7
    %v8458 = vrot.slane %v8450, 7
    %v8459 = vrot.slane %v8451, 7
    %v8460 = vrot.slane %v8452, 7
    %v8461 = vrot.slane %v8453, 7
    %v8462 = vrot.slane %v8454, 7
    %v8463 = vrot.slane %v8455, 7
    %v8464 = vrot.slane %v8456, 7
    %v8465 = vsel %vm540, %v8463, %v8464
    %v8466 = vsel %vm540, %v8462, %v8463
    %v8467 = vsel %vm540, %v8461, %v8462
    %v8468 = vsel %vm540, %v8460, %v8461
    %v8469 = vsel %vm540, %v8459, %v8460
    %v8470 = vsel %vm540, %v8458, %v8459
    %v8471 = vsel %vm540, %v8457, %v8458
    %v8472 = vsel %vm540, %v8464, %v8457
    %v8473 = vmul.f32 %v8465, %v142
    %v8474 = vmul.f32 %v8472, %v147
    %v8475 = vmul.f32 %v8471, %v152
    %v8476 = vmul.f32 %v8470, %v157
    %v8477 = vmul.f32 %v8469, %v162
    %v8478 = vmul.f32 %v8468, %v167
    %v8479 = vmul.f32 %v8467, %v172
    %v8480 = vmul.f32 %v8466, %v177
    %v8481 = vmul.f32 %v8456, %v191
    %v8482 = vmul.f32 %v8449, %v196
    %v8483 = vmul.f32 %v8450, %v201
    %v8484 = vmul.f32 %v8451, %v206
    %v8485 = vmul.f32 %v8452, %v211
    %v8486 = vmul.f32 %v8453, %v216
    %v8487 = vmul.f32 %v8454, %v221
    %v8488 = vmul.f32 %v8455, %v226
    %v8489 = vrot.slane %v8449, 1
    %v8490 = vrot.slane %v8450, 1
    %v8491 = vrot.slane %v8451, 1
    %v8492 = vrot.slane %v8452, 1
    %v8493 = vrot.slane %v8453, 1
    %v8494 = vrot.slane %v8454, 1
    %v8495 = vrot.slane %v8455, 1
    %v8496 = vrot.slane %v8456, 1
    %v8497 = vsel %vm573, %v8495, %v8496
    %v8498 = vsel %vm573, %v8494, %v8495
    %v8499 = vsel %vm573, %v8493, %v8494
    %v8500 = vsel %vm573, %v8492, %v8493
    %v8501 = vsel %vm573, %v8491, %v8492
    %v8502 = vsel %vm573, %v8490, %v8491
    %v8503 = vsel %vm573, %v8489, %v8490
    %v8504 = vsel %vm573, %v8496, %v8489
    %v8505 = vmul.f32 %v8504, %v240
    %v8506 = vmul.f32 %v8503, %v245
    %v8507 = vmul.f32 %v8502, %v250
    %v8508 = vmul.f32 %v8501, %v255
    %v8509 = vmul.f32 %v8500, %v260
    %v8510 = vmul.f32 %v8499, %v265
    %v8511 = vmul.f32 %v8498, %v270
    %v8512 = vmul.f32 %v8497, %v275
    %v8513 = vmul.f32 %v8472, %v289
    %v8514 = vmul.f32 %v8471, %v294
    %v8515 = vmul.f32 %v8470, %v299
    %v8516 = vmul.f32 %v8469, %v304
    %v8517 = vmul.f32 %v8468, %v309
    %v8518 = vmul.f32 %v8467, %v314
    %v8519 = vmul.f32 %v8466, %v319
    %v8520 = vmul.f32 %v8465, %v324
    %v8521 = vmul.f32 %v8503, %v338
    %v8522 = vmul.f32 %v8502, %v343
    %v8523 = vmul.f32 %v8501, %v348
    %v8524 = vmul.f32 %v8500, %v353
    %v8525 = vmul.f32 %v8499, %v358
    %v8526 = vmul.f32 %v8498, %v363
    %v8527 = vmul.f32 %v8497, %v368
    %v8528 = vmul.f32 %v8504, %v373
    %v8529 = vmul.f32 %v8471, %v387
    %v8530 = vmul.f32 %v8470, %v392
    %v8531 = vmul.f32 %v8469, %v397
    %v8532 = vmul.f32 %v8468, %v402
    %v8533 = vmul.f32 %v8467, %v407
    %v8534 = vmul.f32 %v8466, %v412
    %v8535 = vmul.f32 %v8465, %v417
    %v8536 = vmul.f32 %v8472, %v422
    %v8537 = vmul.f32 %v8450, %v436
    %v8538 = vmul.f32 %v8451, %v441
    %v8539 = vmul.f32 %v8452, %v446
    %v8540 = vmul.f32 %v8453, %v451
    %v8541 = vmul.f32 %v8454, %v456
    %v8542 = vmul.f32 %v8455, %v461
    %v8543 = vmul.f32 %v8456, %v466
    %v8544 = vmul.f32 %v8449, %v471
    %v8545 = vmul.f32 %v8502, %v485
    %v8546 = vmul.f32 %v8501, %v490
    %v8547 = vmul.f32 %v8500, %v495
    %v8548 = vmul.f32 %v8499, %v500
    %v8549 = vmul.f32 %v8498, %v505
    %v8550 = vmul.f32 %v8497, %v510
    %v8551 = vmul.f32 %v8504, %v515
    %v8552 = vmul.f32 %v8503, %v520
    %v8553 = vpack.c.bf16 %v8474, %v8473
    %v8554 = vpack.c.bf16 %v8482, %v8481
    %v8555 = vpack.c.bf16 %v8506, %v8505
    %v8556 = vpack.c.bf16 %v8514, %v8513
    %v8557 = vpack.c.bf16 %v8450, %v8449
    %v8558 = vpack.c.bf16 %v8522, %v8521
    %v8559 = vpack.c.bf16 %v8530, %v8529
    %v8560 = vpack.c.bf16 %v8538, %v8537
    %v8561 = vpack.c.bf16 %v8546, %v8545
    %v8562 = vpack.c.bf16 %v8476, %v8475
    %v8563 = vpack.c.bf16 %v8484, %v8483
    %v8564 = vpack.c.bf16 %v8508, %v8507
    %v8565 = vpack.c.bf16 %v8516, %v8515
    %v8566 = vpack.c.bf16 %v8452, %v8451
    %v8567 = vpack.c.bf16 %v8524, %v8523
    %v8568 = vpack.c.bf16 %v8532, %v8531
    %v8569 = vpack.c.bf16 %v8540, %v8539
    %v8570 = vpack.c.bf16 %v8548, %v8547
    %v8571 = vpack.c.bf16 %v8478, %v8477
    %v8572 = vpack.c.bf16 %v8486, %v8485
    %v8573 = vpack.c.bf16 %v8510, %v8509
    %v8574 = vpack.c.bf16 %v8518, %v8517
    %v8575 = vpack.c.bf16 %v8454, %v8453
    %v8576 = vpack.c.bf16 %v8526, %v8525
    %v8577 = vpack.c.bf16 %v8534, %v8533
    %v8578 = vpack.c.bf16 %v8542, %v8541
    %v8579 = vpack.c.bf16 %v8550, %v8549
    %v8580 = vpack.c.bf16 %v8480, %v8479
    %v8581 = vpack.c.bf16 %v8488, %v8487
    %v8582 = vpack.c.bf16 %v8512, %v8511
    %v8583 = vpack.c.bf16 %v8520, %v8519
    %v8584 = vpack.c.bf16 %v8456, %v8455
    %v8585 = vpack.c.bf16 %v8528, %v8527
    %v8586 = vpack.c.bf16 %v8536, %v8535
    %v8587 = vpack.c.bf16 %v8544, %v8543
    %v8588 = vpack.c.bf16 %v8552, %v8551
    %s8589 = scalar_lea.vmem [#allocation5], 4032
    %v8590 = vld [vmem:[%s8589] sm:$0xf]
    %v8591 = vld [vmem:[%s8589 + $0x4] sm:$0xf]
    %v8592 = vld [vmem:[%s8589 + $0x8] sm:$0xf]
    %v8593 = vld [vmem:[%s8589 + $0xc] sm:$0xf]
    %v8594 = vld [vmem:[%s8589 + $0x10] sm:$0xf]
    %v8595 = vld [vmem:[%s8589 + $0x14] sm:$0xf]
    %v8596 = vld [vmem:[%s8589 + $0x18] sm:$0xf]
    %v8597 = vld [vmem:[%s8589 + $0x1c] sm:$0xf]
    %v8598 = vld [vmem:[%s8589 + $0x20] sm:$0xf]
    %v8599 = vld [vmem:[%s8589 + $0x24] sm:$0xf]
    %v8600 = vld [vmem:[%s8589 + $0x28] sm:$0xf]
    %v8601 = vld [vmem:[%s8589 + $0x2c] sm:$0xf]
    %v8602 = vld [vmem:[%s8589 + $0x30] sm:$0xf]
    %v8603 = vld [vmem:[%s8589 + $0x34] sm:$0xf]
    %v8604 = vld [vmem:[%s8589 + $0x38] sm:$0xf]
    %v8605 = vld [vmem:[%s8589 + $0x3c] sm:$0xf]
    %v8606 = vld [vmem:[%s8589 + $0x40] sm:$0xf]
    %v8607 = vld [vmem:[%s8589 + $0x44] sm:$0xf]
    %v8608 = vld [vmem:[%s8589 + $0x48] sm:$0xf]
    %v8609 = vld [vmem:[%s8589 + $0x4c] sm:$0xf]
    %v8610 = vld [vmem:[%s8589 + $0x50] sm:$0xf]
    %v8611 = vld [vmem:[%s8589 + $0x54] sm:$0xf]
    %v8612 = vld [vmem:[%s8589 + $0x58] sm:$0xf]
    %v8613 = vld [vmem:[%s8589 + $0x5c] sm:$0xf]
    %v8614 = vld [vmem:[%s8589 + $0x60] sm:$0xf]
    %v8615 = vld [vmem:[%s8589 + $0x64] sm:$0xf]
    %v8616 = vld [vmem:[%s8589 + $0x68] sm:$0xf]
    %v8617 = vld [vmem:[%s8589 + $0x6c] sm:$0xf]
    %v8618 = vld [vmem:[%s8589 + $0x70] sm:$0xf]
    %v8619 = vld [vmem:[%s8589 + $0x74] sm:$0xf]
    %v8620 = vld [vmem:[%s8589 + $0x78] sm:$0xf]
    %v8621 = vld [vmem:[%s8589 + $0x7c] sm:$0xf]
    %v8622 = vld [vmem:[%s8589 + $0x80] sm:$0xf]
    %v8623 = vld [vmem:[%s8589 + $0x84] sm:$0xf]
    %v8624 = vld [vmem:[%s8589 + $0x88] sm:$0xf]
    %v8625 = vld [vmem:[%s8589 + $0x8c] sm:$0xf]
    %v8626 = vld [vmem:[%s8589 + $0x90] sm:$0xf]
    %v8627 = vld [vmem:[%s8589 + $0x94] sm:$0xf]
    %v8628 = vld [vmem:[%s8589 + $0x98] sm:$0xf]
    %v8629 = vld [vmem:[%s8589 + $0x9c] sm:$0xf]
    %v8630 = vld [vmem:[%s8589 + $0xa0] sm:$0xf]
    %v8631 = vld [vmem:[%s8589 + $0xa4] sm:$0xf]
    %v8632 = vld [vmem:[%s8589 + $0xa8] sm:$0xf]
    %v8633 = vld [vmem:[%s8589 + $0xac] sm:$0xf]
    %v8634 = vld [vmem:[%s8589 + $0xb0] sm:$0xf]
    %v8635 = vld [vmem:[%s8589 + $0xb4] sm:$0xf]
    %v8636 = vld [vmem:[%s8589 + $0xb8] sm:$0xf]
    %v8637 = vld [vmem:[%s8589 + $0xbc] sm:$0xf]
    %v8638 = vld [vmem:[%s8589 + $0xc0] sm:$0xf]
    %v8639 = vld [vmem:[%s8589 + $0xc4] sm:$0xf]
    %v8640 = vld [vmem:[%s8589 + $0xc8] sm:$0xf]
    %v8641 = vld [vmem:[%s8589 + $0xcc] sm:$0xf]
    %v8642 = vld [vmem:[%s8589 + $0xd0] sm:$0xf]
    %v8643 = vld [vmem:[%s8589 + $0xd4] sm:$0xf]
    %v8644 = vld [vmem:[%s8589 + $0xd8] sm:$0xf]
    %v8645 = vld [vmem:[%s8589 + $0xdc] sm:$0xf]
    %v8646 = vld [vmem:[%s8589 + $0xe0] sm:$0xf]
    %v8647 = vld [vmem:[%s8589 + $0xe4] sm:$0xf]
    %v8648 = vld [vmem:[%s8589 + $0xe8] sm:$0xf]
    %v8649 = vld [vmem:[%s8589 + $0xec] sm:$0xf]
    %v8650 = vld [vmem:[%s8589 + $0xf0] sm:$0xf]
    %v8651 = vld [vmem:[%s8589 + $0xf4] sm:$0xf]
    %v8652 = vld [vmem:[%s8589 + $0xf8] sm:$0xf]
    %v8653 = vld [vmem:[%s8589 + $0xfc] sm:$0xf]
    %v8654 = vld [vmem:[%s8589 + $0x100] sm:$0xf]
    %v8655 = vld [vmem:[%s8589 + $0x104] sm:$0xf]
    %v8656 = vld [vmem:[%s8589 + $0x108] sm:$0xf]
    %v8657 = vld [vmem:[%s8589 + $0x10c] sm:$0xf]
    %v8658 = vld [vmem:[%s8589 + $0x110] sm:$0xf]
    %v8659 = vld [vmem:[%s8589 + $0x114] sm:$0xf]
    %v8660 = vld [vmem:[%s8589 + $0x118] sm:$0xf]
    %v8661 = vld [vmem:[%s8589 + $0x11c] sm:$0xf]
    %v8662 = vld [vmem:[%s8589 + $0x120] sm:$0xf]
    %v8663 = vld [vmem:[%s8589 + $0x124] sm:$0xf]
    %v8664 = vld [vmem:[%s8589 + $0x128] sm:$0xf]
    %v8665 = vld [vmem:[%s8589 + $0x12c] sm:$0xf]
    %v8666 = vld [vmem:[%s8589 + $0x130] sm:$0xf]
    %v8667 = vld [vmem:[%s8589 + $0x134] sm:$0xf]
    %v8668 = vld [vmem:[%s8589 + $0x138] sm:$0xf]
    %v8669 = vld [vmem:[%s8589 + $0x13c] sm:$0xf]
    %v8670 = vld [vmem:[%s8589 + $0x140] sm:$0xf]
    %v8671 = vld [vmem:[%s8589 + $0x144] sm:$0xf]
    %v8672 = vld [vmem:[%s8589 + $0x148] sm:$0xf]
    %v8673 = vld [vmem:[%s8589 + $0x14c] sm:$0xf]
    %v8674 = vld [vmem:[%s8589 + $0x150] sm:$0xf]
    %v8675 = vld [vmem:[%s8589 + $0x154] sm:$0xf]
    %v8676 = vld [vmem:[%s8589 + $0x158] sm:$0xf]
    %v8677 = vld [vmem:[%s8589 + $0x15c] sm:$0xf]
    %v8678 = vld [vmem:[%s8589 + $0x160] sm:$0xf]
    %v8679 = vld [vmem:[%s8589 + $0x164] sm:$0xf]
    %v8680 = vld [vmem:[%s8589 + $0x168] sm:$0xf]
    %v8681 = vld [vmem:[%s8589 + $0x16c] sm:$0xf]
    %v8682 = vld [vmem:[%s8589 + $0x170] sm:$0xf]
    %v8683 = vld [vmem:[%s8589 + $0x174] sm:$0xf]
    %v8684 = vld [vmem:[%s8589 + $0x178] sm:$0xf]
    %v8685 = vld [vmem:[%s8589 + $0x17c] sm:$0xf]
    %v8686 = vld [vmem:[%s8589 + $0x180] sm:$0xf]
    %v8687 = vld [vmem:[%s8589 + $0x184] sm:$0xf]
    %v8688 = vld [vmem:[%s8589 + $0x188] sm:$0xf]
    %v8689 = vld [vmem:[%s8589 + $0x18c] sm:$0xf]
    %v8690 = vld [vmem:[%s8589 + $0x190] sm:$0xf]
    %v8691 = vld [vmem:[%s8589 + $0x194] sm:$0xf]
    %v8692 = vld [vmem:[%s8589 + $0x198] sm:$0xf]
    %v8693 = vld [vmem:[%s8589 + $0x19c] sm:$0xf]
    %v8694 = vld [vmem:[%s8589 + $0x1a0] sm:$0xf]
    %v8695 = vld [vmem:[%s8589 + $0x1a4] sm:$0xf]
    %v8696 = vld [vmem:[%s8589 + $0x1a8] sm:$0xf]
    %v8697 = vld [vmem:[%s8589 + $0x1ac] sm:$0xf]
    %v8698 = vld [vmem:[%s8589 + $0x1b0] sm:$0xf]
    %v8699 = vld [vmem:[%s8589 + $0x1b4] sm:$0xf]
    %v8700 = vld [vmem:[%s8589 + $0x1b8] sm:$0xf]
    %v8701 = vld [vmem:[%s8589 + $0x1bc] sm:$0xf]
    %v8702 = vld [vmem:[%s8589 + $0x1c0] sm:$0xf]
    %v8703 = vld [vmem:[%s8589 + $0x1c4] sm:$0xf]
    %v8704 = vld [vmem:[%s8589 + $0x1c8] sm:$0xf]
    %v8705 = vld [vmem:[%s8589 + $0x1cc] sm:$0xf]
    %v8706 = vld [vmem:[%s8589 + $0x1d0] sm:$0xf]
    %v8707 = vld [vmem:[%s8589 + $0x1d4] sm:$0xf]
    %v8708 = vld [vmem:[%s8589 + $0x1d8] sm:$0xf]
    %v8709 = vld [vmem:[%s8589 + $0x1dc] sm:$0xf]
    %v8710 = vld [vmem:[%s8589 + $0x1e0] sm:$0xf]
    %v8711 = vld [vmem:[%s8589 + $0x1e4] sm:$0xf]
    %v8712 = vld [vmem:[%s8589 + $0x1e8] sm:$0xf]
    %v8713 = vld [vmem:[%s8589 + $0x1ec] sm:$0xf]
    %v8714 = vld [vmem:[%s8589 + $0x1f0] sm:$0xf]
    %v8715 = vld [vmem:[%s8589 + $0x1f4] sm:$0xf]
    %v8716 = vld [vmem:[%s8589 + $0x1f8] sm:$0xf]
    %v8717 = vld [vmem:[%s8589 + $0x1fc] sm:$0xf]
    %v8718 = vld [vmem:[%s8589 + $0x200] sm:$0xf]
    %v8719 = vld [vmem:[%s8589 + $0x204] sm:$0xf]
    %v8720 = vld [vmem:[%s8589 + $0x208] sm:$0xf]
    %v8721 = vld [vmem:[%s8589 + $0x20c] sm:$0xf]
    %v8722 = vld [vmem:[%s8589 + $0x210] sm:$0xf]
    %v8723 = vld [vmem:[%s8589 + $0x214] sm:$0xf]
    %v8724 = vld [vmem:[%s8589 + $0x218] sm:$0xf]
    %v8725 = vld [vmem:[%s8589 + $0x21c] sm:$0xf]
    %v8726 = vld [vmem:[%s8589 + $0x220] sm:$0xf]
    %v8727 = vld [vmem:[%s8589 + $0x224] sm:$0xf]
    %v8728 = vld [vmem:[%s8589 + $0x228] sm:$0xf]
    %v8729 = vld [vmem:[%s8589 + $0x22c] sm:$0xf]
    %v8730 = vld [vmem:[%s8589 + $0x230] sm:$0xf]
    %v8731 = vld [vmem:[%s8589 + $0x234] sm:$0xf]
    %v8732 = vld [vmem:[%s8589 + $0x238] sm:$0xf]
    %v8733 = vld [vmem:[%s8589 + $0x23c] sm:$0xf]
    %v8878 = vunpack.c.l.b16 %v8590
    %v8879 = vunpack.c.l.b16 %v8591
    %v8880 = vunpack.c.l.b16 %v8592
    %v8881 = vunpack.c.l.b16 %v8593
    %v8882 = vunpack.c.l.b16 %v8594
    %v8883 = vunpack.c.l.b16 %v8595
    %v8884 = vunpack.c.l.b16 %v8596
    %v8885 = vunpack.c.l.b16 %v8597
    %v8886 = vunpack.c.l.b16 %v8598
    %v8887 = vunpack.c.l.b16 %v8599
    %v8888 = vunpack.c.l.b16 %v8600
    %v8889 = vunpack.c.l.b16 %v8601
    %v8890 = vunpack.c.l.b16 %v8602
    %v8891 = vunpack.c.l.b16 %v8603
    %v8892 = vunpack.c.l.b16 %v8604
    %v8893 = vunpack.c.l.b16 %v8605
    %v8894 = vunpack.c.l.b16 %v8606
    %v8895 = vunpack.c.l.b16 %v8607
    %v8896 = vunpack.c.l.b16 %v8608
    %v8897 = vunpack.c.l.b16 %v8609
    %v8898 = vunpack.c.l.b16 %v8610
    %v8899 = vunpack.c.l.b16 %v8611
    %v8900 = vunpack.c.l.b16 %v8612
    %v8901 = vunpack.c.l.b16 %v8613
    %v8902 = vunpack.c.l.b16 %v8614
    %v8903 = vunpack.c.l.b16 %v8615
    %v8904 = vunpack.c.l.b16 %v8616
    %v8905 = vunpack.c.l.b16 %v8617
    %v8906 = vunpack.c.l.b16 %v8618
    %v8907 = vunpack.c.l.b16 %v8619
    %v8908 = vunpack.c.l.b16 %v8620
    %v8909 = vunpack.c.l.b16 %v8621
    %v8910 = vunpack.c.l.b16 %v8622
    %v8911 = vunpack.c.l.b16 %v8623
    %v8912 = vunpack.c.l.b16 %v8624
    %v8913 = vunpack.c.l.b16 %v8625
    %v8914 = vunpack.c.l.b16 %v8626
    %v8915 = vunpack.c.l.b16 %v8627
    %v8916 = vunpack.c.l.b16 %v8628
    %v8917 = vunpack.c.l.b16 %v8629
    %v8918 = vunpack.c.l.b16 %v8630
    %v8919 = vunpack.c.l.b16 %v8631
    %v8920 = vunpack.c.l.b16 %v8632
    %v8921 = vunpack.c.l.b16 %v8633
    %v8922 = vunpack.c.l.b16 %v8634
    %v8923 = vunpack.c.l.b16 %v8635
    %v8924 = vunpack.c.l.b16 %v8636
    %v8925 = vunpack.c.l.b16 %v8637
    %v8926 = vunpack.c.l.b16 %v8638
    %v8927 = vunpack.c.l.b16 %v8639
    %v8928 = vunpack.c.l.b16 %v8640
    %v8929 = vunpack.c.l.b16 %v8641
    %v8930 = vunpack.c.l.b16 %v8642
    %v8931 = vunpack.c.l.b16 %v8643
    %v8932 = vunpack.c.l.b16 %v8644
    %v8933 = vunpack.c.l.b16 %v8645
    %v8934 = vunpack.c.l.b16 %v8646
    %v8935 = vunpack.c.l.b16 %v8647
    %v8936 = vunpack.c.l.b16 %v8648
    %v8937 = vunpack.c.l.b16 %v8649
    %v8938 = vunpack.c.l.b16 %v8650
    %v8939 = vunpack.c.l.b16 %v8651
    %v8940 = vunpack.c.l.b16 %v8652
    %v8941 = vunpack.c.l.b16 %v8653
    %v8942 = vunpack.c.l.b16 %v8654
    %v8943 = vunpack.c.l.b16 %v8655
    %v8944 = vunpack.c.l.b16 %v8656
    %v8945 = vunpack.c.l.b16 %v8657
    %v8946 = vunpack.c.l.b16 %v8658
    %v8947 = vunpack.c.l.b16 %v8659
    %v8948 = vunpack.c.l.b16 %v8660
    %v8949 = vunpack.c.l.b16 %v8661
    %v8950 = vunpack.c.l.b16 %v8662
    %v8951 = vunpack.c.l.b16 %v8663
    %v8952 = vunpack.c.l.b16 %v8664
    %v8953 = vunpack.c.l.b16 %v8665
    %v8954 = vunpack.c.l.b16 %v8666
    %v8955 = vunpack.c.l.b16 %v8667
    %v8956 = vunpack.c.l.b16 %v8668
    %v8957 = vunpack.c.l.b16 %v8669
    %v8958 = vunpack.c.l.b16 %v8670
    %v8959 = vunpack.c.l.b16 %v8671
    %v8960 = vunpack.c.l.b16 %v8672
    %v8961 = vunpack.c.l.b16 %v8673
    %v8962 = vunpack.c.l.b16 %v8674
    %v8963 = vunpack.c.l.b16 %v8675
    %v8964 = vunpack.c.l.b16 %v8676
    %v8965 = vunpack.c.l.b16 %v8677
    %v8966 = vunpack.c.l.b16 %v8678
    %v8967 = vunpack.c.l.b16 %v8679
    %v8968 = vunpack.c.l.b16 %v8680
    %v8969 = vunpack.c.l.b16 %v8681
    %v8970 = vunpack.c.l.b16 %v8682
    %v8971 = vunpack.c.l.b16 %v8683
    %v8972 = vunpack.c.l.b16 %v8684
    %v8973 = vunpack.c.l.b16 %v8685
    %v8974 = vunpack.c.l.b16 %v8686
    %v8975 = vunpack.c.l.b16 %v8687
    %v8976 = vunpack.c.l.b16 %v8688
    %v8977 = vunpack.c.l.b16 %v8689
    %v8978 = vunpack.c.l.b16 %v8690
    %v8979 = vunpack.c.l.b16 %v8691
    %v8980 = vunpack.c.l.b16 %v8692
    %v8981 = vunpack.c.l.b16 %v8693
    %v8982 = vunpack.c.l.b16 %v8694
    %v8983 = vunpack.c.l.b16 %v8695
    %v8984 = vunpack.c.l.b16 %v8696
    %v8985 = vunpack.c.l.b16 %v8697
    %v8986 = vunpack.c.l.b16 %v8698
    %v8987 = vunpack.c.l.b16 %v8699
    %v8988 = vunpack.c.l.b16 %v8700
    %v8989 = vunpack.c.l.b16 %v8701
    %v8990 = vunpack.c.l.b16 %v8702
    %v8991 = vunpack.c.l.b16 %v8703
    %v8992 = vunpack.c.l.b16 %v8704
    %v8993 = vunpack.c.l.b16 %v8705
    %v8994 = vunpack.c.l.b16 %v8706
    %v8995 = vunpack.c.l.b16 %v8707
    %v8996 = vunpack.c.l.b16 %v8708
    %v8997 = vunpack.c.l.b16 %v8709
    %v8998 = vunpack.c.l.b16 %v8710
    %v8999 = vunpack.c.l.b16 %v8711
    %v9000 = vunpack.c.l.b16 %v8712
    %v9001 = vunpack.c.l.b16 %v8713
    %v9002 = vunpack.c.l.b16 %v8714
    %v9003 = vunpack.c.l.b16 %v8715
    %v9004 = vunpack.c.l.b16 %v8716
    %v9005 = vunpack.c.l.b16 %v8717
    %v9006 = vunpack.c.l.b16 %v8718
    %v9007 = vunpack.c.l.b16 %v8719
    %v9008 = vunpack.c.l.b16 %v8720
    %v9009 = vunpack.c.l.b16 %v8721
    %v9010 = vunpack.c.l.b16 %v8722
    %v9011 = vunpack.c.l.b16 %v8723
    %v9012 = vunpack.c.l.b16 %v8724
    %v9013 = vunpack.c.l.b16 %v8725
    %v9014 = vunpack.c.l.b16 %v8726
    %v9015 = vunpack.c.l.b16 %v8727
    %v9016 = vunpack.c.l.b16 %v8728
    %v9017 = vunpack.c.l.b16 %v8729
    %v9018 = vunpack.c.l.b16 %v8730
    %v9019 = vunpack.c.l.b16 %v8731
    %v9020 = vunpack.c.l.b16 %v8732
    %v9021 = vunpack.c.l.b16 %v8733
    %v9022 = vpack.c.b16 %v8879, %v8878
    %v9023 = vpack.c.b16 %v8881, %v8880
    %v9024 = vpack.c.b16 %v8883, %v8882
    %v9025 = vpack.c.b16 %v8885, %v8884
    %v9026 = vpack.c.b16 %v8887, %v8886
    %v9027 = vpack.c.b16 %v8889, %v8888
    %v9028 = vpack.c.b16 %v8891, %v8890
    %v9029 = vpack.c.b16 %v8893, %v8892
    %v9030 = vpack.c.b16 %v8895, %v8894
    %v9031 = vpack.c.b16 %v8897, %v8896
    %v9032 = vpack.c.b16 %v8899, %v8898
    %v9033 = vpack.c.b16 %v8901, %v8900
    %v9034 = vpack.c.b16 %v8903, %v8902
    %v9035 = vpack.c.b16 %v8905, %v8904
    %v9036 = vpack.c.b16 %v8907, %v8906
    %v9037 = vpack.c.b16 %v8909, %v8908
    %v9038 = vpack.c.b16 %v8911, %v8910
    %v9039 = vpack.c.b16 %v8913, %v8912
    %v9040 = vpack.c.b16 %v8915, %v8914
    %v9041 = vpack.c.b16 %v8917, %v8916
    %v9042 = vpack.c.b16 %v8919, %v8918
    %v9043 = vpack.c.b16 %v8921, %v8920
    %v9044 = vpack.c.b16 %v8923, %v8922
    %v9045 = vpack.c.b16 %v8925, %v8924
    %v9046 = vpack.c.b16 %v8927, %v8926
    %v9047 = vpack.c.b16 %v8929, %v8928
    %v9048 = vpack.c.b16 %v8931, %v8930
    %v9049 = vpack.c.b16 %v8933, %v8932
    %v9050 = vpack.c.b16 %v8935, %v8934
    %v9051 = vpack.c.b16 %v8937, %v8936
    %v9052 = vpack.c.b16 %v8939, %v8938
    %v9053 = vpack.c.b16 %v8941, %v8940
    %v9054 = vpack.c.b16 %v8943, %v8942
    %v9055 = vpack.c.b16 %v8945, %v8944
    %v9056 = vpack.c.b16 %v8947, %v8946
    %v9057 = vpack.c.b16 %v8949, %v8948
    %v9058 = vpack.c.b16 %v8951, %v8950
    %v9059 = vpack.c.b16 %v8953, %v8952
    %v9060 = vpack.c.b16 %v8955, %v8954
    %v9061 = vpack.c.b16 %v8957, %v8956
    %v9062 = vpack.c.b16 %v8959, %v8958
    %v9063 = vpack.c.b16 %v8961, %v8960
    %v9064 = vpack.c.b16 %v8963, %v8962
    %v9065 = vpack.c.b16 %v8965, %v8964
    %v9066 = vpack.c.b16 %v8967, %v8966
    %v9067 = vpack.c.b16 %v8969, %v8968
    %v9068 = vpack.c.b16 %v8971, %v8970
    %v9069 = vpack.c.b16 %v8973, %v8972
    %v9070 = vpack.c.b16 %v8975, %v8974
    %v9071 = vpack.c.b16 %v8977, %v8976
    %v9072 = vpack.c.b16 %v8979, %v8978
    %v9073 = vpack.c.b16 %v8981, %v8980
    %v9074 = vpack.c.b16 %v8983, %v8982
    %v9075 = vpack.c.b16 %v8985, %v8984
    %v9076 = vpack.c.b16 %v8987, %v8986
    %v9077 = vpack.c.b16 %v8989, %v8988
    %v9078 = vpack.c.b16 %v8991, %v8990
    %v9079 = vpack.c.b16 %v8993, %v8992
    %v9080 = vpack.c.b16 %v8995, %v8994
    %v9081 = vpack.c.b16 %v8997, %v8996
    %v9082 = vpack.c.b16 %v8999, %v8998
    %v9083 = vpack.c.b16 %v9001, %v9000
    %v9084 = vpack.c.b16 %v9003, %v9002
    %v9085 = vpack.c.b16 %v9005, %v9004
    %v9086 = vpack.c.b16 %v9007, %v9006
    %v9087 = vpack.c.b16 %v9009, %v9008
    %v9088 = vpack.c.b16 %v9011, %v9010
    %v9089 = vpack.c.b16 %v9013, %v9012
    %v9090 = vpack.c.b16 %v9015, %v9014
    %v9091 = vpack.c.b16 %v9017, %v9016
    %v9092 = vpack.c.b16 %v9019, %v9018
    %v9093 = vpack.c.b16 %v9021, %v9020
    %9166 = vmatprep.subr.bf16.mxu0 0
    %9167 = vmatpush1.bf16.msra.mxu0 %v9022
    %9168 = vmatprep.subr.bf16.mxu0 0
    %9169 = vmatpush1.bf16.msra.mxu0 %v9023
    %9170 = vmatprep.subr.bf16.mxu0 0
    %9171 = vmatpush1.bf16.msra.mxu0 %v9024
    %9172 = vmatprep.subr.bf16.mxu0 0
    %9173 = vmatpush1.bf16.msra.mxu0 %v9025
    %9174 = vmatprep.subr.bf16.mxu0 0
    %9175 = vmatpush1.bf16.msra.mxu0 %v9026
    %9176 = vmatprep.subr.bf16.mxu0 0
    %9177 = vmatpush1.bf16.msra.mxu0 %v9027
    %9178 = vmatprep.subr.bf16.mxu0 0
    %9179 = vmatpush1.bf16.msra.mxu0 %v9028
    %9180 = vmatprep.subr.bf16.mxu0 0
    %9181 = vmatpush1.bf16.msra.mxu0 %v9029
    %9182 = vmatprep.subr.bf16.mxu0 0
    %9183 = vmatpush1.bf16.msra.mxu0 %v9030
    %9184 = vmatprep.subr.bf16.mxu0 0
    %9185 = vmatpush1.bf16.msra.mxu0 %v9031
    %9186 = vmatprep.subr.bf16.mxu0 0
    %9187 = vmatpush1.bf16.msra.mxu0 %v9032
    %9188 = vmatprep.subr.bf16.mxu0 0
    %9189 = vmatpush1.bf16.msra.mxu0 %v9033
    %9190 = vmatprep.subr.bf16.mxu0 0
    %9191 = vmatpush1.bf16.msra.mxu0 %v9034
    %9192 = vmatprep.subr.bf16.mxu0 0
    %9193 = vmatpush1.bf16.msra.mxu0 %v9035
    %9194 = vmatprep.subr.bf16.mxu0 0
    %9195 = vmatpush1.bf16.msra.mxu0 %v9036
    %9196 = vmatprep.subr.bf16.mxu0 0
    %9197 = vmatpush1.bf16.msra.mxu0 %v9037
    %9198 = vmatprep.mubr.bf16.mxu0 %v8554
    %9199 = vmatmul.mubr.bf16.gmra.mrb[0].mxu0 %v8553
    %v9200 = vpop.f32.mrb[0].mxu0
    %v9201 = vadd.f32 0.0, %v9200
    %v9202 = vpop.f32.mrb[0].mxu0
    %v9203 = vpop.f32.mrb[0].mxu0
    %v9204 = vadd.f32 0.0, %v9203
    %v9205 = vpop.f32.mrb[0].mxu0
    %9206 = vmatprep.mubr.bf16.mxu0 %v8563
    %9207 = vmatmul.mubr.bf16.gmra.mrb[0].mxu0 %v8562
    %v9208 = vpop.f32.mrb[0].mxu0
    %v9209 = vadd.f32 0.0, %v9208
    %v9210 = vpop.f32.mrb[0].mxu0
    %v9211 = vpop.f32.mrb[0].mxu0
    %v9212 = vadd.f32 0.0, %v9211
    %v9213 = vpop.f32.mrb[0].mxu0
    %9214 = vmatprep.mubr.bf16.mxu0 %v8572
    %9215 = vmatmul.mubr.bf16.gmra.mrb[0].mxu0 %v8571
    %v9216 = vpop.f32.mrb[0].mxu0
    %v9217 = vadd.f32 0.0, %v9216
    %v9218 = vpop.f32.mrb[0].mxu0
    %v9219 = vpop.f32.mrb[0].mxu0
    %v9220 = vadd.f32 0.0, %v9219
    %v9221 = vpop.f32.mrb[0].mxu0
    %9222 = vmatprep.mubr.bf16.mxu0 %v8581
    %9223 = vmatmul.mubr.bf16.gmra.mrb[0].mxu0 %v8580
    %v9224 = vpop.f32.mrb[0].mxu0
    %v9225 = vadd.f32 0.0, %v9224
    %v9226 = vpop.f32.mrb[0].mxu0
    %v9227 = vpop.f32.mrb[0].mxu0
    %v9228 = vadd.f32 0.0, %v9227
    %v9229 = vpop.f32.mrb[0].mxu0
    %9230 = vdwg.mxu0
    %9231 = vmatprep.subr.bf16.mxu0 0
    %9232 = vmatpush1.bf16.msra.mxu0 %v9038
    %9233 = vmatprep.subr.bf16.mxu0 0
    %9234 = vmatpush1.bf16.msra.mxu0 %v9039
    %9235 = vmatprep.subr.bf16.mxu0 0
    %9236 = vmatpush1.bf16.msra.mxu0 %v9040
    %9237 = vmatprep.subr.bf16.mxu0 0
    %9238 = vmatpush1.bf16.msra.mxu0 %v9041
    %9239 = vmatprep.subr.bf16.mxu0 0
    %9240 = vmatpush1.bf16.msra.mxu0 %v9042
    %9241 = vmatprep.subr.bf16.mxu0 0
    %9242 = vmatpush1.bf16.msra.mxu0 %v9043
    %9243 = vmatprep.subr.bf16.mxu0 0
    %9244 = vmatpush1.bf16.msra.mxu0 %v9044
    %9245 = vmatprep.subr.bf16.mxu0 0
    %9246 = vmatpush1.bf16.msra.mxu0 %v9045
    %9247 = vmatprep.subr.bf16.mxu0 0
    %9248 = vmatpush1.bf16.msra.mxu0 %v9046
    %9249 = vmatprep.subr.bf16.mxu0 0
    %9250 = vmatpush1.bf16.msra.mxu0 %v9047
    %9251 = vmatprep.subr.bf16.mxu0 0
    %9252 = vmatpush1.bf16.msra.mxu0 %v9048
    %9253 = vmatprep.subr.bf16.mxu0 0
    %9254 = vmatpush1.bf16.msra.mxu0 %v9049
    %9255 = vmatprep.subr.bf16.mxu0 0
    %9256 = vmatpush1.bf16.msra.mxu0 %v9050
    %9257 = vmatprep.subr.bf16.mxu0 0
    %9258 = vmatpush1.bf16.msra.mxu0 %v9051
    %9259 = vmatprep.subr.bf16.mxu0 0
    %9260 = vmatpush1.bf16.msra.mxu0 %v9052
    %9261 = vmatprep.subr.bf16.mxu0 0
    %9262 = vmatpush1.bf16.msra.mxu0 %v9053
    %9263 = vmatprep.mubr.bf16.mxu0 %v8556
    %9264 = vmatmul.mubr.bf16.gmra.mrb[0].mxu0 %v8555
    %v9265 = vpop.f32.mrb[0].mxu0
    %v9266 = vadd.f32 %v9201, %v9265
    %v9267 = vpop.f32.mrb[0].mxu0
    %v9268 = vpop.f32.mrb[0].mxu0
    %v9269 = vadd.f32 %v9204, %v9268
    %v9270 = vpop.f32.mrb[0].mxu0
    %9271 = vmatprep.mubr.bf16.mxu0 %v8565
    %9272 = vmatmul.mubr.bf16.gmra.mrb[0].mxu0 %v8564
    %v9273 = vpop.f32.mrb[0].mxu0
    %v9274 = vadd.f32 %v9209, %v9273
    %v9275 = vpop.f32.mrb[0].mxu0
    %v9276 = vpop.f32.mrb[0].mxu0
    %v9277 = vadd.f32 %v9212, %v9276
    %v9278 = vpop.f32.mrb[0].mxu0
    %9279 = vmatprep.mubr.bf16.mxu0 %v8574
    %9280 = vmatmul.mubr.bf16.gmra.mrb[0].mxu0 %v8573
    %v9281 = vpop.f32.mrb[0].mxu0
    %v9282 = vadd.f32 %v9217, %v9281
    %v9283 = vpop.f32.mrb[0].mxu0
    %v9284 = vpop.f32.mrb[0].mxu0
    %v9285 = vadd.f32 %v9220, %v9284
    %v9286 = vpop.f32.mrb[0].mxu0
    %9287 = vmatprep.mubr.bf16.mxu0 %v8583
    %9288 = vmatmul.mubr.bf16.gmra.mrb[0].mxu0 %v8582
    %v9289 = vpop.f32.mrb[0].mxu0
    %v9290 = vadd.f32 %v9225, %v9289
    %v9291 = vpop.f32.mrb[0].mxu0
    %v9292 = vpop.f32.mrb[0].mxu0
    %v9293 = vadd.f32 %v9228, %v9292
    %v9294 = vpop.f32.mrb[0].mxu0
    %9295 = vdwg.mxu0
    %9296 = vmatprep.subr.bf16.mxu0 0
    %9297 = vmatpush1.bf16.msra.mxu0 %v9054
    %9298 = vmatprep.subr.bf16.mxu0 0
    %9299 = vmatpush1.bf16.msra.mxu0 %v9055
    %9300 = vmatprep.subr.bf16.mxu0 0
    %9301 = vmatpush1.bf16.msra.mxu0 %v9056
    %9302 = vmatprep.subr.bf16.mxu0 0
    %9303 = vmatpush1.bf16.msra.mxu0 %v9057
    %9304 = vmatprep.subr.bf16.mxu0 0
    %9305 = vmatpush1.bf16.msra.mxu0 %v9058
    %9306 = vmatprep.subr.bf16.mxu0 0
    %9307 = vmatpush1.bf16.msra.mxu0 %v9059
    %9308 = vmatprep.subr.bf16.mxu0 0
    %9309 = vmatpush1.bf16.msra.mxu0 %v9060
    %9310 = vmatprep.subr.bf16.mxu0 0
    %9311 = vmatpush1.bf16.msra.mxu0 %v9061
    %9312 = vmatprep.subr.bf16.mxu0 0
    %9313 = vmatpush1.bf16.msra.mxu0 %v9062
    %9314 = vmatprep.subr.bf16.mxu0 0
    %9315 = vmatpush1.bf16.msra.mxu0 %v9063
    %9316 = vmatprep.subr.bf16.mxu0 0
    %9317 = vmatpush1.bf16.msra.mxu0 %v9064
    %9318 = vmatprep.subr.bf16.mxu0 0
    %9319 = vmatpush1.bf16.msra.mxu0 %v9065
    %9320 = vmatprep.subr.bf16.mxu0 0
    %9321 = vmatpush1.bf16.msra.mxu0 %v9066
    %9322 = vmatprep.subr.bf16.mxu0 0
    %9323 = vmatpush1.bf16.msra.mxu0 %v9067
    %9324 = vmatprep.subr.bf16.mxu0 0
    %9325 = vmatpush1.bf16.msra.mxu0 %v9068
    %9326 = vmatprep.subr.bf16.mxu0 0
    %9327 = vmatpush1.bf16.msra.mxu0 %v9069
    %9328 = vmatprep.mubr.bf16.mxu0 %v8558
    %9329 = vmatmul.mubr.bf16.gmra.mrb[0].mxu0 %v8557
    %v9330 = vpop.f32.mrb[0].mxu0
    %v9331 = vadd.f32 %v9266, %v9330
    %v9332 = vpop.f32.mrb[0].mxu0
    %v9333 = vpop.f32.mrb[0].mxu0
    %v9334 = vadd.f32 %v9269, %v9333
    %v9335 = vpop.f32.mrb[0].mxu0
    %9336 = vmatprep.mubr.bf16.mxu0 %v8567
    %9337 = vmatmul.mubr.bf16.gmra.mrb[0].mxu0 %v8566
    %v9338 = vpop.f32.mrb[0].mxu0
    %v9339 = vadd.f32 %v9274, %v9338
    %v9340 = vpop.f32.mrb[0].mxu0
    %v9341 = vpop.f32.mrb[0].mxu0
    %v9342 = vadd.f32 %v9277, %v9341
    %v9343 = vpop.f32.mrb[0].mxu0
    %9344 = vmatprep.mubr.bf16.mxu0 %v8576
    %9345 = vmatmul.mubr.bf16.gmra.mrb[0].mxu0 %v8575
    %v9346 = vpop.f32.mrb[0].mxu0
    %v9347 = vadd.f32 %v9282, %v9346
    %v9348 = vpop.f32.mrb[0].mxu0
    %v9349 = vpop.f32.mrb[0].mxu0
    %v9350 = vadd.f32 %v9285, %v9349
    %v9351 = vpop.f32.mrb[0].mxu0
    %9352 = vmatprep.mubr.bf16.mxu0 %v8585
    %9353 = vmatmul.mubr.bf16.gmra.mrb[0].mxu0 %v8584
    %v9354 = vpop.f32.mrb[0].mxu0
    %v9355 = vadd.f32 %v9290, %v9354
    %v9356 = vpop.f32.mrb[0].mxu0
    %v9357 = vpop.f32.mrb[0].mxu0
    %v9358 = vadd.f32 %v9293, %v9357
    %v9359 = vpop.f32.mrb[0].mxu0
    %9360 = vdwg.mxu0
    %9361 = vmatprep.subr.bf16.mxu0 0
    %9362 = vmatpush1.bf16.msra.mxu0 %v9070
    %9363 = vmatprep.subr.bf16.mxu0 0
    %9364 = vmatpush1.bf16.msra.mxu0 %v9071
    %9365 = vmatprep.subr.bf16.mxu0 0
    %9366 = vmatpush1.bf16.msra.mxu0 %v9072
    %9367 = vmatprep.subr.bf16.mxu0 0
    %9368 = vmatpush1.bf16.msra.mxu0 %v9073
    %9369 = vmatprep.subr.bf16.mxu0 0
    %9370 = vmatpush1.bf16.msra.mxu0 %v9074
    %9371 = vmatprep.subr.bf16.mxu0 0
    %9372 = vmatpush1.bf16.msra.mxu0 %v9075
    %9373 = vmatprep.subr.bf16.mxu0 0
    %9374 = vmatpush1.bf16.msra.mxu0 %v9076
    %9375 = vmatprep.subr.bf16.mxu0 0
    %9376 = vmatpush1.bf16.msra.mxu0 %v9077
    %9377 = vmatprep.subr.bf16.mxu0 0
    %9378 = vmatpush1.bf16.msra.mxu0 %v9078
    %9379 = vmatprep.subr.bf16.mxu0 0
    %9380 = vmatpush1.bf16.msra.mxu0 %v9079
    %9381 = vmatprep.subr.bf16.mxu0 0
    %9382 = vmatpush1.bf16.msra.mxu0 %v9080
    %9383 = vmatprep.subr.bf16.mxu0 0
    %9384 = vmatpush1.bf16.msra.mxu0 %v9081
    %9385 = vmatprep.subr.bf16.mxu0 0
    %9386 = vmatpush1.bf16.msra.mxu0 %v9082
    %9387 = vmatprep.subr.bf16.mxu0 0
    %9388 = vmatpush1.bf16.msra.mxu0 %v9083
    %9389 = vmatprep.subr.bf16.mxu0 0
    %9390 = vmatpush1.bf16.msra.mxu0 %v9084
    %9391 = vmatprep.subr.bf16.mxu0 0
    %9392 = vmatpush1.bf16.msra.mxu0 %v9085
    %9393 = vmatprep.mubr.bf16.mxu0 %v8560
    %9394 = vmatmul.mubr.bf16.gmra.mrb[0].mxu0 %v8559
    %v9395 = vpop.f32.mrb[0].mxu0
    %v9396 = vadd.f32 %v9331, %v9395
    %v9397 = vpop.f32.mrb[0].mxu0
    %v9398 = vpop.f32.mrb[0].mxu0
    %v9399 = vadd.f32 %v9334, %v9398
    %v9400 = vpop.f32.mrb[0].mxu0
    %9401 = vmatprep.mubr.bf16.mxu0 %v8569
    %9402 = vmatmul.mubr.bf16.gmra.mrb[0].mxu0 %v8568
    %v9403 = vpop.f32.mrb[0].mxu0
    %v9404 = vadd.f32 %v9339, %v9403
    %v9405 = vpop.f32.mrb[0].mxu0
    %v9406 = vpop.f32.mrb[0].mxu0
    %v9407 = vadd.f32 %v9342, %v9406
    %v9408 = vpop.f32.mrb[0].mxu0
    %9409 = vmatprep.mubr.bf16.mxu0 %v8578
    %9410 = vmatmul.mubr.bf16.gmra.mrb[0].mxu0 %v8577
    %v9411 = vpop.f32.mrb[0].mxu0
    %v9412 = vadd.f32 %v9347, %v9411
    %v9413 = vpop.f32.mrb[0].mxu0
    %v9414 = vpop.f32.mrb[0].mxu0
    %v9415 = vadd.f32 %v9350, %v9414
    %v9416 = vpop.f32.mrb[0].mxu0
    %9417 = vmatprep.mubr.bf16.mxu0 %v8587
    %9418 = vmatmul.mubr.bf16.gmra.mrb[0].mxu0 %v8586
    %v9419 = vpop.f32.mrb[0].mxu0
    %v9420 = vadd.f32 %v9355, %v9419
    %v9421 = vpop.f32.mrb[0].mxu0
    %v9422 = vpop.f32.mrb[0].mxu0
    %v9423 = vadd.f32 %v9358, %v9422
    %v9424 = vpop.f32.mrb[0].mxu0
    %9425 = vdwg.mxu0
    %9426 = vmatprep.subr.bf16.mxu0 0
    %9427 = vmatpush1.bf16.msra.mxu0 %v9086
    %9428 = vmatprep.subr.bf16.mxu0 0
    %9429 = vmatpush1.bf16.msra.mxu0 %v9087
    %9430 = vmatprep.subr.bf16.mxu0 0
    %9431 = vmatpush1.bf16.msra.mxu0 %v9088
    %9432 = vmatprep.subr.bf16.mxu0 0
    %9433 = vmatpush1.bf16.msra.mxu0 %v9089
    %9434 = vmatprep.subr.bf16.mxu0 0
    %9435 = vmatpush1.bf16.msra.mxu0 %v9090
    %9436 = vmatprep.subr.bf16.mxu0 0
    %9437 = vmatpush1.bf16.msra.mxu0 %v9091
    %9438 = vmatprep.subr.bf16.mxu0 0
    %9439 = vmatpush1.bf16.msra.mxu0 %v9092
    %9440 = vmatprep.subr.bf16.mxu0 0
    %9441 = vmatpush1.bf16.msra.mxu0 %v9093
    %9442 = vmatprep.subr.bf16.mxu0 0
    %9443 = vmatpush1.bf16.msra.mxu0 0
    %9444 = vmatprep.subr.bf16.mxu0 0
    %9445 = vmatpush1.bf16.msra.mxu0 0
    %9446 = vmatprep.subr.bf16.mxu0 0
    %9447 = vmatpush1.bf16.msra.mxu0 0
    %9448 = vmatprep.subr.bf16.mxu0 0
    %9449 = vmatpush1.bf16.msra.mxu0 0
    %9450 = vmatprep.subr.bf16.mxu0 0
    %9451 = vmatpush1.bf16.msra.mxu0 0
    %9452 = vmatprep.subr.bf16.mxu0 0
    %9453 = vmatpush1.bf16.msra.mxu0 0
    %9454 = vmatprep.subr.bf16.mxu0 0
    %9455 = vmatpush1.bf16.msra.mxu0 0
    %9456 = vmatprep.subr.bf16.mxu0 0
    %9457 = vmatpush1.bf16.msra.mxu0 0
    %9458 = vmatprep.mubr.bf16.mxu0 0
    %9459 = vmatmul.mubr.bf16.gmra.mrb[0].mxu0 %v8561
    %v9460 = vpop.f32.mrb[0].mxu0
    %v9461 = vadd.f32 %v9396, %v9460
    %v9462 = vpop.f32.mrb[0].mxu0
    %v9463 = vpop.f32.mrb[0].mxu0
    %v9464 = vadd.f32 %v9399, %v9463
    %v9465 = vpop.f32.mrb[0].mxu0
    %9466 = vmatprep.mubr.bf16.mxu0 0
    %9467 = vmatmul.mubr.bf16.gmra.mrb[0].mxu0 %v8570
    %v9468 = vpop.f32.mrb[0].mxu0
    %v9469 = vadd.f32 %v9404, %v9468
    %v9470 = vpop.f32.mrb[0].mxu0
    %v9471 = vpop.f32.mrb[0].mxu0
    %v9472 = vadd.f32 %v9407, %v9471
    %v9473 = vpop.f32.mrb[0].mxu0
    %9474 = vmatprep.mubr.bf16.mxu0 0
    %9475 = vmatmul.mubr.bf16.gmra.mrb[0].mxu0 %v8579
    %v9476 = vpop.f32.mrb[0].mxu0
    %v9477 = vadd.f32 %v9412, %v9476
    %v9478 = vpop.f32.mrb[0].mxu0
    %v9479 = vpop.f32.mrb[0].mxu0
    %v9480 = vadd.f32 %v9415, %v9479
    %v9481 = vpop.f32.mrb[0].mxu0
    %9482 = vmatprep.mubr.bf16.mxu0 0
    %9483 = vmatmul.mubr.bf16.gmra.mrb[0].mxu0 %v8588
    %v9484 = vpop.f32.mrb[0].mxu0
    %v9485 = vadd.f32 %v9420, %v9484
    %v9486 = vpop.f32.mrb[0].mxu0
    %v9487 = vpop.f32.mrb[0].mxu0
    %v9488 = vadd.f32 %v9423, %v9487
    %v9489 = vpop.f32.mrb[0].mxu0
    %9490 = vdwg.mxu0
    %v9491 = vadd.f32 %v9461, %v9464
    %v9492 = vadd.f32 %v9491, %v9469
    %v9493 = vadd.f32 %v9492, %v9472
    %v9494 = vadd.f32 %v9493, %v9477
    %v9495 = vadd.f32 %v9494, %v9480
    %v9496 = vadd.f32 %v9495, %v9485
    %v9497 = vadd.f32 %v9496, %v9488
    %v9498 = vrot.slane %v9497, 4
    %v9499 = vadd.f32 %v9497, %v9498
    %v9500 = vrot.slane %v9499, 2
    %v9501 = vadd.f32 %v9499, %v9500
    %v9502 = vrot.slane %v9501, 1
    %v9503 = vadd.f32 %v9501, %v9502
    %v9504 = vmul.f32 %v9461, %v9461
    %v9505 = vmul.f32 %v9464, %v9464
    %v9506 = vmul.f32 %v9469, %v9469
    %v9507 = vmul.f32 %v9472, %v9472
    %v9508 = vmul.f32 %v9477, %v9477
    %v9509 = vmul.f32 %v9480, %v9480
    %v9510 = vmul.f32 %v9485, %v9485
    %v9511 = vmul.f32 %v9488, %v9488
    %v9512 = vadd.f32 %v9504, %v9505
    %v9513 = vadd.f32 %v9512, %v9506
    %v9514 = vadd.f32 %v9513, %v9507
    %v9515 = vadd.f32 %v9514, %v9508
    %v9516 = vadd.f32 %v9515, %v9509
    %v9517 = vadd.f32 %v9516, %v9510
    %v9518 = vadd.f32 %v9517, %v9511
    %v9519 = vrot.slane %v9518, 4
    %v9520 = vadd.f32 %v9518, %v9519
    %v9521 = vrot.slane %v9520, 2
    %v9522 = vadd.f32 %v9520, %v9521
    %v9523 = vrot.slane %v9522, 1
    %v9524 = vadd.f32 %v9522, %v9523
    %v9525 = vmul.f32 %v9503, 0.015625
    %v9526 = vmul.f32 %v9524, 0.015625
    %v9527 = vmul.f32 %v9525, %v9525
    %v9528 = vsub.f32 %v9526, %v9527
    %v9529 = vsub.f32 %v9461, %v9525
    %v9530 = vsub.f32 %v9464, %v9525
    %v9531 = vsub.f32 %v9469, %v9525
    %v9532 = vsub.f32 %v9472, %v9525
    %v9533 = vsub.f32 %v9477, %v9525
    %v9534 = vsub.f32 %v9480, %v9525
    %v9535 = vsub.f32 %v9485, %v9525
    %v9536 = vsub.f32 %v9488, %v9525
    %v9537 = vadd.f32 %v9528, 1e-05
    %v9538 = vrsqrt.pop %v9537
    %v9539 = vmul.f32 %v9529, %v9538
    %v9540 = vmul.f32 %v9530, %v9538
    %v9541 = vmul.f32 %v9531, %v9538
    %v9542 = vmul.f32 %v9532, %v9538
    %v9543 = vmul.f32 %v9533, %v9538
    %v9544 = vmul.f32 %v9534, %v9538
    %v9545 = vmul.f32 %v9535, %v9538
    %v9546 = vmul.f32 %v9536, %v9538
    %s9547 = scalar_lea.vmem [#allocation8], 7
    %v9548 = vld [vmem:[%s9547] sm:$0x1]
    %v9550 = vlaneseq
    %v9551 = vshrl.u32 %v9550, 7
    %v9552 = vsub.s32 0, %v9551
    %v9553 = vrot.slane %v9548, %v9552
    %v9555 = vmul.f32 %v9553, %v9539
    %v9556 = vmul.f32 %v9553, %v9540
    %v9557 = vmul.f32 %v9553, %v9541
    %v9558 = vmul.f32 %v9553, %v9542
    %v9559 = vmul.f32 %v9553, %v9543
    %v9560 = vmul.f32 %v9553, %v9544
    %v9561 = vmul.f32 %v9553, %v9545
    %v9562 = vmul.f32 %v9553, %v9546
    %s9563 = scalar_lea.vmem [#allocation10], 7
    %v9564 = vld [vmem:[%s9563] sm:$0x1]
    %v9566 = vlaneseq
    %v9567 = vshrl.u32 %v9566, 7
    %v9568 = vsub.s32 0, %v9567
    %v9569 = vrot.slane %v9564, %v9568
    %v9571 = vadd.f32 %v9555, %v9569
    %v9572 = vadd.f32 %v9556, %v9569
    %v9573 = vadd.f32 %v9557, %v9569
    %v9574 = vadd.f32 %v9558, %v9569
    %v9575 = vadd.f32 %v9559, %v9569
    %v9576 = vadd.f32 %v9560, %v9569
    %v9577 = vadd.f32 %v9561, %v9569
    %v9578 = vadd.f32 %v9562, %v9569
    %v9579 = vmax.f32 %v9571, 0.0
    %v9580 = vmax.f32 %v9572, 0.0
    %v9581 = vmax.f32 %v9573, 0.0
    %v9582 = vmax.f32 %v9574, 0.0
    %v9583 = vmax.f32 %v9575, 0.0
    %v9584 = vmax.f32 %v9576, 0.0
    %v9585 = vmax.f32 %v9577, 0.0
    %v9586 = vmax.f32 %v9578, 0.0
    %v9587 = vadd.f32 %v9579, %v7319
    %v9588 = vadd.f32 %v9580, %v7320
    %v9589 = vadd.f32 %v9581, %v7321
    %v9590 = vadd.f32 %v9582, %v7322
    %v9591 = vadd.f32 %v9583, %v7323
    %v9592 = vadd.f32 %v9584, %v7324
    %v9593 = vadd.f32 %v9585, %v7325
    %v9594 = vadd.f32 %v9586, %v7326
    %v9595 = vrot.slane %v9587, 7
    %v9596 = vrot.slane %v9588, 7
    %v9597 = vrot.slane %v9589, 7
    %v9598 = vrot.slane %v9590, 7
    %v9599 = vrot.slane %v9591, 7
    %v9600 = vrot.slane %v9592, 7
    %v9601 = vrot.slane %v9593, 7
    %v9602 = vrot.slane %v9594, 7
    %v9603 = vsel %vm540, %v9601, %v9602
    %v9604 = vsel %vm540, %v9600, %v9601
    %v9605 = vsel %vm540, %v9599, %v9600
    %v9606 = vsel %vm540, %v9598, %v9599
    %v9607 = vsel %vm540, %v9597, %v9598
    %v9608 = vsel %vm540, %v9596, %v9597
    %v9609 = vsel %vm540, %v9595, %v9596
    %v9610 = vsel %vm540, %v9602, %v9595
    %v9611 = vmul.f32 %v9603, %v142
    %v9612 = vmul.f32 %v9610, %v147
    %v9613 = vmul.f32 %v9609, %v152
    %v9614 = vmul.f32 %v9608, %v157
    %v9615 = vmul.f32 %v9607, %v162
    %v9616 = vmul.f32 %v9606, %v167
    %v9617 = vmul.f32 %v9605, %v172
    %v9618 = vmul.f32 %v9604, %v177
    %v9619 = vmul.f32 %v9594, %v191
    %v9620 = vmul.f32 %v9587, %v196
    %v9621 = vmul.f32 %v9588, %v201
    %v9622 = vmul.f32 %v9589, %v206
    %v9623 = vmul.f32 %v9590, %v211
    %v9624 = vmul.f32 %v9591, %v216
    %v9625 = vmul.f32 %v9592, %v221
    %v9626 = vmul.f32 %v9593, %v226
    %v9627 = vrot.slane %v9587, 1
    %v9628 = vrot.slane %v9588, 1
    %v9629 = vrot.slane %v9589, 1
    %v9630 = vrot.slane %v9590, 1
    %v9631 = vrot.slane %v9591, 1
    %v9632 = vrot.slane %v9592, 1
    %v9633 = vrot.slane %v9593, 1
    %v9634 = vrot.slane %v9594, 1
    %v9635 = vsel %vm573, %v9633, %v9634
    %v9636 = vsel %vm573, %v9632, %v9633
    %v9637 = vsel %vm573, %v9631, %v9632
    %v9638 = vsel %vm573, %v9630, %v9631
    %v9639 = vsel %vm573, %v9629, %v9630
    %v9640 = vsel %vm573, %v9628, %v9629
    %v9641 = vsel %vm573, %v9627, %v9628
    %v9642 = vsel %vm573, %v9634, %v9627
    %v9643 = vmul.f32 %v9642, %v240
    %v9644 = vmul.f32 %v9641, %v245
    %v9645 = vmul.f32 %v9640, %v250
    %v9646 = vmul.f32 %v9639, %v255
    %v9647 = vmul.f32 %v9638, %v260
    %v9648 = vmul.f32 %v9637, %v265
    %v9649 = vmul.f32 %v9636, %v270
    %v9650 = vmul.f32 %v9635, %v275
    %v9651 = vmul.f32 %v9610, %v289
    %v9652 = vmul.f32 %v9609, %v294
    %v9653 = vmul.f32 %v9608, %v299
    %v9654 = vmul.f32 %v9607, %v304
    %v9655 = vmul.f32 %v9606, %v309
    %v9656 = vmul.f32 %v9605, %v314
    %v9657 = vmul.f32 %v9604, %v319
    %v9658 = vmul.f32 %v9603, %v324
    %v9659 = vmul.f32 %v9641, %v338
    %v9660 = vmul.f32 %v9640, %v343
    %v9661 = vmul.f32 %v9639, %v348
    %v9662 = vmul.f32 %v9638, %v353
    %v9663 = vmul.f32 %v9637, %v358
    %v9664 = vmul.f32 %v9636, %v363
    %v9665 = vmul.f32 %v9635, %v368
    %v9666 = vmul.f32 %v9642, %v373
    %v9667 = vmul.f32 %v9609, %v387
    %v9668 = vmul.f32 %v9608, %v392
    %v9669 = vmul.f32 %v9607, %v397
    %v9670 = vmul.f32 %v9606, %v402
    %v9671 = vmul.f32 %v9605, %v407
    %v9672 = vmul.f32 %v9604, %v412
    %v9673 = vmul.f32 %v9603, %v417
    %v9674 = vmul.f32 %v9610, %v422
    %v9675 = vmul.f32 %v9588, %v436
    %v9676 = vmul.f32 %v9589, %v441
    %v9677 = vmul.f32 %v9590, %v446
    %v9678 = vmul.f32 %v9591, %v451
    %v9679 = vmul.f32 %v9592, %v456
    %v9680 = vmul.f32 %v9593, %v461
    %v9681 = vmul.f32 %v9594, %v466
    %v9682 = vmul.f32 %v9587, %v471
    %v9683 = vmul.f32 %v9640, %v485
    %v9684 = vmul.f32 %v9639, %v490
    %v9685 = vmul.f32 %v9638, %v495
    %v9686 = vmul.f32 %v9637, %v500
    %v9687 = vmul.f32 %v9636, %v505
    %v9688 = vmul.f32 %v9635, %v510
    %v9689 = vmul.f32 %v9642, %v515
    %v9690 = vmul.f32 %v9641, %v520
    %v9691 = vpack.c.bf16 %v9612, %v9611
    %v9692 = vpack.c.bf16 %v9620, %v9619
    %v9693 = vpack.c.bf16 %v9644, %v9643
    %v9694 = vpack.c.bf16 %v9652, %v9651
    %v9695 = vpack.c.bf16 %v9588, %v9587
    %v9696 = vpack.c.bf16 %v9660, %v9659
    %v9697 = vpack.c.bf16 %v9668, %v9667
    %v9698 = vpack.c.bf16 %v9676, %v9675
    %v9699 = vpack.c.bf16 %v9684, %v9683
    %v9700 = vpack.c.bf16 %v9614, %v9613
    %v9701 = vpack.c.bf16 %v9622, %v9621
    %v9702 = vpack.c.bf16 %v9646, %v9645
    %v9703 = vpack.c.bf16 %v9654, %v9653
    %v9704 = vpack.c.bf16 %v9590, %v9589
    %v9705 = vpack.c.bf16 %v9662, %v9661
    %v9706 = vpack.c.bf16 %v9670, %v9669
    %v9707 = vpack.c.bf16 %v9678, %v9677
    %v9708 = vpack.c.bf16 %v9686, %v9685
    %v9709 = vpack.c.bf16 %v9616, %v9615
    %v9710 = vpack.c.bf16 %v9624, %v9623
    %v9711 = vpack.c.bf16 %v9648, %v9647
    %v9712 = vpack.c.bf16 %v9656, %v9655
    %v9713 = vpack.c.bf16 %v9592, %v9591
    %v9714 = vpack.c.bf16 %v9664, %v9663
    %v9715 = vpack.c.bf16 %v9672, %v9671
    %v9716 = vpack.c.bf16 %v9680, %v9679
    %v9717 = vpack.c.bf16 %v9688, %v9687
    %v9718 = vpack.c.bf16 %v9618, %v9617
    %v9719 = vpack.c.bf16 %v9626, %v9625
    %v9720 = vpack.c.bf16 %v9650, %v9649
    %v9721 = vpack.c.bf16 %v9658, %v9657
    %v9722 = vpack.c.bf16 %v9594, %v9593
    %v9723 = vpack.c.bf16 %v9666, %v9665
    %v9724 = vpack.c.bf16 %v9674, %v9673
    %v9725 = vpack.c.bf16 %v9682, %v9681
    %v9726 = vpack.c.bf16 %v9690, %v9689
    %s9727 = scalar_lea.vmem [#allocation5], 4608
    %v9728 = vld [vmem:[%s9727] sm:$0xf]
    %v9729 = vld [vmem:[%s9727 + $0x4] sm:$0xf]
    %v9730 = vld [vmem:[%s9727 + $0x8] sm:$0xf]
    %v9731 = vld [vmem:[%s9727 + $0xc] sm:$0xf]
    %v9732 = vld [vmem:[%s9727 + $0x10] sm:$0xf]
    %v9733 = vld [vmem:[%s9727 + $0x14] sm:$0xf]
    %v9734 = vld [vmem:[%s9727 + $0x18] sm:$0xf]
    %v9735 = vld [vmem:[%s9727 + $0x1c] sm:$0xf]
    %v9736 = vld [vmem:[%s9727 + $0x20] sm:$0xf]
    %v9737 = vld [vmem:[%s9727 + $0x24] sm:$0xf]
    %v9738 = vld [vmem:[%s9727 + $0x28] sm:$0xf]
    %v9739 = vld [vmem:[%s9727 + $0x2c] sm:$0xf]
    %v9740 = vld [vmem:[%s9727 + $0x30] sm:$0xf]
    %v9741 = vld [vmem:[%s9727 + $0x34] sm:$0xf]
    %v9742 = vld [vmem:[%s9727 + $0x38] sm:$0xf]
    %v9743 = vld [vmem:[%s9727 + $0x3c] sm:$0xf]
    %v9744 = vld [vmem:[%s9727 + $0x40] sm:$0xf]
    %v9745 = vld [vmem:[%s9727 + $0x44] sm:$0xf]
    %v9746 = vld [vmem:[%s9727 + $0x48] sm:$0xf]
    %v9747 = vld [vmem:[%s9727 + $0x4c] sm:$0xf]
    %v9748 = vld [vmem:[%s9727 + $0x50] sm:$0xf]
    %v9749 = vld [vmem:[%s9727 + $0x54] sm:$0xf]
    %v9750 = vld [vmem:[%s9727 + $0x58] sm:$0xf]
    %v9751 = vld [vmem:[%s9727 + $0x5c] sm:$0xf]
    %v9752 = vld [vmem:[%s9727 + $0x60] sm:$0xf]
    %v9753 = vld [vmem:[%s9727 + $0x64] sm:$0xf]
    %v9754 = vld [vmem:[%s9727 + $0x68] sm:$0xf]
    %v9755 = vld [vmem:[%s9727 + $0x6c] sm:$0xf]
    %v9756 = vld [vmem:[%s9727 + $0x70] sm:$0xf]
    %v9757 = vld [vmem:[%s9727 + $0x74] sm:$0xf]
    %v9758 = vld [vmem:[%s9727 + $0x78] sm:$0xf]
    %v9759 = vld [vmem:[%s9727 + $0x7c] sm:$0xf]
    %v9760 = vld [vmem:[%s9727 + $0x80] sm:$0xf]
    %v9761 = vld [vmem:[%s9727 + $0x84] sm:$0xf]
    %v9762 = vld [vmem:[%s9727 + $0x88] sm:$0xf]
    %v9763 = vld [vmem:[%s9727 + $0x8c] sm:$0xf]
    %v9764 = vld [vmem:[%s9727 + $0x90] sm:$0xf]
    %v9765 = vld [vmem:[%s9727 + $0x94] sm:$0xf]
    %v9766 = vld [vmem:[%s9727 + $0x98] sm:$0xf]
    %v9767 = vld [vmem:[%s9727 + $0x9c] sm:$0xf]
    %v9768 = vld [vmem:[%s9727 + $0xa0] sm:$0xf]
    %v9769 = vld [vmem:[%s9727 + $0xa4] sm:$0xf]
    %v9770 = vld [vmem:[%s9727 + $0xa8] sm:$0xf]
    %v9771 = vld [vmem:[%s9727 + $0xac] sm:$0xf]
    %v9772 = vld [vmem:[%s9727 + $0xb0] sm:$0xf]
    %v9773 = vld [vmem:[%s9727 + $0xb4] sm:$0xf]
    %v9774 = vld [vmem:[%s9727 + $0xb8] sm:$0xf]
    %v9775 = vld [vmem:[%s9727 + $0xbc] sm:$0xf]
    %v9776 = vld [vmem:[%s9727 + $0xc0] sm:$0xf]
    %v9777 = vld [vmem:[%s9727 + $0xc4] sm:$0xf]
    %v9778 = vld [vmem:[%s9727 + $0xc8] sm:$0xf]
    %v9779 = vld [vmem:[%s9727 + $0xcc] sm:$0xf]
    %v9780 = vld [vmem:[%s9727 + $0xd0] sm:$0xf]
    %v9781 = vld [vmem:[%s9727 + $0xd4] sm:$0xf]
    %v9782 = vld [vmem:[%s9727 + $0xd8] sm:$0xf]
    %v9783 = vld [vmem:[%s9727 + $0xdc] sm:$0xf]
    %v9784 = vld [vmem:[%s9727 + $0xe0] sm:$0xf]
    %v9785 = vld [vmem:[%s9727 + $0xe4] sm:$0xf]
    %v9786 = vld [vmem:[%s9727 + $0xe8] sm:$0xf]
    %v9787 = vld [vmem:[%s9727 + $0xec] sm:$0xf]
    %v9788 = vld [vmem:[%s9727 + $0xf0] sm:$0xf]
    %v9789 = vld [vmem:[%s9727 + $0xf4] sm:$0xf]
    %v9790 = vld [vmem:[%s9727 + $0xf8] sm:$0xf]
    %v9791 = vld [vmem:[%s9727 + $0xfc] sm:$0xf]
    %v9792 = vld [vmem:[%s9727 + $0x100] sm:$0xf]
    %v9793 = vld [vmem:[%s9727 + $0x104] sm:$0xf]
    %v9794 = vld [vmem:[%s9727 + $0x108] sm:$0xf]
    %v9795 = vld [vmem:[%s9727 + $0x10c] sm:$0xf]
    %v9796 = vld [vmem:[%s9727 + $0x110] sm:$0xf]
    %v9797 = vld [vmem:[%s9727 + $0x114] sm:$0xf]
    %v9798 = vld [vmem:[%s9727 + $0x118] sm:$0xf]
    %v9799 = vld [vmem:[%s9727 + $0x11c] sm:$0xf]
    %v9800 = vld [vmem:[%s9727 + $0x120] sm:$0xf]
    %v9801 = vld [vmem:[%s9727 + $0x124] sm:$0xf]
    %v9802 = vld [vmem:[%s9727 + $0x128] sm:$0xf]
    %v9803 = vld [vmem:[%s9727 + $0x12c] sm:$0xf]
    %v9804 = vld [vmem:[%s9727 + $0x130] sm:$0xf]
    %v9805 = vld [vmem:[%s9727 + $0x134] sm:$0xf]
    %v9806 = vld [vmem:[%s9727 + $0x138] sm:$0xf]
    %v9807 = vld [vmem:[%s9727 + $0x13c] sm:$0xf]
    %v9808 = vld [vmem:[%s9727 + $0x140] sm:$0xf]
    %v9809 = vld [vmem:[%s9727 + $0x144] sm:$0xf]
    %v9810 = vld [vmem:[%s9727 + $0x148] sm:$0xf]
    %v9811 = vld [vmem:[%s9727 + $0x14c] sm:$0xf]
    %v9812 = vld [vmem:[%s9727 + $0x150] sm:$0xf]
    %v9813 = vld [vmem:[%s9727 + $0x154] sm:$0xf]
    %v9814 = vld [vmem:[%s9727 + $0x158] sm:$0xf]
    %v9815 = vld [vmem:[%s9727 + $0x15c] sm:$0xf]
    %v9816 = vld [vmem:[%s9727 + $0x160] sm:$0xf]
    %v9817 = vld [vmem:[%s9727 + $0x164] sm:$0xf]
    %v9818 = vld [vmem:[%s9727 + $0x168] sm:$0xf]
    %v9819 = vld [vmem:[%s9727 + $0x16c] sm:$0xf]
    %v9820 = vld [vmem:[%s9727 + $0x170] sm:$0xf]
    %v9821 = vld [vmem:[%s9727 + $0x174] sm:$0xf]
    %v9822 = vld [vmem:[%s9727 + $0x178] sm:$0xf]
    %v9823 = vld [vmem:[%s9727 + $0x17c] sm:$0xf]
    %v9824 = vld [vmem:[%s9727 + $0x180] sm:$0xf]
    %v9825 = vld [vmem:[%s9727 + $0x184] sm:$0xf]
    %v9826 = vld [vmem:[%s9727 + $0x188] sm:$0xf]
    %v9827 = vld [vmem:[%s9727 + $0x18c] sm:$0xf]
    %v9828 = vld [vmem:[%s9727 + $0x190] sm:$0xf]
    %v9829 = vld [vmem:[%s9727 + $0x194] sm:$0xf]
    %v9830 = vld [vmem:[%s9727 + $0x198] sm:$0xf]
    %v9831 = vld [vmem:[%s9727 + $0x19c] sm:$0xf]
    %v9832 = vld [vmem:[%s9727 + $0x1a0] sm:$0xf]
    %v9833 = vld [vmem:[%s9727 + $0x1a4] sm:$0xf]
    %v9834 = vld [vmem:[%s9727 + $0x1a8] sm:$0xf]
    %v9835 = vld [vmem:[%s9727 + $0x1ac] sm:$0xf]
    %v9836 = vld [vmem:[%s9727 + $0x1b0] sm:$0xf]
    %v9837 = vld [vmem:[%s9727 + $0x1b4] sm:$0xf]
    %v9838 = vld [vmem:[%s9727 + $0x1b8] sm:$0xf]
    %v9839 = vld [vmem:[%s9727 + $0x1bc] sm:$0xf]
    %v9840 = vld [vmem:[%s9727 + $0x1c0] sm:$0xf]
    %v9841 = vld [vmem:[%s9727 + $0x1c4] sm:$0xf]
    %v9842 = vld [vmem:[%s9727 + $0x1c8] sm:$0xf]
    %v9843 = vld [vmem:[%s9727 + $0x1cc] sm:$0xf]
    %v9844 = vld [vmem:[%s9727 + $0x1d0] sm:$0xf]
    %v9845 = vld [vmem:[%s9727 + $0x1d4] sm:$0xf]
    %v9846 = vld [vmem:[%s9727 + $0x1d8] sm:$0xf]
    %v9847 = vld [vmem:[%s9727 + $0x1dc] sm:$0xf]
    %v9848 = vld [vmem:[%s9727 + $0x1e0] sm:$0xf]
    %v9849 = vld [vmem:[%s9727 + $0x1e4] sm:$0xf]
    %v9850 = vld [vmem:[%s9727 + $0x1e8] sm:$0xf]
    %v9851 = vld [vmem:[%s9727 + $0x1ec] sm:$0xf]
    %v9852 = vld [vmem:[%s9727 + $0x1f0] sm:$0xf]
    %v9853 = vld [vmem:[%s9727 + $0x1f4] sm:$0xf]
    %v9854 = vld [vmem:[%s9727 + $0x1f8] sm:$0xf]
    %v9855 = vld [vmem:[%s9727 + $0x1fc] sm:$0xf]
    %v9856 = vld [vmem:[%s9727 + $0x200] sm:$0xf]
    %v9857 = vld [vmem:[%s9727 + $0x204] sm:$0xf]
    %v9858 = vld [vmem:[%s9727 + $0x208] sm:$0xf]
    %v9859 = vld [vmem:[%s9727 + $0x20c] sm:$0xf]
    %v9860 = vld [vmem:[%s9727 + $0x210] sm:$0xf]
    %v9861 = vld [vmem:[%s9727 + $0x214] sm:$0xf]
    %v9862 = vld [vmem:[%s9727 + $0x218] sm:$0xf]
    %v9863 = vld [vmem:[%s9727 + $0x21c] sm:$0xf]
    %v9864 = vld [vmem:[%s9727 + $0x220] sm:$0xf]
    %v9865 = vld [vmem:[%s9727 + $0x224] sm:$0xf]
    %v9866 = vld [vmem:[%s9727 + $0x228] sm:$0xf]
    %v9867 = vld [vmem:[%s9727 + $0x22c] sm:$0xf]
    %v9868 = vld [vmem:[%s9727 + $0x230] sm:$0xf]
    %v9869 = vld [vmem:[%s9727 + $0x234] sm:$0xf]
    %v9870 = vld [vmem:[%s9727 + $0x238] sm:$0xf]
    %v9871 = vld [vmem:[%s9727 + $0x23c] sm:$0xf]
    %v10016 = vunpack.c.l.b16 %v9728
    %v10017 = vunpack.c.l.b16 %v9729
    %v10018 = vunpack.c.l.b16 %v9730
    %v10019 = vunpack.c.l.b16 %v9731
    %v10020 = vunpack.c.l.b16 %v9732
    %v10021 = vunpack.c.l.b16 %v9733
    %v10022 = vunpack.c.l.b16 %v9734
    %v10023 = vunpack.c.l.b16 %v9735
    %v10024 = vunpack.c.l.b16 %v9736
    %v10025 = vunpack.c.l.b16 %v9737
    %v10026 = vunpack.c.l.b16 %v9738
    %v10027 = vunpack.c.l.b16 %v9739
    %v10028 = vunpack.c.l.b16 %v9740
    %v10029 = vunpack.c.l.b16 %v9741
    %v10030 = vunpack.c.l.b16 %v9742
    %v10031 = vunpack.c.l.b16 %v9743
    %v10032 = vunpack.c.l.b16 %v9744
    %v10033 = vunpack.c.l.b16 %v9745
    %v10034 = vunpack.c.l.b16 %v9746
    %v10035 = vunpack.c.l.b16 %v9747
    %v10036 = vunpack.c.l.b16 %v9748
    %v10037 = vunpack.c.l.b16 %v9749
    %v10038 = vunpack.c.l.b16 %v9750
    %v10039 = vunpack.c.l.b16 %v9751
    %v10040 = vunpack.c.l.b16 %v9752
    %v10041 = vunpack.c.l.b16 %v9753
    %v10042 = vunpack.c.l.b16 %v9754
    %v10043 = vunpack.c.l.b16 %v9755
    %v10044 = vunpack.c.l.b16 %v9756
    %v10045 = vunpack.c.l.b16 %v9757
    %v10046 = vunpack.c.l.b16 %v9758
    %v10047 = vunpack.c.l.b16 %v9759
    %v10048 = vunpack.c.l.b16 %v9760
    %v10049 = vunpack.c.l.b16 %v9761
    %v10050 = vunpack.c.l.b16 %v9762
    %v10051 = vunpack.c.l.b16 %v9763
    %v10052 = vunpack.c.l.b16 %v9764
    %v10053 = vunpack.c.l.b16 %v9765
    %v10054 = vunpack.c.l.b16 %v9766
    %v10055 = vunpack.c.l.b16 %v9767
    %v10056 = vunpack.c.l.b16 %v9768
    %v10057 = vunpack.c.l.b16 %v9769
    %v10058 = vunpack.c.l.b16 %v9770
    %v10059 = vunpack.c.l.b16 %v9771
    %v10060 = vunpack.c.l.b16 %v9772
    %v10061 = vunpack.c.l.b16 %v9773
    %v10062 = vunpack.c.l.b16 %v9774
    %v10063 = vunpack.c.l.b16 %v9775
    %v10064 = vunpack.c.l.b16 %v9776
    %v10065 = vunpack.c.l.b16 %v9777
    %v10066 = vunpack.c.l.b16 %v9778
    %v10067 = vunpack.c.l.b16 %v9779
    %v10068 = vunpack.c.l.b16 %v9780
    %v10069 = vunpack.c.l.b16 %v9781
    %v10070 = vunpack.c.l.b16 %v9782
    %v10071 = vunpack.c.l.b16 %v9783
    %v10072 = vunpack.c.l.b16 %v9784
    %v10073 = vunpack.c.l.b16 %v9785
    %v10074 = vunpack.c.l.b16 %v9786
    %v10075 = vunpack.c.l.b16 %v9787
    %v10076 = vunpack.c.l.b16 %v9788
    %v10077 = vunpack.c.l.b16 %v9789
    %v10078 = vunpack.c.l.b16 %v9790
    %v10079 = vunpack.c.l.b16 %v9791
    %v10080 = vunpack.c.l.b16 %v9792
    %v10081 = vunpack.c.l.b16 %v9793
    %v10082 = vunpack.c.l.b16 %v9794
    %v10083 = vunpack.c.l.b16 %v9795
    %v10084 = vunpack.c.l.b16 %v9796
    %v10085 = vunpack.c.l.b16 %v9797
    %v10086 = vunpack.c.l.b16 %v9798
    %v10087 = vunpack.c.l.b16 %v9799
    %v10088 = vunpack.c.l.b16 %v9800
    %v10089 = vunpack.c.l.b16 %v9801
    %v10090 = vunpack.c.l.b16 %v9802
    %v10091 = vunpack.c.l.b16 %v9803
    %v10092 = vunpack.c.l.b16 %v9804
    %v10093 = vunpack.c.l.b16 %v9805
    %v10094 = vunpack.c.l.b16 %v9806
    %v10095 = vunpack.c.l.b16 %v9807
    %v10096 = vunpack.c.l.b16 %v9808
    %v10097 = vunpack.c.l.b16 %v9809
    %v10098 = vunpack.c.l.b16 %v9810
    %v10099 = vunpack.c.l.b16 %v9811
    %v10100 = vunpack.c.l.b16 %v9812
    %v10101 = vunpack.c.l.b16 %v9813
    %v10102 = vunpack.c.l.b16 %v9814
    %v10103 = vunpack.c.l.b16 %v9815
    %v10104 = vunpack.c.l.b16 %v9816
    %v10105 = vunpack.c.l.b16 %v9817
    %v10106 = vunpack.c.l.b16 %v9818
    %v10107 = vunpack.c.l.b16 %v9819
    %v10108 = vunpack.c.l.b16 %v9820
    %v10109 = vunpack.c.l.b16 %v9821
    %v10110 = vunpack.c.l.b16 %v9822
    %v10111 = vunpack.c.l.b16 %v9823
    %v10112 = vunpack.c.l.b16 %v9824
    %v10113 = vunpack.c.l.b16 %v9825
    %v10114 = vunpack.c.l.b16 %v9826
    %v10115 = vunpack.c.l.b16 %v9827
    %v10116 = vunpack.c.l.b16 %v9828
    %v10117 = vunpack.c.l.b16 %v9829
    %v10118 = vunpack.c.l.b16 %v9830
    %v10119 = vunpack.c.l.b16 %v9831
    %v10120 = vunpack.c.l.b16 %v9832
    %v10121 = vunpack.c.l.b16 %v9833
    %v10122 = vunpack.c.l.b16 %v9834
    %v10123 = vunpack.c.l.b16 %v9835
    %v10124 = vunpack.c.l.b16 %v9836
    %v10125 = vunpack.c.l.b16 %v9837
    %v10126 = vunpack.c.l.b16 %v9838
    %v10127 = vunpack.c.l.b16 %v9839
    %v10128 = vunpack.c.l.b16 %v9840
    %v10129 = vunpack.c.l.b16 %v9841
    %v10130 = vunpack.c.l.b16 %v9842
    %v10131 = vunpack.c.l.b16 %v9843
    %v10132 = vunpack.c.l.b16 %v9844
    %v10133 = vunpack.c.l.b16 %v9845
    %v10134 = vunpack.c.l.b16 %v9846
    %v10135 = vunpack.c.l.b16 %v9847
    %v10136 = vunpack.c.l.b16 %v9848
    %v10137 = vunpack.c.l.b16 %v9849
    %v10138 = vunpack.c.l.b16 %v9850
    %v10139 = vunpack.c.l.b16 %v9851
    %v10140 = vunpack.c.l.b16 %v9852
    %v10141 = vunpack.c.l.b16 %v9853
    %v10142 = vunpack.c.l.b16 %v9854
    %v10143 = vunpack.c.l.b16 %v9855
    %v10144 = vunpack.c.l.b16 %v9856
    %v10145 = vunpack.c.l.b16 %v9857
    %v10146 = vunpack.c.l.b16 %v9858
    %v10147 = vunpack.c.l.b16 %v9859
    %v10148 = vunpack.c.l.b16 %v9860
    %v10149 = vunpack.c.l.b16 %v9861
    %v10150 = vunpack.c.l.b16 %v9862
    %v10151 = vunpack.c.l.b16 %v9863
    %v10152 = vunpack.c.l.b16 %v9864
    %v10153 = vunpack.c.l.b16 %v9865
    %v10154 = vunpack.c.l.b16 %v9866
    %v10155 = vunpack.c.l.b16 %v9867
    %v10156 = vunpack.c.l.b16 %v9868
    %v10157 = vunpack.c.l.b16 %v9869
    %v10158 = vunpack.c.l.b16 %v9870
    %v10159 = vunpack.c.l.b16 %v9871
    %v10160 = vpack.c.b16 %v10017, %v10016
    %v10161 = vpack.c.b16 %v10019, %v10018
    %v10162 = vpack.c.b16 %v10021, %v10020
    %v10163 = vpack.c.b16 %v10023, %v10022
    %v10164 = vpack.c.b16 %v10025, %v10024
    %v10165 = vpack.c.b16 %v10027, %v10026
    %v10166 = vpack.c.b16 %v10029, %v10028
    %v10167 = vpack.c.b16 %v10031, %v10030
    %v10168 = vpack.c.b16 %v10033, %v10032
    %v10169 = vpack.c.b16 %v10035, %v10034
    %v10170 = vpack.c.b16 %v10037, %v10036
    %v10171 = vpack.c.b16 %v10039, %v10038
    %v10172 = vpack.c.b16 %v10041, %v10040
    %v10173 = vpack.c.b16 %v10043, %v10042
    %v10174 = vpack.c.b16 %v10045, %v10044
    %v10175 = vpack.c.b16 %v10047, %v10046
    %v10176 = vpack.c.b16 %v10049, %v10048
    %v10177 = vpack.c.b16 %v10051, %v10050
    %v10178 = vpack.c.b16 %v10053, %v10052
    %v10179 = vpack.c.b16 %v10055, %v10054
    %v10180 = vpack.c.b16 %v10057, %v10056
    %v10181 = vpack.c.b16 %v10059, %v10058
    %v10182 = vpack.c.b16 %v10061, %v10060
    %v10183 = vpack.c.b16 %v10063, %v10062
    %v10184 = vpack.c.b16 %v10065, %v10064
    %v10185 = vpack.c.b16 %v10067, %v10066
    %v10186 = vpack.c.b16 %v10069, %v10068
    %v10187 = vpack.c.b16 %v10071, %v10070
    %v10188 = vpack.c.b16 %v10073, %v10072
    %v10189 = vpack.c.b16 %v10075, %v10074
    %v10190 = vpack.c.b16 %v10077, %v10076
    %v10191 = vpack.c.b16 %v10079, %v10078
    %v10192 = vpack.c.b16 %v10081, %v10080
    %v10193 = vpack.c.b16 %v10083, %v10082
    %v10194 = vpack.c.b16 %v10085, %v10084
    %v10195 = vpack.c.b16 %v10087, %v10086
    %v10196 = vpack.c.b16 %v10089, %v10088
    %v10197 = vpack.c.b16 %v10091, %v10090
    %v10198 = vpack.c.b16 %v10093, %v10092
    %v10199 = vpack.c.b16 %v10095, %v10094
    %v10200 = vpack.c.b16 %v10097, %v10096
    %v10201 = vpack.c.b16 %v10099, %v10098
    %v10202 = vpack.c.b16 %v10101, %v10100
    %v10203 = vpack.c.b16 %v10103, %v10102
    %v10204 = vpack.c.b16 %v10105, %v10104
    %v10205 = vpack.c.b16 %v10107, %v10106
    %v10206 = vpack.c.b16 %v10109, %v10108
    %v10207 = vpack.c.b16 %v10111, %v10110
    %v10208 = vpack.c.b16 %v10113, %v10112
    %v10209 = vpack.c.b16 %v10115, %v10114
    %v10210 = vpack.c.b16 %v10117, %v10116
    %v10211 = vpack.c.b16 %v10119, %v10118
    %v10212 = vpack.c.b16 %v10121, %v10120
    %v10213 = vpack.c.b16 %v10123, %v10122
    %v10214 = vpack.c.b16 %v10125, %v10124
    %v10215 = vpack.c.b16 %v10127, %v10126
    %v10216 = vpack.c.b16 %v10129, %v10128
    %v10217 = vpack.c.b16 %v10131, %v10130
    %v10218 = vpack.c.b16 %v10133, %v10132
    %v10219 = vpack.c.b16 %v10135, %v10134
    %v10220 = vpack.c.b16 %v10137, %v10136
    %v10221 = vpack.c.b16 %v10139, %v10138
    %v10222 = vpack.c.b16 %v10141, %v10140
    %v10223 = vpack.c.b16 %v10143, %v10142
    %v10224 = vpack.c.b16 %v10145, %v10144
    %v10225 = vpack.c.b16 %v10147, %v10146
    %v10226 = vpack.c.b16 %v10149, %v10148
    %v10227 = vpack.c.b16 %v10151, %v10150
    %v10228 = vpack.c.b16 %v10153, %v10152
    %v10229 = vpack.c.b16 %v10155, %v10154
    %v10230 = vpack.c.b16 %v10157, %v10156
    %v10231 = vpack.c.b16 %v10159, %v10158
    %10304 = vmatprep.subr.bf16.mxu0 0
    %10305 = vmatpush1.bf16.msra.mxu0 %v10160
    %10306 = vmatprep.subr.bf16.mxu0 0
    %10307 = vmatpush1.bf16.msra.mxu0 %v10161
    %10308 = vmatprep.subr.bf16.mxu0 0
    %10309 = vmatpush1.bf16.msra.mxu0 %v10162
    %10310 = vmatprep.subr.bf16.mxu0 0
    %10311 = vmatpush1.bf16.msra.mxu0 %v10163
    %10312 = vmatprep.subr.bf16.mxu0 0
    %10313 = vmatpush1.bf16.msra.mxu0 %v10164
    %10314 = vmatprep.subr.bf16.mxu0 0
    %10315 = vmatpush1.bf16.msra.mxu0 %v10165
    %10316 = vmatprep.subr.bf16.mxu0 0
    %10317 = vmatpush1.bf16.msra.mxu0 %v10166
    %10318 = vmatprep.subr.bf16.mxu0 0
    %10319 = vmatpush1.bf16.msra.mxu0 %v10167
    %10320 = vmatprep.subr.bf16.mxu0 0
    %10321 = vmatpush1.bf16.msra.mxu0 %v10168
    %10322 = vmatprep.subr.bf16.mxu0 0
    %10323 = vmatpush1.bf16.msra.mxu0 %v10169
    %10324 = vmatprep.subr.bf16.mxu0 0
    %10325 = vmatpush1.bf16.msra.mxu0 %v10170
    %10326 = vmatprep.subr.bf16.mxu0 0
    %10327 = vmatpush1.bf16.msra.mxu0 %v10171
    %10328 = vmatprep.subr.bf16.mxu0 0
    %10329 = vmatpush1.bf16.msra.mxu0 %v10172
    %10330 = vmatprep.subr.bf16.mxu0 0
    %10331 = vmatpush1.bf16.msra.mxu0 %v10173
    %10332 = vmatprep.subr.bf16.mxu0 0
    %10333 = vmatpush1.bf16.msra.mxu0 %v10174
    %10334 = vmatprep.subr.bf16.mxu0 0
    %10335 = vmatpush1.bf16.msra.mxu0 %v10175
    %10336 = vmatprep.mubr.bf16.mxu0 %v9692
    %10337 = vmatmul.mubr.bf16.gmra.mrb[0].mxu0 %v9691
    %v10338 = vpop.f32.mrb[0].mxu0
    %v10339 = vadd.f32 0.0, %v10338
    %v10340 = vpop.f32.mrb[0].mxu0
    %v10341 = vpop.f32.mrb[0].mxu0
    %v10342 = vadd.f32 0.0, %v10341
    %v10343 = vpop.f32.mrb[0].mxu0
    %10344 = vmatprep.mubr.bf16.mxu0 %v9701
    %10345 = vmatmul.mubr.bf16.gmra.mrb[0].mxu0 %v9700
    %v10346 = vpop.f32.mrb[0].mxu0
    %v10347 = vadd.f32 0.0, %v10346
    %v10348 = vpop.f32.mrb[0].mxu0
    %v10349 = vpop.f32.mrb[0].mxu0
    %v10350 = vadd.f32 0.0, %v10349
    %v10351 = vpop.f32.mrb[0].mxu0
    %10352 = vmatprep.mubr.bf16.mxu0 %v9710
    %10353 = vmatmul.mubr.bf16.gmra.mrb[0].mxu0 %v9709
    %v10354 = vpop.f32.mrb[0].mxu0
    %v10355 = vadd.f32 0.0, %v10354
    %v10356 = vpop.f32.mrb[0].mxu0
    %v10357 = vpop.f32.mrb[0].mxu0
    %v10358 = vadd.f32 0.0, %v10357
    %v10359 = vpop.f32.mrb[0].mxu0
    %10360 = vmatprep.mubr.bf16.mxu0 %v9719
    %10361 = vmatmul.mubr.bf16.gmra.mrb[0].mxu0 %v9718
    %v10362 = vpop.f32.mrb[0].mxu0
    %v10363 = vadd.f32 0.0, %v10362
    %v10364 = vpop.f32.mrb[0].mxu0
    %v10365 = vpop.f32.mrb[0].mxu0
    %v10366 = vadd.f32 0.0, %v10365
    %v10367 = vpop.f32.mrb[0].mxu0
    %10368 = vdwg.mxu0
    %10369 = vmatprep.subr.bf16.mxu0 0
    %10370 = vmatpush1.bf16.msra.mxu0 %v10176
    %10371 = vmatprep.subr.bf16.mxu0 0
    %10372 = vmatpush1.bf16.msra.mxu0 %v10177
    %10373 = vmatprep.subr.bf16.mxu0 0
    %10374 = vmatpush1.bf16.msra.mxu0 %v10178
    %10375 = vmatprep.subr.bf16.mxu0 0
    %10376 = vmatpush1.bf16.msra.mxu0 %v10179
    %10377 = vmatprep.subr.bf16.mxu0 0
    %10378 = vmatpush1.bf16.msra.mxu0 %v10180
    %10379 = vmatprep.subr.bf16.mxu0 0
    %10380 = vmatpush1.bf16.msra.mxu0 %v10181
    %10381 = vmatprep.subr.bf16.mxu0 0
    %10382 = vmatpush1.bf16.msra.mxu0 %v10182
    %10383 = vmatprep.subr.bf16.mxu0 0
    %10384 = vmatpush1.bf16.msra.mxu0 %v10183
    %10385 = vmatprep.subr.bf16.mxu0 0
    %10386 = vmatpush1.bf16.msra.mxu0 %v10184
    %10387 = vmatprep.subr.bf16.mxu0 0
    %10388 = vmatpush1.bf16.msra.mxu0 %v10185
    %10389 = vmatprep.subr.bf16.mxu0 0
    %10390 = vmatpush1.bf16.msra.mxu0 %v10186
    %10391 = vmatprep.subr.bf16.mxu0 0
    %10392 = vmatpush1.bf16.msra.mxu0 %v10187
    %10393 = vmatprep.subr.bf16.mxu0 0
    %10394 = vmatpush1.bf16.msra.mxu0 %v10188
    %10395 = vmatprep.subr.bf16.mxu0 0
    %10396 = vmatpush1.bf16.msra.mxu0 %v10189
    %10397 = vmatprep.subr.bf16.mxu0 0
    %10398 = vmatpush1.bf16.msra.mxu0 %v10190
    %10399 = vmatprep.subr.bf16.mxu0 0
    %10400 = vmatpush1.bf16.msra.mxu0 %v10191
    %10401 = vmatprep.mubr.bf16.mxu0 %v9694
    %10402 = vmatmul.mubr.bf16.gmra.mrb[0].mxu0 %v9693
    %v10403 = vpop.f32.mrb[0].mxu0
    %v10404 = vadd.f32 %v10339, %v10403
    %v10405 = vpop.f32.mrb[0].mxu0
    %v10406 = vpop.f32.mrb[0].mxu0
    %v10407 = vadd.f32 %v10342, %v10406
    %v10408 = vpop.f32.mrb[0].mxu0
    %10409 = vmatprep.mubr.bf16.mxu0 %v9703
    %10410 = vmatmul.mubr.bf16.gmra.mrb[0].mxu0 %v9702
    %v10411 = vpop.f32.mrb[0].mxu0
    %v10412 = vadd.f32 %v10347, %v10411
    %v10413 = vpop.f32.mrb[0].mxu0
    %v10414 = vpop.f32.mrb[0].mxu0
    %v10415 = vadd.f32 %v10350, %v10414
    %v10416 = vpop.f32.mrb[0].mxu0
    %10417 = vmatprep.mubr.bf16.mxu0 %v9712
    %10418 = vmatmul.mubr.bf16.gmra.mrb[0].mxu0 %v9711
    %v10419 = vpop.f32.mrb[0].mxu0
    %v10420 = vadd.f32 %v10355, %v10419
    %v10421 = vpop.f32.mrb[0].mxu0
    %v10422 = vpop.f32.mrb[0].mxu0
    %v10423 = vadd.f32 %v10358, %v10422
    %v10424 = vpop.f32.mrb[0].mxu0
    %10425 = vmatprep.mubr.bf16.mxu0 %v9721
    %10426 = vmatmul.mubr.bf16.gmra.mrb[0].mxu0 %v9720
    %v10427 = vpop.f32.mrb[0].mxu0
    %v10428 = vadd.f32 %v10363, %v10427
    %v10429 = vpop.f32.mrb[0].mxu0
    %v10430 = vpop.f32.mrb[0].mxu0
    %v10431 = vadd.f32 %v10366, %v10430
    %v10432 = vpop.f32.mrb[0].mxu0
    %10433 = vdwg.mxu0
    %10434 = vmatprep.subr.bf16.mxu0 0
    %10435 = vmatpush1.bf16.msra.mxu0 %v10192
    %10436 = vmatprep.subr.bf16.mxu0 0
    %10437 = vmatpush1.bf16.msra.mxu0 %v10193
    %10438 = vmatprep.subr.bf16.mxu0 0
    %10439 = vmatpush1.bf16.msra.mxu0 %v10194
    %10440 = vmatprep.subr.bf16.mxu0 0
    %10441 = vmatpush1.bf16.msra.mxu0 %v10195
    %10442 = vmatprep.subr.bf16.mxu0 0
    %10443 = vmatpush1.bf16.msra.mxu0 %v10196
    %10444 = vmatprep.subr.bf16.mxu0 0
    %10445 = vmatpush1.bf16.msra.mxu0 %v10197
    %10446 = vmatprep.subr.bf16.mxu0 0
    %10447 = vmatpush1.bf16.msra.mxu0 %v10198
    %10448 = vmatprep.subr.bf16.mxu0 0
    %10449 = vmatpush1.bf16.msra.mxu0 %v10199
    %10450 = vmatprep.subr.bf16.mxu0 0
    %10451 = vmatpush1.bf16.msra.mxu0 %v10200
    %10452 = vmatprep.subr.bf16.mxu0 0
    %10453 = vmatpush1.bf16.msra.mxu0 %v10201
    %10454 = vmatprep.subr.bf16.mxu0 0
    %10455 = vmatpush1.bf16.msra.mxu0 %v10202
    %10456 = vmatprep.subr.bf16.mxu0 0
    %10457 = vmatpush1.bf16.msra.mxu0 %v10203
    %10458 = vmatprep.subr.bf16.mxu0 0
    %10459 = vmatpush1.bf16.msra.mxu0 %v10204
    %10460 = vmatprep.subr.bf16.mxu0 0
    %10461 = vmatpush1.bf16.msra.mxu0 %v10205
    %10462 = vmatprep.subr.bf16.mxu0 0
    %10463 = vmatpush1.bf16.msra.mxu0 %v10206
    %10464 = vmatprep.subr.bf16.mxu0 0
    %10465 = vmatpush1.bf16.msra.mxu0 %v10207
    %10466 = vmatprep.mubr.bf16.mxu0 %v9696
    %10467 = vmatmul.mubr.bf16.gmra.mrb[0].mxu0 %v9695
    %v10468 = vpop.f32.mrb[0].mxu0
    %v10469 = vadd.f32 %v10404, %v10468
    %v10470 = vpop.f32.mrb[0].mxu0
    %v10471 = vpop.f32.mrb[0].mxu0
    %v10472 = vadd.f32 %v10407, %v10471
    %v10473 = vpop.f32.mrb[0].mxu0
    %10474 = vmatprep.mubr.bf16.mxu0 %v9705
    %10475 = vmatmul.mubr.bf16.gmra.mrb[0].mxu0 %v9704
    %v10476 = vpop.f32.mrb[0].mxu0
    %v10477 = vadd.f32 %v10412, %v10476
    %v10478 = vpop.f32.mrb[0].mxu0
    %v10479 = vpop.f32.mrb[0].mxu0
    %v10480 = vadd.f32 %v10415, %v10479
    %v10481 = vpop.f32.mrb[0].mxu0
    %10482 = vmatprep.mubr.bf16.mxu0 %v9714
    %10483 = vmatmul.mubr.bf16.gmra.mrb[0].mxu0 %v9713
    %v10484 = vpop.f32.mrb[0].mxu0
    %v10485 = vadd.f32 %v10420, %v10484
    %v10486 = vpop.f32.mrb[0].mxu0
    %v10487 = vpop.f32.mrb[0].mxu0
    %v10488 = vadd.f32 %v10423, %v10487
    %v10489 = vpop.f32.mrb[0].mxu0
    %10490 = vmatprep.mubr.bf16.mxu0 %v9723
    %10491 = vmatmul.mubr.bf16.gmra.mrb[0].mxu0 %v9722
    %v10492 = vpop.f32.mrb[0].mxu0
    %v10493 = vadd.f32 %v10428, %v10492
    %v10494 = vpop.f32.mrb[0].mxu0
    %v10495 = vpop.f32.mrb[0].mxu0
    %v10496 = vadd.f32 %v10431, %v10495
    %v10497 = vpop.f32.mrb[0].mxu0
    %10498 = vdwg.mxu0
    %10499 = vmatprep.subr.bf16.mxu0 0
    %10500 = vmatpush1.bf16.msra.mxu0 %v10208
    %10501 = vmatprep.subr.bf16.mxu0 0
    %10502 = vmatpush1.bf16.msra.mxu0 %v10209
    %10503 = vmatprep.subr.bf16.mxu0 0
    %10504 = vmatpush1.bf16.msra.mxu0 %v10210
    %10505 = vmatprep.subr.bf16.mxu0 0
    %10506 = vmatpush1.bf16.msra.mxu0 %v10211
    %10507 = vmatprep.subr.bf16.mxu0 0
    %10508 = vmatpush1.bf16.msra.mxu0 %v10212
    %10509 = vmatprep.subr.bf16.mxu0 0
    %10510 = vmatpush1.bf16.msra.mxu0 %v10213
    %10511 = vmatprep.subr.bf16.mxu0 0
    %10512 = vmatpush1.bf16.msra.mxu0 %v10214
    %10513 = vmatprep.subr.bf16.mxu0 0
    %10514 = vmatpush1.bf16.msra.mxu0 %v10215
    %10515 = vmatprep.subr.bf16.mxu0 0
    %10516 = vmatpush1.bf16.msra.mxu0 %v10216
    %10517 = vmatprep.subr.bf16.mxu0 0
    %10518 = vmatpush1.bf16.msra.mxu0 %v10217
    %10519 = vmatprep.subr.bf16.mxu0 0
    %10520 = vmatpush1.bf16.msra.mxu0 %v10218
    %10521 = vmatprep.subr.bf16.mxu0 0
    %10522 = vmatpush1.bf16.msra.mxu0 %v10219
    %10523 = vmatprep.subr.bf16.mxu0 0
    %10524 = vmatpush1.bf16.msra.mxu0 %v10220
    %10525 = vmatprep.subr.bf16.mxu0 0
    %10526 = vmatpush1.bf16.msra.mxu0 %v10221
    %10527 = vmatprep.subr.bf16.mxu0 0
    %10528 = vmatpush1.bf16.msra.mxu0 %v10222
    %10529 = vmatprep.subr.bf16.mxu0 0
    %10530 = vmatpush1.bf16.msra.mxu0 %v10223
    %10531 = vmatprep.mubr.bf16.mxu0 %v9698
    %10532 = vmatmul.mubr.bf16.gmra.mrb[0].mxu0 %v9697
    %v10533 = vpop.f32.mrb[0].mxu0
    %v10534 = vadd.f32 %v10469, %v10533
    %v10535 = vpop.f32.mrb[0].mxu0
    %v10536 = vpop.f32.mrb[0].mxu0
    %v10537 = vadd.f32 %v10472, %v10536
    %v10538 = vpop.f32.mrb[0].mxu0
    %10539 = vmatprep.mubr.bf16.mxu0 %v9707
    %10540 = vmatmul.mubr.bf16.gmra.mrb[0].mxu0 %v9706
    %v10541 = vpop.f32.mrb[0].mxu0
    %v10542 = vadd.f32 %v10477, %v10541
    %v10543 = vpop.f32.mrb[0].mxu0
    %v10544 = vpop.f32.mrb[0].mxu0
    %v10545 = vadd.f32 %v10480, %v10544
    %v10546 = vpop.f32.mrb[0].mxu0
    %10547 = vmatprep.mubr.bf16.mxu0 %v9716
    %10548 = vmatmul.mubr.bf16.gmra.mrb[0].mxu0 %v9715
    %v10549 = vpop.f32.mrb[0].mxu0
    %v10550 = vadd.f32 %v10485, %v10549
    %v10551 = vpop.f32.mrb[0].mxu0
    %v10552 = vpop.f32.mrb[0].mxu0
    %v10553 = vadd.f32 %v10488, %v10552
    %v10554 = vpop.f32.mrb[0].mxu0
    %10555 = vmatprep.mubr.bf16.mxu0 %v9725
    %10556 = vmatmul.mubr.bf16.gmra.mrb[0].mxu0 %v9724
    %v10557 = vpop.f32.mrb[0].mxu0
    %v10558 = vadd.f32 %v10493, %v10557
    %v10559 = vpop.f32.mrb[0].mxu0
    %v10560 = vpop.f32.mrb[0].mxu0
    %v10561 = vadd.f32 %v10496, %v10560
    %v10562 = vpop.f32.mrb[0].mxu0
    %10563 = vdwg.mxu0
    %10564 = vmatprep.subr.bf16.mxu0 0
    %10565 = vmatpush1.bf16.msra.mxu0 %v10224
    %10566 = vmatprep.subr.bf16.mxu0 0
    %10567 = vmatpush1.bf16.msra.mxu0 %v10225
    %10568 = vmatprep.subr.bf16.mxu0 0
    %10569 = vmatpush1.bf16.msra.mxu0 %v10226
    %10570 = vmatprep.subr.bf16.mxu0 0
    %10571 = vmatpush1.bf16.msra.mxu0 %v10227
    %10572 = vmatprep.subr.bf16.mxu0 0
    %10573 = vmatpush1.bf16.msra.mxu0 %v10228
    %10574 = vmatprep.subr.bf16.mxu0 0
    %10575 = vmatpush1.bf16.msra.mxu0 %v10229
    %10576 = vmatprep.subr.bf16.mxu0 0
    %10577 = vmatpush1.bf16.msra.mxu0 %v10230
    %10578 = vmatprep.subr.bf16.mxu0 0
    %10579 = vmatpush1.bf16.msra.mxu0 %v10231
    %10580 = vmatprep.subr.bf16.mxu0 0
    %10581 = vmatpush1.bf16.msra.mxu0 0
    %10582 = vmatprep.subr.bf16.mxu0 0
    %10583 = vmatpush1.bf16.msra.mxu0 0
    %10584 = vmatprep.subr.bf16.mxu0 0
    %10585 = vmatpush1.bf16.msra.mxu0 0
    %10586 = vmatprep.subr.bf16.mxu0 0
    %10587 = vmatpush1.bf16.msra.mxu0 0
    %10588 = vmatprep.subr.bf16.mxu0 0
    %10589 = vmatpush1.bf16.msra.mxu0 0
    %10590 = vmatprep.subr.bf16.mxu0 0
    %10591 = vmatpush1.bf16.msra.mxu0 0
    %10592 = vmatprep.subr.bf16.mxu0 0
    %10593 = vmatpush1.bf16.msra.mxu0 0
    %10594 = vmatprep.subr.bf16.mxu0 0
    %10595 = vmatpush1.bf16.msra.mxu0 0
    %10596 = vmatprep.mubr.bf16.mxu0 0
    %10597 = vmatmul.mubr.bf16.gmra.mrb[0].mxu0 %v9699
    %v10598 = vpop.f32.mrb[0].mxu0
    %v10599 = vadd.f32 %v10534, %v10598
    %v10600 = vpop.f32.mrb[0].mxu0
    %v10601 = vpop.f32.mrb[0].mxu0
    %v10602 = vadd.f32 %v10537, %v10601
    %v10603 = vpop.f32.mrb[0].mxu0
    %10604 = vmatprep.mubr.bf16.mxu0 0
    %10605 = vmatmul.mubr.bf16.gmra.mrb[0].mxu0 %v9708
    %v10606 = vpop.f32.mrb[0].mxu0
    %v10607 = vadd.f32 %v10542, %v10606
    %v10608 = vpop.f32.mrb[0].mxu0
    %v10609 = vpop.f32.mrb[0].mxu0
    %v10610 = vadd.f32 %v10545, %v10609
    %v10611 = vpop.f32.mrb[0].mxu0
    %10612 = vmatprep.mubr.bf16.mxu0 0
    %10613 = vmatmul.mubr.bf16.gmra.mrb[0].mxu0 %v9717
    %v10614 = vpop.f32.mrb[0].mxu0
    %v10615 = vadd.f32 %v10550, %v10614
    %v10616 = vpop.f32.mrb[0].mxu0
    %v10617 = vpop.f32.mrb[0].mxu0
    %v10618 = vadd.f32 %v10553, %v10617
    %v10619 = vpop.f32.mrb[0].mxu0
    %10620 = vmatprep.mubr.bf16.mxu0 0
    %10621 = vmatmul.mubr.bf16.gmra.mrb[0].mxu0 %v9726
    %v10622 = vpop.f32.mrb[0].mxu0
    %v10623 = vadd.f32 %v10558, %v10622
    %v10624 = vpop.f32.mrb[0].mxu0
    %v10625 = vpop.f32.mrb[0].mxu0
    %v10626 = vadd.f32 %v10561, %v10625
    %v10627 = vpop.f32.mrb[0].mxu0
    %10628 = vdwg.mxu0
    %v10629 = vadd.f32 %v10599, %v10602
    %v10630 = vadd.f32 %v10629, %v10607
    %v10631 = vadd.f32 %v10630, %v10610
    %v10632 = vadd.f32 %v10631, %v10615
    %v10633 = vadd.f32 %v10632, %v10618
    %v10634 = vadd.f32 %v10633, %v10623
    %v10635 = vadd.f32 %v10634, %v10626
    %v10636 = vrot.slane %v10635, 4
    %v10637 = vadd.f32 %v10635, %v10636
    %v10638 = vrot.slane %v10637, 2
    %v10639 = vadd.f32 %v10637, %v10638
    %v10640 = vrot.slane %v10639, 1
    %v10641 = vadd.f32 %v10639, %v10640
    %v10642 = vmul.f32 %v10599, %v10599
    %v10643 = vmul.f32 %v10602, %v10602
    %v10644 = vmul.f32 %v10607, %v10607
    %v10645 = vmul.f32 %v10610, %v10610
    %v10646 = vmul.f32 %v10615, %v10615
    %v10647 = vmul.f32 %v10618, %v10618
    %v10648 = vmul.f32 %v10623, %v10623
    %v10649 = vmul.f32 %v10626, %v10626
    %v10650 = vadd.f32 %v10642, %v10643
    %v10651 = vadd.f32 %v10650, %v10644
    %v10652 = vadd.f32 %v10651, %v10645
    %v10653 = vadd.f32 %v10652, %v10646
    %v10654 = vadd.f32 %v10653, %v10647
    %v10655 = vadd.f32 %v10654, %v10648
    %v10656 = vadd.f32 %v10655, %v10649
    %v10657 = vrot.slane %v10656, 4
    %v10658 = vadd.f32 %v10656, %v10657
    %v10659 = vrot.slane %v10658, 2
    %v10660 = vadd.f32 %v10658, %v10659
    %v10661 = vrot.slane %v10660, 1
    %v10662 = vadd.f32 %v10660, %v10661
    %v10663 = vmul.f32 %v10641, 0.015625
    %v10664 = vmul.f32 %v10662, 0.015625
    %v10665 = vmul.f32 %v10663, %v10663
    %v10666 = vsub.f32 %v10664, %v10665
    %v10667 = vsub.f32 %v10599, %v10663
    %v10668 = vsub.f32 %v10602, %v10663
    %v10669 = vsub.f32 %v10607, %v10663
    %v10670 = vsub.f32 %v10610, %v10663
    %v10671 = vsub.f32 %v10615, %v10663
    %v10672 = vsub.f32 %v10618, %v10663
    %v10673 = vsub.f32 %v10623, %v10663
    %v10674 = vsub.f32 %v10626, %v10663
    %v10675 = vadd.f32 %v10666, 1e-05
    %v10676 = vrsqrt.pop %v10675
    %v10677 = vmul.f32 %v10667, %v10676
    %v10678 = vmul.f32 %v10668, %v10676
    %v10679 = vmul.f32 %v10669, %v10676
    %v10680 = vmul.f32 %v10670, %v10676
    %v10681 = vmul.f32 %v10671, %v10676
    %v10682 = vmul.f32 %v10672, %v10676
    %v10683 = vmul.f32 %v10673, %v10676
    %v10684 = vmul.f32 %v10674, %v10676
    %s10685 = scalar_lea.vmem [#allocation8], 8
    %v10686 = vld [vmem:[%s10685] sm:$0x1]
    %v10688 = vlaneseq
    %v10689 = vshrl.u32 %v10688, 7
    %v10690 = vsub.s32 0, %v10689
    %v10691 = vrot.slane %v10686, %v10690
    %v10693 = vmul.f32 %v10691, %v10677
    %v10694 = vmul.f32 %v10691, %v10678
    %v10695 = vmul.f32 %v10691, %v10679
    %v10696 = vmul.f32 %v10691, %v10680
    %v10697 = vmul.f32 %v10691, %v10681
    %v10698 = vmul.f32 %v10691, %v10682
    %v10699 = vmul.f32 %v10691, %v10683
    %v10700 = vmul.f32 %v10691, %v10684
    %s10701 = scalar_lea.vmem [#allocation10], 8
    %v10702 = vld [vmem:[%s10701] sm:$0x1]
    %v10704 = vlaneseq
    %v10705 = vshrl.u32 %v10704, 7
    %v10706 = vsub.s32 0, %v10705
    %v10707 = vrot.slane %v10702, %v10706
    %v10709 = vadd.f32 %v10693, %v10707
    %v10710 = vadd.f32 %v10694, %v10707
    %v10711 = vadd.f32 %v10695, %v10707
    %v10712 = vadd.f32 %v10696, %v10707
    %v10713 = vadd.f32 %v10697, %v10707
    %v10714 = vadd.f32 %v10698, %v10707
    %v10715 = vadd.f32 %v10699, %v10707
    %v10716 = vadd.f32 %v10700, %v10707
    %v10717 = vmax.f32 %v10709, 0.0
    %v10718 = vmax.f32 %v10710, 0.0
    %v10719 = vmax.f32 %v10711, 0.0
    %v10720 = vmax.f32 %v10712, 0.0
    %v10721 = vmax.f32 %v10713, 0.0
    %v10722 = vmax.f32 %v10714, 0.0
    %v10723 = vmax.f32 %v10715, 0.0
    %v10724 = vmax.f32 %v10716, 0.0
    %v10725 = vrot.slane %v10717, 7
    %v10726 = vrot.slane %v10718, 7
    %v10727 = vrot.slane %v10719, 7
    %v10728 = vrot.slane %v10720, 7
    %v10729 = vrot.slane %v10721, 7
    %v10730 = vrot.slane %v10722, 7
    %v10731 = vrot.slane %v10723, 7
    %v10732 = vrot.slane %v10724, 7
    %v10733 = vsel %vm540, %v10731, %v10732
    %v10734 = vsel %vm540, %v10730, %v10731
    %v10735 = vsel %vm540, %v10729, %v10730
    %v10736 = vsel %vm540, %v10728, %v10729
    %v10737 = vsel %vm540, %v10727, %v10728
    %v10738 = vsel %vm540, %v10726, %v10727
    %v10739 = vsel %vm540, %v10725, %v10726
    %v10740 = vsel %vm540, %v10732, %v10725
    %v10741 = vmul.f32 %v10733, %v142
    %v10742 = vmul.f32 %v10740, %v147
    %v10743 = vmul.f32 %v10739, %v152
    %v10744 = vmul.f32 %v10738, %v157
    %v10745 = vmul.f32 %v10737, %v162
    %v10746 = vmul.f32 %v10736, %v167
    %v10747 = vmul.f32 %v10735, %v172
    %v10748 = vmul.f32 %v10734, %v177
    %v10749 = vmul.f32 %v10724, %v191
    %v10750 = vmul.f32 %v10717, %v196
    %v10751 = vmul.f32 %v10718, %v201
    %v10752 = vmul.f32 %v10719, %v206
    %v10753 = vmul.f32 %v10720, %v211
    %v10754 = vmul.f32 %v10721, %v216
    %v10755 = vmul.f32 %v10722, %v221
    %v10756 = vmul.f32 %v10723, %v226
    %v10757 = vrot.slane %v10717, 1
    %v10758 = vrot.slane %v10718, 1
    %v10759 = vrot.slane %v10719, 1
    %v10760 = vrot.slane %v10720, 1
    %v10761 = vrot.slane %v10721, 1
    %v10762 = vrot.slane %v10722, 1
    %v10763 = vrot.slane %v10723, 1
    %v10764 = vrot.slane %v10724, 1
    %v10765 = vsel %vm573, %v10763, %v10764
    %v10766 = vsel %vm573, %v10762, %v10763
    %v10767 = vsel %vm573, %v10761, %v10762
    %v10768 = vsel %vm573, %v10760, %v10761
    %v10769 = vsel %vm573, %v10759, %v10760
    %v10770 = vsel %vm573, %v10758, %v10759
    %v10771 = vsel %vm573, %v10757, %v10758
    %v10772 = vsel %vm573, %v10764, %v10757
    %v10773 = vmul.f32 %v10772, %v240
    %v10774 = vmul.f32 %v10771, %v245
    %v10775 = vmul.f32 %v10770, %v250
    %v10776 = vmul.f32 %v10769, %v255
    %v10777 = vmul.f32 %v10768, %v260
    %v10778 = vmul.f32 %v10767, %v265
    %v10779 = vmul.f32 %v10766, %v270
    %v10780 = vmul.f32 %v10765, %v275
    %v10781 = vmul.f32 %v10740, %v289
    %v10782 = vmul.f32 %v10739, %v294
    %v10783 = vmul.f32 %v10738, %v299
    %v10784 = vmul.f32 %v10737, %v304
    %v10785 = vmul.f32 %v10736, %v309
    %v10786 = vmul.f32 %v10735, %v314
    %v10787 = vmul.f32 %v10734, %v319
    %v10788 = vmul.f32 %v10733, %v324
    %v10789 = vmul.f32 %v10771, %v338
    %v10790 = vmul.f32 %v10770, %v343
    %v10791 = vmul.f32 %v10769, %v348
    %v10792 = vmul.f32 %v10768, %v353
    %v10793 = vmul.f32 %v10767, %v358
    %v10794 = vmul.f32 %v10766, %v363
    %v10795 = vmul.f32 %v10765, %v368
    %v10796 = vmul.f32 %v10772, %v373
    %v10797 = vmul.f32 %v10739, %v387
    %v10798 = vmul.f32 %v10738, %v392
    %v10799 = vmul.f32 %v10737, %v397
    %v10800 = vmul.f32 %v10736, %v402
    %v10801 = vmul.f32 %v10735, %v407
    %v10802 = vmul.f32 %v10734, %v412
    %v10803 = vmul.f32 %v10733, %v417
    %v10804 = vmul.f32 %v10740, %v422
    %v10805 = vmul.f32 %v10718, %v436
    %v10806 = vmul.f32 %v10719, %v441
    %v10807 = vmul.f32 %v10720, %v446
    %v10808 = vmul.f32 %v10721, %v451
    %v10809 = vmul.f32 %v10722, %v456
    %v10810 = vmul.f32 %v10723, %v461
    %v10811 = vmul.f32 %v10724, %v466
    %v10812 = vmul.f32 %v10717, %v471
    %v10813 = vmul.f32 %v10770, %v485
    %v10814 = vmul.f32 %v10769, %v490
    %v10815 = vmul.f32 %v10768, %v495
    %v10816 = vmul.f32 %v10767, %v500
    %v10817 = vmul.f32 %v10766, %v505
    %v10818 = vmul.f32 %v10765, %v510
    %v10819 = vmul.f32 %v10772, %v515
    %v10820 = vmul.f32 %v10771, %v520
    %v10821 = vpack.c.bf16 %v10742, %v10741
    %v10822 = vpack.c.bf16 %v10750, %v10749
    %v10823 = vpack.c.bf16 %v10774, %v10773
    %v10824 = vpack.c.bf16 %v10782, %v10781
    %v10825 = vpack.c.bf16 %v10718, %v10717
    %v10826 = vpack.c.bf16 %v10790, %v10789
    %v10827 = vpack.c.bf16 %v10798, %v10797
    %v10828 = vpack.c.bf16 %v10806, %v10805
    %v10829 = vpack.c.bf16 %v10814, %v10813
    %v10830 = vpack.c.bf16 %v10744, %v10743
    %v10831 = vpack.c.bf16 %v10752, %v10751
    %v10832 = vpack.c.bf16 %v10776, %v10775
    %v10833 = vpack.c.bf16 %v10784, %v10783
    %v10834 = vpack.c.bf16 %v10720, %v10719
    %v10835 = vpack.c.bf16 %v10792, %v10791
    %v10836 = vpack.c.bf16 %v10800, %v10799
    %v10837 = vpack.c.bf16 %v10808, %v10807
    %v10838 = vpack.c.bf16 %v10816, %v10815
    %v10839 = vpack.c.bf16 %v10746, %v10745
    %v10840 = vpack.c.bf16 %v10754, %v10753
    %v10841 = vpack.c.bf16 %v10778, %v10777
    %v10842 = vpack.c.bf16 %v10786, %v10785
    %v10843 = vpack.c.bf16 %v10722, %v10721
    %v10844 = vpack.c.bf16 %v10794, %v10793
    %v10845 = vpack.c.bf16 %v10802, %v10801
    %v10846 = vpack.c.bf16 %v10810, %v10809
    %v10847 = vpack.c.bf16 %v10818, %v10817
    %v10848 = vpack.c.bf16 %v10748, %v10747
    %v10849 = vpack.c.bf16 %v10756, %v10755
    %v10850 = vpack.c.bf16 %v10780, %v10779
    %v10851 = vpack.c.bf16 %v10788, %v10787
    %v10852 = vpack.c.bf16 %v10724, %v10723
    %v10853 = vpack.c.bf16 %v10796, %v10795
    %v10854 = vpack.c.bf16 %v10804, %v10803
    %v10855 = vpack.c.bf16 %v10812, %v10811
    %v10856 = vpack.c.bf16 %v10820, %v10819
    %s10857 = scalar_lea.vmem [#allocation5], 5184
    %v10858 = vld [vmem:[%s10857] sm:$0xf]
    %v10859 = vld [vmem:[%s10857 + $0x4] sm:$0xf]
    %v10860 = vld [vmem:[%s10857 + $0x8] sm:$0xf]
    %v10861 = vld [vmem:[%s10857 + $0xc] sm:$0xf]
    %v10862 = vld [vmem:[%s10857 + $0x10] sm:$0xf]
    %v10863 = vld [vmem:[%s10857 + $0x14] sm:$0xf]
    %v10864 = vld [vmem:[%s10857 + $0x18] sm:$0xf]
    %v10865 = vld [vmem:[%s10857 + $0x1c] sm:$0xf]
    %v10866 = vld [vmem:[%s10857 + $0x20] sm:$0xf]
    %v10867 = vld [vmem:[%s10857 + $0x24] sm:$0xf]
    %v10868 = vld [vmem:[%s10857 + $0x28] sm:$0xf]
    %v10869 = vld [vmem:[%s10857 + $0x2c] sm:$0xf]
    %v10870 = vld [vmem:[%s10857 + $0x30] sm:$0xf]
    %v10871 = vld [vmem:[%s10857 + $0x34] sm:$0xf]
    %v10872 = vld [vmem:[%s10857 + $0x38] sm:$0xf]
    %v10873 = vld [vmem:[%s10857 + $0x3c] sm:$0xf]
    %v10874 = vld [vmem:[%s10857 + $0x40] sm:$0xf]
    %v10875 = vld [vmem:[%s10857 + $0x44] sm:$0xf]
    %v10876 = vld [vmem:[%s10857 + $0x48] sm:$0xf]
    %v10877 = vld [vmem:[%s10857 + $0x4c] sm:$0xf]
    %v10878 = vld [vmem:[%s10857 + $0x50] sm:$0xf]
    %v10879 = vld [vmem:[%s10857 + $0x54] sm:$0xf]
    %v10880 = vld [vmem:[%s10857 + $0x58] sm:$0xf]
    %v10881 = vld [vmem:[%s10857 + $0x5c] sm:$0xf]
    %v10882 = vld [vmem:[%s10857 + $0x60] sm:$0xf]
    %v10883 = vld [vmem:[%s10857 + $0x64] sm:$0xf]
    %v10884 = vld [vmem:[%s10857 + $0x68] sm:$0xf]
    %v10885 = vld [vmem:[%s10857 + $0x6c] sm:$0xf]
    %v10886 = vld [vmem:[%s10857 + $0x70] sm:$0xf]
    %v10887 = vld [vmem:[%s10857 + $0x74] sm:$0xf]
    %v10888 = vld [vmem:[%s10857 + $0x78] sm:$0xf]
    %v10889 = vld [vmem:[%s10857 + $0x7c] sm:$0xf]
    %v10890 = vld [vmem:[%s10857 + $0x80] sm:$0xf]
    %v10891 = vld [vmem:[%s10857 + $0x84] sm:$0xf]
    %v10892 = vld [vmem:[%s10857 + $0x88] sm:$0xf]
    %v10893 = vld [vmem:[%s10857 + $0x8c] sm:$0xf]
    %v10894 = vld [vmem:[%s10857 + $0x90] sm:$0xf]
    %v10895 = vld [vmem:[%s10857 + $0x94] sm:$0xf]
    %v10896 = vld [vmem:[%s10857 + $0x98] sm:$0xf]
    %v10897 = vld [vmem:[%s10857 + $0x9c] sm:$0xf]
    %v10898 = vld [vmem:[%s10857 + $0xa0] sm:$0xf]
    %v10899 = vld [vmem:[%s10857 + $0xa4] sm:$0xf]
    %v10900 = vld [vmem:[%s10857 + $0xa8] sm:$0xf]
    %v10901 = vld [vmem:[%s10857 + $0xac] sm:$0xf]
    %v10902 = vld [vmem:[%s10857 + $0xb0] sm:$0xf]
    %v10903 = vld [vmem:[%s10857 + $0xb4] sm:$0xf]
    %v10904 = vld [vmem:[%s10857 + $0xb8] sm:$0xf]
    %v10905 = vld [vmem:[%s10857 + $0xbc] sm:$0xf]
    %v10906 = vld [vmem:[%s10857 + $0xc0] sm:$0xf]
    %v10907 = vld [vmem:[%s10857 + $0xc4] sm:$0xf]
    %v10908 = vld [vmem:[%s10857 + $0xc8] sm:$0xf]
    %v10909 = vld [vmem:[%s10857 + $0xcc] sm:$0xf]
    %v10910 = vld [vmem:[%s10857 + $0xd0] sm:$0xf]
    %v10911 = vld [vmem:[%s10857 + $0xd4] sm:$0xf]
    %v10912 = vld [vmem:[%s10857 + $0xd8] sm:$0xf]
    %v10913 = vld [vmem:[%s10857 + $0xdc] sm:$0xf]
    %v10914 = vld [vmem:[%s10857 + $0xe0] sm:$0xf]
    %v10915 = vld [vmem:[%s10857 + $0xe4] sm:$0xf]
    %v10916 = vld [vmem:[%s10857 + $0xe8] sm:$0xf]
    %v10917 = vld [vmem:[%s10857 + $0xec] sm:$0xf]
    %v10918 = vld [vmem:[%s10857 + $0xf0] sm:$0xf]
    %v10919 = vld [vmem:[%s10857 + $0xf4] sm:$0xf]
    %v10920 = vld [vmem:[%s10857 + $0xf8] sm:$0xf]
    %v10921 = vld [vmem:[%s10857 + $0xfc] sm:$0xf]
    %v10922 = vld [vmem:[%s10857 + $0x100] sm:$0xf]
    %v10923 = vld [vmem:[%s10857 + $0x104] sm:$0xf]
    %v10924 = vld [vmem:[%s10857 + $0x108] sm:$0xf]
    %v10925 = vld [vmem:[%s10857 + $0x10c] sm:$0xf]
    %v10926 = vld [vmem:[%s10857 + $0x110] sm:$0xf]
    %v10927 = vld [vmem:[%s10857 + $0x114] sm:$0xf]
    %v10928 = vld [vmem:[%s10857 + $0x118] sm:$0xf]
    %v10929 = vld [vmem:[%s10857 + $0x11c] sm:$0xf]
    %v10930 = vld [vmem:[%s10857 + $0x120] sm:$0xf]
    %v10931 = vld [vmem:[%s10857 + $0x124] sm:$0xf]
    %v10932 = vld [vmem:[%s10857 + $0x128] sm:$0xf]
    %v10933 = vld [vmem:[%s10857 + $0x12c] sm:$0xf]
    %v10934 = vld [vmem:[%s10857 + $0x130] sm:$0xf]
    %v10935 = vld [vmem:[%s10857 + $0x134] sm:$0xf]
    %v10936 = vld [vmem:[%s10857 + $0x138] sm:$0xf]
    %v10937 = vld [vmem:[%s10857 + $0x13c] sm:$0xf]
    %v10938 = vld [vmem:[%s10857 + $0x140] sm:$0xf]
    %v10939 = vld [vmem:[%s10857 + $0x144] sm:$0xf]
    %v10940 = vld [vmem:[%s10857 + $0x148] sm:$0xf]
    %v10941 = vld [vmem:[%s10857 + $0x14c] sm:$0xf]
    %v10942 = vld [vmem:[%s10857 + $0x150] sm:$0xf]
    %v10943 = vld [vmem:[%s10857 + $0x154] sm:$0xf]
    %v10944 = vld [vmem:[%s10857 + $0x158] sm:$0xf]
    %v10945 = vld [vmem:[%s10857 + $0x15c] sm:$0xf]
    %v10946 = vld [vmem:[%s10857 + $0x160] sm:$0xf]
    %v10947 = vld [vmem:[%s10857 + $0x164] sm:$0xf]
    %v10948 = vld [vmem:[%s10857 + $0x168] sm:$0xf]
    %v10949 = vld [vmem:[%s10857 + $0x16c] sm:$0xf]
    %v10950 = vld [vmem:[%s10857 + $0x170] sm:$0xf]
    %v10951 = vld [vmem:[%s10857 + $0x174] sm:$0xf]
    %v10952 = vld [vmem:[%s10857 + $0x178] sm:$0xf]
    %v10953 = vld [vmem:[%s10857 + $0x17c] sm:$0xf]
    %v10954 = vld [vmem:[%s10857 + $0x180] sm:$0xf]
    %v10955 = vld [vmem:[%s10857 + $0x184] sm:$0xf]
    %v10956 = vld [vmem:[%s10857 + $0x188] sm:$0xf]
    %v10957 = vld [vmem:[%s10857 + $0x18c] sm:$0xf]
    %v10958 = vld [vmem:[%s10857 + $0x190] sm:$0xf]
    %v10959 = vld [vmem:[%s10857 + $0x194] sm:$0xf]
    %v10960 = vld [vmem:[%s10857 + $0x198] sm:$0xf]
    %v10961 = vld [vmem:[%s10857 + $0x19c] sm:$0xf]
    %v10962 = vld [vmem:[%s10857 + $0x1a0] sm:$0xf]
    %v10963 = vld [vmem:[%s10857 + $0x1a4] sm:$0xf]
    %v10964 = vld [vmem:[%s10857 + $0x1a8] sm:$0xf]
    %v10965 = vld [vmem:[%s10857 + $0x1ac] sm:$0xf]
    %v10966 = vld [vmem:[%s10857 + $0x1b0] sm:$0xf]
    %v10967 = vld [vmem:[%s10857 + $0x1b4] sm:$0xf]
    %v10968 = vld [vmem:[%s10857 + $0x1b8] sm:$0xf]
    %v10969 = vld [vmem:[%s10857 + $0x1bc] sm:$0xf]
    %v10970 = vld [vmem:[%s10857 + $0x1c0] sm:$0xf]
    %v10971 = vld [vmem:[%s10857 + $0x1c4] sm:$0xf]
    %v10972 = vld [vmem:[%s10857 + $0x1c8] sm:$0xf]
    %v10973 = vld [vmem:[%s10857 + $0x1cc] sm:$0xf]
    %v10974 = vld [vmem:[%s10857 + $0x1d0] sm:$0xf]
    %v10975 = vld [vmem:[%s10857 + $0x1d4] sm:$0xf]
    %v10976 = vld [vmem:[%s10857 + $0x1d8] sm:$0xf]
    %v10977 = vld [vmem:[%s10857 + $0x1dc] sm:$0xf]
    %v10978 = vld [vmem:[%s10857 + $0x1e0] sm:$0xf]
    %v10979 = vld [vmem:[%s10857 + $0x1e4] sm:$0xf]
    %v10980 = vld [vmem:[%s10857 + $0x1e8] sm:$0xf]
    %v10981 = vld [vmem:[%s10857 + $0x1ec] sm:$0xf]
    %v10982 = vld [vmem:[%s10857 + $0x1f0] sm:$0xf]
    %v10983 = vld [vmem:[%s10857 + $0x1f4] sm:$0xf]
    %v10984 = vld [vmem:[%s10857 + $0x1f8] sm:$0xf]
    %v10985 = vld [vmem:[%s10857 + $0x1fc] sm:$0xf]
    %v10986 = vld [vmem:[%s10857 + $0x200] sm:$0xf]
    %v10987 = vld [vmem:[%s10857 + $0x204] sm:$0xf]
    %v10988 = vld [vmem:[%s10857 + $0x208] sm:$0xf]
    %v10989 = vld [vmem:[%s10857 + $0x20c] sm:$0xf]
    %v10990 = vld [vmem:[%s10857 + $0x210] sm:$0xf]
    %v10991 = vld [vmem:[%s10857 + $0x214] sm:$0xf]
    %v10992 = vld [vmem:[%s10857 + $0x218] sm:$0xf]
    %v10993 = vld [vmem:[%s10857 + $0x21c] sm:$0xf]
    %v10994 = vld [vmem:[%s10857 + $0x220] sm:$0xf]
    %v10995 = vld [vmem:[%s10857 + $0x224] sm:$0xf]
    %v10996 = vld [vmem:[%s10857 + $0x228] sm:$0xf]
    %v10997 = vld [vmem:[%s10857 + $0x22c] sm:$0xf]
    %v10998 = vld [vmem:[%s10857 + $0x230] sm:$0xf]
    %v10999 = vld [vmem:[%s10857 + $0x234] sm:$0xf]
    %v11000 = vld [vmem:[%s10857 + $0x238] sm:$0xf]
    %v11001 = vld [vmem:[%s10857 + $0x23c] sm:$0xf]
    %v11146 = vunpack.c.l.b16 %v10858
    %v11147 = vunpack.c.l.b16 %v10859
    %v11148 = vunpack.c.l.b16 %v10860
    %v11149 = vunpack.c.l.b16 %v10861
    %v11150 = vunpack.c.l.b16 %v10862
    %v11151 = vunpack.c.l.b16 %v10863
    %v11152 = vunpack.c.l.b16 %v10864
    %v11153 = vunpack.c.l.b16 %v10865
    %v11154 = vunpack.c.l.b16 %v10866
    %v11155 = vunpack.c.l.b16 %v10867
    %v11156 = vunpack.c.l.b16 %v10868
    %v11157 = vunpack.c.l.b16 %v10869
    %v11158 = vunpack.c.l.b16 %v10870
    %v11159 = vunpack.c.l.b16 %v10871
    %v11160 = vunpack.c.l.b16 %v10872
    %v11161 = vunpack.c.l.b16 %v10873
    %v11162 = vunpack.c.l.b16 %v10874
    %v11163 = vunpack.c.l.b16 %v10875
    %v11164 = vunpack.c.l.b16 %v10876
    %v11165 = vunpack.c.l.b16 %v10877
    %v11166 = vunpack.c.l.b16 %v10878
    %v11167 = vunpack.c.l.b16 %v10879
    %v11168 = vunpack.c.l.b16 %v10880
    %v11169 = vunpack.c.l.b16 %v10881
    %v11170 = vunpack.c.l.b16 %v10882
    %v11171 = vunpack.c.l.b16 %v10883
    %v11172 = vunpack.c.l.b16 %v10884
    %v11173 = vunpack.c.l.b16 %v10885
    %v11174 = vunpack.c.l.b16 %v10886
    %v11175 = vunpack.c.l.b16 %v10887
    %v11176 = vunpack.c.l.b16 %v10888
    %v11177 = vunpack.c.l.b16 %v10889
    %v11178 = vunpack.c.l.b16 %v10890
    %v11179 = vunpack.c.l.b16 %v10891
    %v11180 = vunpack.c.l.b16 %v10892
    %v11181 = vunpack.c.l.b16 %v10893
    %v11182 = vunpack.c.l.b16 %v10894
    %v11183 = vunpack.c.l.b16 %v10895
    %v11184 = vunpack.c.l.b16 %v10896
    %v11185 = vunpack.c.l.b16 %v10897
    %v11186 = vunpack.c.l.b16 %v10898
    %v11187 = vunpack.c.l.b16 %v10899
    %v11188 = vunpack.c.l.b16 %v10900
    %v11189 = vunpack.c.l.b16 %v10901
    %v11190 = vunpack.c.l.b16 %v10902
    %v11191 = vunpack.c.l.b16 %v10903
    %v11192 = vunpack.c.l.b16 %v10904
    %v11193 = vunpack.c.l.b16 %v10905
    %v11194 = vunpack.c.l.b16 %v10906
    %v11195 = vunpack.c.l.b16 %v10907
    %v11196 = vunpack.c.l.b16 %v10908
    %v11197 = vunpack.c.l.b16 %v10909
    %v11198 = vunpack.c.l.b16 %v10910
    %v11199 = vunpack.c.l.b16 %v10911
    %v11200 = vunpack.c.l.b16 %v10912
    %v11201 = vunpack.c.l.b16 %v10913
    %v11202 = vunpack.c.l.b16 %v10914
    %v11203 = vunpack.c.l.b16 %v10915
    %v11204 = vunpack.c.l.b16 %v10916
    %v11205 = vunpack.c.l.b16 %v10917
    %v11206 = vunpack.c.l.b16 %v10918
    %v11207 = vunpack.c.l.b16 %v10919
    %v11208 = vunpack.c.l.b16 %v10920
    %v11209 = vunpack.c.l.b16 %v10921
    %v11210 = vunpack.c.l.b16 %v10922
    %v11211 = vunpack.c.l.b16 %v10923
    %v11212 = vunpack.c.l.b16 %v10924
    %v11213 = vunpack.c.l.b16 %v10925
    %v11214 = vunpack.c.l.b16 %v10926
    %v11215 = vunpack.c.l.b16 %v10927
    %v11216 = vunpack.c.l.b16 %v10928
    %v11217 = vunpack.c.l.b16 %v10929
    %v11218 = vunpack.c.l.b16 %v10930
    %v11219 = vunpack.c.l.b16 %v10931
    %v11220 = vunpack.c.l.b16 %v10932
    %v11221 = vunpack.c.l.b16 %v10933
    %v11222 = vunpack.c.l.b16 %v10934
    %v11223 = vunpack.c.l.b16 %v10935
    %v11224 = vunpack.c.l.b16 %v10936
    %v11225 = vunpack.c.l.b16 %v10937
    %v11226 = vunpack.c.l.b16 %v10938
    %v11227 = vunpack.c.l.b16 %v10939
    %v11228 = vunpack.c.l.b16 %v10940
    %v11229 = vunpack.c.l.b16 %v10941
    %v11230 = vunpack.c.l.b16 %v10942
    %v11231 = vunpack.c.l.b16 %v10943
    %v11232 = vunpack.c.l.b16 %v10944
    %v11233 = vunpack.c.l.b16 %v10945
    %v11234 = vunpack.c.l.b16 %v10946
    %v11235 = vunpack.c.l.b16 %v10947
    %v11236 = vunpack.c.l.b16 %v10948
    %v11237 = vunpack.c.l.b16 %v10949
    %v11238 = vunpack.c.l.b16 %v10950
    %v11239 = vunpack.c.l.b16 %v10951
    %v11240 = vunpack.c.l.b16 %v10952
    %v11241 = vunpack.c.l.b16 %v10953
    %v11242 = vunpack.c.l.b16 %v10954
    %v11243 = vunpack.c.l.b16 %v10955
    %v11244 = vunpack.c.l.b16 %v10956
    %v11245 = vunpack.c.l.b16 %v10957
    %v11246 = vunpack.c.l.b16 %v10958
    %v11247 = vunpack.c.l.b16 %v10959
    %v11248 = vunpack.c.l.b16 %v10960
    %v11249 = vunpack.c.l.b16 %v10961
    %v11250 = vunpack.c.l.b16 %v10962
    %v11251 = vunpack.c.l.b16 %v10963
    %v11252 = vunpack.c.l.b16 %v10964
    %v11253 = vunpack.c.l.b16 %v10965
    %v11254 = vunpack.c.l.b16 %v10966
    %v11255 = vunpack.c.l.b16 %v10967
    %v11256 = vunpack.c.l.b16 %v10968
    %v11257 = vunpack.c.l.b16 %v10969
    %v11258 = vunpack.c.l.b16 %v10970
    %v11259 = vunpack.c.l.b16 %v10971
    %v11260 = vunpack.c.l.b16 %v10972
    %v11261 = vunpack.c.l.b16 %v10973
    %v11262 = vunpack.c.l.b16 %v10974
    %v11263 = vunpack.c.l.b16 %v10975
    %v11264 = vunpack.c.l.b16 %v10976
    %v11265 = vunpack.c.l.b16 %v10977
    %v11266 = vunpack.c.l.b16 %v10978
    %v11267 = vunpack.c.l.b16 %v10979
    %v11268 = vunpack.c.l.b16 %v10980
    %v11269 = vunpack.c.l.b16 %v10981
    %v11270 = vunpack.c.l.b16 %v10982
    %v11271 = vunpack.c.l.b16 %v10983
    %v11272 = vunpack.c.l.b16 %v10984
    %v11273 = vunpack.c.l.b16 %v10985
    %v11274 = vunpack.c.l.b16 %v10986
    %v11275 = vunpack.c.l.b16 %v10987
    %v11276 = vunpack.c.l.b16 %v10988
    %v11277 = vunpack.c.l.b16 %v10989
    %v11278 = vunpack.c.l.b16 %v10990
    %v11279 = vunpack.c.l.b16 %v10991
    %v11280 = vunpack.c.l.b16 %v10992
    %v11281 = vunpack.c.l.b16 %v10993
    %v11282 = vunpack.c.l.b16 %v10994
    %v11283 = vunpack.c.l.b16 %v10995
    %v11284 = vunpack.c.l.b16 %v10996
    %v11285 = vunpack.c.l.b16 %v10997
    %v11286 = vunpack.c.l.b16 %v10998
    %v11287 = vunpack.c.l.b16 %v10999
    %v11288 = vunpack.c.l.b16 %v11000
    %v11289 = vunpack.c.l.b16 %v11001
    %v11290 = vpack.c.b16 %v11147, %v11146
    %v11291 = vpack.c.b16 %v11149, %v11148
    %v11292 = vpack.c.b16 %v11151, %v11150
    %v11293 = vpack.c.b16 %v11153, %v11152
    %v11294 = vpack.c.b16 %v11155, %v11154
    %v11295 = vpack.c.b16 %v11157, %v11156
    %v11296 = vpack.c.b16 %v11159, %v11158
    %v11297 = vpack.c.b16 %v11161, %v11160
    %v11298 = vpack.c.b16 %v11163, %v11162
    %v11299 = vpack.c.b16 %v11165, %v11164
    %v11300 = vpack.c.b16 %v11167, %v11166
    %v11301 = vpack.c.b16 %v11169, %v11168
    %v11302 = vpack.c.b16 %v11171, %v11170
    %v11303 = vpack.c.b16 %v11173, %v11172
    %v11304 = vpack.c.b16 %v11175, %v11174
    %v11305 = vpack.c.b16 %v11177, %v11176
    %v11306 = vpack.c.b16 %v11179, %v11178
    %v11307 = vpack.c.b16 %v11181, %v11180
    %v11308 = vpack.c.b16 %v11183, %v11182
    %v11309 = vpack.c.b16 %v11185, %v11184
    %v11310 = vpack.c.b16 %v11187, %v11186
    %v11311 = vpack.c.b16 %v11189, %v11188
    %v11312 = vpack.c.b16 %v11191, %v11190
    %v11313 = vpack.c.b16 %v11193, %v11192
    %v11314 = vpack.c.b16 %v11195, %v11194
    %v11315 = vpack.c.b16 %v11197, %v11196
    %v11316 = vpack.c.b16 %v11199, %v11198
    %v11317 = vpack.c.b16 %v11201, %v11200
    %v11318 = vpack.c.b16 %v11203, %v11202
    %v11319 = vpack.c.b16 %v11205, %v11204
    %v11320 = vpack.c.b16 %v11207, %v11206
    %v11321 = vpack.c.b16 %v11209, %v11208
    %v11322 = vpack.c.b16 %v11211, %v11210
    %v11323 = vpack.c.b16 %v11213, %v11212
    %v11324 = vpack.c.b16 %v11215, %v11214
    %v11325 = vpack.c.b16 %v11217, %v11216
    %v11326 = vpack.c.b16 %v11219, %v11218
    %v11327 = vpack.c.b16 %v11221, %v11220
    %v11328 = vpack.c.b16 %v11223, %v11222
    %v11329 = vpack.c.b16 %v11225, %v11224
    %v11330 = vpack.c.b16 %v11227, %v11226
    %v11331 = vpack.c.b16 %v11229, %v11228
    %v11332 = vpack.c.b16 %v11231, %v11230
    %v11333 = vpack.c.b16 %v11233, %v11232
    %v11334 = vpack.c.b16 %v11235, %v11234
    %v11335 = vpack.c.b16 %v11237, %v11236
    %v11336 = vpack.c.b16 %v11239, %v11238
    %v11337 = vpack.c.b16 %v11241, %v11240
    %v11338 = vpack.c.b16 %v11243, %v11242
    %v11339 = vpack.c.b16 %v11245, %v11244
    %v11340 = vpack.c.b16 %v11247, %v11246
    %v11341 = vpack.c.b16 %v11249, %v11248
    %v11342 = vpack.c.b16 %v11251, %v11250
    %v11343 = vpack.c.b16 %v11253, %v11252
    %v11344 = vpack.c.b16 %v11255, %v11254
    %v11345 = vpack.c.b16 %v11257, %v11256
    %v11346 = vpack.c.b16 %v11259, %v11258
    %v11347 = vpack.c.b16 %v11261, %v11260
    %v11348 = vpack.c.b16 %v11263, %v11262
    %v11349 = vpack.c.b16 %v11265, %v11264
    %v11350 = vpack.c.b16 %v11267, %v11266
    %v11351 = vpack.c.b16 %v11269, %v11268
    %v11352 = vpack.c.b16 %v11271, %v11270
    %v11353 = vpack.c.b16 %v11273, %v11272
    %v11354 = vpack.c.b16 %v11275, %v11274
    %v11355 = vpack.c.b16 %v11277, %v11276
    %v11356 = vpack.c.b16 %v11279, %v11278
    %v11357 = vpack.c.b16 %v11281, %v11280
    %v11358 = vpack.c.b16 %v11283, %v11282
    %v11359 = vpack.c.b16 %v11285, %v11284
    %v11360 = vpack.c.b16 %v11287, %v11286
    %v11361 = vpack.c.b16 %v11289, %v11288
    %11434 = vmatprep.subr.bf16.mxu0 0
    %11435 = vmatpush1.bf16.msra.mxu0 %v11290
    %11436 = vmatprep.subr.bf16.mxu0 0
    %11437 = vmatpush1.bf16.msra.mxu0 %v11291
    %11438 = vmatprep.subr.bf16.mxu0 0
    %11439 = vmatpush1.bf16.msra.mxu0 %v11292
    %11440 = vmatprep.subr.bf16.mxu0 0
    %11441 = vmatpush1.bf16.msra.mxu0 %v11293
    %11442 = vmatprep.subr.bf16.mxu0 0
    %11443 = vmatpush1.bf16.msra.mxu0 %v11294
    %11444 = vmatprep.subr.bf16.mxu0 0
    %11445 = vmatpush1.bf16.msra.mxu0 %v11295
    %11446 = vmatprep.subr.bf16.mxu0 0
    %11447 = vmatpush1.bf16.msra.mxu0 %v11296
    %11448 = vmatprep.subr.bf16.mxu0 0
    %11449 = vmatpush1.bf16.msra.mxu0 %v11297
    %11450 = vmatprep.subr.bf16.mxu0 0
    %11451 = vmatpush1.bf16.msra.mxu0 %v11298
    %11452 = vmatprep.subr.bf16.mxu0 0
    %11453 = vmatpush1.bf16.msra.mxu0 %v11299
    %11454 = vmatprep.subr.bf16.mxu0 0
    %11455 = vmatpush1.bf16.msra.mxu0 %v11300
    %11456 = vmatprep.subr.bf16.mxu0 0
    %11457 = vmatpush1.bf16.msra.mxu0 %v11301
    %11458 = vmatprep.subr.bf16.mxu0 0
    %11459 = vmatpush1.bf16.msra.mxu0 %v11302
    %11460 = vmatprep.subr.bf16.mxu0 0
    %11461 = vmatpush1.bf16.msra.mxu0 %v11303
    %11462 = vmatprep.subr.bf16.mxu0 0
    %11463 = vmatpush1.bf16.msra.mxu0 %v11304
    %11464 = vmatprep.subr.bf16.mxu0 0
    %11465 = vmatpush1.bf16.msra.mxu0 %v11305
    %11466 = vmatprep.mubr.bf16.mxu0 %v10822
    %11467 = vmatmul.mubr.bf16.gmra.mrb[0].mxu0 %v10821
    %v11468 = vpop.f32.mrb[0].mxu0
    %v11469 = vadd.f32 0.0, %v11468
    %v11470 = vpop.f32.mrb[0].mxu0
    %v11471 = vpop.f32.mrb[0].mxu0
    %v11472 = vadd.f32 0.0, %v11471
    %v11473 = vpop.f32.mrb[0].mxu0
    %11474 = vmatprep.mubr.bf16.mxu0 %v10831
    %11475 = vmatmul.mubr.bf16.gmra.mrb[0].mxu0 %v10830
    %v11476 = vpop.f32.mrb[0].mxu0
    %v11477 = vadd.f32 0.0, %v11476
    %v11478 = vpop.f32.mrb[0].mxu0
    %v11479 = vpop.f32.mrb[0].mxu0
    %v11480 = vadd.f32 0.0, %v11479
    %v11481 = vpop.f32.mrb[0].mxu0
    %11482 = vmatprep.mubr.bf16.mxu0 %v10840
    %11483 = vmatmul.mubr.bf16.gmra.mrb[0].mxu0 %v10839
    %v11484 = vpop.f32.mrb[0].mxu0
    %v11485 = vadd.f32 0.0, %v11484
    %v11486 = vpop.f32.mrb[0].mxu0
    %v11487 = vpop.f32.mrb[0].mxu0
    %v11488 = vadd.f32 0.0, %v11487
    %v11489 = vpop.f32.mrb[0].mxu0
    %11490 = vmatprep.mubr.bf16.mxu0 %v10849
    %11491 = vmatmul.mubr.bf16.gmra.mrb[0].mxu0 %v10848
    %v11492 = vpop.f32.mrb[0].mxu0
    %v11493 = vadd.f32 0.0, %v11492
    %v11494 = vpop.f32.mrb[0].mxu0
    %v11495 = vpop.f32.mrb[0].mxu0
    %v11496 = vadd.f32 0.0, %v11495
    %v11497 = vpop.f32.mrb[0].mxu0
    %11498 = vdwg.mxu0
    %11499 = vmatprep.subr.bf16.mxu0 0
    %11500 = vmatpush1.bf16.msra.mxu0 %v11306
    %11501 = vmatprep.subr.bf16.mxu0 0
    %11502 = vmatpush1.bf16.msra.mxu0 %v11307
    %11503 = vmatprep.subr.bf16.mxu0 0
    %11504 = vmatpush1.bf16.msra.mxu0 %v11308
    %11505 = vmatprep.subr.bf16.mxu0 0
    %11506 = vmatpush1.bf16.msra.mxu0 %v11309
    %11507 = vmatprep.subr.bf16.mxu0 0
    %11508 = vmatpush1.bf16.msra.mxu0 %v11310
    %11509 = vmatprep.subr.bf16.mxu0 0
    %11510 = vmatpush1.bf16.msra.mxu0 %v11311
    %11511 = vmatprep.subr.bf16.mxu0 0
    %11512 = vmatpush1.bf16.msra.mxu0 %v11312
    %11513 = vmatprep.subr.bf16.mxu0 0
    %11514 = vmatpush1.bf16.msra.mxu0 %v11313
    %11515 = vmatprep.subr.bf16.mxu0 0
    %11516 = vmatpush1.bf16.msra.mxu0 %v11314
    %11517 = vmatprep.subr.bf16.mxu0 0
    %11518 = vmatpush1.bf16.msra.mxu0 %v11315
    %11519 = vmatprep.subr.bf16.mxu0 0
    %11520 = vmatpush1.bf16.msra.mxu0 %v11316
    %11521 = vmatprep.subr.bf16.mxu0 0
    %11522 = vmatpush1.bf16.msra.mxu0 %v11317
    %11523 = vmatprep.subr.bf16.mxu0 0
    %11524 = vmatpush1.bf16.msra.mxu0 %v11318
    %11525 = vmatprep.subr.bf16.mxu0 0
    %11526 = vmatpush1.bf16.msra.mxu0 %v11319
    %11527 = vmatprep.subr.bf16.mxu0 0
    %11528 = vmatpush1.bf16.msra.mxu0 %v11320
    %11529 = vmatprep.subr.bf16.mxu0 0
    %11530 = vmatpush1.bf16.msra.mxu0 %v11321
    %11531 = vmatprep.mubr.bf16.mxu0 %v10824
    %11532 = vmatmul.mubr.bf16.gmra.mrb[0].mxu0 %v10823
    %v11533 = vpop.f32.mrb[0].mxu0
    %v11534 = vadd.f32 %v11469, %v11533
    %v11535 = vpop.f32.mrb[0].mxu0
    %v11536 = vpop.f32.mrb[0].mxu0
    %v11537 = vadd.f32 %v11472, %v11536
    %v11538 = vpop.f32.mrb[0].mxu0
    %11539 = vmatprep.mubr.bf16.mxu0 %v10833
    %11540 = vmatmul.mubr.bf16.gmra.mrb[0].mxu0 %v10832
    %v11541 = vpop.f32.mrb[0].mxu0
    %v11542 = vadd.f32 %v11477, %v11541
    %v11543 = vpop.f32.mrb[0].mxu0
    %v11544 = vpop.f32.mrb[0].mxu0
    %v11545 = vadd.f32 %v11480, %v11544
    %v11546 = vpop.f32.mrb[0].mxu0
    %11547 = vmatprep.mubr.bf16.mxu0 %v10842
    %11548 = vmatmul.mubr.bf16.gmra.mrb[0].mxu0 %v10841
    %v11549 = vpop.f32.mrb[0].mxu0
    %v11550 = vadd.f32 %v11485, %v11549
    %v11551 = vpop.f32.mrb[0].mxu0
    %v11552 = vpop.f32.mrb[0].mxu0
    %v11553 = vadd.f32 %v11488, %v11552
    %v11554 = vpop.f32.mrb[0].mxu0
    %11555 = vmatprep.mubr.bf16.mxu0 %v10851
    %11556 = vmatmul.mubr.bf16.gmra.mrb[0].mxu0 %v10850
    %v11557 = vpop.f32.mrb[0].mxu0
    %v11558 = vadd.f32 %v11493, %v11557
    %v11559 = vpop.f32.mrb[0].mxu0
    %v11560 = vpop.f32.mrb[0].mxu0
    %v11561 = vadd.f32 %v11496, %v11560
    %v11562 = vpop.f32.mrb[0].mxu0
    %11563 = vdwg.mxu0
    %11564 = vmatprep.subr.bf16.mxu0 0
    %11565 = vmatpush1.bf16.msra.mxu0 %v11322
    %11566 = vmatprep.subr.bf16.mxu0 0
    %11567 = vmatpush1.bf16.msra.mxu0 %v11323
    %11568 = vmatprep.subr.bf16.mxu0 0
    %11569 = vmatpush1.bf16.msra.mxu0 %v11324
    %11570 = vmatprep.subr.bf16.mxu0 0
    %11571 = vmatpush1.bf16.msra.mxu0 %v11325
    %11572 = vmatprep.subr.bf16.mxu0 0
    %11573 = vmatpush1.bf16.msra.mxu0 %v11326
    %11574 = vmatprep.subr.bf16.mxu0 0
    %11575 = vmatpush1.bf16.msra.mxu0 %v11327
    %11576 = vmatprep.subr.bf16.mxu0 0
    %11577 = vmatpush1.bf16.msra.mxu0 %v11328
    %11578 = vmatprep.subr.bf16.mxu0 0
    %11579 = vmatpush1.bf16.msra.mxu0 %v11329
    %11580 = vmatprep.subr.bf16.mxu0 0
    %11581 = vmatpush1.bf16.msra.mxu0 %v11330
    %11582 = vmatprep.subr.bf16.mxu0 0
    %11583 = vmatpush1.bf16.msra.mxu0 %v11331
    %11584 = vmatprep.subr.bf16.mxu0 0
    %11585 = vmatpush1.bf16.msra.mxu0 %v11332
    %11586 = vmatprep.subr.bf16.mxu0 0
    %11587 = vmatpush1.bf16.msra.mxu0 %v11333
    %11588 = vmatprep.subr.bf16.mxu0 0
    %11589 = vmatpush1.bf16.msra.mxu0 %v11334
    %11590 = vmatprep.subr.bf16.mxu0 0
    %11591 = vmatpush1.bf16.msra.mxu0 %v11335
    %11592 = vmatprep.subr.bf16.mxu0 0
    %11593 = vmatpush1.bf16.msra.mxu0 %v11336
    %11594 = vmatprep.subr.bf16.mxu0 0
    %11595 = vmatpush1.bf16.msra.mxu0 %v11337
    %11596 = vmatprep.mubr.bf16.mxu0 %v10826
    %11597 = vmatmul.mubr.bf16.gmra.mrb[0].mxu0 %v10825
    %v11598 = vpop.f32.mrb[0].mxu0
    %v11599 = vadd.f32 %v11534, %v11598
    %v11600 = vpop.f32.mrb[0].mxu0
    %v11601 = vpop.f32.mrb[0].mxu0
    %v11602 = vadd.f32 %v11537, %v11601
    %v11603 = vpop.f32.mrb[0].mxu0
    %11604 = vmatprep.mubr.bf16.mxu0 %v10835
    %11605 = vmatmul.mubr.bf16.gmra.mrb[0].mxu0 %v10834
    %v11606 = vpop.f32.mrb[0].mxu0
    %v11607 = vadd.f32 %v11542, %v11606
    %v11608 = vpop.f32.mrb[0].mxu0
    %v11609 = vpop.f32.mrb[0].mxu0
    %v11610 = vadd.f32 %v11545, %v11609
    %v11611 = vpop.f32.mrb[0].mxu0
    %11612 = vmatprep.mubr.bf16.mxu0 %v10844
    %11613 = vmatmul.mubr.bf16.gmra.mrb[0].mxu0 %v10843
    %v11614 = vpop.f32.mrb[0].mxu0
    %v11615 = vadd.f32 %v11550, %v11614
    %v11616 = vpop.f32.mrb[0].mxu0
    %v11617 = vpop.f32.mrb[0].mxu0
    %v11618 = vadd.f32 %v11553, %v11617
    %v11619 = vpop.f32.mrb[0].mxu0
    %11620 = vmatprep.mubr.bf16.mxu0 %v10853
    %11621 = vmatmul.mubr.bf16.gmra.mrb[0].mxu0 %v10852
    %v11622 = vpop.f32.mrb[0].mxu0
    %v11623 = vadd.f32 %v11558, %v11622
    %v11624 = vpop.f32.mrb[0].mxu0
    %v11625 = vpop.f32.mrb[0].mxu0
    %v11626 = vadd.f32 %v11561, %v11625
    %v11627 = vpop.f32.mrb[0].mxu0
    %11628 = vdwg.mxu0
    %11629 = vmatprep.subr.bf16.mxu0 0
    %11630 = vmatpush1.bf16.msra.mxu0 %v11338
    %11631 = vmatprep.subr.bf16.mxu0 0
    %11632 = vmatpush1.bf16.msra.mxu0 %v11339
    %11633 = vmatprep.subr.bf16.mxu0 0
    %11634 = vmatpush1.bf16.msra.mxu0 %v11340
    %11635 = vmatprep.subr.bf16.mxu0 0
    %11636 = vmatpush1.bf16.msra.mxu0 %v11341
    %11637 = vmatprep.subr.bf16.mxu0 0
    %11638 = vmatpush1.bf16.msra.mxu0 %v11342
    %11639 = vmatprep.subr.bf16.mxu0 0
    %11640 = vmatpush1.bf16.msra.mxu0 %v11343
    %11641 = vmatprep.subr.bf16.mxu0 0
    %11642 = vmatpush1.bf16.msra.mxu0 %v11344
    %11643 = vmatprep.subr.bf16.mxu0 0
    %11644 = vmatpush1.bf16.msra.mxu0 %v11345
    %11645 = vmatprep.subr.bf16.mxu0 0
    %11646 = vmatpush1.bf16.msra.mxu0 %v11346
    %11647 = vmatprep.subr.bf16.mxu0 0
    %11648 = vmatpush1.bf16.msra.mxu0 %v11347
    %11649 = vmatprep.subr.bf16.mxu0 0
    %11650 = vmatpush1.bf16.msra.mxu0 %v11348
    %11651 = vmatprep.subr.bf16.mxu0 0
    %11652 = vmatpush1.bf16.msra.mxu0 %v11349
    %11653 = vmatprep.subr.bf16.mxu0 0
    %11654 = vmatpush1.bf16.msra.mxu0 %v11350
    %11655 = vmatprep.subr.bf16.mxu0 0
    %11656 = vmatpush1.bf16.msra.mxu0 %v11351
    %11657 = vmatprep.subr.bf16.mxu0 0
    %11658 = vmatpush1.bf16.msra.mxu0 %v11352
    %11659 = vmatprep.subr.bf16.mxu0 0
    %11660 = vmatpush1.bf16.msra.mxu0 %v11353
    %11661 = vmatprep.mubr.bf16.mxu0 %v10828
    %11662 = vmatmul.mubr.bf16.gmra.mrb[0].mxu0 %v10827
    %v11663 = vpop.f32.mrb[0].mxu0
    %v11664 = vadd.f32 %v11599, %v11663
    %v11665 = vpop.f32.mrb[0].mxu0
    %v11666 = vpop.f32.mrb[0].mxu0
    %v11667 = vadd.f32 %v11602, %v11666
    %v11668 = vpop.f32.mrb[0].mxu0
    %11669 = vmatprep.mubr.bf16.mxu0 %v10837
    %11670 = vmatmul.mubr.bf16.gmra.mrb[0].mxu0 %v10836
    %v11671 = vpop.f32.mrb[0].mxu0
    %v11672 = vadd.f32 %v11607, %v11671
    %v11673 = vpop.f32.mrb[0].mxu0
    %v11674 = vpop.f32.mrb[0].mxu0
    %v11675 = vadd.f32 %v11610, %v11674
    %v11676 = vpop.f32.mrb[0].mxu0
    %11677 = vmatprep.mubr.bf16.mxu0 %v10846
    %11678 = vmatmul.mubr.bf16.gmra.mrb[0].mxu0 %v10845
    %v11679 = vpop.f32.mrb[0].mxu0
    %v11680 = vadd.f32 %v11615, %v11679
    %v11681 = vpop.f32.mrb[0].mxu0
    %v11682 = vpop.f32.mrb[0].mxu0
    %v11683 = vadd.f32 %v11618, %v11682
    %v11684 = vpop.f32.mrb[0].mxu0
    %11685 = vmatprep.mubr.bf16.mxu0 %v10855
    %11686 = vmatmul.mubr.bf16.gmra.mrb[0].mxu0 %v10854
    %v11687 = vpop.f32.mrb[0].mxu0
    %v11688 = vadd.f32 %v11623, %v11687
    %v11689 = vpop.f32.mrb[0].mxu0
    %v11690 = vpop.f32.mrb[0].mxu0
    %v11691 = vadd.f32 %v11626, %v11690
    %v11692 = vpop.f32.mrb[0].mxu0
    %11693 = vdwg.mxu0
    %11694 = vmatprep.subr.bf16.mxu0 0
    %11695 = vmatpush1.bf16.msra.mxu0 %v11354
    %11696 = vmatprep.subr.bf16.mxu0 0
    %11697 = vmatpush1.bf16.msra.mxu0 %v11355
    %11698 = vmatprep.subr.bf16.mxu0 0
    %11699 = vmatpush1.bf16.msra.mxu0 %v11356
    %11700 = vmatprep.subr.bf16.mxu0 0
    %11701 = vmatpush1.bf16.msra.mxu0 %v11357
    %11702 = vmatprep.subr.bf16.mxu0 0
    %11703 = vmatpush1.bf16.msra.mxu0 %v11358
    %11704 = vmatprep.subr.bf16.mxu0 0
    %11705 = vmatpush1.bf16.msra.mxu0 %v11359
    %11706 = vmatprep.subr.bf16.mxu0 0
    %11707 = vmatpush1.bf16.msra.mxu0 %v11360
    %11708 = vmatprep.subr.bf16.mxu0 0
    %11709 = vmatpush1.bf16.msra.mxu0 %v11361
    %11710 = vmatprep.subr.bf16.mxu0 0
    %11711 = vmatpush1.bf16.msra.mxu0 0
    %11712 = vmatprep.subr.bf16.mxu0 0
    %11713 = vmatpush1.bf16.msra.mxu0 0
    %11714 = vmatprep.subr.bf16.mxu0 0
    %11715 = vmatpush1.bf16.msra.mxu0 0
    %11716 = vmatprep.subr.bf16.mxu0 0
    %11717 = vmatpush1.bf16.msra.mxu0 0
    %11718 = vmatprep.subr.bf16.mxu0 0
    %11719 = vmatpush1.bf16.msra.mxu0 0
    %11720 = vmatprep.subr.bf16.mxu0 0
    %11721 = vmatpush1.bf16.msra.mxu0 0
    %11722 = vmatprep.subr.bf16.mxu0 0
    %11723 = vmatpush1.bf16.msra.mxu0 0
    %11724 = vmatprep.subr.bf16.mxu0 0
    %11725 = vmatpush1.bf16.msra.mxu0 0
    %11726 = vmatprep.mubr.bf16.mxu0 0
    %11727 = vmatmul.mubr.bf16.gmra.mrb[0].mxu0 %v10829
    %v11728 = vpop.f32.mrb[0].mxu0
    %v11729 = vadd.f32 %v11664, %v11728
    %v11730 = vpop.f32.mrb[0].mxu0
    %v11731 = vpop.f32.mrb[0].mxu0
    %v11732 = vadd.f32 %v11667, %v11731
    %v11733 = vpop.f32.mrb[0].mxu0
    %11734 = vmatprep.mubr.bf16.mxu0 0
    %11735 = vmatmul.mubr.bf16.gmra.mrb[0].mxu0 %v10838
    %v11736 = vpop.f32.mrb[0].mxu0
    %v11737 = vadd.f32 %v11672, %v11736
    %v11738 = vpop.f32.mrb[0].mxu0
    %v11739 = vpop.f32.mrb[0].mxu0
    %v11740 = vadd.f32 %v11675, %v11739
    %v11741 = vpop.f32.mrb[0].mxu0
    %11742 = vmatprep.mubr.bf16.mxu0 0
    %11743 = vmatmul.mubr.bf16.gmra.mrb[0].mxu0 %v10847
    %v11744 = vpop.f32.mrb[0].mxu0
    %v11745 = vadd.f32 %v11680, %v11744
    %v11746 = vpop.f32.mrb[0].mxu0
    %v11747 = vpop.f32.mrb[0].mxu0
    %v11748 = vadd.f32 %v11683, %v11747
    %v11749 = vpop.f32.mrb[0].mxu0
    %11750 = vmatprep.mubr.bf16.mxu0 0
    %11751 = vmatmul.mubr.bf16.gmra.mrb[0].mxu0 %v10856
    %v11752 = vpop.f32.mrb[0].mxu0
    %v11753 = vadd.f32 %v11688, %v11752
    %v11754 = vpop.f32.mrb[0].mxu0
    %v11755 = vpop.f32.mrb[0].mxu0
    %v11756 = vadd.f32 %v11691, %v11755
    %v11757 = vpop.f32.mrb[0].mxu0
    %11758 = vdwg.mxu0
    %v11759 = vadd.f32 %v11729, %v11732
    %v11760 = vadd.f32 %v11759, %v11737
    %v11761 = vadd.f32 %v11760, %v11740
    %v11762 = vadd.f32 %v11761, %v11745
    %v11763 = vadd.f32 %v11762, %v11748
    %v11764 = vadd.f32 %v11763, %v11753
    %v11765 = vadd.f32 %v11764, %v11756
    %v11766 = vrot.slane %v11765, 4
    %v11767 = vadd.f32 %v11765, %v11766
    %v11768 = vrot.slane %v11767, 2
    %v11769 = vadd.f32 %v11767, %v11768
    %v11770 = vrot.slane %v11769, 1
    %v11771 = vadd.f32 %v11769, %v11770
    %v11772 = vmul.f32 %v11729, %v11729
    %v11773 = vmul.f32 %v11732, %v11732
    %v11774 = vmul.f32 %v11737, %v11737
    %v11775 = vmul.f32 %v11740, %v11740
    %v11776 = vmul.f32 %v11745, %v11745
    %v11777 = vmul.f32 %v11748, %v11748
    %v11778 = vmul.f32 %v11753, %v11753
    %v11779 = vmul.f32 %v11756, %v11756
    %v11780 = vadd.f32 %v11772, %v11773
    %v11781 = vadd.f32 %v11780, %v11774
    %v11782 = vadd.f32 %v11781, %v11775
    %v11783 = vadd.f32 %v11782, %v11776
    %v11784 = vadd.f32 %v11783, %v11777
    %v11785 = vadd.f32 %v11784, %v11778
    %v11786 = vadd.f32 %v11785, %v11779
    %v11787 = vrot.slane %v11786, 4
    %v11788 = vadd.f32 %v11786, %v11787
    %v11789 = vrot.slane %v11788, 2
    %v11790 = vadd.f32 %v11788, %v11789
    %v11791 = vrot.slane %v11790, 1
    %v11792 = vadd.f32 %v11790, %v11791
    %v11793 = vmul.f32 %v11771, 0.015625
    %v11794 = vmul.f32 %v11792, 0.015625
    %v11795 = vmul.f32 %v11793, %v11793
    %v11796 = vsub.f32 %v11794, %v11795
    %v11797 = vsub.f32 %v11729, %v11793
    %v11798 = vsub.f32 %v11732, %v11793
    %v11799 = vsub.f32 %v11737, %v11793
    %v11800 = vsub.f32 %v11740, %v11793
    %v11801 = vsub.f32 %v11745, %v11793
    %v11802 = vsub.f32 %v11748, %v11793
    %v11803 = vsub.f32 %v11753, %v11793
    %v11804 = vsub.f32 %v11756, %v11793
    %v11805 = vadd.f32 %v11796, 1e-05
    %v11806 = vrsqrt.pop %v11805
    %v11807 = vmul.f32 %v11797, %v11806
    %v11808 = vmul.f32 %v11798, %v11806
    %v11809 = vmul.f32 %v11799, %v11806
    %v11810 = vmul.f32 %v11800, %v11806
    %v11811 = vmul.f32 %v11801, %v11806
    %v11812 = vmul.f32 %v11802, %v11806
    %v11813 = vmul.f32 %v11803, %v11806
    %v11814 = vmul.f32 %v11804, %v11806
    %s11815 = scalar_lea.vmem [#allocation8], 9
    %v11816 = vld [vmem:[%s11815] sm:$0x1]
    %v11818 = vlaneseq
    %v11819 = vshrl.u32 %v11818, 7
    %v11820 = vsub.s32 0, %v11819
    %v11821 = vrot.slane %v11816, %v11820
    %v11823 = vmul.f32 %v11821, %v11807
    %v11824 = vmul.f32 %v11821, %v11808
    %v11825 = vmul.f32 %v11821, %v11809
    %v11826 = vmul.f32 %v11821, %v11810
    %v11827 = vmul.f32 %v11821, %v11811
    %v11828 = vmul.f32 %v11821, %v11812
    %v11829 = vmul.f32 %v11821, %v11813
    %v11830 = vmul.f32 %v11821, %v11814
    %s11831 = scalar_lea.vmem [#allocation10], 9
    %v11832 = vld [vmem:[%s11831] sm:$0x1]
    %v11834 = vlaneseq
    %v11835 = vshrl.u32 %v11834, 7
    %v11836 = vsub.s32 0, %v11835
    %v11837 = vrot.slane %v11832, %v11836
    %v11839 = vadd.f32 %v11823, %v11837
    %v11840 = vadd.f32 %v11824, %v11837
    %v11841 = vadd.f32 %v11825, %v11837
    %v11842 = vadd.f32 %v11826, %v11837
    %v11843 = vadd.f32 %v11827, %v11837
    %v11844 = vadd.f32 %v11828, %v11837
    %v11845 = vadd.f32 %v11829, %v11837
    %v11846 = vadd.f32 %v11830, %v11837
    %v11847 = vmax.f32 %v11839, 0.0
    %v11848 = vmax.f32 %v11840, 0.0
    %v11849 = vmax.f32 %v11841, 0.0
    %v11850 = vmax.f32 %v11842, 0.0
    %v11851 = vmax.f32 %v11843, 0.0
    %v11852 = vmax.f32 %v11844, 0.0
    %v11853 = vmax.f32 %v11845, 0.0
    %v11854 = vmax.f32 %v11846, 0.0
    %v11855 = vadd.f32 %v11847, %v9587
    %v11856 = vadd.f32 %v11848, %v9588
    %v11857 = vadd.f32 %v11849, %v9589
    %v11858 = vadd.f32 %v11850, %v9590
    %v11859 = vadd.f32 %v11851, %v9591
    %v11860 = vadd.f32 %v11852, %v9592
    %v11861 = vadd.f32 %v11853, %v9593
    %v11862 = vadd.f32 %v11854, %v9594
    %v11863 = vld [vmem:[#allocation11] sm:$0x1]
    %v11865 = vlaneseq
    %v11866 = vshrl.u32 %v11865, 7
    %v11867 = vsub.s32 0, %v11866
    %v11868 = vrot.slane %v11863, %v11867
    %v11870 = vmul.f32 %v11855, %v11868
    %v11871 = vmul.f32 %v11856, %v11868
    %v11872 = vmul.f32 %v11857, %v11868
    %v11873 = vmul.f32 %v11858, %v11868
    %v11874 = vmul.f32 %v11859, %v11868
    %v11875 = vmul.f32 %v11860, %v11868
    %v11876 = vmul.f32 %v11861, %v11868
    %v11877 = vmul.f32 %v11862, %v11868
    %11878 = vadd.xlane.f32.xlu0 %v11870
    %v11879 = vpop.xlane.xlu0 %11878
    %11880 = vadd.xlane.f32.xlu0 %v11871
    %v11881 = vpop.xlane.xlu0 %11880
    %11882 = vadd.xlane.f32.xlu0 %v11872
    %v11883 = vpop.xlane.xlu0 %11882
    %11884 = vadd.xlane.f32.xlu0 %v11873
    %v11885 = vpop.xlane.xlu0 %11884
    %11886 = vadd.xlane.f32.xlu0 %v11874
    %v11887 = vpop.xlane.xlu0 %11886
    %11888 = vadd.xlane.f32.xlu0 %v11875
    %v11889 = vpop.xlane.xlu0 %11888
    %11890 = vadd.xlane.f32.xlu0 %v11876
    %v11891 = vpop.xlane.xlu0 %11890
    %11892 = vadd.xlane.f32.xlu0 %v11877
    %v11893 = vpop.xlane.xlu0 %11892
    %v11894 = vld [vmem:[#allocation2] sm:$0x1]
    %v11896 = vlaneseq
    %v11897 = vshrl.u32 %v11896, 7
    %v11898 = vsub.s32 0, %v11897
    %v11899 = vrot.slane %v11894, %v11898
    %v11901 = vadd.f32 %v11879, %v11899
    %v11902 = vadd.f32 %v11881, %v11899
    %v11903 = vadd.f32 %v11883, %v11899
    %v11904 = vadd.f32 %v11885, %v11899
    %v11905 = vadd.f32 %v11887, %v11899
    %v11906 = vadd.f32 %v11889, %v11899
    %v11907 = vadd.f32 %v11891, %v11899
    %v11908 = vadd.f32 %v11893, %v11899
    %v11909 = vmax.f32 %v11901, 0.0
    %v11910 = vmax.f32 %v11902, 0.0
    %v11911 = vmax.f32 %v11903, 0.0
    %v11912 = vmax.f32 %v11904, 0.0
    %v11913 = vmax.f32 %v11905, 0.0
    %v11914 = vmax.f32 %v11906, 0.0
    %v11915 = vmax.f32 %v11907, 0.0
    %v11916 = vmax.f32 %v11908, 0.0
    %v11917 = vld [vmem:[#allocation13] sm:$0x1]
    %v11919 = vlaneseq
    %v11920 = vshrl.u32 %v11919, 7
    %v11921 = vsub.s32 0, %v11920
    %v11922 = vrot.slane %v11917, %v11921
    %v11924 = vmul.f32 %v11855, %v11922
    %v11925 = vmul.f32 %v11856, %v11922
    %v11926 = vmul.f32 %v11857, %v11922
    %v11927 = vmul.f32 %v11858, %v11922
    %v11928 = vmul.f32 %v11859, %v11922
    %v11929 = vmul.f32 %v11860, %v11922
    %v11930 = vmul.f32 %v11861, %v11922
    %v11931 = vmul.f32 %v11862, %v11922
    %11932 = vadd.xlane.f32.xlu0 %v11924
    %v11933 = vpop.xlane.xlu0 %11932
    %11934 = vadd.xlane.f32.xlu0 %v11925
    %v11935 = vpop.xlane.xlu0 %11934
    %11936 = vadd.xlane.f32.xlu0 %v11926
    %v11937 = vpop.xlane.xlu0 %11936
    %11938 = vadd.xlane.f32.xlu0 %v11927
    %v11939 = vpop.xlane.xlu0 %11938
    %11940 = vadd.xlane.f32.xlu0 %v11928
    %v11941 = vpop.xlane.xlu0 %11940
    %11942 = vadd.xlane.f32.xlu0 %v11929
    %v11943 = vpop.xlane.xlu0 %11942
    %11944 = vadd.xlane.f32.xlu0 %v11930
    %v11945 = vpop.xlane.xlu0 %11944
    %11946 = vadd.xlane.f32.xlu0 %v11931
    %v11947 = vpop.xlane.xlu0 %11946
    %v11948 = vld [vmem:[#allocation3] sm:$0x1]
    %v11950 = vlaneseq
    %v11951 = vshrl.u32 %v11950, 7
    %v11952 = vsub.s32 0, %v11951
    %v11953 = vrot.slane %v11948, %v11952
    %v11955 = vadd.f32 %v11933, %v11953
    %v11956 = vadd.f32 %v11935, %v11953
    %v11957 = vadd.f32 %v11937, %v11953
    %v11958 = vadd.f32 %v11939, %v11953
    %v11959 = vadd.f32 %v11941, %v11953
    %v11960 = vadd.f32 %v11943, %v11953
    %v11961 = vadd.f32 %v11945, %v11953
    %v11962 = vadd.f32 %v11947, %v11953
    %v11963 = vmax.f32 %v11955, 0.0
    %v11964 = vmax.f32 %v11956, 0.0
    %v11965 = vmax.f32 %v11957, 0.0
    %v11966 = vmax.f32 %v11958, 0.0
    %v11967 = vmax.f32 %v11959, 0.0
    %v11968 = vmax.f32 %v11960, 0.0
    %v11969 = vmax.f32 %v11961, 0.0
    %v11970 = vmax.f32 %v11962, 0.0
    %v11971 = vld [vmem:[%s9] sm:$0xff]
    %v11972 = vld [vmem:[%s9 + $0x8] sm:$0xff]
    %v11973 = vld [vmem:[%s9 + $0x10] sm:$0xff]
    %v11974 = vld [vmem:[%s9 + $0x18] sm:$0xff]
    %v11975 = vld [vmem:[%s9 + $0x20] sm:$0xff]
    %v11976 = vld [vmem:[%s9 + $0x28] sm:$0xff]
    %v11977 = vld [vmem:[%s9 + $0x30] sm:$0xff]
    %v11978 = vld [vmem:[%s9 + $0x38] sm:$0xff]
    %11980 = vset.pattern.permute.xlu0 0
    %11981 = vperm.xlu0 %11980, %v11909
    %v11982 = vpop.permute.xlu0 %11981
    %11985 = vset.pattern.permute.xlu0 0
    %11986 = vperm.xlu0 %11985, %v11910
    %v11987 = vpop.permute.xlu0 %11986
    %11990 = vset.pattern.permute.xlu0 0
    %11991 = vperm.xlu0 %11990, %v11911
    %v11992 = vpop.permute.xlu0 %11991
    %11995 = vset.pattern.permute.xlu0 0
    %11996 = vperm.xlu0 %11995, %v11912
    %v11997 = vpop.permute.xlu0 %11996
    %12000 = vset.pattern.permute.xlu0 0
    %12001 = vperm.xlu0 %12000, %v11913
    %v12002 = vpop.permute.xlu0 %12001
    %12005 = vset.pattern.permute.xlu0 0
    %12006 = vperm.xlu0 %12005, %v11914
    %v12007 = vpop.permute.xlu0 %12006
    %12010 = vset.pattern.permute.xlu0 0
    %12011 = vperm.xlu0 %12010, %v11915
    %v12012 = vpop.permute.xlu0 %12011
    %12015 = vset.pattern.permute.xlu0 0
    %12016 = vperm.xlu0 %12015, %v11916
    %v12017 = vpop.permute.xlu0 %12016
    %v12019 = vmul.f32 %v11982, %v11971
    %v12020 = vmul.f32 %v11987, %v11972
    %v12021 = vmul.f32 %v11992, %v11973
    %v12022 = vmul.f32 %v11997, %v11974
    %v12023 = vmul.f32 %v12002, %v11975
    %v12024 = vmul.f32 %v12007, %v11976
    %v12025 = vmul.f32 %v12012, %v11977
    %v12026 = vmul.f32 %v12017, %v11978
    %vm12027 = vcmask 23552
    %v12028 = vsel %vm12027, %v12019, 0.0
    %v12029 = vsel %vm12027, %v12020, 0.0
    %v12030 = vadd.f32 %v12028, %v12029
    %v12031 = vsel %vm12027, %v12021, 0.0
    %v12032 = vadd.f32 %v12030, %v12031
    %v12033 = vsel %vm12027, %v12022, 0.0
    %v12034 = vadd.f32 %v12032, %v12033
    %v12035 = vsel %vm12027, %v12023, 0.0
    %v12036 = vadd.f32 %v12034, %v12035
    %v12037 = vsel %vm12027, %v12024, 0.0
    %v12038 = vadd.f32 %v12036, %v12037
    %v12039 = vsel %vm12027, %v12025, 0.0
    %v12040 = vadd.f32 %v12038, %v12039
    %v12041 = vsel %vm12027, %v12026, 0.0
    %v12042 = vadd.f32 %v12040, %v12041
    %v12043 = vrot.slane %v12042, 4
    %v12044 = vadd.f32 %v12042, %v12043
    %v12045 = vrot.slane %v12044, 2
    %v12046 = vadd.f32 %v12044, %v12045
    %v12047 = vrot.slane %v12046, 1
    %v12048 = vadd.f32 %v12046, %v12047
    %v12049 = vld [vmem:[#allocation14] sm:$0x1]
    %v12050 = vadd.f32 %v12048, %v12049
    %vm12051 = vcmask 16384
    %v12052 = vsel %vm12051, %v12050, -inf
    %12053 = vmax.xlane.f32.xlu0 %v12052
    %v12054 = vpop.xlane.xlu0 %12053
    %v12055 = vsub.f32 %v12050, %v12054
    %v12056 = vmul.f32 %v12055, 1.442695
    %v12057 = vpow.pop %v12056
    %v12058 = vsel %vm12051, %v12057, 0.0
    %12059 = vadd.xlane.f32.xlu0 %v12058
    %v12060 = vpop.xlane.xlu0 %12059
    %v12061 = vrcp.pop %v12060
    %v12062 = vmul.f32 %v12057, %v12061
    %12063 = vst.msk [vmem:[#allocation16] sm:$0x1] %vm12051, %v12062
    %v12064 = vld [vmem:[%s11] sm:$0xff]
    %v12065 = vld [vmem:[%s11 + $0x8] sm:$0xff]
    %v12066 = vld [vmem:[%s11 + $0x10] sm:$0xff]
    %v12067 = vld [vmem:[%s11 + $0x18] sm:$0xff]
    %v12068 = vld [vmem:[%s11 + $0x20] sm:$0xff]
    %v12069 = vld [vmem:[%s11 + $0x28] sm:$0xff]
    %v12070 = vld [vmem:[%s11 + $0x30] sm:$0xff]
    %v12071 = vld [vmem:[%s11 + $0x38] sm:$0xff]
    %v12072 = vmul.f32 %v11963, %v12064
    %v12073 = vmul.f32 %v11964, %v12065
    %v12074 = vmul.f32 %v11965, %v12066
    %v12075 = vmul.f32 %v11966, %v12067
    %v12076 = vmul.f32 %v11967, %v12068
    %v12077 = vmul.f32 %v11968, %v12069
    %v12078 = vmul.f32 %v11969, %v12070
    %v12079 = vmul.f32 %v11970, %v12071
    %vm12080 = vcmask 7168
    %v12081 = vsel %vm12080, %v12072, 0.0
    %v12082 = vsel %vm12080, %v12073, 0.0
    %v12083 = vadd.f32 %v12081, %v12082
    %v12084 = vsel %vm12080, %v12074, 0.0
    %v12085 = vadd.f32 %v12083, %v12084
    %v12086 = vsel %vm12080, %v12075, 0.0
    %v12087 = vadd.f32 %v12085, %v12086
    %v12088 = vsel %vm12080, %v12076, 0.0
    %v12089 = vadd.f32 %v12087, %v12088
    %v12090 = vsel %vm12080, %v12077, 0.0
    %v12091 = vadd.f32 %v12089, %v12090
    %v12092 = vsel %vm12080, %v12078, 0.0
    %v12093 = vadd.f32 %v12091, %v12092
    %v12094 = vsel %vm12080, %v12079, 0.0
    %v12095 = vadd.f32 %v12093, %v12094
    %v12096 = vrot.slane %v12095, 4
    %v12097 = vadd.f32 %v12095, %v12096
    %v12098 = vrot.slane %v12097, 2
    %v12099 = vadd.f32 %v12097, %v12098
    %v12100 = vrot.slane %v12099, 1
    %v12101 = vadd.f32 %v12099, %v12100
    %v12102 = vld [vmem:[#allocation4] sm:$0x1]
    %v12103 = vadd.f32 %v12101, %v12102
    %vm12104 = vcmask 0
    %12105 = vst.msk [vmem:[#allocation17] sm:$0x1] %vm12104, %v12103
    // Predicated region
    $region78: #{hpnet_pallas.1} parent=1 // pred_check
      _
    $region79: #{hpnet_pallas.1} parent=1 // pred_check_branch
      %12107 = sbr.rel (0) target = $region81
    $region80: #{hpnet_pallas.1} parent=1 // pred_region
      %s12109 = ssub.s32 16, 16
      %12110 = vsyncadd [#allocation7], %s12109
      %s12112 = sshll.u32 [#allocation16], 4
      %s12113 = int_to_ptr.vmem [resolvable:$true] %s12112
      %12115 = dma.vmem_to_hbm [thread:$0]  %s12113, 16, %s13, [#allocation7]
    $region81: #{hpnet_pallas.1} parent=1 // pred_fallthru
      _
    // Predicated region
    $region82: #{hpnet_pallas.1} parent=1 // pred_check
      _
    $region83: #{hpnet_pallas.1} parent=1 // pred_check_branch
      %12117 = sbr.rel (0) target = $region85
    $region84: #{hpnet_pallas.1} parent=1 // pred_region
      %s12119 = ssub.s32 16, 16
      %12120 = vsyncadd [#allocation18], %s12119
      %s12122 = sshll.u32 [#allocation17], 4
      %s12123 = int_to_ptr.vmem [resolvable:$true] %s12122
      %12125 = dma.vmem_to_hbm [thread:$0]  %s12123, 16, %s14, [#allocation18]
    $region85: #{hpnet_pallas.1} parent=1 // pred_fallthru
      _
    // Predicated region
    $region86: #{hpnet_pallas.1} parent=1 // pred_check
      _
    $region87: #{hpnet_pallas.1} parent=1 // pred_check_branch
      %12127 = sbr.rel (0) target = $region89
    $region88: #{hpnet_pallas.1} parent=1 // pred_region
      %12128 = dma.done [#allocation7], 16
    $region89: #{hpnet_pallas.1} parent=1 // pred_fallthru
      _
    // Predicated region
    $region90: #{hpnet_pallas.1} parent=1 // pred_check
      _
    $region91: #{hpnet_pallas.1} parent=1 // pred_check_branch
      %12130 = sbr.rel (0) target = $region93
    $region92: #{hpnet_pallas.1} parent=1 // pred_region
      %12131 = dma.done [#allocation18], 16
    $region93: #{hpnet_pallas.1} parent=1 // pred_fallthru
      _
    %12132 = vsyncpa [#allocation6], 1
    %12133 = vsyncpa [#allocation9], 1
    %12134 = vsyncpa [#allocation12], 1
    %12135 = vsyncpa [#allocation15], 1
    %12136 = vsyncpa [#allocation7], 1
    %12137 = vsyncpa [#allocation18], 1

</llo_original>
